<compile_context>
chip_gen: v7x
topology: tpu7x:2x2x1
jax: 0.10.0
libtpu: 0.0.40
codegen_flags: <defaults>
</compile_context>

<pallas_src>
import functools

import jax
import jax.numpy as jnp
from jax.experimental import pallas as pl
from jax.experimental.pallas import tpu as pltpu


LANE = 128   # lane width of the packed parameter slab and the lane-dense output slabs
SUB = 8      # sublane alignment


# ----------------------------------------------------------------------------- parameters

PARAM_NAMES = [
    # mapping MLP (per-feature scalar -> d_m)
    "map_w1", "map_b1", "map_w2", "map_b2", "map_w3", "map_b3", "map_w4", "map_b4",
    # learned x query tokens
    "x_attn",
    # xattn: attention(d_q=2dm, d_k=dm, d_v=2dm, d_m=2dm)
    "xa_wq", "xa_bq", "xa_wk", "xa_bk", "xa_wv", "xa_bv",
    # ffn
    "ffn_w1", "ffn_b1", "ffn_w2", "ffn_b2",
    # attn: attention(d_q=dm, d_k=dm, d_v=dm, d_m=dm)
    "ya_wq", "ya_bq", "ya_wk", "ya_bk", "ya_wv", "ya_bv",
    # learned y query tokens + scaling
    "y_attn", "scaling",
    # decoder_full
    "df_w1", "df_b1", "df_w2", "df_b2", "df_w3", "df_b3",
    # decoder_uni
    "du_w1", "du_b1", "du_w2", "du_b2", "du_w3", "du_b3",
]


def _param_shapes(F, O, d_m, hidden=10):
    return {
        "map_w1": ((1, hidden), 0.3), "map_b1": ((1, hidden), 0.1),
        "map_w2": ((hidden, hidden), 0.3), "map_b2": ((1, hidden), 0.1),
        "map_w3": ((hidden, hidden), 0.3), "map_b3": ((1, hidden), 0.1),
        "map_w4": ((hidden, d_m), 0.3), "map_b4": ((1, d_m), 0.1),
        "x_attn": ((1, F, 2 * d_m), 1.0),
        "xa_wq": ((2 * d_m, 2 * d_m), 0.2), "xa_bq": ((1, 2 * d_m), 0.1),
        "xa_wk": ((d_m, 2 * d_m), 0.2), "xa_bk": ((1, 2 * d_m), 0.1),
        "xa_wv": ((2 * d_m, 2 * d_m), 0.2), "xa_bv": ((1, 2 * d_m), 0.1),
        "ffn_w1": ((d_m, d_m), 0.3), "ffn_b1": ((1, d_m), 0.1),
        "ffn_w2": ((d_m, d_m), 0.3), "ffn_b2": ((1, d_m), 0.1),
        "ya_wq": ((d_m, d_m), 0.3), "ya_bq": ((1, d_m), 0.1),
        "ya_wk": ((d_m, d_m), 0.3), "ya_bk": ((1, d_m), 0.1),
        "ya_wv": ((d_m, d_m), 0.3), "ya_bv": ((1, d_m), 0.1),
        "y_attn": ((1, O, d_m), 1.0),
        "scaling": ((1, O, F), 1.0),
        "df_w1": ((d_m, hidden), 0.3), "df_b1": ((1, hidden), 0.1),
        "df_w2": ((hidden, hidden), 0.3), "df_b2": ((1, hidden), 0.1),
        "df_w3": ((hidden, 2), 0.3), "df_b3": ((1, 2), 0.1),
        "du_w1": ((d_m, hidden), 0.3), "du_b1": ((1, hidden), 0.1),
        "du_w2": ((hidden, hidden), 0.3), "du_b2": ((1, hidden), 0.1),
        "du_w3": ((hidden, 2), 0.3), "du_b3": ((1, 2), 0.1),
    }


def init_params(key, F, O, d_m, hidden=10):
    shapes = _param_shapes(F, O, d_m, hidden)
    keys = jax.random.split(key, len(PARAM_NAMES))
    params = {}
    for name, k in zip(PARAM_NAMES, keys):
        shape, scale = shapes[name]
        params[name] = (jax.random.normal(k, shape) * scale).astype(jnp.float32)
    return params


# ----------------------------------------------------------------------------- small helpers

def _softplus(x):
    return jnp.logaddexp(x, 0.0)


def _softmax_last_exact(x):
    m = jnp.max(x, axis=-1, keepdims=True)
    e = jnp.exp(x - m)
    return e / jnp.sum(e, axis=-1, keepdims=True)


def _dot(a, b):
    return jnp.dot(a, b, preferred_element_type=jnp.float32)


def _round_up(x, m):
    return -(-x // m) * m


def _pack_params(arrs):
    """Pack a dict of 2-D f32 arrays into one (R, LANE) slab; rows 8-aligned per entry."""
    layout = {}
    blocks = []
    r = 0
    for name, a in arrs.items():
        a = jnp.asarray(a, jnp.float32)
        nr, nc = a.shape
        nr8 = _round_up(nr, SUB)
        blocks.append(jnp.zeros((nr8, LANE), jnp.float32).at[:nr, :nc].set(a))
        layout[name] = (r, nr, nc)
        r += nr8
    return jnp.concatenate(blocks, axis=0), layout


# ----------------------------------------------------------------------------- Pallas kernel

def forward_kernel(layout, Bt, Fp, Op, d_m,
                   xcol_ref, mask_ref, slab_ref, out_o_ref, out_x_ref):
    f32 = jnp.float32

    def P(name):                       # static slice of the packed parameter slab
        r0, nr, nc = layout[name]
        return slab_ref[r0:r0 + nr, 0:nc]

    def softmax_last(x):               # lane softmax; divide goes to the EUP
        m = jnp.max(x, axis=-1, keepdims=True)
        e = jnp.exp(x - m)
        return e * pl.reciprocal(jnp.sum(e, axis=-1, keepdims=True), approx=True)

    xcol = xcol_ref[...]               # (Bt*Fp, 1)   per-feature scalar column
    mask3 = mask_ref[...]              # (Bt, 1, Fp)  1.0 = valid feature, 0.0 = missing

    # ---- mapping MLP, all (batch, feature) rows folded into M.  First layer has K=1,
    #      so it is a broadcast outer product instead of a matmul.
    h0 = _softplus(xcol * P("map_w1") + P("map_b1"))                  # (Bt*Fp, h)
    h1 = _softplus(_dot(h0, P("map_w2")) + P("map_b2"))
    h2 = _softplus(_dot(h1, P("map_w3")) + P("map_b3"))
    xm2 = _dot(h2, P("map_w4")) + P("map_b4")                         # (Bt*Fp, dm)
    xm3 = xm2.reshape(Bt, Fp, d_m)                                    # layout-free (Fp%8==0)

    # ---- x attention; queries (q_x) and values (v_x) are parameter-only and pre-projected.
    x_attn = P("x_attn")                                              # (Fp, 2dm)
    xshift3 = x_attn[None, :, :d_m] + xm3 * x_attn[None, :, d_m:]     # (Bt, Fp, dm)
    k2 = _dot(xshift3.reshape(Bt * Fp, d_m), P("xa_wk")) + P("xa_bk") # (Bt*Fp, 2dm)
    k3 = k2.reshape(Bt, Fp, 2 * d_m)
    qxb = jnp.broadcast_to(P("q_x")[None], (Bt, Fp, 2 * d_m))
    sc = jnp.einsum("bqe,bke->bqk", qxb, k3,
                    preferred_element_type=f32) * (1.0 / (2.0 * d_m) ** 0.5)
    sc = jnp.where(mask3 > 0.5, sc, -1e30)
    attn_x = softmax_last(sc)                                         # (Bt, Fp, Fp)
    # values are shared across batch -> one big 2-D matmul (M = Bt*Fp)
    xx2 = _dot(attn_x.reshape(Bt * Fp, Fp), P("v_x"))                 # (Bt*Fp, 2dm)

    # ---- gated combine + FFN (all 2-D, M = Bt*Fp)
    h_in = xx2[:, :d_m] + xm2 * xx2[:, d_m:]
    hf = _dot(_softplus(_dot(h_in, P("ffn_w1")) + P("ffn_b1")),
              P("ffn_w2")) + P("ffn_b2")                              # (Bt*Fp, dm)

    # ---- outcome attention (qy pre-projected; k/v are batch-dependent)
    ky3 = (_dot(hf, P("ya_wk")) + P("ya_bk")).reshape(Bt, Fp, d_m)
    vy3 = (_dot(hf, P("ya_wv")) + P("ya_bv")).reshape(Bt, Fp, d_m)
    qyb = jnp.broadcast_to(P("q_y")[None], (Bt, Op, d_m))
    sc2 = jnp.einsum("bod,bfd->bof", qyb, ky3,
                     preferred_element_type=f32) * (1.0 / float(d_m) ** 0.5)
    sc2 = jnp.where(mask3 > 0.5, sc2, -1e30)
    attn_y = softmax_last(sc2)                                        # (Bt, Op, Fp)
    z3 = jnp.einsum("bof,bfd->bod", attn_y, vy3, preferred_element_type=f32)

    # multiplier = (softplus(scaling) * mask).sum(-1); softplus is hoisted to the wrapper.
    mult = jnp.sum(P("sp_scaling")[None] * mask3, axis=-1, keepdims=True)   # (Bt, Op, 1)
    y_attn = P("y_attn")                                              # (Op, dm)
    z3 = z3 * mult + y_attn[None]
    z2 = z3.reshape(Bt * Op, d_m)                                     # layout-free (Op%8==0)

    # ---- decoder_full -> Beta params -> Beta mean
    d1 = _softplus(_dot(z2, P("df_w1")) + P("df_b1"))
    d2 = _softplus(_dot(d1, P("df_w2")) + P("df_b2"))
    beta2 = 1.0 + _softplus(_dot(d2, P("df_w3")) + P("df_b3"))        # (Bt*Op, 2)
    single2 = beta2[:, 0:1] * pl.reciprocal(beta2[:, 0:1] + beta2[:, 1:2], approx=True)

    # ---- decoder_uni on xm[b,f] + y_attn[o]: one (Bt*Op*Fp, d_m) matmul slab
    vals4 = xm3[:, None, :, :] + y_attn[None, :, None, :]             # (Bt, Op, Fp, dm)
    vflat = vals4.reshape(Bt * Op * Fp, d_m)                          # layout-free (Fp%8==0)
    u1 = _softplus(_dot(vflat, P("du_w1")) + P("du_b1"))
    u2 = _softplus(_dot(u1, P("du_w2")) + P("du_b2"))
    uni = 1.0 + _softplus(_dot(u2, P("du_w3")) + P("du_b3"))          # (Bt*Op*Fp, 2)
    probs_flat = uni[:, 0] * pl.reciprocal(uni[:, 0] + uni[:, 1], approx=True)
    probs3 = probs_flat.reshape(Bt * Op, Fp).reshape(Bt, Op, Fp)      # small relayout only

    single3 = single2.reshape(Bt, Op, 1)
    beta3 = beta2.reshape(Bt, Op, 2)

    # ---- lane-dense outputs: assemble 128-wide slabs in registers, store full-width.
    parts_o = [single3, beta3, probs3, attn_y]
    rem_o = LANE - (3 + 2 * Fp)
    if rem_o:
        parts_o.append(jnp.zeros((Bt, Op, rem_o), f32))
    out_o_ref[...] = jnp.concatenate(parts_o, axis=-1)                # (Bt, Op, 128)

    parts_x = [attn_x]
    rem_x = LANE - Fp
    if rem_x:
        parts_x.append(jnp.zeros((Bt, Fp, rem_x), f32))
    out_x_ref[...] = jnp.concatenate(parts_x, axis=-1)                # (Bt, Fp, 128)


# ----------------------------------------------------------------------------- wrapper

def network_forward(xv, params, N_param, d_m, outcomes, *, num_blocks=2):
    B, F = xv.shape
    O = outcomes

    Fp = _round_up(F, SUB)
    Op = _round_up(O, SUB)
    num_blocks = max(1, min(num_blocks, B))        # >=2 blocks lets both v7x TCs work
    Bt = -(-B // num_blocks)
    Bpad = Bt * num_blocks

    # TODO(synk): for F > 62 the single-slab lane packing below needs a second slab / tiling.
    assert 3 + 2 * Fp <= LANE, "output lane packing assumes F <= 62"

    # ---- inputs: pad batch with dummy rows and features with the -1 'missing' sentinel
    xvp = jnp.pad(xv.astype(jnp.float32), ((0, Bpad - B), (0, Fp - F)), constant_values=-1.0)
    xcol = xvp.reshape(Bpad * Fp, 1)                                 # feature column for the MLP
    mask3 = (xvp != -1.0).astype(jnp.float32).reshape(Bpad, 1, Fp)   # key mask

    # ---- hoist batch-invariant projections (parameter-only; computed once, outside kernel)
    Pr = params
    x_attn0 = Pr["x_attn"][0]                                        # (F, 2dm)
    y_attn0 = Pr["y_attn"][0]                                        # (O, dm)
    q_x = x_attn0 @ Pr["xa_wq"] + Pr["xa_bq"]
    v_x = x_attn0 @ Pr["xa_wv"] + Pr["xa_bv"]
    q_y = y_attn0 @ Pr["ya_wq"] + Pr["ya_bq"]
    sp_scaling = _softplus(Pr["scaling"][0])                         # (O, F)

    padF = lambda a: jnp.pad(a, ((0, Fp - F), (0, 0)))
    padO = lambda a: jnp.pad(a, ((0, Op - O), (0, 0)))

    packed = {
        "map_w1": Pr["map_w1"], "map_b1": Pr["map_b1"],
        "map_w2": Pr["map_w2"], "map_b2": Pr["map_b2"],
        "map_w3": Pr["map_w3"], "map_b3": Pr["map_b3"],
        "map_w4": Pr["map_w4"], "map_b4": Pr["map_b4"],
        "x_attn": padF(x_attn0), "q_x": padF(q_x), "v_x": padF(v_x),
        "xa_wk": Pr["xa_wk"], "xa_bk": Pr["xa_bk"],
        "ffn_w1": Pr["ffn_w1"], "ffn_b1": Pr["ffn_b1"],
        "ffn_w2": Pr["ffn_w2"], "ffn_b2": Pr["ffn_b2"],
        "q_y": padO(q_y),
        "ya_wk": Pr["ya_wk"], "ya_bk": Pr["ya_bk"],
        "ya_wv": Pr["ya_wv"], "ya_bv": Pr["ya_bv"],
        "y_attn": padO(y_attn0),
        "sp_scaling": jnp.pad(sp_scaling, ((0, Op - O), (0, Fp - F))),
        "df_w1": Pr["df_w1"], "df_b1": Pr["df_b1"],
        "df_w2": Pr["df_w2"], "df_b2": Pr["df_b2"],
        "df_w3": Pr["df_w3"], "df_b3": Pr["df_b3"],
        "du_w1": Pr["du_w1"], "du_b1": Pr["du_b1"],
        "du_w2": Pr["du_w2"], "du_b2": Pr["du_b2"],
        "du_w3": Pr["du_w3"], "du_b3": Pr["du_b3"],
    }
    slab, layout = _pack_params(packed)
    R = slab.shape[0]

    kern = functools.partial(forward_kernel, layout, Bt, Fp, Op, d_m)

    out_o, out_x = pl.pallas_call(
        kern,
        out_shape=(jax.ShapeDtypeStruct((Bpad, Op, LANE), jnp.float32),
                   jax.ShapeDtypeStruct((Bpad, Fp, LANE), jnp.float32)),
        grid=(num_blocks,),
        in_specs=[
            pl.BlockSpec((Bt * Fp, 1), lambda b: (b, 0)),       # xv as a feature column
            pl.BlockSpec((Bt, 1, Fp), lambda b: (b, 0, 0)),     # float key mask
            pl.BlockSpec((R, LANE), lambda b: (0, 0)),          # packed parameter slab (resident)
        ],
        out_specs=(
            pl.BlockSpec((Bt, Op, LANE), lambda b: (b, 0, 0)),
            pl.BlockSpec((Bt, Fp, LANE), lambda b: (b, 0, 0)),
        ),
        compiler_params=pltpu.CompilerParams(dimension_semantics=("parallel",)),
    )(xcol, mask3, slab)

    # ---- unpack the lane-dense slabs (free layout plumbing in XLA)
    single_prob = out_o[:B, :O, 0]                       # (B, O)
    beta_params = out_o[:B, :O, 1:3]                     # (B, O, 2)
    probs = out_o[:B, :O, 3:3 + F]                       # (B, O, F)
    attn = out_o[:B, :O, 3 + Fp:3 + Fp + F]              # (B, O, F)
    attn_x = out_x[:B, :F, :F]                           # (B, F, F)

    N = jnp.broadcast_to(N_param[None], (B,) + N_param.shape)   # N.unsqueeze(0).repeat(B,1,1)
    return single_prob, probs, N, (attn, attn_x, beta_params)


# ----------------------------------------------------------------------------- pure-JAX reference

def reference_forward(xv, P, N_param, d_m, outcomes):
    B, F = xv.shape
    O = outcomes
    mask = (xv != -1.0)

    t = xv[..., None]
    h0 = _softplus(t @ P["map_w1"] + P["map_b1"])
    h1 = _softplus(h0 @ P["map_w2"] + P["map_b2"])
    h2 = _softplus(h1 @ P["map_w3"] + P["map_b3"])
    xm = h2 @ P["map_w4"] + P["map_b4"]                           # (B, F, d_m)

    x_attn = jnp.broadcast_to(P["x_attn"], (B, F, 2 * d_m))
    xshift = x_attn[..., :d_m] + xm * x_attn[..., d_m:]
    q = x_attn @ P["xa_wq"] + P["xa_bq"]
    k = xshift @ P["xa_wk"] + P["xa_bk"]
    v = x_attn @ P["xa_wv"] + P["xa_bv"]
    sc = jnp.einsum("bqd,bkd->bqk", q, k) / (2.0 * d_m) ** 0.5
    sc = jnp.where(mask[:, None, :], sc, -1e30)
    attn_x = _softmax_last_exact(sc)
    x_x = attn_x @ v

    h = x_x[..., :d_m] + xm * x_x[..., d_m:]
    h = _softplus(h @ P["ffn_w1"] + P["ffn_b1"]) @ P["ffn_w2"] + P["ffn_b2"]

    y_attn = jnp.broadcast_to(P["y_attn"], (B, O, d_m))
    qy = y_attn @ P["ya_wq"] + P["ya_bq"]
    ky = h @ P["ya_wk"] + P["ya_bk"]
    vy = h @ P["ya_wv"] + P["ya_bv"]
    sc2 = jnp.einsum("bod,bfd->bof", qy, ky) / float(d_m) ** 0.5
    sc2 = jnp.where(mask[:, None, :], sc2, -1e30)
    attn_y = _softmax_last_exact(sc2)
    z = attn_y @ vy

    mult = jnp.sum(_softplus(P["scaling"]) * mask[:, None, :].astype(jnp.float32),
                   axis=-1, keepdims=True)
    z = z * mult + y_attn

    d1 = _softplus(z @ P["df_w1"] + P["df_b1"])
    d2 = _softplus(d1 @ P["df_w2"] + P["df_b2"])
    d3 = _softplus(d2 @ P["df_w3"] + P["df_b3"])
    beta = 1.0 + d3
    single = beta[..., 0] / (beta[..., 0] + beta[..., 1])

    values = xm[:, None, :, :] + y_attn[:, :, None, :]
    u1 = _softplus(values @ P["du_w1"] + P["du_b1"])
    u2 = _softplus(u1 @ P["du_w2"] + P["du_b2"])
    u3 = _softplus(u2 @ P["du_w3"] + P["du_b3"])
    uni = 1.0 + u3
    probs = uni[..., 0] / (uni[..., 0] + uni[..., 1])

    N = jnp.broadcast_to(N_param[None], (B,) + N_param.shape)
    return single, probs, N, (attn_y, attn_x, beta)


# ----------------------------------------------------------------------------- main

if __name__ == "__main__":
    B, FEATURES, OUTCOMES, D_M = 8, 8, 4, 8

    key = jax.random.PRNGKey(0)
    k_params, k_x, k_n = jax.random.split(key, 3)

    params = init_params(k_params, FEATURES, OUTCOMES, D_M)
    N_param = jax.random.randint(k_n, (8, 2), 0, 100, dtype=jnp.int32)
    xv = jax.random.normal(k_x, (B, FEATURES), dtype=jnp.float32)
    # mark a couple of features as "missing" to exercise the attention mask path
    xv = xv.at[0, 2].set(-1.0).at[3, 5].set(-1.0)

    out = network_forward(xv, params, N_param, D_M, OUTCOMES, num_blocks=2)
    jax.block_until_ready(out)

    ref = reference_forward(xv, params, N_param, D_M, OUTCOMES)

    sp, pr_, N_, (attn, attn_x, bp) = out
    rsp, rpr, rN, (rattn, rattn_x, rbp) = ref

    checks = [(sp, rsp), (pr_, rpr), (attn, rattn), (attn_x, rattn_x), (bp, rbp)]
    for got, want in checks:
        assert got.shape == want.shape, (got.shape, want.shape)
        assert bool(jnp.all(jnp.isfinite(got)))
        assert bool(jnp.allclose(got, want, rtol=5e-2, atol=5e-2)), \
            float(jnp.max(jnp.abs(got - want)))
    assert bool(jnp.all(N_ == rN))

    print("KERNEL_OK")
</pallas_src>

<mosaic_0001>
module attributes {stable_mosaic.version = 11 : i64} {
  func.func @forward_kernel(%arg0: i32, %arg1: memref<32x1xf32, #tpu.memory_space<vmem>>, %arg2: memref<4x1x8xf32, #tpu.memory_space<vmem>>, %arg3: memref<344x128xf32, #tpu.memory_space<vmem>>, %arg4: memref<4x8x128xf32, #tpu.memory_space<vmem>>, %arg5: memref<4x8x128xf32, #tpu.memory_space<vmem>>) attributes {dimension_semantics = [#tpu.dimension_semantics<parallel>], iteration_bounds = array<i64: 2>, scalar_prefetch = 0 : i64, scratch_operands = 0 : i64, tpu.core_type = #tpu.core_type<tc>, window_params = [{transform_indices = @transform_0, window_bounds = array<i64: 32, 1>}, {transform_indices = @transform_1, window_bounds = array<i64: 4, 1, 8>}, {pipeline_mode = #tpu.pipeline_mode<synchronous>, transform_indices = @transform_2, window_bounds = array<i64: 344, 128>}, {transform_indices = @transform_3, window_bounds = array<i64: 4, 8, 128>}, {transform_indices = @transform_4, window_bounds = array<i64: 4, 8, 128>}]} {
    %c0 = arith.constant 0 : index
    %c0_0 = arith.constant 0 : index
    %0 = vector.load %arg1[%c0, %c0_0] : memref<32x1xf32, #tpu.memory_space<vmem>>, vector<32x1xf32>
    %c0_1 = arith.constant 0 : index
    %c0_2 = arith.constant 0 : index
    %c0_3 = arith.constant 0 : index
    %1 = vector.load %arg2[%c0_1, %c0_2, %c0_3] : memref<4x1x8xf32, #tpu.memory_space<vmem>>, vector<4x1x8xf32>
    %c0_4 = arith.constant 0 : index
    %c0_5 = arith.constant 0 : index
    %2 = vector.load %arg3[%c0_4, %c0_5] : memref<344x128xf32, #tpu.memory_space<vmem>>, vector<1x10xf32>
    %3 = vector.broadcast %0 : vector<32x1xf32> to vector<32x10xf32>
    %4 = vector.broadcast %2 : vector<1x10xf32> to vector<32x10xf32>
    %5 = arith.mulf %3, %4 : vector<32x10xf32>
    %c8 = arith.constant 8 : index
    %c0_6 = arith.constant 0 : index
    %6 = vector.load %arg3[%c8, %c0_6] : memref<344x128xf32, #tpu.memory_space<vmem>>, vector<1x10xf32>
    %7 = vector.broadcast %6 : vector<1x10xf32> to vector<32x10xf32>
    %8 = arith.addf %5, %7 : vector<32x10xf32>
    %cst = arith.constant 0.000000e+00 : f32
    %9 = vector.broadcast %cst : f32 to vector<32x10xf32>
    %10 = arith.maximumf %8, %9 : vector<32x10xf32>
    %11 = vector.broadcast %cst : f32 to vector<32x10xf32>
    %12 = arith.subf %8, %11 : vector<32x10xf32>
    %13 = arith.cmpf one, %12, %12 : vector<32x10xf32>
    %14 = vector.broadcast %cst : f32 to vector<32x10xf32>
    %15 = arith.addf %8, %14 : vector<32x10xf32>
    %16 = math.absf %12 : vector<32x10xf32>
    %cst_7 = arith.constant 0.000000e+00 : f32
    %17 = vector.broadcast %cst_7 : f32 to vector<32x10xf32>
    %18 = arith.subf %17, %16 : vector<32x10xf32>
    %19 = math.exp %18 : vector<32x10xf32>
    %20 = math.log1p %19 : vector<32x10xf32>
    %21 = arith.addf %10, %20 : vector<32x10xf32>
    %22 = arith.select %13, %15, %21 : vector<32x10xi1>, vector<32x10xf32>
    %c16 = arith.constant 16 : index
    %c0_8 = arith.constant 0 : index
    %23 = vector.load %arg3[%c16, %c0_8] : memref<344x128xf32, #tpu.memory_space<vmem>>, vector<10x10xf32>
    %cst_9 = arith.constant dense<0.000000e+00> : vector<32x10xf32>
    %24 = tpu.matmul %22, %23, %cst_9 {dimension_numbers = #tpu.dot_dimension_numbers<[1], [0], [0], [1], [0, 0, 1, 1], [], []>} : vector<32x10xf32>, vector<10x10xf32>, vector<32x10xf32> -> vector<32x10xf32>
    %c32 = arith.constant 32 : index
    %c0_10 = arith.constant 0 : index
    %25 = vector.load %arg3[%c32, %c0_10] : memref<344x128xf32, #tpu.memory_space<vmem>>, vector<1x10xf32>
    %26 = vector.broadcast %25 : vector<1x10xf32> to vector<32x10xf32>
    %27 = arith.addf %24, %26 : vector<32x10xf32>
    %cst_11 = arith.constant 0.000000e+00 : f32
    %28 = vector.broadcast %cst_11 : f32 to vector<32x10xf32>
    %29 = arith.maximumf %27, %28 : vector<32x10xf32>
    %30 = vector.broadcast %cst_11 : f32 to vector<32x10xf32>
    %31 = arith.subf %27, %30 : vector<32x10xf32>
    %32 = arith.cmpf one, %31, %31 : vector<32x10xf32>
    %33 = vector.broadcast %cst_11 : f32 to vector<32x10xf32>
    %34 = arith.addf %27, %33 : vector<32x10xf32>
    %35 = math.absf %31 : vector<32x10xf32>
    %cst_12 = arith.constant 0.000000e+00 : f32
    %36 = vector.broadcast %cst_12 : f32 to vector<32x10xf32>
    %37 = arith.subf %36, %35 : vector<32x10xf32>
    %38 = math.exp %37 : vector<32x10xf32>
    %39 = math.log1p %38 : vector<32x10xf32>
    %40 = arith.addf %29, %39 : vector<32x10xf32>
    %41 = arith.select %32, %34, %40 : vector<32x10xi1>, vector<32x10xf32>
    %c40 = arith.constant 40 : index
    %c0_13 = arith.constant 0 : index
    %42 = vector.load %arg3[%c40, %c0_13] : memref<344x128xf32, #tpu.memory_space<vmem>>, vector<10x10xf32>
    %cst_14 = arith.constant dense<0.000000e+00> : vector<32x10xf32>
    %43 = tpu.matmul %41, %42, %cst_14 {dimension_numbers = #tpu.dot_dimension_numbers<[1], [0], [0], [1], [0, 0, 1, 1], [], []>} : vector<32x10xf32>, vector<10x10xf32>, vector<32x10xf32> -> vector<32x10xf32>
    %c56 = arith.constant 56 : index
    %c0_15 = arith.constant 0 : index
    %44 = vector.load %arg3[%c56, %c0_15] : memref<344x128xf32, #tpu.memory_space<vmem>>, vector<1x10xf32>
    %45 = vector.broadcast %44 : vector<1x10xf32> to vector<32x10xf32>
    %46 = arith.addf %43, %45 : vector<32x10xf32>
    %cst_16 = arith.constant 0.000000e+00 : f32
    %47 = vector.broadcast %cst_16 : f32 to vector<32x10xf32>
    %48 = arith.maximumf %46, %47 : vector<32x10xf32>
    %49 = vector.broadcast %cst_16 : f32 to vector<32x10xf32>
    %50 = arith.subf %46, %49 : vector<32x10xf32>
    %51 = arith.cmpf one, %50, %50 : vector<32x10xf32>
    %52 = vector.broadcast %cst_16 : f32 to vector<32x10xf32>
    %53 = arith.addf %46, %52 : vector<32x10xf32>
    %54 = math.absf %50 : vector<32x10xf32>
    %cst_17 = arith.constant 0.000000e+00 : f32
    %55 = vector.broadcast %cst_17 : f32 to vector<32x10xf32>
    %56 = arith.subf %55, %54 : vector<32x10xf32>
    %57 = math.exp %56 : vector<32x10xf32>
    %58 = math.log1p %57 : vector<32x10xf32>
    %59 = arith.addf %48, %58 : vector<32x10xf32>
    %60 = arith.select %51, %53, %59 : vector<32x10xi1>, vector<32x10xf32>
    %c64 = arith.constant 64 : index
    %c0_18 = arith.constant 0 : index
    %61 = vector.load %arg3[%c64, %c0_18] : memref<344x128xf32, #tpu.memory_space<vmem>>, vector<10x8xf32>
    %cst_19 = arith.constant dense<0.000000e+00> : vector<32x8xf32>
    %62 = tpu.matmul %60, %61, %cst_19 {dimension_numbers = #tpu.dot_dimension_numbers<[1], [0], [0], [1], [0, 0, 1, 1], [], []>} : vector<32x10xf32>, vector<10x8xf32>, vector<32x8xf32> -> vector<32x8xf32>
    %c80 = arith.constant 80 : index
    %c0_20 = arith.constant 0 : index
    %63 = vector.load %arg3[%c80, %c0_20] : memref<344x128xf32, #tpu.memory_space<vmem>>, vector<1x8xf32>
    %64 = vector.broadcast %63 : vector<1x8xf32> to vector<32x8xf32>
    %65 = arith.addf %62, %64 : vector<32x8xf32>
    %66 = vector.shape_cast %65 : vector<32x8xf32> to vector<4x8x8xf32>
    %c88 = arith.constant 88 : index
    %c0_21 = arith.constant 0 : index
    %67 = vector.load %arg3[%c88, %c0_21] : memref<344x128xf32, #tpu.memory_space<vmem>>, vector<8x16xf32>
    %68 = vector.extract_strided_slice %67 {offsets = [0, 0], sizes = [8, 8], strides = [1, 1]} : vector<8x16xf32> to vector<8x8xf32>
    %69 = vector.shape_cast %68 : vector<8x8xf32> to vector<1x8x8xf32>
    %70 = vector.extract_strided_slice %67 {offsets = [0, 8], sizes = [8, 8], strides = [1, 1]} : vector<8x16xf32> to vector<8x8xf32>
    %71 = vector.shape_cast %70 : vector<8x8xf32> to vector<1x8x8xf32>
    %72 = vector.broadcast %71 : vector<1x8x8xf32> to vector<4x8x8xf32>
    %73 = arith.mulf %66, %72 : vector<4x8x8xf32>
    %74 = vector.broadcast %69 : vector<1x8x8xf32> to vector<4x8x8xf32>
    %75 = arith.addf %74, %73 : vector<4x8x8xf32>
    %76 = vector.shape_cast %75 : vector<4x8x8xf32> to vector<32x8xf32>
    %c112 = arith.constant 112 : index
    %c0_22 = arith.constant 0 : index
    %77 = vector.load %arg3[%c112, %c0_22] : memref<344x128xf32, #tpu.memory_space<vmem>>, vector<8x16xf32>
    %cst_23 = arith.constant dense<0.000000e+00> : vector<32x16xf32>
    %78 = tpu.matmul %76, %77, %cst_23 {dimension_numbers = #tpu.dot_dimension_numbers<[1], [0], [0], [1], [0, 0, 1, 1], [], []>} : vector<32x8xf32>, vector<8x16xf32>, vector<32x16xf32> -> vector<32x16xf32>
    %c120 = arith.constant 120 : index
    %c0_24 = arith.constant 0 : index
    %79 = vector.load %arg3[%c120, %c0_24] : memref<344x128xf32, #tpu.memory_space<vmem>>, vector<1x16xf32>
    %80 = vector.broadcast %79 : vector<1x16xf32> to vector<32x16xf32>
    %81 = arith.addf %78, %80 : vector<32x16xf32>
    %82 = vector.shape_cast %81 : vector<32x16xf32> to vector<4x8x16xf32>
    %c96 = arith.constant 96 : index
    %c0_25 = arith.constant 0 : index
    %83 = vector.load %arg3[%c96, %c0_25] : memref<344x128xf32, #tpu.memory_space<vmem>>, vector<8x16xf32>
    %84 = vector.shape_cast %83 : vector<8x16xf32> to vector<1x8x16xf32>
    %85 = vector.shape_cast %84 : vector<1x8x16xf32> to vector<1x8x16xf32>
    %86 = vector.broadcast %85 : vector<1x8x16xf32> to vector<4x8x16xf32>
    "tpu.trace_start"() <{level = 10 : i32, message = "bqe,bke->bqk"}> : () -> ()
    %cst_26 = arith.constant dense<0.000000e+00> : vector<4x8x8xf32>
    %87 = tpu.matmul %86, %82, %cst_26 {dimension_numbers = #tpu.dot_dimension_numbers<[2], [2], [1], [1], [0, 0, 0, 1, 1, 1], [0], [0]>} : vector<4x8x16xf32>, vector<4x8x16xf32>, vector<4x8x8xf32> -> vector<4x8x8xf32>
    "tpu.trace_stop"() : () -> ()
    %cst_27 = arith.constant 2.500000e-01 : f32
    %88 = vector.broadcast %cst_27 : f32 to vector<4x8x8xf32>
    %89 = arith.mulf %87, %88 : vector<4x8x8xf32>
    %cst_28 = arith.constant 5.000000e-01 : f32
    %90 = vector.broadcast %cst_28 : f32 to vector<4x1x8xf32>
    %91 = arith.cmpf ogt, %1, %90 : vector<4x1x8xf32>
    %cst_29 = arith.constant -1.000000e+30 : f32
    %92 = vector.shape_cast %91 : vector<4x1x8xi1> to vector<4x1x8xi1>
    %93 = vector.broadcast %92 : vector<4x1x8xi1> to vector<4x8x8xi1>
    %94 = vector.broadcast %cst_29 : f32 to vector<4x8x8xf32>
    %95 = arith.select %93, %89, %94 : vector<4x8x8xi1>, vector<4x8x8xf32>
    %cst_30 = arith.constant dense<0xFF800000> : vector<4x8xf32>
    %96 = vector.multi_reduction <maximumf>, %95, %cst_30 [2] : vector<4x8x8xf32> to vector<4x8xf32>
    %97 = vector.shape_cast %96 : vector<4x8xf32> to vector<4x8x1xf32>
    %98 = vector.broadcast %97 : vector<4x8x1xf32> to vector<4x8x8xf32>
    %99 = arith.subf %95, %98 : vector<4x8x8xf32>
    %100 = math.exp %99 : vector<4x8x8xf32>
    %cst_31 = arith.constant dense<0.000000e+00> : vector<4x8xf32>
    %101 = vector.multi_reduction <add>, %100, %cst_31 [2] : vector<4x8x8xf32> to vector<4x8xf32>
    %102 = vector.shape_cast %101 : vector<4x8xf32> to vector<4x8x1xf32>
    %103 = tpu.reciprocal %102 {approx = true} : vector<4x8x1xf32> -> vector<4x8x1xf32>
    %104 = vector.broadcast %103 : vector<4x8x1xf32> to vector<4x8x8xf32>
    %105 = arith.mulf %100, %104 : vector<4x8x8xf32>
    %106 = vector.shape_cast %105 : vector<4x8x8xf32> to vector<32x8xf32>
    %c104 = arith.constant 104 : index
    %c0_32 = arith.constant 0 : index
    %107 = vector.load %arg3[%c104, %c0_32] : memref<344x128xf32, #tpu.memory_space<vmem>>, vector<8x16xf32>
    %cst_33 = arith.constant dense<0.000000e+00> : vector<32x16xf32>
    %108 = tpu.matmul %106, %107, %cst_33 {dimension_numbers = #tpu.dot_dimension_numbers<[1], [0], [0], [1], [0, 0, 1, 1], [], []>} : vector<32x8xf32>, vector<8x16xf32>, vector<32x16xf32> -> vector<32x16xf32>
    %109 = vector.extract_strided_slice %108 {offsets = [0, 0], sizes = [32, 8], strides = [1, 1]} : vector<32x16xf32> to vector<32x8xf32>
    %110 = vector.extract_strided_slice %108 {offsets = [0, 8], sizes = [32, 8], strides = [1, 1]} : vector<32x16xf32> to vector<32x8xf32>
    %111 = arith.mulf %65, %110 : vector<32x8xf32>
    %112 = arith.addf %109, %111 : vector<32x8xf32>
    %c128 = arith.constant 128 : index
    %c0_34 = arith.constant 0 : index
    %113 = vector.load %arg3[%c128, %c0_34] : memref<344x128xf32, #tpu.memory_space<vmem>>, vector<8x8xf32>
    %cst_35 = arith.constant dense<0.000000e+00> : vector<32x8xf32>
    %114 = tpu.matmul %112, %113, %cst_35 {dimension_numbers = #tpu.dot_dimension_numbers<[1], [0], [0], [1], [0, 0, 1, 1], [], []>} : vector<32x8xf32>, vector<8x8xf32>, vector<32x8xf32> -> vector<32x8xf32>
    %c136 = arith.constant 136 : index
    %c0_36 = arith.constant 0 : index
    %115 = vector.load %arg3[%c136, %c0_36] : memref<344x128xf32, #tpu.memory_space<vmem>>, vector<1x8xf32>
    %116 = vector.broadcast %115 : vector<1x8xf32> to vector<32x8xf32>
    %117 = arith.addf %114, %116 : vector<32x8xf32>
    %cst_37 = arith.constant 0.000000e+00 : f32
    %118 = vector.broadcast %cst_37 : f32 to vector<32x8xf32>
    %119 = arith.maximumf %117, %118 : vector<32x8xf32>
    %120 = vector.broadcast %cst_37 : f32 to vector<32x8xf32>
    %121 = arith.subf %117, %120 : vector<32x8xf32>
    %122 = arith.cmpf one, %121, %121 : vector<32x8xf32>
    %123 = vector.broadcast %cst_37 : f32 to vector<32x8xf32>
    %124 = arith.addf %117, %123 : vector<32x8xf32>
    %125 = math.absf %121 : vector<32x8xf32>
    %cst_38 = arith.constant 0.000000e+00 : f32
    %126 = vector.broadcast %cst_38 : f32 to vector<32x8xf32>
    %127 = arith.subf %126, %125 : vector<32x8xf32>
    %128 = math.exp %127 : vector<32x8xf32>
    %129 = math.log1p %128 : vector<32x8xf32>
    %130 = arith.addf %119, %129 : vector<32x8xf32>
    %131 = arith.select %122, %124, %130 : vector<32x8xi1>, vector<32x8xf32>
    %c144 = arith.constant 144 : index
    %c0_39 = arith.constant 0 : index
    %132 = vector.load %arg3[%c144, %c0_39] : memref<344x128xf32, #tpu.memory_space<vmem>>, vector<8x8xf32>
    %cst_40 = arith.constant dense<0.000000e+00> : vector<32x8xf32>
    %133 = tpu.matmul %131, %132, %cst_40 {dimension_numbers = #tpu.dot_dimension_numbers<[1], [0], [0], [1], [0, 0, 1, 1], [], []>} : vector<32x8xf32>, vector<8x8xf32>, vector<32x8xf32> -> vector<32x8xf32>
    %c152 = arith.constant 152 : index
    %c0_41 = arith.constant 0 : index
    %134 = vector.load %arg3[%c152, %c0_41] : memref<344x128xf32, #tpu.memory_space<vmem>>, vector<1x8xf32>
    %135 = vector.broadcast %134 : vector<1x8xf32> to vector<32x8xf32>
    %136 = arith.addf %133, %135 : vector<32x8xf32>
    %c168 = arith.constant 168 : index
    %c0_42 = arith.constant 0 : index
    %137 = vector.load %arg3[%c168, %c0_42] : memref<344x128xf32, #tpu.memory_space<vmem>>, vector<8x8xf32>
    %cst_43 = arith.constant dense<0.000000e+00> : vector<32x8xf32>
    %138 = tpu.matmul %136, %137, %cst_43 {dimension_numbers = #tpu.dot_dimension_numbers<[1], [0], [0], [1], [0, 0, 1, 1], [], []>} : vector<32x8xf32>, vector<8x8xf32>, vector<32x8xf32> -> vector<32x8xf32>
    %c176 = arith.constant 176 : index
    %c0_44 = arith.constant 0 : index
    %139 = vector.load %arg3[%c176, %c0_44] : memref<344x128xf32, #tpu.memory_space<vmem>>, vector<1x8xf32>
    %140 = vector.broadcast %139 : vector<1x8xf32> to vector<32x8xf32>
    %141 = arith.addf %138, %140 : vector<32x8xf32>
    %142 = vector.shape_cast %141 : vector<32x8xf32> to vector<4x8x8xf32>
    %c184 = arith.constant 184 : index
    %c0_45 = arith.constant 0 : index
    %143 = vector.load %arg3[%c184, %c0_45] : memref<344x128xf32, #tpu.memory_space<vmem>>, vector<8x8xf32>
    %cst_46 = arith.constant dense<0.000000e+00> : vector<32x8xf32>
    %144 = tpu.matmul %136, %143, %cst_46 {dimension_numbers = #tpu.dot_dimension_numbers<[1], [0], [0], [1], [0, 0, 1, 1], [], []>} : vector<32x8xf32>, vector<8x8xf32>, vector<32x8xf32> -> vector<32x8xf32>
    %c192 = arith.constant 192 : index
    %c0_47 = arith.constant 0 : index
    %145 = vector.load %arg3[%c192, %c0_47] : memref<344x128xf32, #tpu.memory_space<vmem>>, vector<1x8xf32>
    %146 = vector.broadcast %145 : vector<1x8xf32> to vector<32x8xf32>
    %147 = arith.addf %144, %146 : vector<32x8xf32>
    %148 = vector.shape_cast %147 : vector<32x8xf32> to vector<4x8x8xf32>
    %c160 = arith.constant 160 : index
    %c0_48 = arith.constant 0 : index
    %149 = vector.load %arg3[%c160, %c0_48] : memref<344x128xf32, #tpu.memory_space<vmem>>, vector<8x8xf32>
    %150 = vector.shape_cast %149 : vector<8x8xf32> to vector<1x8x8xf32>
    %151 = vector.shape_cast %150 : vector<1x8x8xf32> to vector<1x8x8xf32>
    %152 = vector.broadcast %151 : vector<1x8x8xf32> to vector<4x8x8xf32>
    "tpu.trace_start"() <{level = 10 : i32, message = "bod,bfd->bof"}> : () -> ()
    %cst_49 = arith.constant dense<0.000000e+00> : vector<4x8x8xf32>
    %153 = tpu.matmul %152, %142, %cst_49 {dimension_numbers = #tpu.dot_dimension_numbers<[2], [2], [1], [1], [0, 0, 0, 1, 1, 1], [0], [0]>} : vector<4x8x8xf32>, vector<4x8x8xf32>, vector<4x8x8xf32> -> vector<4x8x8xf32>
    "tpu.trace_stop"() : () -> ()
    %cst_50 = arith.constant 0.353553385 : f32
    %154 = vector.broadcast %cst_50 : f32 to vector<4x8x8xf32>
    %155 = arith.mulf %153, %154 : vector<4x8x8xf32>
    %cst_51 = arith.constant 5.000000e-01 : f32
    %156 = vector.broadcast %cst_51 : f32 to vector<4x1x8xf32>
    %157 = arith.cmpf ogt, %1, %156 : vector<4x1x8xf32>
    %cst_52 = arith.constant -1.000000e+30 : f32
    %158 = vector.shape_cast %157 : vector<4x1x8xi1> to vector<4x1x8xi1>
    %159 = vector.broadcast %158 : vector<4x1x8xi1> to vector<4x8x8xi1>
    %160 = vector.broadcast %cst_52 : f32 to vector<4x8x8xf32>
    %161 = arith.select %159, %155, %160 : vector<4x8x8xi1>, vector<4x8x8xf32>
    %cst_53 = arith.constant dense<0xFF800000> : vector<4x8xf32>
    %162 = vector.multi_reduction <maximumf>, %161, %cst_53 [2] : vector<4x8x8xf32> to vector<4x8xf32>
    %163 = vector.shape_cast %162 : vector<4x8xf32> to vector<4x8x1xf32>
    %164 = vector.broadcast %163 : vector<4x8x1xf32> to vector<4x8x8xf32>
    %165 = arith.subf %161, %164 : vector<4x8x8xf32>
    %166 = math.exp %165 : vector<4x8x8xf32>
    %cst_54 = arith.constant dense<0.000000e+00> : vector<4x8xf32>
    %167 = vector.multi_reduction <add>, %166, %cst_54 [2] : vector<4x8x8xf32> to vector<4x8xf32>
    %168 = vector.shape_cast %167 : vector<4x8xf32> to vector<4x8x1xf32>
    %169 = tpu.reciprocal %168 {approx = true} : vector<4x8x1xf32> -> vector<4x8x1xf32>
    %170 = vector.broadcast %169 : vector<4x8x1xf32> to vector<4x8x8xf32>
    %171 = arith.mulf %166, %170 : vector<4x8x8xf32>
    "tpu.trace_start"() <{level = 10 : i32, message = "bof,bfd->bod"}> : () -> ()
    %cst_55 = arith.constant dense<0.000000e+00> : vector<4x8x8xf32>
    %172 = tpu.matmul %171, %148, %cst_55 {dimension_numbers = #tpu.dot_dimension_numbers<[2], [1], [1], [2], [0, 0, 0, 1, 1, 2], [0], [0]>} : vector<4x8x8xf32>, vector<4x8x8xf32>, vector<4x8x8xf32> -> vector<4x8x8xf32>
    "tpu.trace_stop"() : () -> ()
    %c208 = arith.constant 208 : index
    %c0_56 = arith.constant 0 : index
    %173 = vector.load %arg3[%c208, %c0_56] : memref<344x128xf32, #tpu.memory_space<vmem>>, vector<8x8xf32>
    %174 = vector.shape_cast %173 : vector<8x8xf32> to vector<1x8x8xf32>
    %175 = vector.broadcast %174 : vector<1x8x8xf32> to vector<4x8x8xf32>
    %176 = vector.broadcast %1 : vector<4x1x8xf32> to vector<4x8x8xf32>
    %177 = arith.mulf %175, %176 : vector<4x8x8xf32>
    %cst_57 = arith.constant dense<0.000000e+00> : vector<4x8xf32>
    %178 = vector.multi_reduction <add>, %177, %cst_57 [2] : vector<4x8x8xf32> to vector<4x8xf32>
    %179 = vector.shape_cast %178 : vector<4x8xf32> to vector<4x8x1xf32>
    %c200 = arith.constant 200 : index
    %c0_58 = arith.constant 0 : index
    %180 = vector.load %arg3[%c200, %c0_58] : memref<344x128xf32, #tpu.memory_space<vmem>>, vector<8x8xf32>
    %181 = vector.broadcast %179 : vector<4x8x1xf32> to vector<4x8x8xf32>
    %182 = arith.mulf %172, %181 : vector<4x8x8xf32>
    %183 = vector.shape_cast %180 : vector<8x8xf32> to vector<1x8x8xf32>
    %184 = vector.broadcast %183 : vector<1x8x8xf32> to vector<4x8x8xf32>
    %185 = arith.addf %182, %184 : vector<4x8x8xf32>
    %186 = vector.shape_cast %185 : vector<4x8x8xf32> to vector<32x8xf32>
    %c216 = arith.constant 216 : index
    %c0_59 = arith.constant 0 : index
    %187 = vector.load %arg3[%c216, %c0_59] : memref<344x128xf32, #tpu.memory_space<vmem>>, vector<8x10xf32>
    %cst_60 = arith.constant dense<0.000000e+00> : vector<32x10xf32>
    %188 = tpu.matmul %186, %187, %cst_60 {dimension_numbers = #tpu.dot_dimension_numbers<[1], [0], [0], [1], [0, 0, 1, 1], [], []>} : vector<32x8xf32>, vector<8x10xf32>, vector<32x10xf32> -> vector<32x10xf32>
    %c224 = arith.constant 224 : index
    %c0_61 = arith.constant 0 : index
    %189 = vector.load %arg3[%c224, %c0_61] : memref<344x128xf32, #tpu.memory_space<vmem>>, vector<1x10xf32>
    %190 = vector.broadcast %189 : vector<1x10xf32> to vector<32x10xf32>
    %191 = arith.addf %188, %190 : vector<32x10xf32>
    %cst_62 = arith.constant 0.000000e+00 : f32
    %192 = vector.broadcast %cst_62 : f32 to vector<32x10xf32>
    %193 = arith.maximumf %191, %192 : vector<32x10xf32>
    %194 = vector.broadcast %cst_62 : f32 to vector<32x10xf32>
    %195 = arith.subf %191, %194 : vector<32x10xf32>
    %196 = arith.cmpf one, %195, %195 : vector<32x10xf32>
    %197 = vector.broadcast %cst_62 : f32 to vector<32x10xf32>
    %198 = arith.addf %191, %197 : vector<32x10xf32>
    %199 = math.absf %195 : vector<32x10xf32>
    %cst_63 = arith.constant 0.000000e+00 : f32
    %200 = vector.broadcast %cst_63 : f32 to vector<32x10xf32>
    %201 = arith.subf %200, %199 : vector<32x10xf32>
    %202 = math.exp %201 : vector<32x10xf32>
    %203 = math.log1p %202 : vector<32x10xf32>
    %204 = arith.addf %193, %203 : vector<32x10xf32>
    %205 = arith.select %196, %198, %204 : vector<32x10xi1>, vector<32x10xf32>
    %c232 = arith.constant 232 : index
    %c0_64 = arith.constant 0 : index
    %206 = vector.load %arg3[%c232, %c0_64] : memref<344x128xf32, #tpu.memory_space<vmem>>, vector<10x10xf32>
    %cst_65 = arith.constant dense<0.000000e+00> : vector<32x10xf32>
    %207 = tpu.matmul %205, %206, %cst_65 {dimension_numbers = #tpu.dot_dimension_numbers<[1], [0], [0], [1], [0, 0, 1, 1], [], []>} : vector<32x10xf32>, vector<10x10xf32>, vector<32x10xf32> -> vector<32x10xf32>
    %c248 = arith.constant 248 : index
    %c0_66 = arith.constant 0 : index
    %208 = vector.load %arg3[%c248, %c0_66] : memref<344x128xf32, #tpu.memory_space<vmem>>, vector<1x10xf32>
    %209 = vector.broadcast %208 : vector<1x10xf32> to vector<32x10xf32>
    %210 = arith.addf %207, %209 : vector<32x10xf32>
    %cst_67 = arith.constant 0.000000e+00 : f32
    %211 = vector.broadcast %cst_67 : f32 to vector<32x10xf32>
    %212 = arith.maximumf %210, %211 : vector<32x10xf32>
    %213 = vector.broadcast %cst_67 : f32 to vector<32x10xf32>
    %214 = arith.subf %210, %213 : vector<32x10xf32>
    %215 = arith.cmpf one, %214, %214 : vector<32x10xf32>
    %216 = vector.broadcast %cst_67 : f32 to vector<32x10xf32>
    %217 = arith.addf %210, %216 : vector<32x10xf32>
    %218 = math.absf %214 : vector<32x10xf32>
    %cst_68 = arith.constant 0.000000e+00 : f32
    %219 = vector.broadcast %cst_68 : f32 to vector<32x10xf32>
    %220 = arith.subf %219, %218 : vector<32x10xf32>
    %221 = math.exp %220 : vector<32x10xf32>
    %222 = math.log1p %221 : vector<32x10xf32>
    %223 = arith.addf %212, %222 : vector<32x10xf32>
    %224 = arith.select %215, %217, %223 : vector<32x10xi1>, vector<32x10xf32>
    %c256 = arith.constant 256 : index
    %c0_69 = arith.constant 0 : index
    %225 = vector.load %arg3[%c256, %c0_69] : memref<344x128xf32, #tpu.memory_space<vmem>>, vector<10x2xf32>
    %cst_70 = arith.constant dense<0.000000e+00> : vector<32x2xf32>
    %226 = tpu.matmul %224, %225, %cst_70 {dimension_numbers = #tpu.dot_dimension_numbers<[1], [0], [0], [1], [0, 0, 1, 1], [], []>} : vector<32x10xf32>, vector<10x2xf32>, vector<32x2xf32> -> vector<32x2xf32>
    %c272 = arith.constant 272 : index
    %c0_71 = arith.constant 0 : index
    %227 = vector.load %arg3[%c272, %c0_71] : memref<344x128xf32, #tpu.memory_space<vmem>>, vector<1x2xf32>
    %228 = vector.broadcast %227 : vector<1x2xf32> to vector<32x2xf32>
    %229 = arith.addf %226, %228 : vector<32x2xf32>
    %cst_72 = arith.constant 0.000000e+00 : f32
    %230 = vector.broadcast %cst_72 : f32 to vector<32x2xf32>
    %231 = arith.maximumf %229, %230 : vector<32x2xf32>
    %232 = vector.broadcast %cst_72 : f32 to vector<32x2xf32>
    %233 = arith.subf %229, %232 : vector<32x2xf32>
    %234 = arith.cmpf one, %233, %233 : vector<32x2xf32>
    %235 = vector.broadcast %cst_72 : f32 to vector<32x2xf32>
    %236 = arith.addf %229, %235 : vector<32x2xf32>
    %237 = math.absf %233 : vector<32x2xf32>
    %cst_73 = arith.constant 0.000000e+00 : f32
    %238 = vector.broadcast %cst_73 : f32 to vector<32x2xf32>
    %239 = arith.subf %238, %237 : vector<32x2xf32>
    %240 = math.exp %239 : vector<32x2xf32>
    %241 = math.log1p %240 : vector<32x2xf32>
    %242 = arith.addf %231, %241 : vector<32x2xf32>
    %243 = arith.select %234, %236, %242 : vector<32x2xi1>, vector<32x2xf32>
    %cst_74 = arith.constant 1.000000e+00 : f32
    %244 = vector.broadcast %cst_74 : f32 to vector<32x2xf32>
    %245 = arith.addf %244, %243 : vector<32x2xf32>
    %246 = vector.extract_strided_slice %245 {offsets = [0, 0], sizes = [32, 1], strides = [1, 1]} : vector<32x2xf32> to vector<32x1xf32>
    %247 = vector.extract_strided_slice %245 {offsets = [0, 0], sizes = [32, 1], strides = [1, 1]} : vector<32x2xf32> to vector<32x1xf32>
    %248 = vector.extract_strided_slice %245 {offsets = [0, 1], sizes = [32, 1], strides = [1, 1]} : vector<32x2xf32> to vector<32x1xf32>
    %249 = arith.addf %247, %248 : vector<32x1xf32>
    %250 = tpu.reciprocal %249 {approx = true} : vector<32x1xf32> -> vector<32x1xf32>
    %251 = arith.mulf %246, %250 : vector<32x1xf32>
    %252 = vector.shape_cast %66 : vector<4x8x8xf32> to vector<4x1x8x8xf32>
    %253 = vector.shape_cast %180 : vector<8x8xf32> to vector<1x8x1x8xf32>
    %254 = vector.broadcast %252 : vector<4x1x8x8xf32> to vector<4x8x8x8xf32>
    %255 = vector.broadcast %253 : vector<1x8x1x8xf32> to vector<4x8x8x8xf32>
    %256 = arith.addf %254, %255 : vector<4x8x8x8xf32>
    %257 = vector.shape_cast %256 : vector<4x8x8x8xf32> to vector<256x8xf32>
    %c280 = arith.constant 280 : index
    %c0_75 = arith.constant 0 : index
    %258 = vector.load %arg3[%c280, %c0_75] : memref<344x128xf32, #tpu.memory_space<vmem>>, vector<8x10xf32>
    %cst_76 = arith.constant dense<0.000000e+00> : vector<256x10xf32>
    %259 = tpu.matmul %257, %258, %cst_76 {dimension_numbers = #tpu.dot_dimension_numbers<[1], [0], [0], [1], [0, 0, 1, 1], [], []>} : vector<256x8xf32>, vector<8x10xf32>, vector<256x10xf32> -> vector<256x10xf32>
    %c288 = arith.constant 288 : index
    %c0_77 = arith.constant 0 : index
    %260 = vector.load %arg3[%c288, %c0_77] : memref<344x128xf32, #tpu.memory_space<vmem>>, vector<1x10xf32>
    %261 = vector.broadcast %260 : vector<1x10xf32> to vector<256x10xf32>
    %262 = arith.addf %259, %261 : vector<256x10xf32>
    %cst_78 = arith.constant 0.000000e+00 : f32
    %263 = vector.broadcast %cst_78 : f32 to vector<256x10xf32>
    %264 = arith.maximumf %262, %263 : vector<256x10xf32>
    %265 = vector.broadcast %cst_78 : f32 to vector<256x10xf32>
    %266 = arith.subf %262, %265 : vector<256x10xf32>
    %267 = arith.cmpf one, %266, %266 : vector<256x10xf32>
    %268 = vector.broadcast %cst_78 : f32 to vector<256x10xf32>
    %269 = arith.addf %262, %268 : vector<256x10xf32>
    %270 = math.absf %266 : vector<256x10xf32>
    %cst_79 = arith.constant 0.000000e+00 : f32
    %271 = vector.broadcast %cst_79 : f32 to vector<256x10xf32>
    %272 = arith.subf %271, %270 : vector<256x10xf32>
    %273 = math.exp %272 : vector<256x10xf32>
    %274 = math.log1p %273 : vector<256x10xf32>
    %275 = arith.addf %264, %274 : vector<256x10xf32>
    %276 = arith.select %267, %269, %275 : vector<256x10xi1>, vector<256x10xf32>
    %c296 = arith.constant 296 : index
    %c0_80 = arith.constant 0 : index
    %277 = vector.load %arg3[%c296, %c0_80] : memref<344x128xf32, #tpu.memory_space<vmem>>, vector<10x10xf32>
    %cst_81 = arith.constant dense<0.000000e+00> : vector<256x10xf32>
    %278 = tpu.matmul %276, %277, %cst_81 {dimension_numbers = #tpu.dot_dimension_numbers<[1], [0], [0], [1], [0, 0, 1, 1], [], []>} : vector<256x10xf32>, vector<10x10xf32>, vector<256x10xf32> -> vector<256x10xf32>
    %c312 = arith.constant 312 : index
    %c0_82 = arith.constant 0 : index
    %279 = vector.load %arg3[%c312, %c0_82] : memref<344x128xf32, #tpu.memory_space<vmem>>, vector<1x10xf32>
    %280 = vector.broadcast %279 : vector<1x10xf32> to vector<256x10xf32>
    %281 = arith.addf %278, %280 : vector<256x10xf32>
    %cst_83 = arith.constant 0.000000e+00 : f32
    %282 = vector.broadcast %cst_83 : f32 to vector<256x10xf32>
    %283 = arith.maximumf %281, %282 : vector<256x10xf32>
    %284 = vector.broadcast %cst_83 : f32 to vector<256x10xf32>
    %285 = arith.subf %281, %284 : vector<256x10xf32>
    %286 = arith.cmpf one, %285, %285 : vector<256x10xf32>
    %287 = vector.broadcast %cst_83 : f32 to vector<256x10xf32>
    %288 = arith.addf %281, %287 : vector<256x10xf32>
    %289 = math.absf %285 : vector<256x10xf32>
    %cst_84 = arith.constant 0.000000e+00 : f32
    %290 = vector.broadcast %cst_84 : f32 to vector<256x10xf32>
    %291 = arith.subf %290, %289 : vector<256x10xf32>
    %292 = math.exp %291 : vector<256x10xf32>
    %293 = math.log1p %292 : vector<256x10xf32>
    %294 = arith.addf %283, %293 : vector<256x10xf32>
    %295 = arith.select %286, %288, %294 : vector<256x10xi1>, vector<256x10xf32>
    %c320 = arith.constant 320 : index
    %c0_85 = arith.constant 0 : index
    %296 = vector.load %arg3[%c320, %c0_85] : memref<344x128xf32, #tpu.memory_space<vmem>>, vector<10x2xf32>
    %cst_86 = arith.constant dense<0.000000e+00> : vector<256x2xf32>
    %297 = tpu.matmul %295, %296, %cst_86 {dimension_numbers = #tpu.dot_dimension_numbers<[1], [0], [0], [1], [0, 0, 1, 1], [], []>} : vector<256x10xf32>, vector<10x2xf32>, vector<256x2xf32> -> vector<256x2xf32>
    %c336 = arith.constant 336 : index
    %c0_87 = arith.constant 0 : index
    %298 = vector.load %arg3[%c336, %c0_87] : memref<344x128xf32, #tpu.memory_space<vmem>>, vector<1x2xf32>
    %299 = vector.broadcast %298 : vector<1x2xf32> to vector<256x2xf32>
    %300 = arith.addf %297, %299 : vector<256x2xf32>
    %cst_88 = arith.constant 0.000000e+00 : f32
    %301 = vector.broadcast %cst_88 : f32 to vector<256x2xf32>
    %302 = arith.maximumf %300, %301 : vector<256x2xf32>
    %303 = vector.broadcast %cst_88 : f32 to vector<256x2xf32>
    %304 = arith.subf %300, %303 : vector<256x2xf32>
    %305 = arith.cmpf one, %304, %304 : vector<256x2xf32>
    %306 = vector.broadcast %cst_88 : f32 to vector<256x2xf32>
    %307 = arith.addf %300, %306 : vector<256x2xf32>
    %308 = math.absf %304 : vector<256x2xf32>
    %cst_89 = arith.constant 0.000000e+00 : f32
    %309 = vector.broadcast %cst_89 : f32 to vector<256x2xf32>
    %310 = arith.subf %309, %308 : vector<256x2xf32>
    %311 = math.exp %310 : vector<256x2xf32>
    %312 = math.log1p %311 : vector<256x2xf32>
    %313 = arith.addf %302, %312 : vector<256x2xf32>
    %314 = arith.select %305, %307, %313 : vector<256x2xi1>, vector<256x2xf32>
    %cst_90 = arith.constant 1.000000e+00 : f32
    %315 = vector.broadcast %cst_90 : f32 to vector<256x2xf32>
    %316 = arith.addf %315, %314 : vector<256x2xf32>
    %317 = vector.extract_strided_slice %316 {offsets = [0, 0], sizes = [256, 1], strides = [1, 1]} : vector<256x2xf32> to vector<256x1xf32>
    %318 = vector.shape_cast %317 : vector<256x1xf32> to vector<256xf32>
    %319 = vector.extract_strided_slice %316 {offsets = [0, 0], sizes = [256, 1], strides = [1, 1]} : vector<256x2xf32> to vector<256x1xf32>
    %320 = vector.shape_cast %319 : vector<256x1xf32> to vector<256xf32>
    %321 = vector.extract_strided_slice %316 {offsets = [0, 1], sizes = [256, 1], strides = [1, 1]} : vector<256x2xf32> to vector<256x1xf32>
    %322 = vector.shape_cast %321 : vector<256x1xf32> to vector<256xf32>
    %323 = arith.addf %320, %322 : vector<256xf32>
    %324 = tpu.reciprocal %323 {approx = true} : vector<256xf32> -> vector<256xf32>
    %325 = arith.mulf %318, %324 : vector<256xf32>
    %326 = vector.shape_cast %325 : vector<256xf32> to vector<32x8xf32>
    %327 = vector.shape_cast %326 : vector<32x8xf32> to vector<4x8x8xf32>
    %328 = vector.shape_cast %251 : vector<32x1xf32> to vector<4x8x1xf32>
    %329 = vector.shape_cast %245 : vector<32x2xf32> to vector<4x8x2xf32>
    %cst_91 = arith.constant 0.000000e+00 : f32
    %330 = vector.broadcast %cst_91 : f32 to vector<4x8x109xf32>
    %331 = tpu.concatenate %328, %329, %327, %171, %330 in 2 : vector<4x8x1xf32>, vector<4x8x2xf32>, vector<4x8x8xf32>, vector<4x8x8xf32>, vector<4x8x109xf32> -> vector<4x8x128xf32>
    %c0_92 = arith.constant 0 : index
    %c0_93 = arith.constant 0 : index
    %c0_94 = arith.constant 0 : index
    %332 = vector.load %arg4[%c0_92, %c0_93, %c0_94] : memref<4x8x128xf32, #tpu.memory_space<vmem>>, vector<4x8x128xf32>
    tpu.vector_store %arg4[%c0_92, %c0_93, %c0_94], %331 {strides = array<i32>} : memref<4x8x128xf32, #tpu.memory_space<vmem>>, vector<4x8x128xf32>,
    %cst_95 = arith.constant 0.000000e+00 : f32
    %333 = vector.broadcast %cst_95 : f32 to vector<4x8x120xf32>
    %334 = tpu.concatenate %105, %333 in 2 : vector<4x8x8xf32>, vector<4x8x120xf32> -> vector<4x8x128xf32>
    %c0_96 = arith.constant 0 : index
    %c0_97 = arith.constant 0 : index
    %c0_98 = arith.constant 0 : index
    %335 = vector.load %arg5[%c0_96, %c0_97, %c0_98] : memref<4x8x128xf32, #tpu.memory_space<vmem>>, vector<4x8x128xf32>
    tpu.vector_store %arg5[%c0_96, %c0_97, %c0_98], %334 {strides = array<i32>} : memref<4x8x128xf32, #tpu.memory_space<vmem>>, vector<4x8x128xf32>,
    return
  }
  func.func @transform_0(%arg0: i32) -> (i32, i32) {
    %c0_i32 = arith.constant 0 : i32
    %c0_i32_0 = arith.constant 0 : i32
    return %arg0, %c0_i32 : i32, i32
  }
  func.func @transform_1(%arg0: i32) -> (i32, i32, i32) {
    %c0_i32 = arith.constant 0 : i32
    %c0_i32_0 = arith.constant 0 : i32
    %c0_i32_1 = arith.constant 0 : i32
    return %arg0, %c0_i32, %c0_i32_0 : i32, i32, i32
  }
  func.func @transform_2(%arg0: i32) -> (i32, i32) {
    %c0_i32 = arith.constant 0 : i32
    %c0_i32_0 = arith.constant 0 : i32
    %c0_i32_1 = arith.constant 0 : i32
    return %c0_i32, %c0_i32_0 : i32, i32
  }
  func.func @transform_3(%arg0: i32) -> (i32, i32, i32) {
    %c0_i32 = arith.constant 0 : i32
    %c0_i32_0 = arith.constant 0 : i32
    %c0_i32_1 = arith.constant 0 : i32
    return %arg0, %c0_i32, %c0_i32_0 : i32, i32, i32
  }
  func.func @transform_4(%arg0: i32) -> (i32, i32, i32) {
    %c0_i32 = arith.constant 0 : i32
    %c0_i32_0 = arith.constant 0 : i32
    %c0_i32_1 = arith.constant 0 : i32
    return %arg0, %c0_i32, %c0_i32_0 : i32, i32, i32
  }
}

</mosaic_0001>

<llo_original>
// kernel: tpu_custom_call.1
$region0: #{tpu_custom_call.1}
  #allocation0 [shape = 'u32[]', space=smem, size = 0x4, offset = 0x4, fixed_abs, tag = 'smem constant byte address 0x4 - core index']
  #allocation1 [shape = 'u32[144,128]{1,0:T(1,128)}', space=vmem, size = 0x12000, scoped, tag = 'internal scratch']
  %s0 = inlined_call_operand.vmem [shape: f32[64,1], index: 0, kind: input, shape index: {}]
  %s1 = inlined_call_operand.vmem [shape: f32[8,1,8], index: 1, kind: input, shape index: {}]
  %s2 = inlined_call_operand.hbm [shape: f32[344,128], index: 2, kind: input, shape index: {}]
  %s3 = inlined_call_operand.hbm [shape: f32[8,8,128], index: 3, kind: output, shape index: {0}]
  %s4 = inlined_call_operand.hbm [shape: f32[8,8,128], index: 4, kind: output, shape index: {1}]
  %5 = xla_tuple %s3, %s4
  %s6 = sld [smem:[#allocation0]]
  $region57: #{tpu_custom_call.1} parent=0
    _
  %s8 = ssub.s32 1, %s6
  %s9 = scalar_select 0, %s8, %s6
  $region1: #{tpu_custom_call.1} parent=0
    #allocation2 [shape = 'u8[176128]{0}', space=vmem, size = 0x2b000, scoped, tag = 'input window, operand 2, single buffered']
    #allocation3 [shape = 's32[2]{0}', space=sflag, size = 0x8, scoped, tag = 'scoped memory for tpu_custom_call.1']
    #allocation4 [shape = 's32[2]{0}', space=sflag, size = 0x8, scoped, tag = 'scoped memory for tpu_custom_call.1']
    #allocation5 [shape = 'u8[32768]{0}', space=vmem, size = 0x8000, scoped, tag = 'output window, operand 0']
    #allocation6 [shape = 'u8[32768]{0}', space=vmem, size = 0x8000, scoped, tag = 'output window, operand 1']
    #allocation7 [shape = 's32[2]{0}', space=sflag, size = 0x8, scoped, tag = 'scoped memory for tpu_custom_call.1']
    %10 = vsyncpa [#allocation3], 0
    %11 = vsyncpa [#allocation4], 0
    %s12 = scalar_lea.sflag [#allocation4], 1
    %13 = vsyncpa %s12, 0
    %14 = vsyncpa [#allocation7], 0
    %s15 = scalar_lea.sflag [#allocation7], 1
    %16 = vsyncpa %s15, 0
    loop: start=0, step=1, limit=4
    $region2: #{tpu_custom_call.1} parent=1 // loop_pre_header
      _
    $region3: #{tpu_custom_call.1} parent=1 // loop_header
      %s18 = sphi 0, %s22
      %p19 = scmp.ge.s32.totalorder %s18, 4
      %s28 = sphi 0, %s30
      %s31 = sphi 0, %s28
      %s32 = sphi 0, %s31
      %s48 = sphi 0, %s32
      %s54 = sphi 0, %s56
      %s57 = sphi 0, %s54
      %s58 = sphi 0, %s57
      %s74 = sphi 0, %s58
      %s78 = sphi 0, %s78
      %s80 = sphi 0, %s78
      %s81 = sphi 0, %s80
      %s95 = sphi 0, %s81
      %s101 = sphi 0, %s103
      %s104 = sphi 0, %s101
      %s105 = sphi 0, %s104
      %s121 = sphi 0, %s105
      %s127 = sphi 0, %s129
      %s130 = sphi 0, %s127
      %s131 = sphi 0, %s130
      %s147 = sphi 0, %s131
    $region4: #{tpu_custom_call.1} parent=1 // loop_header_branch
      %21 = sbr.rel (%p19) target = $region8
    $region5: #{tpu_custom_call.1} parent=1 // loop_body
      %s23 = ssub.s32 %s18, 1
      %s24 = ssub.s32 %s18, 2
      %s25 = sadd.s32 %s18, 1
      %s26 = ssub.s32 %s18, %s25
      %p27 = scmp.eq.s32.totalorder %s26, 0
      %s29 = sadd.s32 %s28, 1
      %s30 = scalar_select %p27, %s28, %s29
      %p33 = pneg %p27
      %p34 = scmp.eq.s32.totalorder %s18, 1
      %p35 = por %p33, %p34
      %p36 = scmp.ne.s32.totalorder %s28, %s31
      %p37 = scmp.eq.s32.totalorder %s18, 0
      %p38 = por %p36, %p37
      %p39 = scmp.ne.s32.totalorder %s28, %s31
      %p40 = scmp.eq.s32.totalorder %s23, 1
      %p41 = por %p39, %p40
      %p42 = scmp.ne.s32.totalorder %s31, %s32
      %p43 = scmp.eq.s32.totalorder %s23, 0
      %p44 = por %p42, %p43
      %p45 = scmp.ne.s32.totalorder %s31, %s32
      %p46 = scmp.eq.s32.totalorder %s24, 1
      %p47 = por %p45, %p46
      %p49 = scmp.ne.s32.totalorder %s32, %s48
      %p50 = scmp.eq.s32.totalorder %s24, 0
      %p51 = por %p49, %p50
      %s52 = ssub.s32 %s18, %s25
      %p53 = scmp.eq.s32.totalorder %s52, 0
      %s55 = sadd.s32 %s54, 1
      %s56 = scalar_select %p53, %s54, %s55
      %p59 = pneg %p53
      %p60 = scmp.eq.s32.totalorder %s18, 1
      %p61 = por %p59, %p60
      %p62 = scmp.ne.s32.totalorder %s54, %s57
      %p63 = scmp.eq.s32.totalorder %s18, 0
      %p64 = por %p62, %p63
      %p65 = scmp.ne.s32.totalorder %s54, %s57
      %p66 = scmp.eq.s32.totalorder %s23, 1
      %p67 = por %p65, %p66
      %p68 = scmp.ne.s32.totalorder %s57, %s58
      %p69 = scmp.eq.s32.totalorder %s23, 0
      %p70 = por %p68, %p69
      %p71 = scmp.ne.s32.totalorder %s57, %s58
      %p72 = scmp.eq.s32.totalorder %s24, 1
      %p73 = por %p71, %p72
      %p75 = scmp.ne.s32.totalorder %s58, %s74
      %p76 = scmp.eq.s32.totalorder %s24, 0
      %p77 = por %p75, %p76
      %s79 = sadd.s32 %s78, 1
      %p82 = scmp.eq.s32.totalorder %s18, 1
      %p83 = scmp.ne.s32.totalorder %s78, %s80
      %p84 = scmp.eq.s32.totalorder %s18, 0
      %p85 = por %p83, %p84
      %p86 = scmp.ne.s32.totalorder %s78, %s80
      %p87 = scmp.eq.s32.totalorder %s23, 1
      %p88 = por %p86, %p87
      %p89 = scmp.ne.s32.totalorder %s80, %s81
      %p90 = scmp.eq.s32.totalorder %s23, 0
      %p91 = por %p89, %p90
      %p92 = scmp.ne.s32.totalorder %s80, %s81
      %p93 = scmp.eq.s32.totalorder %s24, 1
      %p94 = por %p92, %p93
      %p96 = scmp.ne.s32.totalorder %s81, %s95
      %p97 = scmp.eq.s32.totalorder %s24, 0
      %p98 = por %p96, %p97
      %s99 = ssub.s32 %s18, %s25
      %p100 = scmp.eq.s32.totalorder %s99, 0
      %s102 = sadd.s32 %s101, 1
      %s103 = scalar_select %p100, %s101, %s102
      %p106 = pneg %p100
      %p107 = scmp.eq.s32.totalorder %s18, 1
      %p108 = por %p106, %p107
      %p109 = scmp.ne.s32.totalorder %s101, %s104
      %p110 = scmp.eq.s32.totalorder %s18, 0
      %p111 = por %p109, %p110
      %p112 = scmp.ne.s32.totalorder %s101, %s104
      %p113 = scmp.eq.s32.totalorder %s23, 1
      %p114 = por %p112, %p113
      %p115 = scmp.ne.s32.totalorder %s104, %s105
      %p116 = scmp.eq.s32.totalorder %s23, 0
      %p117 = por %p115, %p116
      %p118 = scmp.ne.s32.totalorder %s104, %s105
      %p119 = scmp.eq.s32.totalorder %s24, 1
      %p120 = por %p118, %p119
      %p122 = scmp.ne.s32.totalorder %s105, %s121
      %p123 = scmp.eq.s32.totalorder %s24, 0
      %p124 = por %p122, %p123
      %s125 = ssub.s32 %s18, %s25
      %p126 = scmp.eq.s32.totalorder %s125, 0
      %s128 = sadd.s32 %s127, 1
      %s129 = scalar_select %p126, %s127, %s128
      %p132 = pneg %p126
      %p133 = scmp.eq.s32.totalorder %s18, 1
      %p134 = por %p132, %p133
      %p135 = scmp.ne.s32.totalorder %s127, %s130
      %p136 = scmp.eq.s32.totalorder %s18, 0
      %p137 = por %p135, %p136
      %p138 = scmp.ne.s32.totalorder %s127, %s130
      %p139 = scmp.eq.s32.totalorder %s23, 1
      %p140 = por %p138, %p139
      %p141 = scmp.ne.s32.totalorder %s130, %s131
      %p142 = scmp.eq.s32.totalorder %s23, 0
      %p143 = por %p141, %p142
      %p144 = scmp.ne.s32.totalorder %s130, %s131
      %p145 = scmp.eq.s32.totalorder %s24, 1
      %p146 = por %p144, %p145
      %p148 = scmp.ne.s32.totalorder %s131, %s147
      %p149 = scmp.eq.s32.totalorder %s24, 0
      %p150 = por %p148, %p149
      %p151 = scmp.le.s32.totalorder 1, %s18
      %p152 = scmp.lt.s32.totalorder %s18, 3
      %p153 = pnand %p151, %p152
      %p154 = pneg %p153
      // Predicated region
      $region9: #{tpu_custom_call.1} parent=5 // pred_check
        _
      $region10: #{tpu_custom_call.1} parent=5 // pred_check_branch
        %156 = sbr.rel (%p153) target = $region12
      $region11: #{tpu_custom_call.1} parent=5 // pred_region
        %s157 = ssub.s32 %s18, 1
        // Predicated region
        $region13: #{tpu_custom_call.1} parent=11 // pred_check
          %p158 = pneg %p91
        $region14: #{tpu_custom_call.1} parent=11 // pred_check_branch
          %160 = sbr.rel (%p158) target = $region16
        $region15: #{tpu_custom_call.1} parent=11 // pred_region
          %s162 = ssub.s32 5504, 5504
          %163 = vsyncadd [#allocation3], %s162
          %s164 = sshll.u32 [#allocation2], 4
          %s165 = int_to_ptr.vmem [resolvable:$true] %s164
          %170 = dma.hbm_to_vmem [thread:$0]  %s2, 5504, %s165, [#allocation3], 128, 128, 8
        $region16: #{tpu_custom_call.1} parent=11 // pred_fallthru
          _
      $region12: #{tpu_custom_call.1} parent=5 // pred_fallthru
        _
      %p171 = scmp.lt.s32.totalorder %s18, 2
      // Predicated region
      $region17: #{tpu_custom_call.1} parent=5 // pred_check
        %p172 = pneg %p171
      $region18: #{tpu_custom_call.1} parent=5 // pred_check_branch
        %174 = sbr.rel (%p172) target = $region20
      $region19: #{tpu_custom_call.1} parent=5 // pred_region
        // Predicated region
        $region21: #{tpu_custom_call.1} parent=19 // pred_check
          %p175 = pneg %p38
        $region22: #{tpu_custom_call.1} parent=19 // pred_check_branch
          %177 = sbr.rel (%p175) target = $region24
        $region23: #{tpu_custom_call.1} parent=19 // pred_region
          %s178 = smul.u32 4, %s18
          %p179 = scmp.lt.s32.totalorder %s178, 7
          %s180 = scalar_select %p179, %s178, 7
          %s181 = smul.addr %s180, 8
          %s182 = scalar_lea.vmem %s0, %s181
          %s183 = smul.u32 4, %s18
        $region24: #{tpu_custom_call.1} parent=19 // pred_fallthru
          _
        // Predicated region
        $region25: #{tpu_custom_call.1} parent=19 // pred_check
          %p184 = pneg %p64
        $region26: #{tpu_custom_call.1} parent=19 // pred_check_branch
          %186 = sbr.rel (%p184) target = $region28
        $region27: #{tpu_custom_call.1} parent=19 // pred_region
          %s187 = smul.u32 4, %s18
          %p188 = scmp.lt.s32.totalorder %s187, 7
          %s189 = scalar_select %p188, %s187, 7
          %s190 = scalar_lea.vmem %s1, %s189
          %s191 = smul.u32 4, %s18
        $region28: #{tpu_custom_call.1} parent=19 // pred_fallthru
          _
      $region20: #{tpu_custom_call.1} parent=5 // pred_fallthru
        _
      %p192 = scmp.le.s32.totalorder 1, %s18
      %p193 = scmp.lt.s32.totalorder %s18, 3
      %p194 = pnand %p192, %p193
      %p195 = pneg %p194
      // Predicated region
      $region29: #{tpu_custom_call.1} parent=5 // pred_check
        _
      $region30: #{tpu_custom_call.1} parent=5 // pred_check_branch
        %197 = sbr.rel (%p194) target = $region32
      $region31: #{tpu_custom_call.1} parent=5 // pred_region
        %s198 = ssub.s32 %s18, 1
        // Predicated region
        $region33: #{tpu_custom_call.1} parent=31 // pred_check
          %p199 = pneg %p91
        $region34: #{tpu_custom_call.1} parent=31 // pred_check_branch
          %201 = sbr.rel (%p199) target = $region36
        $region35: #{tpu_custom_call.1} parent=31 // pred_region
          %202 = dma.done [#allocation3], 5504
        $region36: #{tpu_custom_call.1} parent=31 // pred_fallthru
          _
        %s203 = smul.u32 4, %s23
        %p204 = scmp.lt.s32.totalorder %s203, 7
        %s205 = scalar_select %p204, %s203, 7
        %s206 = smul.addr %s205, 8
        %s207 = scalar_lea.vmem %s0, %s206
        %p208 = pneg %p44
        %p209 = pneg %p41
        %s210 = smul.u32 4, %s23
        %p211 = scmp.lt.s32.totalorder %s210, 7
        %s212 = scalar_select %p211, %s210, 7
        %s213 = scalar_lea.vmem %s1, %s212
        %p214 = pneg %p70
        %p215 = pneg %p67
        %p216 = pneg %p91
        %p217 = pneg %p88
        %p218 = pneg %p117
        %p219 = pneg %p114
        %s220 = sand.u32 %s104, 1
        %s221 = scalar_lea.sflag [#allocation4], %s220
        %s222 = sand.u32 %s104, 1
        %s223 = smul.addr %s222, 32
        %s224 = scalar_lea.vmem [#allocation5], %s223
        %p225 = pneg %p143
        %p226 = pneg %p140
        %s227 = sand.u32 %s130, 1
        %s228 = scalar_lea.sflag [#allocation7], %s227
        %s229 = sand.u32 %s130, 1
        %s230 = smul.addr %s229, 32
        %s231 = scalar_lea.vmem [#allocation6], %s230
        %s232 = smul.u32 4, %s23
        %p233 = scmp.lt.s32.totalorder %s232, 7
        %s234 = scalar_select %p233, %s232, 7
        %s235 = smul.addr %s234, 8
        %s236 = scalar_lea.vmem %s0, %s235
        %s237 = smul.u32 4, %s23
        %s238 = smul.u32 4, %s23
        %p239 = scmp.lt.s32.totalorder %s238, 7
        %s240 = scalar_select %p239, %s238, 7
        %s241 = scalar_lea.vmem %s1, %s240
        %s242 = smul.u32 4, %s23
        %s243 = smul.u32 4, %s23
        %s244 = smul.u32 4, %s23
        %v245 = vld [vmem:[%s236] sm:$0xff]
        %v246 = vld [vmem:[%s236 + $0x8] sm:$0xff]
        %v247 = vld [vmem:[%s236 + $0x10] sm:$0xff]
        %v248 = vld [vmem:[%s236 + $0x18] sm:$0xff]
        %v249 = vld [vmem:[%s241] sm:$0x1]
        %v250 = vld [vmem:[%s241 + $0x1] sm:$0x1]
        %v251 = vld [vmem:[%s241 + $0x2] sm:$0x1]
        %v252 = vld [vmem:[%s241 + $0x3] sm:$0x1]
        %v253 = vld [vmem:[#allocation2] sm:$0x1]
        %255 = vset.pattern.permute.xlu0 0
        %256 = vperm.xlu0 %255, %v245
        %v257 = vpop.permute.xlu0 %256
        %260 = vset.pattern.permute.xlu0 0
        %261 = vperm.xlu0 %260, %v246
        %v262 = vpop.permute.xlu0 %261
        %265 = vset.pattern.permute.xlu0 0
        %266 = vperm.xlu0 %265, %v247
        %v267 = vpop.permute.xlu0 %266
        %270 = vset.pattern.permute.xlu0 0
        %271 = vperm.xlu0 %270, %v248
        %v272 = vpop.permute.xlu0 %271
        %v274 = vlaneseq
        %v275 = vshrl.u32 %v274, 7
        %v276 = vsub.s32 0, %v275
        %v277 = vrot.slane %v253, %v276
        %v278 = vmul.f32 %v257, %v277
        %v279 = vmul.f32 %v262, %v277
        %v280 = vmul.f32 %v267, %v277
        %v281 = vmul.f32 %v272, %v277
        %v282 = vld [vmem:[#allocation2 + $0x8] sm:$0x1]
        %v283 = vlaneseq
        %v284 = vshrl.u32 %v283, 7
        %v285 = vsub.s32 0, %v284
        %v286 = vrot.slane %v282, %v285
        %v287 = vadd.f32 %v278, %v286
        %v288 = vadd.f32 %v279, %v286
        %v289 = vadd.f32 %v280, %v286
        %v290 = vadd.f32 %v281, %v286
        %v291 = vmax.f32 %v287, 0.0
        %v292 = vmax.f32 %v288, 0.0
        %v293 = vmax.f32 %v289, 0.0
        %v294 = vmax.f32 %v290, 0.0
        %vm295 = vcmp.ne.f32.partialorder %v287, %v287
        %vm296 = vcmp.ne.f32.partialorder %v288, %v288
        %vm297 = vcmp.ne.f32.partialorder %v289, %v289
        %vm298 = vcmp.ne.f32.partialorder %v290, %v290
        %v299 = vadd.f32 %v287, 0.0
        %v300 = vadd.f32 %v288, 0.0
        %v301 = vadd.f32 %v289, 0.0
        %v302 = vadd.f32 %v290, 0.0
        %v303 = vand.u32 2147483647, %v287
        %v304 = vand.u32 2147483647, %v288
        %v305 = vand.u32 2147483647, %v289
        %v306 = vand.u32 2147483647, %v290
        %v307 = vsub.f32 0.0, %v303
        %v308 = vsub.f32 0.0, %v304
        %v309 = vsub.f32 0.0, %v305
        %v310 = vsub.f32 0.0, %v306
        %v311 = vmul.f32 %v307, 1.442695
        %v312 = vpow.pop %v311
        %v313 = vmul.f32 %v308, 1.442695
        %v314 = vpow.pop %v313
        %v315 = vmul.f32 %v309, 1.442695
        %v316 = vpow.pop %v315
        %v317 = vmul.f32 %v310, 1.442695
        %v318 = vpow.pop %v317
        %v319 = vadd.f32 %v312, 1.0
        %v320 = vlog2.pop %v319
        %v321 = vmul.f32 %v320, 0.6931472
        %v322 = vmul.f32 -0.5, %v312
        %v323 = vadd.f32 %v322, 1.0
        %v324 = vmul.f32 %v323, %v312
        %v325 = vand.u32 2147483647, %v312
        %vm326 = vcmp.lt.f32.partialorder %v325, 0.0004427343
        %v327 = vsel %vm326, %v324, %v321
        %v328 = vadd.f32 %v314, 1.0
        %v329 = vlog2.pop %v328
        %v330 = vmul.f32 %v329, 0.6931472
        %v331 = vmul.f32 -0.5, %v314
        %v332 = vadd.f32 %v331, 1.0
        %v333 = vmul.f32 %v332, %v314
        %v334 = vand.u32 2147483647, %v314
        %vm335 = vcmp.lt.f32.partialorder %v334, 0.0004427343
        %v336 = vsel %vm335, %v333, %v330
        %v337 = vadd.f32 %v316, 1.0
        %v338 = vlog2.pop %v337
        %v339 = vmul.f32 %v338, 0.6931472
        %v340 = vmul.f32 -0.5, %v316
        %v341 = vadd.f32 %v340, 1.0
        %v342 = vmul.f32 %v341, %v316
        %v343 = vand.u32 2147483647, %v316
        %vm344 = vcmp.lt.f32.partialorder %v343, 0.0004427343
        %v345 = vsel %vm344, %v342, %v339
        %v346 = vadd.f32 %v318, 1.0
        %v347 = vlog2.pop %v346
        %v348 = vmul.f32 %v347, 0.6931472
        %v349 = vmul.f32 -0.5, %v318
        %v350 = vadd.f32 %v349, 1.0
        %v351 = vmul.f32 %v350, %v318
        %v352 = vand.u32 2147483647, %v318
        %vm353 = vcmp.lt.f32.partialorder %v352, 0.0004427343
        %v354 = vsel %vm353, %v351, %v348
        %v355 = vadd.f32 %v291, %v327
        %v356 = vadd.f32 %v292, %v336
        %v357 = vadd.f32 %v293, %v345
        %v358 = vadd.f32 %v294, %v354
        %v359 = vsel %vm295, %v299, %v355
        %v360 = vsel %vm296, %v300, %v356
        %v361 = vsel %vm297, %v301, %v357
        %v362 = vsel %vm298, %v302, %v358
        %v363 = vld [vmem:[#allocation2 + $0x10] sm:$0xff]
        %v364 = vld [vmem:[#allocation2 + $0x18] sm:$0x3]
        %v365 = vld [vmem:[#allocation2 + $0x20] sm:$0x1]
        %v366 = vlaneseq
        %v367 = vshrl.u32 %v366, 7
        %v368 = vsub.s32 0, %v367
        %v369 = vrot.slane %v365, %v368
        %vm370 = vcmask 80896
        %v372 = vsel %vm370, %v359, 0
        %v375 = vsel %vm370, %v360, 0
        %v378 = vsel %vm370, %v361, 0
        %v381 = vsel %vm370, %v362, 0
        %vm383 = vcmask 1041408
        %v385 = vsel %vm383, %v364, 0
        %387 = vmatprep.subr.mxu0 0.0
        %388 = vmatpush1.msra.mxu0 %v363
        %389 = vmatprep.subr.mxu0 0.0
        %390 = vmatpush1.msra.mxu0 %v385
        %391 = vmatprep.subr.mxu0 0.0
        %392 = vmatpush1.msra.mxu0 0.0
        %393 = vmatprep.subr.mxu0 0.0
        %394 = vmatpush1.msra.mxu0 0.0
        %395 = vmatprep.subr.mxu0 0.0
        %396 = vmatpush1.msra.mxu0 0.0
        %397 = vmatprep.subr.mxu0 0.0
        %398 = vmatpush1.msra.mxu0 0.0
        %399 = vmatprep.subr.mxu0 0.0
        %400 = vmatpush1.msra.mxu0 0.0
        %401 = vmatprep.subr.mxu0 0.0
        %402 = vmatpush1.msra.mxu0 0.0
        %403 = vmatprep.subr.mxu0 0.0
        %404 = vmatpush1.msra.mxu0 0.0
        %405 = vmatprep.subr.mxu0 0.0
        %406 = vmatpush1.msra.mxu0 0.0
        %407 = vmatprep.subr.mxu0 0.0
        %408 = vmatpush1.msra.mxu0 0.0
        %409 = vmatprep.subr.mxu0 0.0
        %410 = vmatpush1.msra.mxu0 0.0
        %411 = vmatprep.subr.mxu0 0.0
        %412 = vmatpush1.msra.mxu0 0.0
        %413 = vmatprep.subr.mxu0 0.0
        %414 = vmatpush1.msra.mxu0 0.0
        %415 = vmatprep.subr.mxu0 0.0
        %416 = vmatpush1.msra.mxu0 0.0
        %417 = vmatprep.subr.mxu0 0.0
        %418 = vmatpush1.msra.mxu0 0.0
        %419 = vmatprep.subr.mxu0 0.0
        %420 = vmatpush1.msra.mxu0 0.0
        %421 = vmatprep.subr.mxu0 0.0
        %422 = vmatpush1.msra.mxu0 0.0
        %423 = vmatprep.subr.mxu0 0.0
        %424 = vmatpush1.msra.mxu0 0.0
        %425 = vmatprep.subr.mxu0 0.0
        %426 = vmatpush1.msra.mxu0 0.0
        %427 = vmatprep.subr.mxu0 0.0
        %428 = vmatpush1.msra.mxu0 0.0
        %429 = vmatprep.subr.mxu0 0.0
        %430 = vmatpush1.msra.mxu0 0.0
        %431 = vmatprep.subr.mxu0 0.0
        %432 = vmatpush1.msra.mxu0 0.0
        %433 = vmatprep.subr.mxu0 0.0
        %434 = vmatpush1.msra.mxu0 0.0
        %435 = vmatprep.subr.mxu0 0.0
        %436 = vmatpush1.msra.mxu0 0.0
        %437 = vmatprep.subr.mxu0 0.0
        %438 = vmatpush1.msra.mxu0 0.0
        %439 = vmatprep.subr.mxu0 0.0
        %440 = vmatpush1.msra.mxu0 0.0
        %441 = vmatprep.subr.mxu0 0.0
        %442 = vmatpush1.msra.mxu0 0.0
        %443 = vmatprep.subr.mxu0 0.0
        %444 = vmatpush1.msra.mxu0 0.0
        %445 = vmatprep.subr.mxu0 0.0
        %446 = vmatpush1.msra.mxu0 0.0
        %447 = vmatprep.subr.mxu0 0.0
        %448 = vmatpush1.msra.mxu0 0.0
        %449 = vmatprep.subr.mxu0 0.0
        %450 = vmatpush1.msra.mxu0 0.0
        %451 = vmatprep.mubr.f32.mxu0 0.0
        %452 = vmatmul.mubr.f32.gmra.mrb[0].mxu0 %v372
        %v453 = vpop.f32.mrb[0].mxu0
        %v454 = vadd.f32 %v369, %v453
        %v455 = vpop.f32.mrb[0].mxu0
        %456 = vmatprep.mubr.f32.mxu0 0.0
        %457 = vmatmul.mubr.f32.gmra.mrb[0].mxu0 %v375
        %v458 = vpop.f32.mrb[0].mxu0
        %v459 = vadd.f32 %v369, %v458
        %v460 = vpop.f32.mrb[0].mxu0
        %461 = vmatprep.mubr.f32.mxu0 0.0
        %462 = vmatmul.mubr.f32.gmra.mrb[0].mxu0 %v378
        %v463 = vpop.f32.mrb[0].mxu0
        %v464 = vadd.f32 %v369, %v463
        %v465 = vpop.f32.mrb[0].mxu0
        %466 = vmatprep.mubr.f32.mxu0 0.0
        %467 = vmatmul.mubr.f32.gmra.mrb[0].mxu0 %v381
        %v468 = vpop.f32.mrb[0].mxu0
        %v469 = vadd.f32 %v369, %v468
        %v470 = vpop.f32.mrb[0].mxu0
        %471 = vdwg.mxu0
        %v472 = vmax.f32 %v454, 0.0
        %v473 = vmax.f32 %v459, 0.0
        %v474 = vmax.f32 %v464, 0.0
        %v475 = vmax.f32 %v469, 0.0
        %vm476 = vcmp.ne.f32.partialorder %v454, %v454
        %vm477 = vcmp.ne.f32.partialorder %v459, %v459
        %vm478 = vcmp.ne.f32.partialorder %v464, %v464
        %vm479 = vcmp.ne.f32.partialorder %v469, %v469
        %v480 = vadd.f32 %v454, 0.0
        %v481 = vadd.f32 %v459, 0.0
        %v482 = vadd.f32 %v464, 0.0
        %v483 = vadd.f32 %v469, 0.0
        %v484 = vand.u32 2147483647, %v454
        %v485 = vand.u32 2147483647, %v459
        %v486 = vand.u32 2147483647, %v464
        %v487 = vand.u32 2147483647, %v469
        %v488 = vsub.f32 0.0, %v484
        %v489 = vsub.f32 0.0, %v485
        %v490 = vsub.f32 0.0, %v486
        %v491 = vsub.f32 0.0, %v487
        %v492 = vmul.f32 %v488, 1.442695
        %v493 = vpow.pop %v492
        %v494 = vmul.f32 %v489, 1.442695
        %v495 = vpow.pop %v494
        %v496 = vmul.f32 %v490, 1.442695
        %v497 = vpow.pop %v496
        %v498 = vmul.f32 %v491, 1.442695
        %v499 = vpow.pop %v498
        %v500 = vadd.f32 %v493, 1.0
        %v501 = vlog2.pop %v500
        %v502 = vmul.f32 %v501, 0.6931472
        %v503 = vmul.f32 -0.5, %v493
        %v504 = vadd.f32 %v503, 1.0
        %v505 = vmul.f32 %v504, %v493
        %v506 = vand.u32 2147483647, %v493
        %vm507 = vcmp.lt.f32.partialorder %v506, 0.0004427343
        %v508 = vsel %vm507, %v505, %v502
        %v509 = vadd.f32 %v495, 1.0
        %v510 = vlog2.pop %v509
        %v511 = vmul.f32 %v510, 0.6931472
        %v512 = vmul.f32 -0.5, %v495
        %v513 = vadd.f32 %v512, 1.0
        %v514 = vmul.f32 %v513, %v495
        %v515 = vand.u32 2147483647, %v495
        %vm516 = vcmp.lt.f32.partialorder %v515, 0.0004427343
        %v517 = vsel %vm516, %v514, %v511
        %v518 = vadd.f32 %v497, 1.0
        %v519 = vlog2.pop %v518
        %v520 = vmul.f32 %v519, 0.6931472
        %v521 = vmul.f32 -0.5, %v497
        %v522 = vadd.f32 %v521, 1.0
        %v523 = vmul.f32 %v522, %v497
        %v524 = vand.u32 2147483647, %v497
        %vm525 = vcmp.lt.f32.partialorder %v524, 0.0004427343
        %v526 = vsel %vm525, %v523, %v520
        %v527 = vadd.f32 %v499, 1.0
        %v528 = vlog2.pop %v527
        %v529 = vmul.f32 %v528, 0.6931472
        %v530 = vmul.f32 -0.5, %v499
        %v531 = vadd.f32 %v530, 1.0
        %v532 = vmul.f32 %v531, %v499
        %v533 = vand.u32 2147483647, %v499
        %vm534 = vcmp.lt.f32.partialorder %v533, 0.0004427343
        %v535 = vsel %vm534, %v532, %v529
        %v536 = vadd.f32 %v472, %v508
        %v537 = vadd.f32 %v473, %v517
        %v538 = vadd.f32 %v474, %v526
        %v539 = vadd.f32 %v475, %v535
        %v540 = vsel %vm476, %v480, %v536
        %v541 = vsel %vm477, %v481, %v537
        %v542 = vsel %vm478, %v482, %v538
        %v543 = vsel %vm479, %v483, %v539
        %v544 = vld [vmem:[#allocation2 + $0x28] sm:$0xff]
        %v545 = vld [vmem:[#allocation2 + $0x30] sm:$0x3]
        %v546 = vld [vmem:[#allocation2 + $0x38] sm:$0x1]
        %v547 = vlaneseq
        %v548 = vshrl.u32 %v547, 7
        %v549 = vsub.s32 0, %v548
        %v550 = vrot.slane %v546, %v549
        %v552 = vsel %vm370, %v540, 0
        %v555 = vsel %vm370, %v541, 0
        %v558 = vsel %vm370, %v542, 0
        %v561 = vsel %vm370, %v543, 0
        %v564 = vsel %vm383, %v545, 0
        %566 = vmatprep.subr.mxu0 0.0
        %567 = vmatpush1.msra.mxu0 %v544
        %568 = vmatprep.subr.mxu0 0.0
        %569 = vmatpush1.msra.mxu0 %v564
        %570 = vmatprep.subr.mxu0 0.0
        %571 = vmatpush1.msra.mxu0 0.0
        %572 = vmatprep.subr.mxu0 0.0
        %573 = vmatpush1.msra.mxu0 0.0
        %574 = vmatprep.subr.mxu0 0.0
        %575 = vmatpush1.msra.mxu0 0.0
        %576 = vmatprep.subr.mxu0 0.0
        %577 = vmatpush1.msra.mxu0 0.0
        %578 = vmatprep.subr.mxu0 0.0
        %579 = vmatpush1.msra.mxu0 0.0
        %580 = vmatprep.subr.mxu0 0.0
        %581 = vmatpush1.msra.mxu0 0.0
        %582 = vmatprep.subr.mxu0 0.0
        %583 = vmatpush1.msra.mxu0 0.0
        %584 = vmatprep.subr.mxu0 0.0
        %585 = vmatpush1.msra.mxu0 0.0
        %586 = vmatprep.subr.mxu0 0.0
        %587 = vmatpush1.msra.mxu0 0.0
        %588 = vmatprep.subr.mxu0 0.0
        %589 = vmatpush1.msra.mxu0 0.0
        %590 = vmatprep.subr.mxu0 0.0
        %591 = vmatpush1.msra.mxu0 0.0
        %592 = vmatprep.subr.mxu0 0.0
        %593 = vmatpush1.msra.mxu0 0.0
        %594 = vmatprep.subr.mxu0 0.0
        %595 = vmatpush1.msra.mxu0 0.0
        %596 = vmatprep.subr.mxu0 0.0
        %597 = vmatpush1.msra.mxu0 0.0
        %598 = vmatprep.subr.mxu0 0.0
        %599 = vmatpush1.msra.mxu0 0.0
        %600 = vmatprep.subr.mxu0 0.0
        %601 = vmatpush1.msra.mxu0 0.0
        %602 = vmatprep.subr.mxu0 0.0
        %603 = vmatpush1.msra.mxu0 0.0
        %604 = vmatprep.subr.mxu0 0.0
        %605 = vmatpush1.msra.mxu0 0.0
        %606 = vmatprep.subr.mxu0 0.0
        %607 = vmatpush1.msra.mxu0 0.0
        %608 = vmatprep.subr.mxu0 0.0
        %609 = vmatpush1.msra.mxu0 0.0
        %610 = vmatprep.subr.mxu0 0.0
        %611 = vmatpush1.msra.mxu0 0.0
        %612 = vmatprep.subr.mxu0 0.0
        %613 = vmatpush1.msra.mxu0 0.0
        %614 = vmatprep.subr.mxu0 0.0
        %615 = vmatpush1.msra.mxu0 0.0
        %616 = vmatprep.subr.mxu0 0.0
        %617 = vmatpush1.msra.mxu0 0.0
        %618 = vmatprep.subr.mxu0 0.0
        %619 = vmatpush1.msra.mxu0 0.0
        %620 = vmatprep.subr.mxu0 0.0
        %621 = vmatpush1.msra.mxu0 0.0
        %622 = vmatprep.subr.mxu0 0.0
        %623 = vmatpush1.msra.mxu0 0.0
        %624 = vmatprep.subr.mxu0 0.0
        %625 = vmatpush1.msra.mxu0 0.0
        %626 = vmatprep.subr.mxu0 0.0
        %627 = vmatpush1.msra.mxu0 0.0
        %628 = vmatprep.subr.mxu0 0.0
        %629 = vmatpush1.msra.mxu0 0.0
        %630 = vmatprep.mubr.f32.mxu0 0.0
        %631 = vmatmul.mubr.f32.gmra.mrb[0].mxu0 %v552
        %v632 = vpop.f32.mrb[0].mxu0
        %v633 = vadd.f32 %v550, %v632
        %v634 = vpop.f32.mrb[0].mxu0
        %635 = vmatprep.mubr.f32.mxu0 0.0
        %636 = vmatmul.mubr.f32.gmra.mrb[0].mxu0 %v555
        %v637 = vpop.f32.mrb[0].mxu0
        %v638 = vadd.f32 %v550, %v637
        %v639 = vpop.f32.mrb[0].mxu0
        %640 = vmatprep.mubr.f32.mxu0 0.0
        %641 = vmatmul.mubr.f32.gmra.mrb[0].mxu0 %v558
        %v642 = vpop.f32.mrb[0].mxu0
        %v643 = vadd.f32 %v550, %v642
        %v644 = vpop.f32.mrb[0].mxu0
        %645 = vmatprep.mubr.f32.mxu0 0.0
        %646 = vmatmul.mubr.f32.gmra.mrb[0].mxu0 %v561
        %v647 = vpop.f32.mrb[0].mxu0
        %v648 = vadd.f32 %v550, %v647
        %v649 = vpop.f32.mrb[0].mxu0
        %650 = vdwg.mxu0
        %v651 = vmax.f32 %v633, 0.0
        %v652 = vmax.f32 %v638, 0.0
        %v653 = vmax.f32 %v643, 0.0
        %v654 = vmax.f32 %v648, 0.0
        %vm655 = vcmp.ne.f32.partialorder %v633, %v633
        %vm656 = vcmp.ne.f32.partialorder %v638, %v638
        %vm657 = vcmp.ne.f32.partialorder %v643, %v643
        %vm658 = vcmp.ne.f32.partialorder %v648, %v648
        %v659 = vadd.f32 %v633, 0.0
        %v660 = vadd.f32 %v638, 0.0
        %v661 = vadd.f32 %v643, 0.0
        %v662 = vadd.f32 %v648, 0.0
        %v663 = vand.u32 2147483647, %v633
        %v664 = vand.u32 2147483647, %v638
        %v665 = vand.u32 2147483647, %v643
        %v666 = vand.u32 2147483647, %v648
        %v667 = vsub.f32 0.0, %v663
        %v668 = vsub.f32 0.0, %v664
        %v669 = vsub.f32 0.0, %v665
        %v670 = vsub.f32 0.0, %v666
        %v671 = vmul.f32 %v667, 1.442695
        %v672 = vpow.pop %v671
        %v673 = vmul.f32 %v668, 1.442695
        %v674 = vpow.pop %v673
        %v675 = vmul.f32 %v669, 1.442695
        %v676 = vpow.pop %v675
        %v677 = vmul.f32 %v670, 1.442695
        %v678 = vpow.pop %v677
        %v679 = vadd.f32 %v672, 1.0
        %v680 = vlog2.pop %v679
        %v681 = vmul.f32 %v680, 0.6931472
        %v682 = vmul.f32 -0.5, %v672
        %v683 = vadd.f32 %v682, 1.0
        %v684 = vmul.f32 %v683, %v672
        %v685 = vand.u32 2147483647, %v672
        %vm686 = vcmp.lt.f32.partialorder %v685, 0.0004427343
        %v687 = vsel %vm686, %v684, %v681
        %v688 = vadd.f32 %v674, 1.0
        %v689 = vlog2.pop %v688
        %v690 = vmul.f32 %v689, 0.6931472
        %v691 = vmul.f32 -0.5, %v674
        %v692 = vadd.f32 %v691, 1.0
        %v693 = vmul.f32 %v692, %v674
        %v694 = vand.u32 2147483647, %v674
        %vm695 = vcmp.lt.f32.partialorder %v694, 0.0004427343
        %v696 = vsel %vm695, %v693, %v690
        %v697 = vadd.f32 %v676, 1.0
        %v698 = vlog2.pop %v697
        %v699 = vmul.f32 %v698, 0.6931472
        %v700 = vmul.f32 -0.5, %v676
        %v701 = vadd.f32 %v700, 1.0
        %v702 = vmul.f32 %v701, %v676
        %v703 = vand.u32 2147483647, %v676
        %vm704 = vcmp.lt.f32.partialorder %v703, 0.0004427343
        %v705 = vsel %vm704, %v702, %v699
        %v706 = vadd.f32 %v678, 1.0
        %v707 = vlog2.pop %v706
        %v708 = vmul.f32 %v707, 0.6931472
        %v709 = vmul.f32 -0.5, %v678
        %v710 = vadd.f32 %v709, 1.0
        %v711 = vmul.f32 %v710, %v678
        %v712 = vand.u32 2147483647, %v678
        %vm713 = vcmp.lt.f32.partialorder %v712, 0.0004427343
        %v714 = vsel %vm713, %v711, %v708
        %v715 = vadd.f32 %v651, %v687
        %v716 = vadd.f32 %v652, %v696
        %v717 = vadd.f32 %v653, %v705
        %v718 = vadd.f32 %v654, %v714
        %v719 = vsel %vm655, %v659, %v715
        %v720 = vsel %vm656, %v660, %v716
        %v721 = vsel %vm657, %v661, %v717
        %v722 = vsel %vm658, %v662, %v718
        %v723 = vld [vmem:[#allocation2 + $0x40] sm:$0xff]
        %v724 = vld [vmem:[#allocation2 + $0x48] sm:$0x3]
        %v725 = vld [vmem:[#allocation2 + $0x50] sm:$0x1]
        %v726 = vlaneseq
        %v727 = vshrl.u32 %v726, 7
        %v728 = vsub.s32 0, %v727
        %v729 = vrot.slane %v725, %v728
        %v731 = vsel %vm370, %v719, 0
        %v734 = vsel %vm370, %v720, 0
        %v737 = vsel %vm370, %v721, 0
        %v740 = vsel %vm370, %v722, 0
        %v743 = vsel %vm383, %v724, 0
        %745 = vmatprep.subr.mxu0 0.0
        %746 = vmatpush1.msra.mxu0 %v723
        %747 = vmatprep.subr.mxu0 0.0
        %748 = vmatpush1.msra.mxu0 %v743
        %749 = vmatprep.subr.mxu0 0.0
        %750 = vmatpush1.msra.mxu0 0.0
        %751 = vmatprep.subr.mxu0 0.0
        %752 = vmatpush1.msra.mxu0 0.0
        %753 = vmatprep.subr.mxu0 0.0
        %754 = vmatpush1.msra.mxu0 0.0
        %755 = vmatprep.subr.mxu0 0.0
        %756 = vmatpush1.msra.mxu0 0.0
        %757 = vmatprep.subr.mxu0 0.0
        %758 = vmatpush1.msra.mxu0 0.0
        %759 = vmatprep.subr.mxu0 0.0
        %760 = vmatpush1.msra.mxu0 0.0
        %761 = vmatprep.subr.mxu0 0.0
        %762 = vmatpush1.msra.mxu0 0.0
        %763 = vmatprep.subr.mxu0 0.0
        %764 = vmatpush1.msra.mxu0 0.0
        %765 = vmatprep.subr.mxu0 0.0
        %766 = vmatpush1.msra.mxu0 0.0
        %767 = vmatprep.subr.mxu0 0.0
        %768 = vmatpush1.msra.mxu0 0.0
        %769 = vmatprep.subr.mxu0 0.0
        %770 = vmatpush1.msra.mxu0 0.0
        %771 = vmatprep.subr.mxu0 0.0
        %772 = vmatpush1.msra.mxu0 0.0
        %773 = vmatprep.subr.mxu0 0.0
        %774 = vmatpush1.msra.mxu0 0.0
        %775 = vmatprep.subr.mxu0 0.0
        %776 = vmatpush1.msra.mxu0 0.0
        %777 = vmatprep.subr.mxu0 0.0
        %778 = vmatpush1.msra.mxu0 0.0
        %779 = vmatprep.subr.mxu0 0.0
        %780 = vmatpush1.msra.mxu0 0.0
        %781 = vmatprep.subr.mxu0 0.0
        %782 = vmatpush1.msra.mxu0 0.0
        %783 = vmatprep.subr.mxu0 0.0
        %784 = vmatpush1.msra.mxu0 0.0
        %785 = vmatprep.subr.mxu0 0.0
        %786 = vmatpush1.msra.mxu0 0.0
        %787 = vmatprep.subr.mxu0 0.0
        %788 = vmatpush1.msra.mxu0 0.0
        %789 = vmatprep.subr.mxu0 0.0
        %790 = vmatpush1.msra.mxu0 0.0
        %791 = vmatprep.subr.mxu0 0.0
        %792 = vmatpush1.msra.mxu0 0.0
        %793 = vmatprep.subr.mxu0 0.0
        %794 = vmatpush1.msra.mxu0 0.0
        %795 = vmatprep.subr.mxu0 0.0
        %796 = vmatpush1.msra.mxu0 0.0
        %797 = vmatprep.subr.mxu0 0.0
        %798 = vmatpush1.msra.mxu0 0.0
        %799 = vmatprep.subr.mxu0 0.0
        %800 = vmatpush1.msra.mxu0 0.0
        %801 = vmatprep.subr.mxu0 0.0
        %802 = vmatpush1.msra.mxu0 0.0
        %803 = vmatprep.subr.mxu0 0.0
        %804 = vmatpush1.msra.mxu0 0.0
        %805 = vmatprep.subr.mxu0 0.0
        %806 = vmatpush1.msra.mxu0 0.0
        %807 = vmatprep.subr.mxu0 0.0
        %808 = vmatpush1.msra.mxu0 0.0
        %809 = vmatprep.mubr.f32.mxu0 0.0
        %810 = vmatmul.mubr.f32.gmra.mrb[0].mxu0 %v731
        %v811 = vpop.f32.mrb[0].mxu0
        %v812 = vadd.f32 %v729, %v811
        %v813 = vpop.f32.mrb[0].mxu0
        %814 = vmatprep.mubr.f32.mxu0 0.0
        %815 = vmatmul.mubr.f32.gmra.mrb[0].mxu0 %v734
        %v816 = vpop.f32.mrb[0].mxu0
        %v817 = vadd.f32 %v729, %v816
        %v818 = vpop.f32.mrb[0].mxu0
        %819 = vmatprep.mubr.f32.mxu0 0.0
        %820 = vmatmul.mubr.f32.gmra.mrb[0].mxu0 %v737
        %v821 = vpop.f32.mrb[0].mxu0
        %v822 = vadd.f32 %v729, %v821
        %v823 = vpop.f32.mrb[0].mxu0
        %824 = vmatprep.mubr.f32.mxu0 0.0
        %825 = vmatmul.mubr.f32.gmra.mrb[0].mxu0 %v740
        %v826 = vpop.f32.mrb[0].mxu0
        %v827 = vadd.f32 %v729, %v826
        %v828 = vpop.f32.mrb[0].mxu0
        %829 = vdwg.mxu0
        %v830 = vld [vmem:[#allocation2 + $0x58] sm:$0xff]
        %832 = vrot.lane.b32.xlu0 %v830, 120
        %v833 = vpop.permute.xlu0 %832
        %v835 = vmul.f32 %v812, %v833
        %v836 = vmul.f32 %v817, %v833
        %v837 = vmul.f32 %v822, %v833
        %v838 = vmul.f32 %v827, %v833
        %v839 = vadd.f32 %v830, %v835
        %v840 = vadd.f32 %v830, %v836
        %v841 = vadd.f32 %v830, %v837
        %v842 = vadd.f32 %v830, %v838
        %v843 = vld [vmem:[#allocation2 + $0x70] sm:$0xff]
        %v844 = vld [vmem:[#allocation2 + $0x78] sm:$0x1]
        %v845 = vlaneseq
        %v846 = vshrl.u32 %v845, 7
        %v847 = vsub.s32 0, %v846
        %v848 = vrot.slane %v844, %v847
        %vm849 = vcmask 64512
        %v851 = vsel %vm849, %v839, 0
        %v854 = vsel %vm849, %v840, 0
        %v857 = vsel %vm849, %v841, 0
        %v860 = vsel %vm849, %v842, 0
        %862 = vmatprep.subr.mxu0 0.0
        %863 = vmatpush1.msra.mxu0 %v843
        %864 = vmatprep.subr.mxu0 0.0
        %865 = vmatpush1.msra.mxu0 0.0
        %866 = vmatprep.subr.mxu0 0.0
        %867 = vmatpush1.msra.mxu0 0.0
        %868 = vmatprep.subr.mxu0 0.0
        %869 = vmatpush1.msra.mxu0 0.0
        %870 = vmatprep.subr.mxu0 0.0
        %871 = vmatpush1.msra.mxu0 0.0
        %872 = vmatprep.subr.mxu0 0.0
        %873 = vmatpush1.msra.mxu0 0.0
        %874 = vmatprep.subr.mxu0 0.0
        %875 = vmatpush1.msra.mxu0 0.0
        %876 = vmatprep.subr.mxu0 0.0
        %877 = vmatpush1.msra.mxu0 0.0
        %878 = vmatprep.subr.mxu0 0.0
        %879 = vmatpush1.msra.mxu0 0.0
        %880 = vmatprep.subr.mxu0 0.0
        %881 = vmatpush1.msra.mxu0 0.0
        %882 = vmatprep.subr.mxu0 0.0
        %883 = vmatpush1.msra.mxu0 0.0
        %884 = vmatprep.subr.mxu0 0.0
        %885 = vmatpush1.msra.mxu0 0.0
        %886 = vmatprep.subr.mxu0 0.0
        %887 = vmatpush1.msra.mxu0 0.0
        %888 = vmatprep.subr.mxu0 0.0
        %889 = vmatpush1.msra.mxu0 0.0
        %890 = vmatprep.subr.mxu0 0.0
        %891 = vmatpush1.msra.mxu0 0.0
        %892 = vmatprep.subr.mxu0 0.0
        %893 = vmatpush1.msra.mxu0 0.0
        %894 = vmatprep.subr.mxu0 0.0
        %895 = vmatpush1.msra.mxu0 0.0
        %896 = vmatprep.subr.mxu0 0.0
        %897 = vmatpush1.msra.mxu0 0.0
        %898 = vmatprep.subr.mxu0 0.0
        %899 = vmatpush1.msra.mxu0 0.0
        %900 = vmatprep.subr.mxu0 0.0
        %901 = vmatpush1.msra.mxu0 0.0
        %902 = vmatprep.subr.mxu0 0.0
        %903 = vmatpush1.msra.mxu0 0.0
        %904 = vmatprep.subr.mxu0 0.0
        %905 = vmatpush1.msra.mxu0 0.0
        %906 = vmatprep.subr.mxu0 0.0
        %907 = vmatpush1.msra.mxu0 0.0
        %908 = vmatprep.subr.mxu0 0.0
        %909 = vmatpush1.msra.mxu0 0.0
        %910 = vmatprep.subr.mxu0 0.0
        %911 = vmatpush1.msra.mxu0 0.0
        %912 = vmatprep.subr.mxu0 0.0
        %913 = vmatpush1.msra.mxu0 0.0
        %914 = vmatprep.subr.mxu0 0.0
        %915 = vmatpush1.msra.mxu0 0.0
        %916 = vmatprep.subr.mxu0 0.0
        %917 = vmatpush1.msra.mxu0 0.0
        %918 = vmatprep.subr.mxu0 0.0
        %919 = vmatpush1.msra.mxu0 0.0
        %920 = vmatprep.subr.mxu0 0.0
        %921 = vmatpush1.msra.mxu0 0.0
        %922 = vmatprep.subr.mxu0 0.0
        %923 = vmatpush1.msra.mxu0 0.0
        %924 = vmatprep.subr.mxu0 0.0
        %925 = vmatpush1.msra.mxu0 0.0
        %926 = vmatprep.mubr.f32.mxu0 0.0
        %927 = vmatmul.mubr.f32.gmra.mrb[0].mxu0 %v851
        %v928 = vpop.f32.mrb[0].mxu0
        %v929 = vadd.f32 %v848, %v928
        %v930 = vpop.f32.mrb[0].mxu0
        %931 = vmatprep.mubr.f32.mxu0 0.0
        %932 = vmatmul.mubr.f32.gmra.mrb[0].mxu0 %v854
        %v933 = vpop.f32.mrb[0].mxu0
        %v934 = vadd.f32 %v848, %v933
        %v935 = vpop.f32.mrb[0].mxu0
        %936 = vmatprep.mubr.f32.mxu0 0.0
        %937 = vmatmul.mubr.f32.gmra.mrb[0].mxu0 %v857
        %v938 = vpop.f32.mrb[0].mxu0
        %v939 = vadd.f32 %v848, %v938
        %v940 = vpop.f32.mrb[0].mxu0
        %941 = vmatprep.mubr.f32.mxu0 0.0
        %942 = vmatmul.mubr.f32.gmra.mrb[0].mxu0 %v860
        %v943 = vpop.f32.mrb[0].mxu0
        %v944 = vadd.f32 %v848, %v943
        %v945 = vpop.f32.mrb[0].mxu0
        %946 = vdwg.mxu0
        %v947 = vld [vmem:[#allocation2 + $0x60] sm:$0xff]
        %vm948 = vcmask 130048
        %v950 = vsel %vm948, %v947, 0
        %v953 = vsel %vm948, %v929, 0
        %955 = vmatprep.subr.mxu0 0.0
        %956 = vmatpush1.xpose.msra.mxu0 %v953
        %957 = vmatprep.subr.mxu0 0.0
        %958 = vmatpush1.xpose.msra.mxu0 0.0
        %959 = vmatprep.subr.mxu0 0.0
        %960 = vmatpush1.xpose.msra.mxu0 0.0
        %961 = vmatprep.subr.mxu0 0.0
        %962 = vmatpush1.xpose.msra.mxu0 0.0
        %963 = vmatprep.subr.mxu0 0.0
        %964 = vmatpush1.xpose.msra.mxu0 0.0
        %965 = vmatprep.subr.mxu0 0.0
        %966 = vmatpush1.xpose.msra.mxu0 0.0
        %967 = vmatprep.subr.mxu0 0.0
        %968 = vmatpush1.xpose.msra.mxu0 0.0
        %969 = vmatprep.subr.mxu0 0.0
        %970 = vmatpush1.xpose.msra.mxu0 0.0
        %971 = vmatprep.subr.mxu0 0.0
        %972 = vmatpush1.xpose.msra.mxu0 0.0
        %973 = vmatprep.subr.mxu0 0.0
        %974 = vmatpush1.xpose.msra.mxu0 0.0
        %975 = vmatprep.subr.mxu0 0.0
        %976 = vmatpush1.xpose.msra.mxu0 0.0
        %977 = vmatprep.subr.mxu0 0.0
        %978 = vmatpush1.xpose.msra.mxu0 0.0
        %979 = vmatprep.subr.mxu0 0.0
        %980 = vmatpush1.xpose.msra.mxu0 0.0
        %981 = vmatprep.subr.mxu0 0.0
        %982 = vmatpush1.xpose.msra.mxu0 0.0
        %983 = vmatprep.subr.mxu0 0.0
        %984 = vmatpush1.xpose.msra.mxu0 0.0
        %985 = vmatprep.subr.mxu0 0.0
        %986 = vmatpush1.xpose.msra.mxu0 0.0
        %987 = vmatprep.subr.mxu0 0.0
        %988 = vmatpush1.xpose.msra.mxu0 0.0
        %989 = vmatprep.subr.mxu0 0.0
        %990 = vmatpush1.xpose.msra.mxu0 0.0
        %991 = vmatprep.subr.mxu0 0.0
        %992 = vmatpush1.xpose.msra.mxu0 0.0
        %993 = vmatprep.subr.mxu0 0.0
        %994 = vmatpush1.xpose.msra.mxu0 0.0
        %995 = vmatprep.subr.mxu0 0.0
        %996 = vmatpush1.xpose.msra.mxu0 0.0
        %997 = vmatprep.subr.mxu0 0.0
        %998 = vmatpush1.xpose.msra.mxu0 0.0
        %999 = vmatprep.subr.mxu0 0.0
        %1000 = vmatpush1.xpose.msra.mxu0 0.0
        %1001 = vmatprep.subr.mxu0 0.0
        %1002 = vmatpush1.xpose.msra.mxu0 0.0
        %1003 = vmatprep.subr.mxu0 0.0
        %1004 = vmatpush1.xpose.msra.mxu0 0.0
        %1005 = vmatprep.subr.mxu0 0.0
        %1006 = vmatpush1.xpose.msra.mxu0 0.0
        %1007 = vmatprep.subr.mxu0 0.0
        %1008 = vmatpush1.xpose.msra.mxu0 0.0
        %1009 = vmatprep.subr.mxu0 0.0
        %1010 = vmatpush1.xpose.msra.mxu0 0.0
        %1011 = vmatprep.subr.mxu0 0.0
        %1012 = vmatpush1.xpose.msra.mxu0 0.0
        %1013 = vmatprep.subr.mxu0 0.0
        %1014 = vmatpush1.xpose.msra.mxu0 0.0
        %1015 = vmatprep.subr.mxu0 0.0
        %1016 = vmatpush1.xpose.msra.mxu0 0.0
        %1017 = vmatprep.subr.mxu0 0.0
        %1018 = vmatpush1.xpose.msra.mxu0 0.0
        %1019 = vmatprep.mubr.f32.mxu0 0.0
        %1020 = vmatmul.mubr.f32.gmra.mrb[0].mxu0 %v950
        %v1021 = vpop.f32.mrb[0].mxu0
        %v1022 = vadd.f32 0.0, %v1021
        %v1023 = vpop.f32.mrb[0].mxu0
        %1024 = vdwg.mxu0
        %v1026 = vsel %vm948, %v934, 0
        %1028 = vmatprep.subr.mxu0 0.0
        %1029 = vmatpush1.xpose.msra.mxu0 %v1026
        %1030 = vmatprep.subr.mxu0 0.0
        %1031 = vmatpush1.xpose.msra.mxu0 0.0
        %1032 = vmatprep.subr.mxu0 0.0
        %1033 = vmatpush1.xpose.msra.mxu0 0.0
        %1034 = vmatprep.subr.mxu0 0.0
        %1035 = vmatpush1.xpose.msra.mxu0 0.0
        %1036 = vmatprep.subr.mxu0 0.0
        %1037 = vmatpush1.xpose.msra.mxu0 0.0
        %1038 = vmatprep.subr.mxu0 0.0
        %1039 = vmatpush1.xpose.msra.mxu0 0.0
        %1040 = vmatprep.subr.mxu0 0.0
        %1041 = vmatpush1.xpose.msra.mxu0 0.0
        %1042 = vmatprep.subr.mxu0 0.0
        %1043 = vmatpush1.xpose.msra.mxu0 0.0
        %1044 = vmatprep.subr.mxu0 0.0
        %1045 = vmatpush1.xpose.msra.mxu0 0.0
        %1046 = vmatprep.subr.mxu0 0.0
        %1047 = vmatpush1.xpose.msra.mxu0 0.0
        %1048 = vmatprep.subr.mxu0 0.0
        %1049 = vmatpush1.xpose.msra.mxu0 0.0
        %1050 = vmatprep.subr.mxu0 0.0
        %1051 = vmatpush1.xpose.msra.mxu0 0.0
        %1052 = vmatprep.subr.mxu0 0.0
        %1053 = vmatpush1.xpose.msra.mxu0 0.0
        %1054 = vmatprep.subr.mxu0 0.0
        %1055 = vmatpush1.xpose.msra.mxu0 0.0
        %1056 = vmatprep.subr.mxu0 0.0
        %1057 = vmatpush1.xpose.msra.mxu0 0.0
        %1058 = vmatprep.subr.mxu0 0.0
        %1059 = vmatpush1.xpose.msra.mxu0 0.0
        %1060 = vmatprep.subr.mxu0 0.0
        %1061 = vmatpush1.xpose.msra.mxu0 0.0
        %1062 = vmatprep.subr.mxu0 0.0
        %1063 = vmatpush1.xpose.msra.mxu0 0.0
        %1064 = vmatprep.subr.mxu0 0.0
        %1065 = vmatpush1.xpose.msra.mxu0 0.0
        %1066 = vmatprep.subr.mxu0 0.0
        %1067 = vmatpush1.xpose.msra.mxu0 0.0
        %1068 = vmatprep.subr.mxu0 0.0
        %1069 = vmatpush1.xpose.msra.mxu0 0.0
        %1070 = vmatprep.subr.mxu0 0.0
        %1071 = vmatpush1.xpose.msra.mxu0 0.0
        %1072 = vmatprep.subr.mxu0 0.0
        %1073 = vmatpush1.xpose.msra.mxu0 0.0
        %1074 = vmatprep.subr.mxu0 0.0
        %1075 = vmatpush1.xpose.msra.mxu0 0.0
        %1076 = vmatprep.subr.mxu0 0.0
        %1077 = vmatpush1.xpose.msra.mxu0 0.0
        %1078 = vmatprep.subr.mxu0 0.0
        %1079 = vmatpush1.xpose.msra.mxu0 0.0
        %1080 = vmatprep.subr.mxu0 0.0
        %1081 = vmatpush1.xpose.msra.mxu0 0.0
        %1082 = vmatprep.subr.mxu0 0.0
        %1083 = vmatpush1.xpose.msra.mxu0 0.0
        %1084 = vmatprep.subr.mxu0 0.0
        %1085 = vmatpush1.xpose.msra.mxu0 0.0
        %1086 = vmatprep.subr.mxu0 0.0
        %1087 = vmatpush1.xpose.msra.mxu0 0.0
        %1088 = vmatprep.subr.mxu0 0.0
        %1089 = vmatpush1.xpose.msra.mxu0 0.0
        %1090 = vmatprep.subr.mxu0 0.0
        %1091 = vmatpush1.xpose.msra.mxu0 0.0
        %1092 = vmatprep.mubr.f32.mxu0 0.0
        %1093 = vmatmul.mubr.f32.gmra.mrb[0].mxu0 %v950
        %v1094 = vpop.f32.mrb[0].mxu0
        %v1095 = vadd.f32 0.0, %v1094
        %v1096 = vpop.f32.mrb[0].mxu0
        %1097 = vdwg.mxu0
        %v1099 = vsel %vm948, %v939, 0
        %1101 = vmatprep.subr.mxu0 0.0
        %1102 = vmatpush1.xpose.msra.mxu0 %v1099
        %1103 = vmatprep.subr.mxu0 0.0
        %1104 = vmatpush1.xpose.msra.mxu0 0.0
        %1105 = vmatprep.subr.mxu0 0.0
        %1106 = vmatpush1.xpose.msra.mxu0 0.0
        %1107 = vmatprep.subr.mxu0 0.0
        %1108 = vmatpush1.xpose.msra.mxu0 0.0
        %1109 = vmatprep.subr.mxu0 0.0
        %1110 = vmatpush1.xpose.msra.mxu0 0.0
        %1111 = vmatprep.subr.mxu0 0.0
        %1112 = vmatpush1.xpose.msra.mxu0 0.0
        %1113 = vmatprep.subr.mxu0 0.0
        %1114 = vmatpush1.xpose.msra.mxu0 0.0
        %1115 = vmatprep.subr.mxu0 0.0
        %1116 = vmatpush1.xpose.msra.mxu0 0.0
        %1117 = vmatprep.subr.mxu0 0.0
        %1118 = vmatpush1.xpose.msra.mxu0 0.0
        %1119 = vmatprep.subr.mxu0 0.0
        %1120 = vmatpush1.xpose.msra.mxu0 0.0
        %1121 = vmatprep.subr.mxu0 0.0
        %1122 = vmatpush1.xpose.msra.mxu0 0.0
        %1123 = vmatprep.subr.mxu0 0.0
        %1124 = vmatpush1.xpose.msra.mxu0 0.0
        %1125 = vmatprep.subr.mxu0 0.0
        %1126 = vmatpush1.xpose.msra.mxu0 0.0
        %1127 = vmatprep.subr.mxu0 0.0
        %1128 = vmatpush1.xpose.msra.mxu0 0.0
        %1129 = vmatprep.subr.mxu0 0.0
        %1130 = vmatpush1.xpose.msra.mxu0 0.0
        %1131 = vmatprep.subr.mxu0 0.0
        %1132 = vmatpush1.xpose.msra.mxu0 0.0
        %1133 = vmatprep.subr.mxu0 0.0
        %1134 = vmatpush1.xpose.msra.mxu0 0.0
        %1135 = vmatprep.subr.mxu0 0.0
        %1136 = vmatpush1.xpose.msra.mxu0 0.0
        %1137 = vmatprep.subr.mxu0 0.0
        %1138 = vmatpush1.xpose.msra.mxu0 0.0
        %1139 = vmatprep.subr.mxu0 0.0
        %1140 = vmatpush1.xpose.msra.mxu0 0.0
        %1141 = vmatprep.subr.mxu0 0.0
        %1142 = vmatpush1.xpose.msra.mxu0 0.0
        %1143 = vmatprep.subr.mxu0 0.0
        %1144 = vmatpush1.xpose.msra.mxu0 0.0
        %1145 = vmatprep.subr.mxu0 0.0
        %1146 = vmatpush1.xpose.msra.mxu0 0.0
        %1147 = vmatprep.subr.mxu0 0.0
        %1148 = vmatpush1.xpose.msra.mxu0 0.0
        %1149 = vmatprep.subr.mxu0 0.0
        %1150 = vmatpush1.xpose.msra.mxu0 0.0
        %1151 = vmatprep.subr.mxu0 0.0
        %1152 = vmatpush1.xpose.msra.mxu0 0.0
        %1153 = vmatprep.subr.mxu0 0.0
        %1154 = vmatpush1.xpose.msra.mxu0 0.0
        %1155 = vmatprep.subr.mxu0 0.0
        %1156 = vmatpush1.xpose.msra.mxu0 0.0
        %1157 = vmatprep.subr.mxu0 0.0
        %1158 = vmatpush1.xpose.msra.mxu0 0.0
        %1159 = vmatprep.subr.mxu0 0.0
        %1160 = vmatpush1.xpose.msra.mxu0 0.0
        %1161 = vmatprep.subr.mxu0 0.0
        %1162 = vmatpush1.xpose.msra.mxu0 0.0
        %1163 = vmatprep.subr.mxu0 0.0
        %1164 = vmatpush1.xpose.msra.mxu0 0.0
        %1165 = vmatprep.mubr.f32.mxu0 0.0
        %1166 = vmatmul.mubr.f32.gmra.mrb[0].mxu0 %v950
        %v1167 = vpop.f32.mrb[0].mxu0
        %v1168 = vadd.f32 0.0, %v1167
        %v1169 = vpop.f32.mrb[0].mxu0
        %1170 = vdwg.mxu0
        %v1172 = vsel %vm948, %v944, 0
        %1174 = vmatprep.subr.mxu0 0.0
        %1175 = vmatpush1.xpose.msra.mxu0 %v1172
        %1176 = vmatprep.subr.mxu0 0.0
        %1177 = vmatpush1.xpose.msra.mxu0 0.0
        %1178 = vmatprep.subr.mxu0 0.0
        %1179 = vmatpush1.xpose.msra.mxu0 0.0
        %1180 = vmatprep.subr.mxu0 0.0
        %1181 = vmatpush1.xpose.msra.mxu0 0.0
        %1182 = vmatprep.subr.mxu0 0.0
        %1183 = vmatpush1.xpose.msra.mxu0 0.0
        %1184 = vmatprep.subr.mxu0 0.0
        %1185 = vmatpush1.xpose.msra.mxu0 0.0
        %1186 = vmatprep.subr.mxu0 0.0
        %1187 = vmatpush1.xpose.msra.mxu0 0.0
        %1188 = vmatprep.subr.mxu0 0.0
        %1189 = vmatpush1.xpose.msra.mxu0 0.0
        %1190 = vmatprep.subr.mxu0 0.0
        %1191 = vmatpush1.xpose.msra.mxu0 0.0
        %1192 = vmatprep.subr.mxu0 0.0
        %1193 = vmatpush1.xpose.msra.mxu0 0.0
        %1194 = vmatprep.subr.mxu0 0.0
        %1195 = vmatpush1.xpose.msra.mxu0 0.0
        %1196 = vmatprep.subr.mxu0 0.0
        %1197 = vmatpush1.xpose.msra.mxu0 0.0
        %1198 = vmatprep.subr.mxu0 0.0
        %1199 = vmatpush1.xpose.msra.mxu0 0.0
        %1200 = vmatprep.subr.mxu0 0.0
        %1201 = vmatpush1.xpose.msra.mxu0 0.0
        %1202 = vmatprep.subr.mxu0 0.0
        %1203 = vmatpush1.xpose.msra.mxu0 0.0
        %1204 = vmatprep.subr.mxu0 0.0
        %1205 = vmatpush1.xpose.msra.mxu0 0.0
        %1206 = vmatprep.subr.mxu0 0.0
        %1207 = vmatpush1.xpose.msra.mxu0 0.0
        %1208 = vmatprep.subr.mxu0 0.0
        %1209 = vmatpush1.xpose.msra.mxu0 0.0
        %1210 = vmatprep.subr.mxu0 0.0
        %1211 = vmatpush1.xpose.msra.mxu0 0.0
        %1212 = vmatprep.subr.mxu0 0.0
        %1213 = vmatpush1.xpose.msra.mxu0 0.0
        %1214 = vmatprep.subr.mxu0 0.0
        %1215 = vmatpush1.xpose.msra.mxu0 0.0
        %1216 = vmatprep.subr.mxu0 0.0
        %1217 = vmatpush1.xpose.msra.mxu0 0.0
        %1218 = vmatprep.subr.mxu0 0.0
        %1219 = vmatpush1.xpose.msra.mxu0 0.0
        %1220 = vmatprep.subr.mxu0 0.0
        %1221 = vmatpush1.xpose.msra.mxu0 0.0
        %1222 = vmatprep.subr.mxu0 0.0
        %1223 = vmatpush1.xpose.msra.mxu0 0.0
        %1224 = vmatprep.subr.mxu0 0.0
        %1225 = vmatpush1.xpose.msra.mxu0 0.0
        %1226 = vmatprep.subr.mxu0 0.0
        %1227 = vmatpush1.xpose.msra.mxu0 0.0
        %1228 = vmatprep.subr.mxu0 0.0
        %1229 = vmatpush1.xpose.msra.mxu0 0.0
        %1230 = vmatprep.subr.mxu0 0.0
        %1231 = vmatpush1.xpose.msra.mxu0 0.0
        %1232 = vmatprep.subr.mxu0 0.0
        %1233 = vmatpush1.xpose.msra.mxu0 0.0
        %1234 = vmatprep.subr.mxu0 0.0
        %1235 = vmatpush1.xpose.msra.mxu0 0.0
        %1236 = vmatprep.subr.mxu0 0.0
        %1237 = vmatpush1.xpose.msra.mxu0 0.0
        %1238 = vmatprep.mubr.f32.mxu0 0.0
        %1239 = vmatmul.mubr.f32.gmra.mrb[0].mxu0 %v950
        %v1240 = vpop.f32.mrb[0].mxu0
        %v1241 = vadd.f32 0.0, %v1240
        %v1242 = vpop.f32.mrb[0].mxu0
        %1243 = vdwg.mxu0
        %v1244 = vmul.f32 %v1022, 0.25
        %v1245 = vmul.f32 %v1095, 0.25
        %v1246 = vmul.f32 %v1168, 0.25
        %v1247 = vmul.f32 %v1241, 0.25
        %vm1248 = vcmp.gt.f32.partialorder %v249, 0.5
        %vm1249 = vcmp.gt.f32.partialorder %v250, 0.5
        %vm1250 = vcmp.gt.f32.partialorder %v251, 0.5
        %vm1251 = vcmp.gt.f32.partialorder %v252, 0.5
        %v1252 = vsel %vm1248, 1, 0
        %v1253 = vsel %vm1249, 1, 0
        %v1254 = vsel %vm1250, 1, 0
        %v1255 = vsel %vm1251, 1, 0
        %v1256 = vlaneseq
        %v1257 = vshrl.u32 %v1256, 7
        %v1258 = vsub.s32 0, %v1257
        %v1259 = vrot.slane %v1252, %v1258
        %v1260 = vlaneseq
        %v1261 = vshrl.u32 %v1260, 7
        %v1262 = vsub.s32 0, %v1261
        %v1263 = vrot.slane %v1253, %v1262
        %v1264 = vlaneseq
        %v1265 = vshrl.u32 %v1264, 7
        %v1266 = vsub.s32 0, %v1265
        %v1267 = vrot.slane %v1254, %v1266
        %v1268 = vlaneseq
        %v1269 = vshrl.u32 %v1268, 7
        %v1270 = vsub.s32 0, %v1269
        %v1271 = vrot.slane %v1255, %v1270
        %vm1272 = vcmp.eq.s32.totalorder %v1259, 1
        %vm1273 = vcmp.eq.s32.totalorder %v1263, 1
        %vm1274 = vcmp.eq.s32.totalorder %v1267, 1
        %vm1275 = vcmp.eq.s32.totalorder %v1271, 1
        %v1276 = vsel %vm1272, %v1244, -1e+30
        %v1277 = vsel %vm1273, %v1245, -1e+30
        %v1278 = vsel %vm1274, %v1246, -1e+30
        %v1279 = vsel %vm1275, %v1247, -1e+30
        %v1280 = vsel %vm849, %v1276, -inf
        %1281 = vmax.xlane.f32.xlu0 %v1280
        %v1282 = vpop.xlane.xlu0 %1281
        %v1283 = vsel %vm849, %v1277, -inf
        %1284 = vmax.xlane.f32.xlu0 %v1283
        %v1285 = vpop.xlane.xlu0 %1284
        %v1286 = vsel %vm849, %v1278, -inf
        %1287 = vmax.xlane.f32.xlu0 %v1286
        %v1288 = vpop.xlane.xlu0 %1287
        %v1289 = vsel %vm849, %v1279, -inf
        %1290 = vmax.xlane.f32.xlu0 %v1289
        %v1291 = vpop.xlane.xlu0 %1290
        %v1292 = vsub.f32 %v1276, %v1282
        %v1293 = vsub.f32 %v1277, %v1285
        %v1294 = vsub.f32 %v1278, %v1288
        %v1295 = vsub.f32 %v1279, %v1291
        %v1296 = vmul.f32 %v1292, 1.442695
        %v1297 = vpow.pop %v1296
        %v1298 = vmul.f32 %v1293, 1.442695
        %v1299 = vpow.pop %v1298
        %v1300 = vmul.f32 %v1294, 1.442695
        %v1301 = vpow.pop %v1300
        %v1302 = vmul.f32 %v1295, 1.442695
        %v1303 = vpow.pop %v1302
        %v1304 = vsel %vm849, %v1297, 0.0
        %1305 = vadd.xlane.f32.xlu0 %v1304
        %v1306 = vpop.xlane.xlu0 %1305
        %v1307 = vsel %vm849, %v1299, 0.0
        %1308 = vadd.xlane.f32.xlu0 %v1307
        %v1309 = vpop.xlane.xlu0 %1308
        %v1310 = vsel %vm849, %v1301, 0.0
        %1311 = vadd.xlane.f32.xlu0 %v1310
        %v1312 = vpop.xlane.xlu0 %1311
        %v1313 = vsel %vm849, %v1303, 0.0
        %1314 = vadd.xlane.f32.xlu0 %v1313
        %v1315 = vpop.xlane.xlu0 %1314
        %v1316 = vrcp.pop %v1306
        %v1317 = vrcp.pop %v1309
        %v1318 = vrcp.pop %v1312
        %v1319 = vrcp.pop %v1315
        %v1320 = vmul.f32 %v1297, %v1316
        %v1321 = vmul.f32 %v1299, %v1317
        %v1322 = vmul.f32 %v1301, %v1318
        %v1323 = vmul.f32 %v1303, %v1319
        %v1324 = vld [vmem:[#allocation2 + $0x68] sm:$0xff]
        %v1326 = vsel %vm849, %v1320, 0
        %v1329 = vsel %vm849, %v1321, 0
        %v1332 = vsel %vm849, %v1322, 0
        %v1335 = vsel %vm849, %v1323, 0
        %1337 = vmatprep.subr.mxu0 0.0
        %1338 = vmatpush1.msra.mxu0 %v1324
        %1339 = vmatprep.subr.mxu0 0.0
        %1340 = vmatpush1.msra.mxu0 0.0
        %1341 = vmatprep.subr.mxu0 0.0
        %1342 = vmatpush1.msra.mxu0 0.0
        %1343 = vmatprep.subr.mxu0 0.0
        %1344 = vmatpush1.msra.mxu0 0.0
        %1345 = vmatprep.subr.mxu0 0.0
        %1346 = vmatpush1.msra.mxu0 0.0
        %1347 = vmatprep.subr.mxu0 0.0
        %1348 = vmatpush1.msra.mxu0 0.0
        %1349 = vmatprep.subr.mxu0 0.0
        %1350 = vmatpush1.msra.mxu0 0.0
        %1351 = vmatprep.subr.mxu0 0.0
        %1352 = vmatpush1.msra.mxu0 0.0
        %1353 = vmatprep.subr.mxu0 0.0
        %1354 = vmatpush1.msra.mxu0 0.0
        %1355 = vmatprep.subr.mxu0 0.0
        %1356 = vmatpush1.msra.mxu0 0.0
        %1357 = vmatprep.subr.mxu0 0.0
        %1358 = vmatpush1.msra.mxu0 0.0
        %1359 = vmatprep.subr.mxu0 0.0
        %1360 = vmatpush1.msra.mxu0 0.0
        %1361 = vmatprep.subr.mxu0 0.0
        %1362 = vmatpush1.msra.mxu0 0.0
        %1363 = vmatprep.subr.mxu0 0.0
        %1364 = vmatpush1.msra.mxu0 0.0
        %1365 = vmatprep.subr.mxu0 0.0
        %1366 = vmatpush1.msra.mxu0 0.0
        %1367 = vmatprep.subr.mxu0 0.0
        %1368 = vmatpush1.msra.mxu0 0.0
        %1369 = vmatprep.subr.mxu0 0.0
        %1370 = vmatpush1.msra.mxu0 0.0
        %1371 = vmatprep.subr.mxu0 0.0
        %1372 = vmatpush1.msra.mxu0 0.0
        %1373 = vmatprep.subr.mxu0 0.0
        %1374 = vmatpush1.msra.mxu0 0.0
        %1375 = vmatprep.subr.mxu0 0.0
        %1376 = vmatpush1.msra.mxu0 0.0
        %1377 = vmatprep.subr.mxu0 0.0
        %1378 = vmatpush1.msra.mxu0 0.0
        %1379 = vmatprep.subr.mxu0 0.0
        %1380 = vmatpush1.msra.mxu0 0.0
        %1381 = vmatprep.subr.mxu0 0.0
        %1382 = vmatpush1.msra.mxu0 0.0
        %1383 = vmatprep.subr.mxu0 0.0
        %1384 = vmatpush1.msra.mxu0 0.0
        %1385 = vmatprep.subr.mxu0 0.0
        %1386 = vmatpush1.msra.mxu0 0.0
        %1387 = vmatprep.subr.mxu0 0.0
        %1388 = vmatpush1.msra.mxu0 0.0
        %1389 = vmatprep.subr.mxu0 0.0
        %1390 = vmatpush1.msra.mxu0 0.0
        %1391 = vmatprep.subr.mxu0 0.0
        %1392 = vmatpush1.msra.mxu0 0.0
        %1393 = vmatprep.subr.mxu0 0.0
        %1394 = vmatpush1.msra.mxu0 0.0
        %1395 = vmatprep.subr.mxu0 0.0
        %1396 = vmatpush1.msra.mxu0 0.0
        %1397 = vmatprep.subr.mxu0 0.0
        %1398 = vmatpush1.msra.mxu0 0.0
        %1399 = vmatprep.subr.mxu0 0.0
        %1400 = vmatpush1.msra.mxu0 0.0
        %1401 = vmatprep.mubr.f32.mxu0 0.0
        %1402 = vmatmul.mubr.f32.gmra.mrb[0].mxu0 %v1326
        %v1403 = vpop.f32.mrb[0].mxu0
        %v1404 = vadd.f32 0.0, %v1403
        %v1405 = vpop.f32.mrb[0].mxu0
        %1406 = vmatprep.mubr.f32.mxu0 0.0
        %1407 = vmatmul.mubr.f32.gmra.mrb[0].mxu0 %v1329
        %v1408 = vpop.f32.mrb[0].mxu0
        %v1409 = vadd.f32 0.0, %v1408
        %v1410 = vpop.f32.mrb[0].mxu0
        %1411 = vmatprep.mubr.f32.mxu0 0.0
        %1412 = vmatmul.mubr.f32.gmra.mrb[0].mxu0 %v1332
        %v1413 = vpop.f32.mrb[0].mxu0
        %v1414 = vadd.f32 0.0, %v1413
        %v1415 = vpop.f32.mrb[0].mxu0
        %1416 = vmatprep.mubr.f32.mxu0 0.0
        %1417 = vmatmul.mubr.f32.gmra.mrb[0].mxu0 %v1335
        %v1418 = vpop.f32.mrb[0].mxu0
        %v1419 = vadd.f32 0.0, %v1418
        %v1420 = vpop.f32.mrb[0].mxu0
        %1421 = vdwg.mxu0
        %1426 = vrot.lane.b32.xlu0 %v1404, 120
        %v1427 = vpop.permute.xlu0 %1426
        %1428 = vrot.lane.b32.xlu0 %v1409, 120
        %v1429 = vpop.permute.xlu0 %1428
        %1430 = vrot.lane.b32.xlu0 %v1414, 120
        %v1431 = vpop.permute.xlu0 %1430
        %1432 = vrot.lane.b32.xlu0 %v1419, 120
        %v1433 = vpop.permute.xlu0 %1432
        %v1438 = vmul.f32 %v812, %v1427
        %v1439 = vmul.f32 %v817, %v1429
        %v1440 = vmul.f32 %v822, %v1431
        %v1441 = vmul.f32 %v827, %v1433
        %v1442 = vadd.f32 %v1404, %v1438
        %v1443 = vadd.f32 %v1409, %v1439
        %v1444 = vadd.f32 %v1414, %v1440
        %v1445 = vadd.f32 %v1419, %v1441
        %v1446 = vld [vmem:[#allocation2 + $0x80] sm:$0xff]
        %v1447 = vld [vmem:[#allocation2 + $0x88] sm:$0x1]
        %v1448 = vlaneseq
        %v1449 = vshrl.u32 %v1448, 7
        %v1450 = vsub.s32 0, %v1449
        %v1451 = vrot.slane %v1447, %v1450
        %v1453 = vsel %vm849, %v1442, 0
        %v1456 = vsel %vm849, %v1443, 0
        %v1459 = vsel %vm849, %v1444, 0
        %v1462 = vsel %vm849, %v1445, 0
        %1464 = vmatprep.subr.mxu0 0.0
        %1465 = vmatpush1.msra.mxu0 %v1446
        %1466 = vmatprep.subr.mxu0 0.0
        %1467 = vmatpush1.msra.mxu0 0.0
        %1468 = vmatprep.subr.mxu0 0.0
        %1469 = vmatpush1.msra.mxu0 0.0
        %1470 = vmatprep.subr.mxu0 0.0
        %1471 = vmatpush1.msra.mxu0 0.0
        %1472 = vmatprep.subr.mxu0 0.0
        %1473 = vmatpush1.msra.mxu0 0.0
        %1474 = vmatprep.subr.mxu0 0.0
        %1475 = vmatpush1.msra.mxu0 0.0
        %1476 = vmatprep.subr.mxu0 0.0
        %1477 = vmatpush1.msra.mxu0 0.0
        %1478 = vmatprep.subr.mxu0 0.0
        %1479 = vmatpush1.msra.mxu0 0.0
        %1480 = vmatprep.subr.mxu0 0.0
        %1481 = vmatpush1.msra.mxu0 0.0
        %1482 = vmatprep.subr.mxu0 0.0
        %1483 = vmatpush1.msra.mxu0 0.0
        %1484 = vmatprep.subr.mxu0 0.0
        %1485 = vmatpush1.msra.mxu0 0.0
        %1486 = vmatprep.subr.mxu0 0.0
        %1487 = vmatpush1.msra.mxu0 0.0
        %1488 = vmatprep.subr.mxu0 0.0
        %1489 = vmatpush1.msra.mxu0 0.0
        %1490 = vmatprep.subr.mxu0 0.0
        %1491 = vmatpush1.msra.mxu0 0.0
        %1492 = vmatprep.subr.mxu0 0.0
        %1493 = vmatpush1.msra.mxu0 0.0
        %1494 = vmatprep.subr.mxu0 0.0
        %1495 = vmatpush1.msra.mxu0 0.0
        %1496 = vmatprep.subr.mxu0 0.0
        %1497 = vmatpush1.msra.mxu0 0.0
        %1498 = vmatprep.subr.mxu0 0.0
        %1499 = vmatpush1.msra.mxu0 0.0
        %1500 = vmatprep.subr.mxu0 0.0
        %1501 = vmatpush1.msra.mxu0 0.0
        %1502 = vmatprep.subr.mxu0 0.0
        %1503 = vmatpush1.msra.mxu0 0.0
        %1504 = vmatprep.subr.mxu0 0.0
        %1505 = vmatpush1.msra.mxu0 0.0
        %1506 = vmatprep.subr.mxu0 0.0
        %1507 = vmatpush1.msra.mxu0 0.0
        %1508 = vmatprep.subr.mxu0 0.0
        %1509 = vmatpush1.msra.mxu0 0.0
        %1510 = vmatprep.subr.mxu0 0.0
        %1511 = vmatpush1.msra.mxu0 0.0
        %1512 = vmatprep.subr.mxu0 0.0
        %1513 = vmatpush1.msra.mxu0 0.0
        %1514 = vmatprep.subr.mxu0 0.0
        %1515 = vmatpush1.msra.mxu0 0.0
        %1516 = vmatprep.subr.mxu0 0.0
        %1517 = vmatpush1.msra.mxu0 0.0
        %1518 = vmatprep.subr.mxu0 0.0
        %1519 = vmatpush1.msra.mxu0 0.0
        %1520 = vmatprep.subr.mxu0 0.0
        %1521 = vmatpush1.msra.mxu0 0.0
        %1522 = vmatprep.subr.mxu0 0.0
        %1523 = vmatpush1.msra.mxu0 0.0
        %1524 = vmatprep.subr.mxu0 0.0
        %1525 = vmatpush1.msra.mxu0 0.0
        %1526 = vmatprep.subr.mxu0 0.0
        %1527 = vmatpush1.msra.mxu0 0.0
        %1528 = vmatprep.mubr.f32.mxu0 0.0
        %1529 = vmatmul.mubr.f32.gmra.mrb[0].mxu0 %v1453
        %v1530 = vpop.f32.mrb[0].mxu0
        %v1531 = vadd.f32 %v1451, %v1530
        %v1532 = vpop.f32.mrb[0].mxu0
        %1533 = vmatprep.mubr.f32.mxu0 0.0
        %1534 = vmatmul.mubr.f32.gmra.mrb[0].mxu0 %v1456
        %v1535 = vpop.f32.mrb[0].mxu0
        %v1536 = vadd.f32 %v1451, %v1535
        %v1537 = vpop.f32.mrb[0].mxu0
        %1538 = vmatprep.mubr.f32.mxu0 0.0
        %1539 = vmatmul.mubr.f32.gmra.mrb[0].mxu0 %v1459
        %v1540 = vpop.f32.mrb[0].mxu0
        %v1541 = vadd.f32 %v1451, %v1540
        %v1542 = vpop.f32.mrb[0].mxu0
        %1543 = vmatprep.mubr.f32.mxu0 0.0
        %1544 = vmatmul.mubr.f32.gmra.mrb[0].mxu0 %v1462
        %v1545 = vpop.f32.mrb[0].mxu0
        %v1546 = vadd.f32 %v1451, %v1545
        %v1547 = vpop.f32.mrb[0].mxu0
        %1548 = vdwg.mxu0
        %v1549 = vmax.f32 %v1531, 0.0
        %v1550 = vmax.f32 %v1536, 0.0
        %v1551 = vmax.f32 %v1541, 0.0
        %v1552 = vmax.f32 %v1546, 0.0
        %vm1553 = vcmp.ne.f32.partialorder %v1531, %v1531
        %vm1554 = vcmp.ne.f32.partialorder %v1536, %v1536
        %vm1555 = vcmp.ne.f32.partialorder %v1541, %v1541
        %vm1556 = vcmp.ne.f32.partialorder %v1546, %v1546
        %v1557 = vadd.f32 %v1531, 0.0
        %v1558 = vadd.f32 %v1536, 0.0
        %v1559 = vadd.f32 %v1541, 0.0
        %v1560 = vadd.f32 %v1546, 0.0
        %v1561 = vand.u32 2147483647, %v1531
        %v1562 = vand.u32 2147483647, %v1536
        %v1563 = vand.u32 2147483647, %v1541
        %v1564 = vand.u32 2147483647, %v1546
        %v1565 = vsub.f32 0.0, %v1561
        %v1566 = vsub.f32 0.0, %v1562
        %v1567 = vsub.f32 0.0, %v1563
        %v1568 = vsub.f32 0.0, %v1564
        %v1569 = vmul.f32 %v1565, 1.442695
        %v1570 = vpow.pop %v1569
        %v1571 = vmul.f32 %v1566, 1.442695
        %v1572 = vpow.pop %v1571
        %v1573 = vmul.f32 %v1567, 1.442695
        %v1574 = vpow.pop %v1573
        %v1575 = vmul.f32 %v1568, 1.442695
        %v1576 = vpow.pop %v1575
        %v1577 = vadd.f32 %v1570, 1.0
        %v1578 = vlog2.pop %v1577
        %v1579 = vmul.f32 %v1578, 0.6931472
        %v1580 = vmul.f32 -0.5, %v1570
        %v1581 = vadd.f32 %v1580, 1.0
        %v1582 = vmul.f32 %v1581, %v1570
        %v1583 = vand.u32 2147483647, %v1570
        %vm1584 = vcmp.lt.f32.partialorder %v1583, 0.0004427343
        %v1585 = vsel %vm1584, %v1582, %v1579
        %v1586 = vadd.f32 %v1572, 1.0
        %v1587 = vlog2.pop %v1586
        %v1588 = vmul.f32 %v1587, 0.6931472
        %v1589 = vmul.f32 -0.5, %v1572
        %v1590 = vadd.f32 %v1589, 1.0
        %v1591 = vmul.f32 %v1590, %v1572
        %v1592 = vand.u32 2147483647, %v1572
        %vm1593 = vcmp.lt.f32.partialorder %v1592, 0.0004427343
        %v1594 = vsel %vm1593, %v1591, %v1588
        %v1595 = vadd.f32 %v1574, 1.0
        %v1596 = vlog2.pop %v1595
        %v1597 = vmul.f32 %v1596, 0.6931472
        %v1598 = vmul.f32 -0.5, %v1574
        %v1599 = vadd.f32 %v1598, 1.0
        %v1600 = vmul.f32 %v1599, %v1574
        %v1601 = vand.u32 2147483647, %v1574
        %vm1602 = vcmp.lt.f32.partialorder %v1601, 0.0004427343
        %v1603 = vsel %vm1602, %v1600, %v1597
        %v1604 = vadd.f32 %v1576, 1.0
        %v1605 = vlog2.pop %v1604
        %v1606 = vmul.f32 %v1605, 0.6931472
        %v1607 = vmul.f32 -0.5, %v1576
        %v1608 = vadd.f32 %v1607, 1.0
        %v1609 = vmul.f32 %v1608, %v1576
        %v1610 = vand.u32 2147483647, %v1576
        %vm1611 = vcmp.lt.f32.partialorder %v1610, 0.0004427343
        %v1612 = vsel %vm1611, %v1609, %v1606
        %v1613 = vadd.f32 %v1549, %v1585
        %v1614 = vadd.f32 %v1550, %v1594
        %v1615 = vadd.f32 %v1551, %v1603
        %v1616 = vadd.f32 %v1552, %v1612
        %v1617 = vsel %vm1553, %v1557, %v1613
        %v1618 = vsel %vm1554, %v1558, %v1614
        %v1619 = vsel %vm1555, %v1559, %v1615
        %v1620 = vsel %vm1556, %v1560, %v1616
        %v1621 = vld [vmem:[#allocation2 + $0x90] sm:$0xff]
        %v1622 = vld [vmem:[#allocation2 + $0x98] sm:$0x1]
        %v1623 = vlaneseq
        %v1624 = vshrl.u32 %v1623, 7
        %v1625 = vsub.s32 0, %v1624
        %v1626 = vrot.slane %v1622, %v1625
        %v1628 = vsel %vm849, %v1617, 0
        %v1631 = vsel %vm849, %v1618, 0
        %v1634 = vsel %vm849, %v1619, 0
        %v1637 = vsel %vm849, %v1620, 0
        %1639 = vmatprep.subr.mxu0 0.0
        %1640 = vmatpush1.msra.mxu0 %v1621
        %1641 = vmatprep.subr.mxu0 0.0
        %1642 = vmatpush1.msra.mxu0 0.0
        %1643 = vmatprep.subr.mxu0 0.0
        %1644 = vmatpush1.msra.mxu0 0.0
        %1645 = vmatprep.subr.mxu0 0.0
        %1646 = vmatpush1.msra.mxu0 0.0
        %1647 = vmatprep.subr.mxu0 0.0
        %1648 = vmatpush1.msra.mxu0 0.0
        %1649 = vmatprep.subr.mxu0 0.0
        %1650 = vmatpush1.msra.mxu0 0.0
        %1651 = vmatprep.subr.mxu0 0.0
        %1652 = vmatpush1.msra.mxu0 0.0
        %1653 = vmatprep.subr.mxu0 0.0
        %1654 = vmatpush1.msra.mxu0 0.0
        %1655 = vmatprep.subr.mxu0 0.0
        %1656 = vmatpush1.msra.mxu0 0.0
        %1657 = vmatprep.subr.mxu0 0.0
        %1658 = vmatpush1.msra.mxu0 0.0
        %1659 = vmatprep.subr.mxu0 0.0
        %1660 = vmatpush1.msra.mxu0 0.0
        %1661 = vmatprep.subr.mxu0 0.0
        %1662 = vmatpush1.msra.mxu0 0.0
        %1663 = vmatprep.subr.mxu0 0.0
        %1664 = vmatpush1.msra.mxu0 0.0
        %1665 = vmatprep.subr.mxu0 0.0
        %1666 = vmatpush1.msra.mxu0 0.0
        %1667 = vmatprep.subr.mxu0 0.0
        %1668 = vmatpush1.msra.mxu0 0.0
        %1669 = vmatprep.subr.mxu0 0.0
        %1670 = vmatpush1.msra.mxu0 0.0
        %1671 = vmatprep.subr.mxu0 0.0
        %1672 = vmatpush1.msra.mxu0 0.0
        %1673 = vmatprep.subr.mxu0 0.0
        %1674 = vmatpush1.msra.mxu0 0.0
        %1675 = vmatprep.subr.mxu0 0.0
        %1676 = vmatpush1.msra.mxu0 0.0
        %1677 = vmatprep.subr.mxu0 0.0
        %1678 = vmatpush1.msra.mxu0 0.0
        %1679 = vmatprep.subr.mxu0 0.0
        %1680 = vmatpush1.msra.mxu0 0.0
        %1681 = vmatprep.subr.mxu0 0.0
        %1682 = vmatpush1.msra.mxu0 0.0
        %1683 = vmatprep.subr.mxu0 0.0
        %1684 = vmatpush1.msra.mxu0 0.0
        %1685 = vmatprep.subr.mxu0 0.0
        %1686 = vmatpush1.msra.mxu0 0.0
        %1687 = vmatprep.subr.mxu0 0.0
        %1688 = vmatpush1.msra.mxu0 0.0
        %1689 = vmatprep.subr.mxu0 0.0
        %1690 = vmatpush1.msra.mxu0 0.0
        %1691 = vmatprep.subr.mxu0 0.0
        %1692 = vmatpush1.msra.mxu0 0.0
        %1693 = vmatprep.subr.mxu0 0.0
        %1694 = vmatpush1.msra.mxu0 0.0
        %1695 = vmatprep.subr.mxu0 0.0
        %1696 = vmatpush1.msra.mxu0 0.0
        %1697 = vmatprep.subr.mxu0 0.0
        %1698 = vmatpush1.msra.mxu0 0.0
        %1699 = vmatprep.subr.mxu0 0.0
        %1700 = vmatpush1.msra.mxu0 0.0
        %1701 = vmatprep.subr.mxu0 0.0
        %1702 = vmatpush1.msra.mxu0 0.0
        %1703 = vmatprep.mubr.f32.mxu0 0.0
        %1704 = vmatmul.mubr.f32.gmra.mrb[0].mxu0 %v1628
        %v1705 = vpop.f32.mrb[0].mxu0
        %v1706 = vadd.f32 %v1626, %v1705
        %v1707 = vpop.f32.mrb[0].mxu0
        %1708 = vmatprep.mubr.f32.mxu0 0.0
        %1709 = vmatmul.mubr.f32.gmra.mrb[0].mxu0 %v1631
        %v1710 = vpop.f32.mrb[0].mxu0
        %v1711 = vadd.f32 %v1626, %v1710
        %v1712 = vpop.f32.mrb[0].mxu0
        %1713 = vmatprep.mubr.f32.mxu0 0.0
        %1714 = vmatmul.mubr.f32.gmra.mrb[0].mxu0 %v1634
        %v1715 = vpop.f32.mrb[0].mxu0
        %v1716 = vadd.f32 %v1626, %v1715
        %v1717 = vpop.f32.mrb[0].mxu0
        %1718 = vmatprep.mubr.f32.mxu0 0.0
        %1719 = vmatmul.mubr.f32.gmra.mrb[0].mxu0 %v1637
        %v1720 = vpop.f32.mrb[0].mxu0
        %v1721 = vadd.f32 %v1626, %v1720
        %v1722 = vpop.f32.mrb[0].mxu0
        %1723 = vdwg.mxu0
        %v1724 = vld [vmem:[#allocation2 + $0xa8] sm:$0xff]
        %v1725 = vld [vmem:[#allocation2 + $0xb0] sm:$0x1]
        %v1726 = vlaneseq
        %v1727 = vshrl.u32 %v1726, 7
        %v1728 = vsub.s32 0, %v1727
        %v1729 = vrot.slane %v1725, %v1728
        %v1731 = vsel %vm849, %v1706, 0
        %v1734 = vsel %vm849, %v1711, 0
        %v1737 = vsel %vm849, %v1716, 0
        %v1740 = vsel %vm849, %v1721, 0
        %1742 = vmatprep.subr.mxu0 0.0
        %1743 = vmatpush1.msra.mxu0 %v1724
        %1744 = vmatprep.subr.mxu0 0.0
        %1745 = vmatpush1.msra.mxu0 0.0
        %1746 = vmatprep.subr.mxu0 0.0
        %1747 = vmatpush1.msra.mxu0 0.0
        %1748 = vmatprep.subr.mxu0 0.0
        %1749 = vmatpush1.msra.mxu0 0.0
        %1750 = vmatprep.subr.mxu0 0.0
        %1751 = vmatpush1.msra.mxu0 0.0
        %1752 = vmatprep.subr.mxu0 0.0
        %1753 = vmatpush1.msra.mxu0 0.0
        %1754 = vmatprep.subr.mxu0 0.0
        %1755 = vmatpush1.msra.mxu0 0.0
        %1756 = vmatprep.subr.mxu0 0.0
        %1757 = vmatpush1.msra.mxu0 0.0
        %1758 = vmatprep.subr.mxu0 0.0
        %1759 = vmatpush1.msra.mxu0 0.0
        %1760 = vmatprep.subr.mxu0 0.0
        %1761 = vmatpush1.msra.mxu0 0.0
        %1762 = vmatprep.subr.mxu0 0.0
        %1763 = vmatpush1.msra.mxu0 0.0
        %1764 = vmatprep.subr.mxu0 0.0
        %1765 = vmatpush1.msra.mxu0 0.0
        %1766 = vmatprep.subr.mxu0 0.0
        %1767 = vmatpush1.msra.mxu0 0.0
        %1768 = vmatprep.subr.mxu0 0.0
        %1769 = vmatpush1.msra.mxu0 0.0
        %1770 = vmatprep.subr.mxu0 0.0
        %1771 = vmatpush1.msra.mxu0 0.0
        %1772 = vmatprep.subr.mxu0 0.0
        %1773 = vmatpush1.msra.mxu0 0.0
        %1774 = vmatprep.subr.mxu0 0.0
        %1775 = vmatpush1.msra.mxu0 0.0
        %1776 = vmatprep.subr.mxu0 0.0
        %1777 = vmatpush1.msra.mxu0 0.0
        %1778 = vmatprep.subr.mxu0 0.0
        %1779 = vmatpush1.msra.mxu0 0.0
        %1780 = vmatprep.subr.mxu0 0.0
        %1781 = vmatpush1.msra.mxu0 0.0
        %1782 = vmatprep.subr.mxu0 0.0
        %1783 = vmatpush1.msra.mxu0 0.0
        %1784 = vmatprep.subr.mxu0 0.0
        %1785 = vmatpush1.msra.mxu0 0.0
        %1786 = vmatprep.subr.mxu0 0.0
        %1787 = vmatpush1.msra.mxu0 0.0
        %1788 = vmatprep.subr.mxu0 0.0
        %1789 = vmatpush1.msra.mxu0 0.0
        %1790 = vmatprep.subr.mxu0 0.0
        %1791 = vmatpush1.msra.mxu0 0.0
        %1792 = vmatprep.subr.mxu0 0.0
        %1793 = vmatpush1.msra.mxu0 0.0
        %1794 = vmatprep.subr.mxu0 0.0
        %1795 = vmatpush1.msra.mxu0 0.0
        %1796 = vmatprep.subr.mxu0 0.0
        %1797 = vmatpush1.msra.mxu0 0.0
        %1798 = vmatprep.subr.mxu0 0.0
        %1799 = vmatpush1.msra.mxu0 0.0
        %1800 = vmatprep.subr.mxu0 0.0
        %1801 = vmatpush1.msra.mxu0 0.0
        %1802 = vmatprep.subr.mxu0 0.0
        %1803 = vmatpush1.msra.mxu0 0.0
        %1804 = vmatprep.subr.mxu0 0.0
        %1805 = vmatpush1.msra.mxu0 0.0
        %1806 = vmatprep.mubr.f32.mxu0 0.0
        %1807 = vmatmul.mubr.f32.gmra.mrb[0].mxu0 %v1731
        %v1808 = vpop.f32.mrb[0].mxu0
        %v1809 = vadd.f32 %v1729, %v1808
        %v1810 = vpop.f32.mrb[0].mxu0
        %1811 = vmatprep.mubr.f32.mxu0 0.0
        %1812 = vmatmul.mubr.f32.gmra.mrb[0].mxu0 %v1734
        %v1813 = vpop.f32.mrb[0].mxu0
        %v1814 = vadd.f32 %v1729, %v1813
        %v1815 = vpop.f32.mrb[0].mxu0
        %1816 = vmatprep.mubr.f32.mxu0 0.0
        %1817 = vmatmul.mubr.f32.gmra.mrb[0].mxu0 %v1737
        %v1818 = vpop.f32.mrb[0].mxu0
        %v1819 = vadd.f32 %v1729, %v1818
        %v1820 = vpop.f32.mrb[0].mxu0
        %1821 = vmatprep.mubr.f32.mxu0 0.0
        %1822 = vmatmul.mubr.f32.gmra.mrb[0].mxu0 %v1740
        %v1823 = vpop.f32.mrb[0].mxu0
        %v1824 = vadd.f32 %v1729, %v1823
        %v1825 = vpop.f32.mrb[0].mxu0
        %1826 = vdwg.mxu0
        %v1827 = vld [vmem:[#allocation2 + $0xb8] sm:$0xff]
        %v1828 = vld [vmem:[#allocation2 + $0xc0] sm:$0x1]
        %v1829 = vlaneseq
        %v1830 = vshrl.u32 %v1829, 7
        %v1831 = vsub.s32 0, %v1830
        %v1832 = vrot.slane %v1828, %v1831
        %1833 = vmatprep.subr.mxu0 0.0
        %1834 = vmatpush1.msra.mxu0 %v1827
        %1835 = vmatprep.subr.mxu0 0.0
        %1836 = vmatpush1.msra.mxu0 0.0
        %1837 = vmatprep.subr.mxu0 0.0
        %1838 = vmatpush1.msra.mxu0 0.0
        %1839 = vmatprep.subr.mxu0 0.0
        %1840 = vmatpush1.msra.mxu0 0.0
        %1841 = vmatprep.subr.mxu0 0.0
        %1842 = vmatpush1.msra.mxu0 0.0
        %1843 = vmatprep.subr.mxu0 0.0
        %1844 = vmatpush1.msra.mxu0 0.0
        %1845 = vmatprep.subr.mxu0 0.0
        %1846 = vmatpush1.msra.mxu0 0.0
        %1847 = vmatprep.subr.mxu0 0.0
        %1848 = vmatpush1.msra.mxu0 0.0
        %1849 = vmatprep.subr.mxu0 0.0
        %1850 = vmatpush1.msra.mxu0 0.0
        %1851 = vmatprep.subr.mxu0 0.0
        %1852 = vmatpush1.msra.mxu0 0.0
        %1853 = vmatprep.subr.mxu0 0.0
        %1854 = vmatpush1.msra.mxu0 0.0
        %1855 = vmatprep.subr.mxu0 0.0
        %1856 = vmatpush1.msra.mxu0 0.0
        %1857 = vmatprep.subr.mxu0 0.0
        %1858 = vmatpush1.msra.mxu0 0.0
        %1859 = vmatprep.subr.mxu0 0.0
        %1860 = vmatpush1.msra.mxu0 0.0
        %1861 = vmatprep.subr.mxu0 0.0
        %1862 = vmatpush1.msra.mxu0 0.0
        %1863 = vmatprep.subr.mxu0 0.0
        %1864 = vmatpush1.msra.mxu0 0.0
        %1865 = vmatprep.subr.mxu0 0.0
        %1866 = vmatpush1.msra.mxu0 0.0
        %1867 = vmatprep.subr.mxu0 0.0
        %1868 = vmatpush1.msra.mxu0 0.0
        %1869 = vmatprep.subr.mxu0 0.0
        %1870 = vmatpush1.msra.mxu0 0.0
        %1871 = vmatprep.subr.mxu0 0.0
        %1872 = vmatpush1.msra.mxu0 0.0
        %1873 = vmatprep.subr.mxu0 0.0
        %1874 = vmatpush1.msra.mxu0 0.0
        %1875 = vmatprep.subr.mxu0 0.0
        %1876 = vmatpush1.msra.mxu0 0.0
        %1877 = vmatprep.subr.mxu0 0.0
        %1878 = vmatpush1.msra.mxu0 0.0
        %1879 = vmatprep.subr.mxu0 0.0
        %1880 = vmatpush1.msra.mxu0 0.0
        %1881 = vmatprep.subr.mxu0 0.0
        %1882 = vmatpush1.msra.mxu0 0.0
        %1883 = vmatprep.subr.mxu0 0.0
        %1884 = vmatpush1.msra.mxu0 0.0
        %1885 = vmatprep.subr.mxu0 0.0
        %1886 = vmatpush1.msra.mxu0 0.0
        %1887 = vmatprep.subr.mxu0 0.0
        %1888 = vmatpush1.msra.mxu0 0.0
        %1889 = vmatprep.subr.mxu0 0.0
        %1890 = vmatpush1.msra.mxu0 0.0
        %1891 = vmatprep.subr.mxu0 0.0
        %1892 = vmatpush1.msra.mxu0 0.0
        %1893 = vmatprep.subr.mxu0 0.0
        %1894 = vmatpush1.msra.mxu0 0.0
        %1895 = vmatprep.subr.mxu0 0.0
        %1896 = vmatpush1.msra.mxu0 0.0
        %1897 = vmatprep.mubr.f32.mxu0 0.0
        %1898 = vmatmul.mubr.f32.gmra.mrb[0].mxu0 %v1731
        %v1899 = vpop.f32.mrb[0].mxu0
        %v1900 = vadd.f32 %v1832, %v1899
        %v1901 = vpop.f32.mrb[0].mxu0
        %1902 = vmatprep.mubr.f32.mxu0 0.0
        %1903 = vmatmul.mubr.f32.gmra.mrb[0].mxu0 %v1734
        %v1904 = vpop.f32.mrb[0].mxu0
        %v1905 = vadd.f32 %v1832, %v1904
        %v1906 = vpop.f32.mrb[0].mxu0
        %1907 = vmatprep.mubr.f32.mxu0 0.0
        %1908 = vmatmul.mubr.f32.gmra.mrb[0].mxu0 %v1737
        %v1909 = vpop.f32.mrb[0].mxu0
        %v1910 = vadd.f32 %v1832, %v1909
        %v1911 = vpop.f32.mrb[0].mxu0
        %1912 = vmatprep.mubr.f32.mxu0 0.0
        %1913 = vmatmul.mubr.f32.gmra.mrb[0].mxu0 %v1740
        %v1914 = vpop.f32.mrb[0].mxu0
        %v1915 = vadd.f32 %v1832, %v1914
        %v1916 = vpop.f32.mrb[0].mxu0
        %1917 = vdwg.mxu0
        %v1918 = vld [vmem:[#allocation2 + $0xa0] sm:$0xff]
        %v1920 = vsel %vm849, %v1918, 0
        %v1923 = vsel %vm849, %v1809, 0
        %1925 = vmatprep.subr.mxu0 0.0
        %1926 = vmatpush1.xpose.msra.mxu0 %v1923
        %1927 = vmatprep.subr.mxu0 0.0
        %1928 = vmatpush1.xpose.msra.mxu0 0.0
        %1929 = vmatprep.subr.mxu0 0.0
        %1930 = vmatpush1.xpose.msra.mxu0 0.0
        %1931 = vmatprep.subr.mxu0 0.0
        %1932 = vmatpush1.xpose.msra.mxu0 0.0
        %1933 = vmatprep.subr.mxu0 0.0
        %1934 = vmatpush1.xpose.msra.mxu0 0.0
        %1935 = vmatprep.subr.mxu0 0.0
        %1936 = vmatpush1.xpose.msra.mxu0 0.0
        %1937 = vmatprep.subr.mxu0 0.0
        %1938 = vmatpush1.xpose.msra.mxu0 0.0
        %1939 = vmatprep.subr.mxu0 0.0
        %1940 = vmatpush1.xpose.msra.mxu0 0.0
        %1941 = vmatprep.subr.mxu0 0.0
        %1942 = vmatpush1.xpose.msra.mxu0 0.0
        %1943 = vmatprep.subr.mxu0 0.0
        %1944 = vmatpush1.xpose.msra.mxu0 0.0
        %1945 = vmatprep.subr.mxu0 0.0
        %1946 = vmatpush1.xpose.msra.mxu0 0.0
        %1947 = vmatprep.subr.mxu0 0.0
        %1948 = vmatpush1.xpose.msra.mxu0 0.0
        %1949 = vmatprep.subr.mxu0 0.0
        %1950 = vmatpush1.xpose.msra.mxu0 0.0
        %1951 = vmatprep.subr.mxu0 0.0
        %1952 = vmatpush1.xpose.msra.mxu0 0.0
        %1953 = vmatprep.subr.mxu0 0.0
        %1954 = vmatpush1.xpose.msra.mxu0 0.0
        %1955 = vmatprep.subr.mxu0 0.0
        %1956 = vmatpush1.xpose.msra.mxu0 0.0
        %1957 = vmatprep.subr.mxu0 0.0
        %1958 = vmatpush1.xpose.msra.mxu0 0.0
        %1959 = vmatprep.subr.mxu0 0.0
        %1960 = vmatpush1.xpose.msra.mxu0 0.0
        %1961 = vmatprep.subr.mxu0 0.0
        %1962 = vmatpush1.xpose.msra.mxu0 0.0
        %1963 = vmatprep.subr.mxu0 0.0
        %1964 = vmatpush1.xpose.msra.mxu0 0.0
        %1965 = vmatprep.subr.mxu0 0.0
        %1966 = vmatpush1.xpose.msra.mxu0 0.0
        %1967 = vmatprep.subr.mxu0 0.0
        %1968 = vmatpush1.xpose.msra.mxu0 0.0
        %1969 = vmatprep.subr.mxu0 0.0
        %1970 = vmatpush1.xpose.msra.mxu0 0.0
        %1971 = vmatprep.subr.mxu0 0.0
        %1972 = vmatpush1.xpose.msra.mxu0 0.0
        %1973 = vmatprep.subr.mxu0 0.0
        %1974 = vmatpush1.xpose.msra.mxu0 0.0
        %1975 = vmatprep.subr.mxu0 0.0
        %1976 = vmatpush1.xpose.msra.mxu0 0.0
        %1977 = vmatprep.subr.mxu0 0.0
        %1978 = vmatpush1.xpose.msra.mxu0 0.0
        %1979 = vmatprep.subr.mxu0 0.0
        %1980 = vmatpush1.xpose.msra.mxu0 0.0
        %1981 = vmatprep.subr.mxu0 0.0
        %1982 = vmatpush1.xpose.msra.mxu0 0.0
        %1983 = vmatprep.subr.mxu0 0.0
        %1984 = vmatpush1.xpose.msra.mxu0 0.0
        %1985 = vmatprep.subr.mxu0 0.0
        %1986 = vmatpush1.xpose.msra.mxu0 0.0
        %1987 = vmatprep.subr.mxu0 0.0
        %1988 = vmatpush1.xpose.msra.mxu0 0.0
        %1989 = vmatprep.mubr.f32.mxu0 0.0
        %1990 = vmatmul.mubr.f32.gmra.mrb[0].mxu0 %v1920
        %v1991 = vpop.f32.mrb[0].mxu0
        %v1992 = vadd.f32 0.0, %v1991
        %v1993 = vpop.f32.mrb[0].mxu0
        %1994 = vdwg.mxu0
        %v1996 = vsel %vm849, %v1814, 0
        %1998 = vmatprep.subr.mxu0 0.0
        %1999 = vmatpush1.xpose.msra.mxu0 %v1996
        %2000 = vmatprep.subr.mxu0 0.0
        %2001 = vmatpush1.xpose.msra.mxu0 0.0
        %2002 = vmatprep.subr.mxu0 0.0
        %2003 = vmatpush1.xpose.msra.mxu0 0.0
        %2004 = vmatprep.subr.mxu0 0.0
        %2005 = vmatpush1.xpose.msra.mxu0 0.0
        %2006 = vmatprep.subr.mxu0 0.0
        %2007 = vmatpush1.xpose.msra.mxu0 0.0
        %2008 = vmatprep.subr.mxu0 0.0
        %2009 = vmatpush1.xpose.msra.mxu0 0.0
        %2010 = vmatprep.subr.mxu0 0.0
        %2011 = vmatpush1.xpose.msra.mxu0 0.0
        %2012 = vmatprep.subr.mxu0 0.0
        %2013 = vmatpush1.xpose.msra.mxu0 0.0
        %2014 = vmatprep.subr.mxu0 0.0
        %2015 = vmatpush1.xpose.msra.mxu0 0.0
        %2016 = vmatprep.subr.mxu0 0.0
        %2017 = vmatpush1.xpose.msra.mxu0 0.0
        %2018 = vmatprep.subr.mxu0 0.0
        %2019 = vmatpush1.xpose.msra.mxu0 0.0
        %2020 = vmatprep.subr.mxu0 0.0
        %2021 = vmatpush1.xpose.msra.mxu0 0.0
        %2022 = vmatprep.subr.mxu0 0.0
        %2023 = vmatpush1.xpose.msra.mxu0 0.0
        %2024 = vmatprep.subr.mxu0 0.0
        %2025 = vmatpush1.xpose.msra.mxu0 0.0
        %2026 = vmatprep.subr.mxu0 0.0
        %2027 = vmatpush1.xpose.msra.mxu0 0.0
        %2028 = vmatprep.subr.mxu0 0.0
        %2029 = vmatpush1.xpose.msra.mxu0 0.0
        %2030 = vmatprep.subr.mxu0 0.0
        %2031 = vmatpush1.xpose.msra.mxu0 0.0
        %2032 = vmatprep.subr.mxu0 0.0
        %2033 = vmatpush1.xpose.msra.mxu0 0.0
        %2034 = vmatprep.subr.mxu0 0.0
        %2035 = vmatpush1.xpose.msra.mxu0 0.0
        %2036 = vmatprep.subr.mxu0 0.0
        %2037 = vmatpush1.xpose.msra.mxu0 0.0
        %2038 = vmatprep.subr.mxu0 0.0
        %2039 = vmatpush1.xpose.msra.mxu0 0.0
        %2040 = vmatprep.subr.mxu0 0.0
        %2041 = vmatpush1.xpose.msra.mxu0 0.0
        %2042 = vmatprep.subr.mxu0 0.0
        %2043 = vmatpush1.xpose.msra.mxu0 0.0
        %2044 = vmatprep.subr.mxu0 0.0
        %2045 = vmatpush1.xpose.msra.mxu0 0.0
        %2046 = vmatprep.subr.mxu0 0.0
        %2047 = vmatpush1.xpose.msra.mxu0 0.0
        %2048 = vmatprep.subr.mxu0 0.0
        %2049 = vmatpush1.xpose.msra.mxu0 0.0
        %2050 = vmatprep.subr.mxu0 0.0
        %2051 = vmatpush1.xpose.msra.mxu0 0.0
        %2052 = vmatprep.subr.mxu0 0.0
        %2053 = vmatpush1.xpose.msra.mxu0 0.0
        %2054 = vmatprep.subr.mxu0 0.0
        %2055 = vmatpush1.xpose.msra.mxu0 0.0
        %2056 = vmatprep.subr.mxu0 0.0
        %2057 = vmatpush1.xpose.msra.mxu0 0.0
        %2058 = vmatprep.subr.mxu0 0.0
        %2059 = vmatpush1.xpose.msra.mxu0 0.0
        %2060 = vmatprep.subr.mxu0 0.0
        %2061 = vmatpush1.xpose.msra.mxu0 0.0
        %2062 = vmatprep.mubr.f32.mxu0 0.0
        %2063 = vmatmul.mubr.f32.gmra.mrb[0].mxu0 %v1920
        %v2064 = vpop.f32.mrb[0].mxu0
        %v2065 = vadd.f32 0.0, %v2064
        %v2066 = vpop.f32.mrb[0].mxu0
        %2067 = vdwg.mxu0
        %v2069 = vsel %vm849, %v1819, 0
        %2071 = vmatprep.subr.mxu0 0.0
        %2072 = vmatpush1.xpose.msra.mxu0 %v2069
        %2073 = vmatprep.subr.mxu0 0.0
        %2074 = vmatpush1.xpose.msra.mxu0 0.0
        %2075 = vmatprep.subr.mxu0 0.0
        %2076 = vmatpush1.xpose.msra.mxu0 0.0
        %2077 = vmatprep.subr.mxu0 0.0
        %2078 = vmatpush1.xpose.msra.mxu0 0.0
        %2079 = vmatprep.subr.mxu0 0.0
        %2080 = vmatpush1.xpose.msra.mxu0 0.0
        %2081 = vmatprep.subr.mxu0 0.0
        %2082 = vmatpush1.xpose.msra.mxu0 0.0
        %2083 = vmatprep.subr.mxu0 0.0
        %2084 = vmatpush1.xpose.msra.mxu0 0.0
        %2085 = vmatprep.subr.mxu0 0.0
        %2086 = vmatpush1.xpose.msra.mxu0 0.0
        %2087 = vmatprep.subr.mxu0 0.0
        %2088 = vmatpush1.xpose.msra.mxu0 0.0
        %2089 = vmatprep.subr.mxu0 0.0
        %2090 = vmatpush1.xpose.msra.mxu0 0.0
        %2091 = vmatprep.subr.mxu0 0.0
        %2092 = vmatpush1.xpose.msra.mxu0 0.0
        %2093 = vmatprep.subr.mxu0 0.0
        %2094 = vmatpush1.xpose.msra.mxu0 0.0
        %2095 = vmatprep.subr.mxu0 0.0
        %2096 = vmatpush1.xpose.msra.mxu0 0.0
        %2097 = vmatprep.subr.mxu0 0.0
        %2098 = vmatpush1.xpose.msra.mxu0 0.0
        %2099 = vmatprep.subr.mxu0 0.0
        %2100 = vmatpush1.xpose.msra.mxu0 0.0
        %2101 = vmatprep.subr.mxu0 0.0
        %2102 = vmatpush1.xpose.msra.mxu0 0.0
        %2103 = vmatprep.subr.mxu0 0.0
        %2104 = vmatpush1.xpose.msra.mxu0 0.0
        %2105 = vmatprep.subr.mxu0 0.0
        %2106 = vmatpush1.xpose.msra.mxu0 0.0
        %2107 = vmatprep.subr.mxu0 0.0
        %2108 = vmatpush1.xpose.msra.mxu0 0.0
        %2109 = vmatprep.subr.mxu0 0.0
        %2110 = vmatpush1.xpose.msra.mxu0 0.0
        %2111 = vmatprep.subr.mxu0 0.0
        %2112 = vmatpush1.xpose.msra.mxu0 0.0
        %2113 = vmatprep.subr.mxu0 0.0
        %2114 = vmatpush1.xpose.msra.mxu0 0.0
        %2115 = vmatprep.subr.mxu0 0.0
        %2116 = vmatpush1.xpose.msra.mxu0 0.0
        %2117 = vmatprep.subr.mxu0 0.0
        %2118 = vmatpush1.xpose.msra.mxu0 0.0
        %2119 = vmatprep.subr.mxu0 0.0
        %2120 = vmatpush1.xpose.msra.mxu0 0.0
        %2121 = vmatprep.subr.mxu0 0.0
        %2122 = vmatpush1.xpose.msra.mxu0 0.0
        %2123 = vmatprep.subr.mxu0 0.0
        %2124 = vmatpush1.xpose.msra.mxu0 0.0
        %2125 = vmatprep.subr.mxu0 0.0
        %2126 = vmatpush1.xpose.msra.mxu0 0.0
        %2127 = vmatprep.subr.mxu0 0.0
        %2128 = vmatpush1.xpose.msra.mxu0 0.0
        %2129 = vmatprep.subr.mxu0 0.0
        %2130 = vmatpush1.xpose.msra.mxu0 0.0
        %2131 = vmatprep.subr.mxu0 0.0
        %2132 = vmatpush1.xpose.msra.mxu0 0.0
        %2133 = vmatprep.subr.mxu0 0.0
        %2134 = vmatpush1.xpose.msra.mxu0 0.0
        %2135 = vmatprep.mubr.f32.mxu0 0.0
        %2136 = vmatmul.mubr.f32.gmra.mrb[0].mxu0 %v1920
        %v2137 = vpop.f32.mrb[0].mxu0
        %v2138 = vadd.f32 0.0, %v2137
        %v2139 = vpop.f32.mrb[0].mxu0
        %2140 = vdwg.mxu0
        %v2142 = vsel %vm849, %v1824, 0
        %2144 = vmatprep.subr.mxu0 0.0
        %2145 = vmatpush1.xpose.msra.mxu0 %v2142
        %2146 = vmatprep.subr.mxu0 0.0
        %2147 = vmatpush1.xpose.msra.mxu0 0.0
        %2148 = vmatprep.subr.mxu0 0.0
        %2149 = vmatpush1.xpose.msra.mxu0 0.0
        %2150 = vmatprep.subr.mxu0 0.0
        %2151 = vmatpush1.xpose.msra.mxu0 0.0
        %2152 = vmatprep.subr.mxu0 0.0
        %2153 = vmatpush1.xpose.msra.mxu0 0.0
        %2154 = vmatprep.subr.mxu0 0.0
        %2155 = vmatpush1.xpose.msra.mxu0 0.0
        %2156 = vmatprep.subr.mxu0 0.0
        %2157 = vmatpush1.xpose.msra.mxu0 0.0
        %2158 = vmatprep.subr.mxu0 0.0
        %2159 = vmatpush1.xpose.msra.mxu0 0.0
        %2160 = vmatprep.subr.mxu0 0.0
        %2161 = vmatpush1.xpose.msra.mxu0 0.0
        %2162 = vmatprep.subr.mxu0 0.0
        %2163 = vmatpush1.xpose.msra.mxu0 0.0
        %2164 = vmatprep.subr.mxu0 0.0
        %2165 = vmatpush1.xpose.msra.mxu0 0.0
        %2166 = vmatprep.subr.mxu0 0.0
        %2167 = vmatpush1.xpose.msra.mxu0 0.0
        %2168 = vmatprep.subr.mxu0 0.0
        %2169 = vmatpush1.xpose.msra.mxu0 0.0
        %2170 = vmatprep.subr.mxu0 0.0
        %2171 = vmatpush1.xpose.msra.mxu0 0.0
        %2172 = vmatprep.subr.mxu0 0.0
        %2173 = vmatpush1.xpose.msra.mxu0 0.0
        %2174 = vmatprep.subr.mxu0 0.0
        %2175 = vmatpush1.xpose.msra.mxu0 0.0
        %2176 = vmatprep.subr.mxu0 0.0
        %2177 = vmatpush1.xpose.msra.mxu0 0.0
        %2178 = vmatprep.subr.mxu0 0.0
        %2179 = vmatpush1.xpose.msra.mxu0 0.0
        %2180 = vmatprep.subr.mxu0 0.0
        %2181 = vmatpush1.xpose.msra.mxu0 0.0
        %2182 = vmatprep.subr.mxu0 0.0
        %2183 = vmatpush1.xpose.msra.mxu0 0.0
        %2184 = vmatprep.subr.mxu0 0.0
        %2185 = vmatpush1.xpose.msra.mxu0 0.0
        %2186 = vmatprep.subr.mxu0 0.0
        %2187 = vmatpush1.xpose.msra.mxu0 0.0
        %2188 = vmatprep.subr.mxu0 0.0
        %2189 = vmatpush1.xpose.msra.mxu0 0.0
        %2190 = vmatprep.subr.mxu0 0.0
        %2191 = vmatpush1.xpose.msra.mxu0 0.0
        %2192 = vmatprep.subr.mxu0 0.0
        %2193 = vmatpush1.xpose.msra.mxu0 0.0
        %2194 = vmatprep.subr.mxu0 0.0
        %2195 = vmatpush1.xpose.msra.mxu0 0.0
        %2196 = vmatprep.subr.mxu0 0.0
        %2197 = vmatpush1.xpose.msra.mxu0 0.0
        %2198 = vmatprep.subr.mxu0 0.0
        %2199 = vmatpush1.xpose.msra.mxu0 0.0
        %2200 = vmatprep.subr.mxu0 0.0
        %2201 = vmatpush1.xpose.msra.mxu0 0.0
        %2202 = vmatprep.subr.mxu0 0.0
        %2203 = vmatpush1.xpose.msra.mxu0 0.0
        %2204 = vmatprep.subr.mxu0 0.0
        %2205 = vmatpush1.xpose.msra.mxu0 0.0
        %2206 = vmatprep.subr.mxu0 0.0
        %2207 = vmatpush1.xpose.msra.mxu0 0.0
        %2208 = vmatprep.mubr.f32.mxu0 0.0
        %2209 = vmatmul.mubr.f32.gmra.mrb[0].mxu0 %v1920
        %v2210 = vpop.f32.mrb[0].mxu0
        %v2211 = vadd.f32 0.0, %v2210
        %v2212 = vpop.f32.mrb[0].mxu0
        %2213 = vdwg.mxu0
        %v2214 = vmul.f32 %v1992, 0.35355338
        %v2215 = vmul.f32 %v2065, 0.35355338
        %v2216 = vmul.f32 %v2138, 0.35355338
        %v2217 = vmul.f32 %v2211, 0.35355338
        %v2218 = vsel %vm1272, %v2214, -1e+30
        %v2219 = vsel %vm1273, %v2215, -1e+30
        %v2220 = vsel %vm1274, %v2216, -1e+30
        %v2221 = vsel %vm1275, %v2217, -1e+30
        %v2222 = vsel %vm849, %v2218, -inf
        %2223 = vmax.xlane.f32.xlu0 %v2222
        %v2224 = vpop.xlane.xlu0 %2223
        %v2225 = vsel %vm849, %v2219, -inf
        %2226 = vmax.xlane.f32.xlu0 %v2225
        %v2227 = vpop.xlane.xlu0 %2226
        %v2228 = vsel %vm849, %v2220, -inf
        %2229 = vmax.xlane.f32.xlu0 %v2228
        %v2230 = vpop.xlane.xlu0 %2229
        %v2231 = vsel %vm849, %v2221, -inf
        %2232 = vmax.xlane.f32.xlu0 %v2231
        %v2233 = vpop.xlane.xlu0 %2232
        %v2234 = vsub.f32 %v2218, %v2224
        %v2235 = vsub.f32 %v2219, %v2227
        %v2236 = vsub.f32 %v2220, %v2230
        %v2237 = vsub.f32 %v2221, %v2233
        %v2238 = vmul.f32 %v2234, 1.442695
        %v2239 = vpow.pop %v2238
        %v2240 = vmul.f32 %v2235, 1.442695
        %v2241 = vpow.pop %v2240
        %v2242 = vmul.f32 %v2236, 1.442695
        %v2243 = vpow.pop %v2242
        %v2244 = vmul.f32 %v2237, 1.442695
        %v2245 = vpow.pop %v2244
        %v2246 = vsel %vm849, %v2239, 0.0
        %2247 = vadd.xlane.f32.xlu0 %v2246
        %v2248 = vpop.xlane.xlu0 %2247
        %v2249 = vsel %vm849, %v2241, 0.0
        %2250 = vadd.xlane.f32.xlu0 %v2249
        %v2251 = vpop.xlane.xlu0 %2250
        %v2252 = vsel %vm849, %v2243, 0.0
        %2253 = vadd.xlane.f32.xlu0 %v2252
        %v2254 = vpop.xlane.xlu0 %2253
        %v2255 = vsel %vm849, %v2245, 0.0
        %2256 = vadd.xlane.f32.xlu0 %v2255
        %v2257 = vpop.xlane.xlu0 %2256
        %v2258 = vrcp.pop %v2248
        %v2259 = vrcp.pop %v2251
        %v2260 = vrcp.pop %v2254
        %v2261 = vrcp.pop %v2257
        %v2262 = vmul.f32 %v2239, %v2258
        %v2263 = vmul.f32 %v2241, %v2259
        %v2264 = vmul.f32 %v2243, %v2260
        %v2265 = vmul.f32 %v2245, %v2261
        %v2267 = vsel %vm849, %v2262, 0
        %2269 = vmatprep.subr.mxu0 0.0
        %2270 = vmatpush1.msra.mxu0 %v1900
        %2271 = vmatprep.subr.mxu0 0.0
        %2272 = vmatpush1.msra.mxu0 0.0
        %2273 = vmatprep.subr.mxu0 0.0
        %2274 = vmatpush1.msra.mxu0 0.0
        %2275 = vmatprep.subr.mxu0 0.0
        %2276 = vmatpush1.msra.mxu0 0.0
        %2277 = vmatprep.subr.mxu0 0.0
        %2278 = vmatpush1.msra.mxu0 0.0
        %2279 = vmatprep.subr.mxu0 0.0
        %2280 = vmatpush1.msra.mxu0 0.0
        %2281 = vmatprep.subr.mxu0 0.0
        %2282 = vmatpush1.msra.mxu0 0.0
        %2283 = vmatprep.subr.mxu0 0.0
        %2284 = vmatpush1.msra.mxu0 0.0
        %2285 = vmatprep.subr.mxu0 0.0
        %2286 = vmatpush1.msra.mxu0 0.0
        %2287 = vmatprep.subr.mxu0 0.0
        %2288 = vmatpush1.msra.mxu0 0.0
        %2289 = vmatprep.subr.mxu0 0.0
        %2290 = vmatpush1.msra.mxu0 0.0
        %2291 = vmatprep.subr.mxu0 0.0
        %2292 = vmatpush1.msra.mxu0 0.0
        %2293 = vmatprep.subr.mxu0 0.0
        %2294 = vmatpush1.msra.mxu0 0.0
        %2295 = vmatprep.subr.mxu0 0.0
        %2296 = vmatpush1.msra.mxu0 0.0
        %2297 = vmatprep.subr.mxu0 0.0
        %2298 = vmatpush1.msra.mxu0 0.0
        %2299 = vmatprep.subr.mxu0 0.0
        %2300 = vmatpush1.msra.mxu0 0.0
        %2301 = vmatprep.subr.mxu0 0.0
        %2302 = vmatpush1.msra.mxu0 0.0
        %2303 = vmatprep.subr.mxu0 0.0
        %2304 = vmatpush1.msra.mxu0 0.0
        %2305 = vmatprep.subr.mxu0 0.0
        %2306 = vmatpush1.msra.mxu0 0.0
        %2307 = vmatprep.subr.mxu0 0.0
        %2308 = vmatpush1.msra.mxu0 0.0
        %2309 = vmatprep.subr.mxu0 0.0
        %2310 = vmatpush1.msra.mxu0 0.0
        %2311 = vmatprep.subr.mxu0 0.0
        %2312 = vmatpush1.msra.mxu0 0.0
        %2313 = vmatprep.subr.mxu0 0.0
        %2314 = vmatpush1.msra.mxu0 0.0
        %2315 = vmatprep.subr.mxu0 0.0
        %2316 = vmatpush1.msra.mxu0 0.0
        %2317 = vmatprep.subr.mxu0 0.0
        %2318 = vmatpush1.msra.mxu0 0.0
        %2319 = vmatprep.subr.mxu0 0.0
        %2320 = vmatpush1.msra.mxu0 0.0
        %2321 = vmatprep.subr.mxu0 0.0
        %2322 = vmatpush1.msra.mxu0 0.0
        %2323 = vmatprep.subr.mxu0 0.0
        %2324 = vmatpush1.msra.mxu0 0.0
        %2325 = vmatprep.subr.mxu0 0.0
        %2326 = vmatpush1.msra.mxu0 0.0
        %2327 = vmatprep.subr.mxu0 0.0
        %2328 = vmatpush1.msra.mxu0 0.0
        %2329 = vmatprep.subr.mxu0 0.0
        %2330 = vmatpush1.msra.mxu0 0.0
        %2331 = vmatprep.subr.mxu0 0.0
        %2332 = vmatpush1.msra.mxu0 0.0
        %2333 = vmatprep.mubr.f32.mxu0 0.0
        %2334 = vmatmul.mubr.f32.gmra.mrb[0].mxu0 %v2267
        %v2335 = vpop.f32.mrb[0].mxu0
        %v2336 = vadd.f32 0.0, %v2335
        %v2337 = vpop.f32.mrb[0].mxu0
        %2338 = vdwg.mxu0
        %v2340 = vsel %vm849, %v2263, 0
        %2342 = vmatprep.subr.mxu0 0.0
        %2343 = vmatpush1.msra.mxu0 %v1905
        %2344 = vmatprep.subr.mxu0 0.0
        %2345 = vmatpush1.msra.mxu0 0.0
        %2346 = vmatprep.subr.mxu0 0.0
        %2347 = vmatpush1.msra.mxu0 0.0
        %2348 = vmatprep.subr.mxu0 0.0
        %2349 = vmatpush1.msra.mxu0 0.0
        %2350 = vmatprep.subr.mxu0 0.0
        %2351 = vmatpush1.msra.mxu0 0.0
        %2352 = vmatprep.subr.mxu0 0.0
        %2353 = vmatpush1.msra.mxu0 0.0
        %2354 = vmatprep.subr.mxu0 0.0
        %2355 = vmatpush1.msra.mxu0 0.0
        %2356 = vmatprep.subr.mxu0 0.0
        %2357 = vmatpush1.msra.mxu0 0.0
        %2358 = vmatprep.subr.mxu0 0.0
        %2359 = vmatpush1.msra.mxu0 0.0
        %2360 = vmatprep.subr.mxu0 0.0
        %2361 = vmatpush1.msra.mxu0 0.0
        %2362 = vmatprep.subr.mxu0 0.0
        %2363 = vmatpush1.msra.mxu0 0.0
        %2364 = vmatprep.subr.mxu0 0.0
        %2365 = vmatpush1.msra.mxu0 0.0
        %2366 = vmatprep.subr.mxu0 0.0
        %2367 = vmatpush1.msra.mxu0 0.0
        %2368 = vmatprep.subr.mxu0 0.0
        %2369 = vmatpush1.msra.mxu0 0.0
        %2370 = vmatprep.subr.mxu0 0.0
        %2371 = vmatpush1.msra.mxu0 0.0
        %2372 = vmatprep.subr.mxu0 0.0
        %2373 = vmatpush1.msra.mxu0 0.0
        %2374 = vmatprep.subr.mxu0 0.0
        %2375 = vmatpush1.msra.mxu0 0.0
        %2376 = vmatprep.subr.mxu0 0.0
        %2377 = vmatpush1.msra.mxu0 0.0
        %2378 = vmatprep.subr.mxu0 0.0
        %2379 = vmatpush1.msra.mxu0 0.0
        %2380 = vmatprep.subr.mxu0 0.0
        %2381 = vmatpush1.msra.mxu0 0.0
        %2382 = vmatprep.subr.mxu0 0.0
        %2383 = vmatpush1.msra.mxu0 0.0
        %2384 = vmatprep.subr.mxu0 0.0
        %2385 = vmatpush1.msra.mxu0 0.0
        %2386 = vmatprep.subr.mxu0 0.0
        %2387 = vmatpush1.msra.mxu0 0.0
        %2388 = vmatprep.subr.mxu0 0.0
        %2389 = vmatpush1.msra.mxu0 0.0
        %2390 = vmatprep.subr.mxu0 0.0
        %2391 = vmatpush1.msra.mxu0 0.0
        %2392 = vmatprep.subr.mxu0 0.0
        %2393 = vmatpush1.msra.mxu0 0.0
        %2394 = vmatprep.subr.mxu0 0.0
        %2395 = vmatpush1.msra.mxu0 0.0
        %2396 = vmatprep.subr.mxu0 0.0
        %2397 = vmatpush1.msra.mxu0 0.0
        %2398 = vmatprep.subr.mxu0 0.0
        %2399 = vmatpush1.msra.mxu0 0.0
        %2400 = vmatprep.subr.mxu0 0.0
        %2401 = vmatpush1.msra.mxu0 0.0
        %2402 = vmatprep.subr.mxu0 0.0
        %2403 = vmatpush1.msra.mxu0 0.0
        %2404 = vmatprep.subr.mxu0 0.0
        %2405 = vmatpush1.msra.mxu0 0.0
        %2406 = vmatprep.mubr.f32.mxu0 0.0
        %2407 = vmatmul.mubr.f32.gmra.mrb[0].mxu0 %v2340
        %v2408 = vpop.f32.mrb[0].mxu0
        %v2409 = vadd.f32 0.0, %v2408
        %v2410 = vpop.f32.mrb[0].mxu0
        %2411 = vdwg.mxu0
        %v2413 = vsel %vm849, %v2264, 0
        %2415 = vmatprep.subr.mxu0 0.0
        %2416 = vmatpush1.msra.mxu0 %v1910
        %2417 = vmatprep.subr.mxu0 0.0
        %2418 = vmatpush1.msra.mxu0 0.0
        %2419 = vmatprep.subr.mxu0 0.0
        %2420 = vmatpush1.msra.mxu0 0.0
        %2421 = vmatprep.subr.mxu0 0.0
        %2422 = vmatpush1.msra.mxu0 0.0
        %2423 = vmatprep.subr.mxu0 0.0
        %2424 = vmatpush1.msra.mxu0 0.0
        %2425 = vmatprep.subr.mxu0 0.0
        %2426 = vmatpush1.msra.mxu0 0.0
        %2427 = vmatprep.subr.mxu0 0.0
        %2428 = vmatpush1.msra.mxu0 0.0
        %2429 = vmatprep.subr.mxu0 0.0
        %2430 = vmatpush1.msra.mxu0 0.0
        %2431 = vmatprep.subr.mxu0 0.0
        %2432 = vmatpush1.msra.mxu0 0.0
        %2433 = vmatprep.subr.mxu0 0.0
        %2434 = vmatpush1.msra.mxu0 0.0
        %2435 = vmatprep.subr.mxu0 0.0
        %2436 = vmatpush1.msra.mxu0 0.0
        %2437 = vmatprep.subr.mxu0 0.0
        %2438 = vmatpush1.msra.mxu0 0.0
        %2439 = vmatprep.subr.mxu0 0.0
        %2440 = vmatpush1.msra.mxu0 0.0
        %2441 = vmatprep.subr.mxu0 0.0
        %2442 = vmatpush1.msra.mxu0 0.0
        %2443 = vmatprep.subr.mxu0 0.0
        %2444 = vmatpush1.msra.mxu0 0.0
        %2445 = vmatprep.subr.mxu0 0.0
        %2446 = vmatpush1.msra.mxu0 0.0
        %2447 = vmatprep.subr.mxu0 0.0
        %2448 = vmatpush1.msra.mxu0 0.0
        %2449 = vmatprep.subr.mxu0 0.0
        %2450 = vmatpush1.msra.mxu0 0.0
        %2451 = vmatprep.subr.mxu0 0.0
        %2452 = vmatpush1.msra.mxu0 0.0
        %2453 = vmatprep.subr.mxu0 0.0
        %2454 = vmatpush1.msra.mxu0 0.0
        %2455 = vmatprep.subr.mxu0 0.0
        %2456 = vmatpush1.msra.mxu0 0.0
        %2457 = vmatprep.subr.mxu0 0.0
        %2458 = vmatpush1.msra.mxu0 0.0
        %2459 = vmatprep.subr.mxu0 0.0
        %2460 = vmatpush1.msra.mxu0 0.0
        %2461 = vmatprep.subr.mxu0 0.0
        %2462 = vmatpush1.msra.mxu0 0.0
        %2463 = vmatprep.subr.mxu0 0.0
        %2464 = vmatpush1.msra.mxu0 0.0
        %2465 = vmatprep.subr.mxu0 0.0
        %2466 = vmatpush1.msra.mxu0 0.0
        %2467 = vmatprep.subr.mxu0 0.0
        %2468 = vmatpush1.msra.mxu0 0.0
        %2469 = vmatprep.subr.mxu0 0.0
        %2470 = vmatpush1.msra.mxu0 0.0
        %2471 = vmatprep.subr.mxu0 0.0
        %2472 = vmatpush1.msra.mxu0 0.0
        %2473 = vmatprep.subr.mxu0 0.0
        %2474 = vmatpush1.msra.mxu0 0.0
        %2475 = vmatprep.subr.mxu0 0.0
        %2476 = vmatpush1.msra.mxu0 0.0
        %2477 = vmatprep.subr.mxu0 0.0
        %2478 = vmatpush1.msra.mxu0 0.0
        %2479 = vmatprep.mubr.f32.mxu0 0.0
        %2480 = vmatmul.mubr.f32.gmra.mrb[0].mxu0 %v2413
        %v2481 = vpop.f32.mrb[0].mxu0
        %v2482 = vadd.f32 0.0, %v2481
        %v2483 = vpop.f32.mrb[0].mxu0
        %2484 = vdwg.mxu0
        %v2486 = vsel %vm849, %v2265, 0
        %2488 = vmatprep.subr.mxu0 0.0
        %2489 = vmatpush1.msra.mxu0 %v1915
        %2490 = vmatprep.subr.mxu0 0.0
        %2491 = vmatpush1.msra.mxu0 0.0
        %2492 = vmatprep.subr.mxu0 0.0
        %2493 = vmatpush1.msra.mxu0 0.0
        %2494 = vmatprep.subr.mxu0 0.0
        %2495 = vmatpush1.msra.mxu0 0.0
        %2496 = vmatprep.subr.mxu0 0.0
        %2497 = vmatpush1.msra.mxu0 0.0
        %2498 = vmatprep.subr.mxu0 0.0
        %2499 = vmatpush1.msra.mxu0 0.0
        %2500 = vmatprep.subr.mxu0 0.0
        %2501 = vmatpush1.msra.mxu0 0.0
        %2502 = vmatprep.subr.mxu0 0.0
        %2503 = vmatpush1.msra.mxu0 0.0
        %2504 = vmatprep.subr.mxu0 0.0
        %2505 = vmatpush1.msra.mxu0 0.0
        %2506 = vmatprep.subr.mxu0 0.0
        %2507 = vmatpush1.msra.mxu0 0.0
        %2508 = vmatprep.subr.mxu0 0.0
        %2509 = vmatpush1.msra.mxu0 0.0
        %2510 = vmatprep.subr.mxu0 0.0
        %2511 = vmatpush1.msra.mxu0 0.0
        %2512 = vmatprep.subr.mxu0 0.0
        %2513 = vmatpush1.msra.mxu0 0.0
        %2514 = vmatprep.subr.mxu0 0.0
        %2515 = vmatpush1.msra.mxu0 0.0
        %2516 = vmatprep.subr.mxu0 0.0
        %2517 = vmatpush1.msra.mxu0 0.0
        %2518 = vmatprep.subr.mxu0 0.0
        %2519 = vmatpush1.msra.mxu0 0.0
        %2520 = vmatprep.subr.mxu0 0.0
        %2521 = vmatpush1.msra.mxu0 0.0
        %2522 = vmatprep.subr.mxu0 0.0
        %2523 = vmatpush1.msra.mxu0 0.0
        %2524 = vmatprep.subr.mxu0 0.0
        %2525 = vmatpush1.msra.mxu0 0.0
        %2526 = vmatprep.subr.mxu0 0.0
        %2527 = vmatpush1.msra.mxu0 0.0
        %2528 = vmatprep.subr.mxu0 0.0
        %2529 = vmatpush1.msra.mxu0 0.0
        %2530 = vmatprep.subr.mxu0 0.0
        %2531 = vmatpush1.msra.mxu0 0.0
        %2532 = vmatprep.subr.mxu0 0.0
        %2533 = vmatpush1.msra.mxu0 0.0
        %2534 = vmatprep.subr.mxu0 0.0
        %2535 = vmatpush1.msra.mxu0 0.0
        %2536 = vmatprep.subr.mxu0 0.0
        %2537 = vmatpush1.msra.mxu0 0.0
        %2538 = vmatprep.subr.mxu0 0.0
        %2539 = vmatpush1.msra.mxu0 0.0
        %2540 = vmatprep.subr.mxu0 0.0
        %2541 = vmatpush1.msra.mxu0 0.0
        %2542 = vmatprep.subr.mxu0 0.0
        %2543 = vmatpush1.msra.mxu0 0.0
        %2544 = vmatprep.subr.mxu0 0.0
        %2545 = vmatpush1.msra.mxu0 0.0
        %2546 = vmatprep.subr.mxu0 0.0
        %2547 = vmatpush1.msra.mxu0 0.0
        %2548 = vmatprep.subr.mxu0 0.0
        %2549 = vmatpush1.msra.mxu0 0.0
        %2550 = vmatprep.subr.mxu0 0.0
        %2551 = vmatpush1.msra.mxu0 0.0
        %2552 = vmatprep.mubr.f32.mxu0 0.0
        %2553 = vmatmul.mubr.f32.gmra.mrb[0].mxu0 %v2486
        %v2554 = vpop.f32.mrb[0].mxu0
        %v2555 = vadd.f32 0.0, %v2554
        %v2556 = vpop.f32.mrb[0].mxu0
        %2557 = vdwg.mxu0
        %v2558 = vld [vmem:[#allocation2 + $0xd0] sm:$0xff]
        %v2563 = vlaneseq
        %v2564 = vshrl.u32 %v2563, 7
        %v2565 = vsub.s32 0, %v2564
        %v2566 = vrot.slane %v249, %v2565
        %v2567 = vlaneseq
        %v2568 = vshrl.u32 %v2567, 7
        %v2569 = vsub.s32 0, %v2568
        %v2570 = vrot.slane %v250, %v2569
        %v2571 = vlaneseq
        %v2572 = vshrl.u32 %v2571, 7
        %v2573 = vsub.s32 0, %v2572
        %v2574 = vrot.slane %v251, %v2573
        %v2575 = vlaneseq
        %v2576 = vshrl.u32 %v2575, 7
        %v2577 = vsub.s32 0, %v2576
        %v2578 = vrot.slane %v252, %v2577
        %v2583 = vmul.f32 %v2558, %v2566
        %v2584 = vmul.f32 %v2558, %v2570
        %v2585 = vmul.f32 %v2558, %v2574
        %v2586 = vmul.f32 %v2558, %v2578
        %v2587 = vsel %vm849, %v2583, 0.0
        %2588 = vadd.xlane.f32.xlu0 %v2587
        %v2589 = vpop.xlane.xlu0 %2588
        %v2590 = vsel %vm849, %v2584, 0.0
        %2591 = vadd.xlane.f32.xlu0 %v2590
        %v2592 = vpop.xlane.xlu0 %2591
        %v2593 = vsel %vm849, %v2585, 0.0
        %2594 = vadd.xlane.f32.xlu0 %v2593
        %v2595 = vpop.xlane.xlu0 %2594
        %v2596 = vsel %vm849, %v2586, 0.0
        %2597 = vadd.xlane.f32.xlu0 %v2596
        %v2598 = vpop.xlane.xlu0 %2597
        %v2599 = vld [vmem:[#allocation2 + $0xc8] sm:$0xff]
        %v2600 = vmul.f32 %v2336, %v2589
        %v2601 = vmul.f32 %v2409, %v2592
        %v2602 = vmul.f32 %v2482, %v2595
        %v2603 = vmul.f32 %v2555, %v2598
        %v2604 = vadd.f32 %v2600, %v2599
        %v2605 = vadd.f32 %v2601, %v2599
        %v2606 = vadd.f32 %v2602, %v2599
        %v2607 = vadd.f32 %v2603, %v2599
        %v2608 = vld [vmem:[#allocation2 + $0xd8] sm:$0xff]
        %v2609 = vld [vmem:[#allocation2 + $0xe0] sm:$0x1]
        %v2610 = vlaneseq
        %v2611 = vshrl.u32 %v2610, 7
        %v2612 = vsub.s32 0, %v2611
        %v2613 = vrot.slane %v2609, %v2612
        %v2615 = vsel %vm849, %v2604, 0
        %v2618 = vsel %vm849, %v2605, 0
        %v2621 = vsel %vm849, %v2606, 0
        %v2624 = vsel %vm849, %v2607, 0
        %2626 = vmatprep.subr.mxu0 0.0
        %2627 = vmatpush1.msra.mxu0 %v2608
        %2628 = vmatprep.subr.mxu0 0.0
        %2629 = vmatpush1.msra.mxu0 0.0
        %2630 = vmatprep.subr.mxu0 0.0
        %2631 = vmatpush1.msra.mxu0 0.0
        %2632 = vmatprep.subr.mxu0 0.0
        %2633 = vmatpush1.msra.mxu0 0.0
        %2634 = vmatprep.subr.mxu0 0.0
        %2635 = vmatpush1.msra.mxu0 0.0
        %2636 = vmatprep.subr.mxu0 0.0
        %2637 = vmatpush1.msra.mxu0 0.0
        %2638 = vmatprep.subr.mxu0 0.0
        %2639 = vmatpush1.msra.mxu0 0.0
        %2640 = vmatprep.subr.mxu0 0.0
        %2641 = vmatpush1.msra.mxu0 0.0
        %2642 = vmatprep.subr.mxu0 0.0
        %2643 = vmatpush1.msra.mxu0 0.0
        %2644 = vmatprep.subr.mxu0 0.0
        %2645 = vmatpush1.msra.mxu0 0.0
        %2646 = vmatprep.subr.mxu0 0.0
        %2647 = vmatpush1.msra.mxu0 0.0
        %2648 = vmatprep.subr.mxu0 0.0
        %2649 = vmatpush1.msra.mxu0 0.0
        %2650 = vmatprep.subr.mxu0 0.0
        %2651 = vmatpush1.msra.mxu0 0.0
        %2652 = vmatprep.subr.mxu0 0.0
        %2653 = vmatpush1.msra.mxu0 0.0
        %2654 = vmatprep.subr.mxu0 0.0
        %2655 = vmatpush1.msra.mxu0 0.0
        %2656 = vmatprep.subr.mxu0 0.0
        %2657 = vmatpush1.msra.mxu0 0.0
        %2658 = vmatprep.subr.mxu0 0.0
        %2659 = vmatpush1.msra.mxu0 0.0
        %2660 = vmatprep.subr.mxu0 0.0
        %2661 = vmatpush1.msra.mxu0 0.0
        %2662 = vmatprep.subr.mxu0 0.0
        %2663 = vmatpush1.msra.mxu0 0.0
        %2664 = vmatprep.subr.mxu0 0.0
        %2665 = vmatpush1.msra.mxu0 0.0
        %2666 = vmatprep.subr.mxu0 0.0
        %2667 = vmatpush1.msra.mxu0 0.0
        %2668 = vmatprep.subr.mxu0 0.0
        %2669 = vmatpush1.msra.mxu0 0.0
        %2670 = vmatprep.subr.mxu0 0.0
        %2671 = vmatpush1.msra.mxu0 0.0
        %2672 = vmatprep.subr.mxu0 0.0
        %2673 = vmatpush1.msra.mxu0 0.0
        %2674 = vmatprep.subr.mxu0 0.0
        %2675 = vmatpush1.msra.mxu0 0.0
        %2676 = vmatprep.subr.mxu0 0.0
        %2677 = vmatpush1.msra.mxu0 0.0
        %2678 = vmatprep.subr.mxu0 0.0
        %2679 = vmatpush1.msra.mxu0 0.0
        %2680 = vmatprep.subr.mxu0 0.0
        %2681 = vmatpush1.msra.mxu0 0.0
        %2682 = vmatprep.subr.mxu0 0.0
        %2683 = vmatpush1.msra.mxu0 0.0
        %2684 = vmatprep.subr.mxu0 0.0
        %2685 = vmatpush1.msra.mxu0 0.0
        %2686 = vmatprep.subr.mxu0 0.0
        %2687 = vmatpush1.msra.mxu0 0.0
        %2688 = vmatprep.subr.mxu0 0.0
        %2689 = vmatpush1.msra.mxu0 0.0
        %2690 = vmatprep.mubr.f32.mxu0 0.0
        %2691 = vmatmul.mubr.f32.gmra.mrb[0].mxu0 %v2615
        %v2692 = vpop.f32.mrb[0].mxu0
        %v2693 = vadd.f32 %v2613, %v2692
        %v2694 = vpop.f32.mrb[0].mxu0
        %2695 = vmatprep.mubr.f32.mxu0 0.0
        %2696 = vmatmul.mubr.f32.gmra.mrb[0].mxu0 %v2618
        %v2697 = vpop.f32.mrb[0].mxu0
        %v2698 = vadd.f32 %v2613, %v2697
        %v2699 = vpop.f32.mrb[0].mxu0
        %2700 = vmatprep.mubr.f32.mxu0 0.0
        %2701 = vmatmul.mubr.f32.gmra.mrb[0].mxu0 %v2621
        %v2702 = vpop.f32.mrb[0].mxu0
        %v2703 = vadd.f32 %v2613, %v2702
        %v2704 = vpop.f32.mrb[0].mxu0
        %2705 = vmatprep.mubr.f32.mxu0 0.0
        %2706 = vmatmul.mubr.f32.gmra.mrb[0].mxu0 %v2624
        %v2707 = vpop.f32.mrb[0].mxu0
        %v2708 = vadd.f32 %v2613, %v2707
        %v2709 = vpop.f32.mrb[0].mxu0
        %2710 = vdwg.mxu0
        %v2711 = vmax.f32 %v2693, 0.0
        %v2712 = vmax.f32 %v2698, 0.0
        %v2713 = vmax.f32 %v2703, 0.0
        %v2714 = vmax.f32 %v2708, 0.0
        %vm2715 = vcmp.ne.f32.partialorder %v2693, %v2693
        %vm2716 = vcmp.ne.f32.partialorder %v2698, %v2698
        %vm2717 = vcmp.ne.f32.partialorder %v2703, %v2703
        %vm2718 = vcmp.ne.f32.partialorder %v2708, %v2708
        %v2719 = vadd.f32 %v2693, 0.0
        %v2720 = vadd.f32 %v2698, 0.0
        %v2721 = vadd.f32 %v2703, 0.0
        %v2722 = vadd.f32 %v2708, 0.0
        %v2723 = vand.u32 2147483647, %v2693
        %v2724 = vand.u32 2147483647, %v2698
        %v2725 = vand.u32 2147483647, %v2703
        %v2726 = vand.u32 2147483647, %v2708
        %v2727 = vsub.f32 0.0, %v2723
        %v2728 = vsub.f32 0.0, %v2724
        %v2729 = vsub.f32 0.0, %v2725
        %v2730 = vsub.f32 0.0, %v2726
        %v2731 = vmul.f32 %v2727, 1.442695
        %v2732 = vpow.pop %v2731
        %v2733 = vmul.f32 %v2728, 1.442695
        %v2734 = vpow.pop %v2733
        %v2735 = vmul.f32 %v2729, 1.442695
        %v2736 = vpow.pop %v2735
        %v2737 = vmul.f32 %v2730, 1.442695
        %v2738 = vpow.pop %v2737
        %v2739 = vadd.f32 %v2732, 1.0
        %v2740 = vlog2.pop %v2739
        %v2741 = vmul.f32 %v2740, 0.6931472
        %v2742 = vmul.f32 -0.5, %v2732
        %v2743 = vadd.f32 %v2742, 1.0
        %v2744 = vmul.f32 %v2743, %v2732
        %v2745 = vand.u32 2147483647, %v2732
        %vm2746 = vcmp.lt.f32.partialorder %v2745, 0.0004427343
        %v2747 = vsel %vm2746, %v2744, %v2741
        %v2748 = vadd.f32 %v2734, 1.0
        %v2749 = vlog2.pop %v2748
        %v2750 = vmul.f32 %v2749, 0.6931472
        %v2751 = vmul.f32 -0.5, %v2734
        %v2752 = vadd.f32 %v2751, 1.0
        %v2753 = vmul.f32 %v2752, %v2734
        %v2754 = vand.u32 2147483647, %v2734
        %vm2755 = vcmp.lt.f32.partialorder %v2754, 0.0004427343
        %v2756 = vsel %vm2755, %v2753, %v2750
        %v2757 = vadd.f32 %v2736, 1.0
        %v2758 = vlog2.pop %v2757
        %v2759 = vmul.f32 %v2758, 0.6931472
        %v2760 = vmul.f32 -0.5, %v2736
        %v2761 = vadd.f32 %v2760, 1.0
        %v2762 = vmul.f32 %v2761, %v2736
        %v2763 = vand.u32 2147483647, %v2736
        %vm2764 = vcmp.lt.f32.partialorder %v2763, 0.0004427343
        %v2765 = vsel %vm2764, %v2762, %v2759
        %v2766 = vadd.f32 %v2738, 1.0
        %v2767 = vlog2.pop %v2766
        %v2768 = vmul.f32 %v2767, 0.6931472
        %v2769 = vmul.f32 -0.5, %v2738
        %v2770 = vadd.f32 %v2769, 1.0
        %v2771 = vmul.f32 %v2770, %v2738
        %v2772 = vand.u32 2147483647, %v2738
        %vm2773 = vcmp.lt.f32.partialorder %v2772, 0.0004427343
        %v2774 = vsel %vm2773, %v2771, %v2768
        %v2775 = vadd.f32 %v2711, %v2747
        %v2776 = vadd.f32 %v2712, %v2756
        %v2777 = vadd.f32 %v2713, %v2765
        %v2778 = vadd.f32 %v2714, %v2774
        %v2779 = vsel %vm2715, %v2719, %v2775
        %v2780 = vsel %vm2716, %v2720, %v2776
        %v2781 = vsel %vm2717, %v2721, %v2777
        %v2782 = vsel %vm2718, %v2722, %v2778
        %v2783 = vld [vmem:[#allocation2 + $0xe8] sm:$0xff]
        %v2784 = vld [vmem:[#allocation2 + $0xf0] sm:$0x3]
        %v2785 = vld [vmem:[#allocation2 + $0xf8] sm:$0x1]
        %v2786 = vlaneseq
        %v2787 = vshrl.u32 %v2786, 7
        %v2788 = vsub.s32 0, %v2787
        %v2789 = vrot.slane %v2785, %v2788
        %v2791 = vsel %vm370, %v2779, 0
        %v2794 = vsel %vm370, %v2780, 0
        %v2797 = vsel %vm370, %v2781, 0
        %v2800 = vsel %vm370, %v2782, 0
        %v2803 = vsel %vm383, %v2784, 0
        %2805 = vmatprep.subr.mxu0 0.0
        %2806 = vmatpush1.msra.mxu0 %v2783
        %2807 = vmatprep.subr.mxu0 0.0
        %2808 = vmatpush1.msra.mxu0 %v2803
        %2809 = vmatprep.subr.mxu0 0.0
        %2810 = vmatpush1.msra.mxu0 0.0
        %2811 = vmatprep.subr.mxu0 0.0
        %2812 = vmatpush1.msra.mxu0 0.0
        %2813 = vmatprep.subr.mxu0 0.0
        %2814 = vmatpush1.msra.mxu0 0.0
        %2815 = vmatprep.subr.mxu0 0.0
        %2816 = vmatpush1.msra.mxu0 0.0
        %2817 = vmatprep.subr.mxu0 0.0
        %2818 = vmatpush1.msra.mxu0 0.0
        %2819 = vmatprep.subr.mxu0 0.0
        %2820 = vmatpush1.msra.mxu0 0.0
        %2821 = vmatprep.subr.mxu0 0.0
        %2822 = vmatpush1.msra.mxu0 0.0
        %2823 = vmatprep.subr.mxu0 0.0
        %2824 = vmatpush1.msra.mxu0 0.0
        %2825 = vmatprep.subr.mxu0 0.0
        %2826 = vmatpush1.msra.mxu0 0.0
        %2827 = vmatprep.subr.mxu0 0.0
        %2828 = vmatpush1.msra.mxu0 0.0
        %2829 = vmatprep.subr.mxu0 0.0
        %2830 = vmatpush1.msra.mxu0 0.0
        %2831 = vmatprep.subr.mxu0 0.0
        %2832 = vmatpush1.msra.mxu0 0.0
        %2833 = vmatprep.subr.mxu0 0.0
        %2834 = vmatpush1.msra.mxu0 0.0
        %2835 = vmatprep.subr.mxu0 0.0
        %2836 = vmatpush1.msra.mxu0 0.0
        %2837 = vmatprep.subr.mxu0 0.0
        %2838 = vmatpush1.msra.mxu0 0.0
        %2839 = vmatprep.subr.mxu0 0.0
        %2840 = vmatpush1.msra.mxu0 0.0
        %2841 = vmatprep.subr.mxu0 0.0
        %2842 = vmatpush1.msra.mxu0 0.0
        %2843 = vmatprep.subr.mxu0 0.0
        %2844 = vmatpush1.msra.mxu0 0.0
        %2845 = vmatprep.subr.mxu0 0.0
        %2846 = vmatpush1.msra.mxu0 0.0
        %2847 = vmatprep.subr.mxu0 0.0
        %2848 = vmatpush1.msra.mxu0 0.0
        %2849 = vmatprep.subr.mxu0 0.0
        %2850 = vmatpush1.msra.mxu0 0.0
        %2851 = vmatprep.subr.mxu0 0.0
        %2852 = vmatpush1.msra.mxu0 0.0
        %2853 = vmatprep.subr.mxu0 0.0
        %2854 = vmatpush1.msra.mxu0 0.0
        %2855 = vmatprep.subr.mxu0 0.0
        %2856 = vmatpush1.msra.mxu0 0.0
        %2857 = vmatprep.subr.mxu0 0.0
        %2858 = vmatpush1.msra.mxu0 0.0
        %2859 = vmatprep.subr.mxu0 0.0
        %2860 = vmatpush1.msra.mxu0 0.0
        %2861 = vmatprep.subr.mxu0 0.0
        %2862 = vmatpush1.msra.mxu0 0.0
        %2863 = vmatprep.subr.mxu0 0.0
        %2864 = vmatpush1.msra.mxu0 0.0
        %2865 = vmatprep.subr.mxu0 0.0
        %2866 = vmatpush1.msra.mxu0 0.0
        %2867 = vmatprep.subr.mxu0 0.0
        %2868 = vmatpush1.msra.mxu0 0.0
        %2869 = vmatprep.mubr.f32.mxu0 0.0
        %2870 = vmatmul.mubr.f32.gmra.mrb[0].mxu0 %v2791
        %v2871 = vpop.f32.mrb[0].mxu0
        %v2872 = vadd.f32 %v2789, %v2871
        %v2873 = vpop.f32.mrb[0].mxu0
        %2874 = vmatprep.mubr.f32.mxu0 0.0
        %2875 = vmatmul.mubr.f32.gmra.mrb[0].mxu0 %v2794
        %v2876 = vpop.f32.mrb[0].mxu0
        %v2877 = vadd.f32 %v2789, %v2876
        %v2878 = vpop.f32.mrb[0].mxu0
        %2879 = vmatprep.mubr.f32.mxu0 0.0
        %2880 = vmatmul.mubr.f32.gmra.mrb[0].mxu0 %v2797
        %v2881 = vpop.f32.mrb[0].mxu0
        %v2882 = vadd.f32 %v2789, %v2881
        %v2883 = vpop.f32.mrb[0].mxu0
        %2884 = vmatprep.mubr.f32.mxu0 0.0
        %2885 = vmatmul.mubr.f32.gmra.mrb[0].mxu0 %v2800
        %v2886 = vpop.f32.mrb[0].mxu0
        %v2887 = vadd.f32 %v2789, %v2886
        %v2888 = vpop.f32.mrb[0].mxu0
        %2889 = vdwg.mxu0
        %v2890 = vmax.f32 %v2872, 0.0
        %v2891 = vmax.f32 %v2877, 0.0
        %v2892 = vmax.f32 %v2882, 0.0
        %v2893 = vmax.f32 %v2887, 0.0
        %vm2894 = vcmp.ne.f32.partialorder %v2872, %v2872
        %vm2895 = vcmp.ne.f32.partialorder %v2877, %v2877
        %vm2896 = vcmp.ne.f32.partialorder %v2882, %v2882
        %vm2897 = vcmp.ne.f32.partialorder %v2887, %v2887
        %v2898 = vadd.f32 %v2872, 0.0
        %v2899 = vadd.f32 %v2877, 0.0
        %v2900 = vadd.f32 %v2882, 0.0
        %v2901 = vadd.f32 %v2887, 0.0
        %v2902 = vand.u32 2147483647, %v2872
        %v2903 = vand.u32 2147483647, %v2877
        %v2904 = vand.u32 2147483647, %v2882
        %v2905 = vand.u32 2147483647, %v2887
        %v2906 = vsub.f32 0.0, %v2902
        %v2907 = vsub.f32 0.0, %v2903
        %v2908 = vsub.f32 0.0, %v2904
        %v2909 = vsub.f32 0.0, %v2905
        %v2910 = vmul.f32 %v2906, 1.442695
        %v2911 = vpow.pop %v2910
        %v2912 = vmul.f32 %v2907, 1.442695
        %v2913 = vpow.pop %v2912
        %v2914 = vmul.f32 %v2908, 1.442695
        %v2915 = vpow.pop %v2914
        %v2916 = vmul.f32 %v2909, 1.442695
        %v2917 = vpow.pop %v2916
        %v2918 = vadd.f32 %v2911, 1.0
        %v2919 = vlog2.pop %v2918
        %v2920 = vmul.f32 %v2919, 0.6931472
        %v2921 = vmul.f32 -0.5, %v2911
        %v2922 = vadd.f32 %v2921, 1.0
        %v2923 = vmul.f32 %v2922, %v2911
        %v2924 = vand.u32 2147483647, %v2911
        %vm2925 = vcmp.lt.f32.partialorder %v2924, 0.0004427343
        %v2926 = vsel %vm2925, %v2923, %v2920
        %v2927 = vadd.f32 %v2913, 1.0
        %v2928 = vlog2.pop %v2927
        %v2929 = vmul.f32 %v2928, 0.6931472
        %v2930 = vmul.f32 -0.5, %v2913
        %v2931 = vadd.f32 %v2930, 1.0
        %v2932 = vmul.f32 %v2931, %v2913
        %v2933 = vand.u32 2147483647, %v2913
        %vm2934 = vcmp.lt.f32.partialorder %v2933, 0.0004427343
        %v2935 = vsel %vm2934, %v2932, %v2929
        %v2936 = vadd.f32 %v2915, 1.0
        %v2937 = vlog2.pop %v2936
        %v2938 = vmul.f32 %v2937, 0.6931472
        %v2939 = vmul.f32 -0.5, %v2915
        %v2940 = vadd.f32 %v2939, 1.0
        %v2941 = vmul.f32 %v2940, %v2915
        %v2942 = vand.u32 2147483647, %v2915
        %vm2943 = vcmp.lt.f32.partialorder %v2942, 0.0004427343
        %v2944 = vsel %vm2943, %v2941, %v2938
        %v2945 = vadd.f32 %v2917, 1.0
        %v2946 = vlog2.pop %v2945
        %v2947 = vmul.f32 %v2946, 0.6931472
        %v2948 = vmul.f32 -0.5, %v2917
        %v2949 = vadd.f32 %v2948, 1.0
        %v2950 = vmul.f32 %v2949, %v2917
        %v2951 = vand.u32 2147483647, %v2917
        %vm2952 = vcmp.lt.f32.partialorder %v2951, 0.0004427343
        %v2953 = vsel %vm2952, %v2950, %v2947
        %v2954 = vadd.f32 %v2890, %v2926
        %v2955 = vadd.f32 %v2891, %v2935
        %v2956 = vadd.f32 %v2892, %v2944
        %v2957 = vadd.f32 %v2893, %v2953
        %v2958 = vsel %vm2894, %v2898, %v2954
        %v2959 = vsel %vm2895, %v2899, %v2955
        %v2960 = vsel %vm2896, %v2900, %v2956
        %v2961 = vsel %vm2897, %v2901, %v2957
        %v2962 = vld [vmem:[#allocation2 + $0x100] sm:$0xff]
        %v2963 = vld [vmem:[#allocation2 + $0x108] sm:$0x3]
        %v2964 = vld [vmem:[#allocation2 + $0x110] sm:$0x1]
        %v2965 = vlaneseq
        %v2966 = vshrl.u32 %v2965, 7
        %v2967 = vsub.s32 0, %v2966
        %v2968 = vrot.slane %v2964, %v2967
        %v2970 = vsel %vm370, %v2958, 0
        %v2973 = vsel %vm370, %v2959, 0
        %v2976 = vsel %vm370, %v2960, 0
        %v2979 = vsel %vm370, %v2961, 0
        %v2982 = vsel %vm383, %v2963, 0
        %2984 = vmatprep.subr.mxu0 0.0
        %2985 = vmatpush1.msra.mxu0 %v2962
        %2986 = vmatprep.subr.mxu0 0.0
        %2987 = vmatpush1.msra.mxu0 %v2982
        %2988 = vmatprep.subr.mxu0 0.0
        %2989 = vmatpush1.msra.mxu0 0.0
        %2990 = vmatprep.subr.mxu0 0.0
        %2991 = vmatpush1.msra.mxu0 0.0
        %2992 = vmatprep.subr.mxu0 0.0
        %2993 = vmatpush1.msra.mxu0 0.0
        %2994 = vmatprep.subr.mxu0 0.0
        %2995 = vmatpush1.msra.mxu0 0.0
        %2996 = vmatprep.subr.mxu0 0.0
        %2997 = vmatpush1.msra.mxu0 0.0
        %2998 = vmatprep.subr.mxu0 0.0
        %2999 = vmatpush1.msra.mxu0 0.0
        %3000 = vmatprep.subr.mxu0 0.0
        %3001 = vmatpush1.msra.mxu0 0.0
        %3002 = vmatprep.subr.mxu0 0.0
        %3003 = vmatpush1.msra.mxu0 0.0
        %3004 = vmatprep.subr.mxu0 0.0
        %3005 = vmatpush1.msra.mxu0 0.0
        %3006 = vmatprep.subr.mxu0 0.0
        %3007 = vmatpush1.msra.mxu0 0.0
        %3008 = vmatprep.subr.mxu0 0.0
        %3009 = vmatpush1.msra.mxu0 0.0
        %3010 = vmatprep.subr.mxu0 0.0
        %3011 = vmatpush1.msra.mxu0 0.0
        %3012 = vmatprep.subr.mxu0 0.0
        %3013 = vmatpush1.msra.mxu0 0.0
        %3014 = vmatprep.subr.mxu0 0.0
        %3015 = vmatpush1.msra.mxu0 0.0
        %3016 = vmatprep.subr.mxu0 0.0
        %3017 = vmatpush1.msra.mxu0 0.0
        %3018 = vmatprep.subr.mxu0 0.0
        %3019 = vmatpush1.msra.mxu0 0.0
        %3020 = vmatprep.subr.mxu0 0.0
        %3021 = vmatpush1.msra.mxu0 0.0
        %3022 = vmatprep.subr.mxu0 0.0
        %3023 = vmatpush1.msra.mxu0 0.0
        %3024 = vmatprep.subr.mxu0 0.0
        %3025 = vmatpush1.msra.mxu0 0.0
        %3026 = vmatprep.subr.mxu0 0.0
        %3027 = vmatpush1.msra.mxu0 0.0
        %3028 = vmatprep.subr.mxu0 0.0
        %3029 = vmatpush1.msra.mxu0 0.0
        %3030 = vmatprep.subr.mxu0 0.0
        %3031 = vmatpush1.msra.mxu0 0.0
        %3032 = vmatprep.subr.mxu0 0.0
        %3033 = vmatpush1.msra.mxu0 0.0
        %3034 = vmatprep.subr.mxu0 0.0
        %3035 = vmatpush1.msra.mxu0 0.0
        %3036 = vmatprep.subr.mxu0 0.0
        %3037 = vmatpush1.msra.mxu0 0.0
        %3038 = vmatprep.subr.mxu0 0.0
        %3039 = vmatpush1.msra.mxu0 0.0
        %3040 = vmatprep.subr.mxu0 0.0
        %3041 = vmatpush1.msra.mxu0 0.0
        %3042 = vmatprep.subr.mxu0 0.0
        %3043 = vmatpush1.msra.mxu0 0.0
        %3044 = vmatprep.subr.mxu0 0.0
        %3045 = vmatpush1.msra.mxu0 0.0
        %3046 = vmatprep.subr.mxu0 0.0
        %3047 = vmatpush1.msra.mxu0 0.0
        %3048 = vmatprep.mubr.f32.mxu0 0.0
        %3049 = vmatmul.mubr.f32.gmra.mrb[0].mxu0 %v2970
        %v3050 = vpop.f32.mrb[0].mxu0
        %v3051 = vadd.f32 %v2968, %v3050
        %v3052 = vpop.f32.mrb[0].mxu0
        %3053 = vmatprep.mubr.f32.mxu0 0.0
        %3054 = vmatmul.mubr.f32.gmra.mrb[0].mxu0 %v2973
        %v3055 = vpop.f32.mrb[0].mxu0
        %v3056 = vadd.f32 %v2968, %v3055
        %v3057 = vpop.f32.mrb[0].mxu0
        %3058 = vmatprep.mubr.f32.mxu0 0.0
        %3059 = vmatmul.mubr.f32.gmra.mrb[0].mxu0 %v2976
        %v3060 = vpop.f32.mrb[0].mxu0
        %v3061 = vadd.f32 %v2968, %v3060
        %v3062 = vpop.f32.mrb[0].mxu0
        %3063 = vmatprep.mubr.f32.mxu0 0.0
        %3064 = vmatmul.mubr.f32.gmra.mrb[0].mxu0 %v2979
        %v3065 = vpop.f32.mrb[0].mxu0
        %v3066 = vadd.f32 %v2968, %v3065
        %v3067 = vpop.f32.mrb[0].mxu0
        %3068 = vdwg.mxu0
        %v3069 = vmax.f32 %v3051, 0.0
        %v3070 = vmax.f32 %v3056, 0.0
        %v3071 = vmax.f32 %v3061, 0.0
        %v3072 = vmax.f32 %v3066, 0.0
        %vm3073 = vcmp.ne.f32.partialorder %v3051, %v3051
        %vm3074 = vcmp.ne.f32.partialorder %v3056, %v3056
        %vm3075 = vcmp.ne.f32.partialorder %v3061, %v3061
        %vm3076 = vcmp.ne.f32.partialorder %v3066, %v3066
        %v3077 = vadd.f32 %v3051, 0.0
        %v3078 = vadd.f32 %v3056, 0.0
        %v3079 = vadd.f32 %v3061, 0.0
        %v3080 = vadd.f32 %v3066, 0.0
        %v3081 = vand.u32 2147483647, %v3051
        %v3082 = vand.u32 2147483647, %v3056
        %v3083 = vand.u32 2147483647, %v3061
        %v3084 = vand.u32 2147483647, %v3066
        %v3085 = vsub.f32 0.0, %v3081
        %v3086 = vsub.f32 0.0, %v3082
        %v3087 = vsub.f32 0.0, %v3083
        %v3088 = vsub.f32 0.0, %v3084
        %v3089 = vmul.f32 %v3085, 1.442695
        %v3090 = vpow.pop %v3089
        %v3091 = vmul.f32 %v3086, 1.442695
        %v3092 = vpow.pop %v3091
        %v3093 = vmul.f32 %v3087, 1.442695
        %v3094 = vpow.pop %v3093
        %v3095 = vmul.f32 %v3088, 1.442695
        %v3096 = vpow.pop %v3095
        %v3097 = vadd.f32 %v3090, 1.0
        %v3098 = vlog2.pop %v3097
        %v3099 = vmul.f32 %v3098, 0.6931472
        %v3100 = vmul.f32 -0.5, %v3090
        %v3101 = vadd.f32 %v3100, 1.0
        %v3102 = vmul.f32 %v3101, %v3090
        %v3103 = vand.u32 2147483647, %v3090
        %vm3104 = vcmp.lt.f32.partialorder %v3103, 0.0004427343
        %v3105 = vsel %vm3104, %v3102, %v3099
        %v3106 = vadd.f32 %v3092, 1.0
        %v3107 = vlog2.pop %v3106
        %v3108 = vmul.f32 %v3107, 0.6931472
        %v3109 = vmul.f32 -0.5, %v3092
        %v3110 = vadd.f32 %v3109, 1.0
        %v3111 = vmul.f32 %v3110, %v3092
        %v3112 = vand.u32 2147483647, %v3092
        %vm3113 = vcmp.lt.f32.partialorder %v3112, 0.0004427343
        %v3114 = vsel %vm3113, %v3111, %v3108
        %v3115 = vadd.f32 %v3094, 1.0
        %v3116 = vlog2.pop %v3115
        %v3117 = vmul.f32 %v3116, 0.6931472
        %v3118 = vmul.f32 -0.5, %v3094
        %v3119 = vadd.f32 %v3118, 1.0
        %v3120 = vmul.f32 %v3119, %v3094
        %v3121 = vand.u32 2147483647, %v3094
        %vm3122 = vcmp.lt.f32.partialorder %v3121, 0.0004427343
        %v3123 = vsel %vm3122, %v3120, %v3117
        %v3124 = vadd.f32 %v3096, 1.0
        %v3125 = vlog2.pop %v3124
        %v3126 = vmul.f32 %v3125, 0.6931472
        %v3127 = vmul.f32 -0.5, %v3096
        %v3128 = vadd.f32 %v3127, 1.0
        %v3129 = vmul.f32 %v3128, %v3096
        %v3130 = vand.u32 2147483647, %v3096
        %vm3131 = vcmp.lt.f32.partialorder %v3130, 0.0004427343
        %v3132 = vsel %vm3131, %v3129, %v3126
        %v3133 = vadd.f32 %v3069, %v3105
        %v3134 = vadd.f32 %v3070, %v3114
        %v3135 = vadd.f32 %v3071, %v3123
        %v3136 = vadd.f32 %v3072, %v3132
        %v3137 = vsel %vm3073, %v3077, %v3133
        %v3138 = vsel %vm3074, %v3078, %v3134
        %v3139 = vsel %vm3075, %v3079, %v3135
        %v3140 = vsel %vm3076, %v3080, %v3136
        %v3141 = vadd.f32 %v3137, 1.0
        %v3142 = vadd.f32 %v3138, 1.0
        %v3143 = vadd.f32 %v3139, 1.0
        %v3144 = vadd.f32 %v3140, 1.0
        %3149 = vrot.lane.b32.xlu0 %v3141, 127
        %v3150 = vpop.permute.xlu0 %3149
        %3151 = vrot.lane.b32.xlu0 %v3142, 127
        %v3152 = vpop.permute.xlu0 %3151
        %3153 = vrot.lane.b32.xlu0 %v3143, 127
        %v3154 = vpop.permute.xlu0 %3153
        %3155 = vrot.lane.b32.xlu0 %v3144, 127
        %v3156 = vpop.permute.xlu0 %3155
        %v3161 = vadd.f32 %v3141, %v3150
        %v3162 = vadd.f32 %v3142, %v3152
        %v3163 = vadd.f32 %v3143, %v3154
        %v3164 = vadd.f32 %v3144, %v3156
        %v3165 = vrcp.pop %v3161
        %v3166 = vrcp.pop %v3162
        %v3167 = vrcp.pop %v3163
        %v3168 = vrcp.pop %v3164
        %v3169 = vmul.f32 %v3141, %v3165
        %v3170 = vmul.f32 %v3142, %v3166
        %v3171 = vmul.f32 %v3143, %v3167
        %v3172 = vmul.f32 %v3144, %v3168
        %v3174 = vcombine.high %v2599, %v2599
        %v3176 = vunpack.c.l.s4 1966171168
        %v3177 = vunpack.c.0.s8 %v3176
        %v3178 = vlaneseq
        %v3179 = vshrl.u32 %v3178, 7
        %v3180 = vsub.s32 %v3177, %v3179
        %v3181 = vrot.slane %v2599, %v3180
        %v3183 = vunpack.c.l.s4 1966171168
        %v3184 = vunpack.c.0.s8 %v3183
        %v3185 = vlaneseq
        %v3186 = vshrl.u32 %v3185, 7
        %v3187 = vsub.s32 %v3184, %v3186
        %v3188 = vrot.slane %v3174, %v3187
        %v3189 = vcombine.high %v3181, %v3181
        %v3190 = vcombine.high %v3188, %v3188
        %v3192 = vunpack.c.l.s4 1966171168
        %v3193 = vunpack.c.0.s8 %v3192
        %v3194 = vlaneseq
        %v3195 = vshrl.u32 %v3194, 7
        %v3196 = vsub.s32 %v3193, %v3195
        %v3197 = vrot.slane %v3181, %v3196
        %v3199 = vunpack.c.l.s4 1966171168
        %v3200 = vunpack.c.0.s8 %v3199
        %v3201 = vlaneseq
        %v3202 = vshrl.u32 %v3201, 7
        %v3203 = vsub.s32 %v3200, %v3202
        %v3204 = vrot.slane %v3188, %v3203
        %v3206 = vunpack.c.l.s4 1966171168
        %v3207 = vunpack.c.0.s8 %v3206
        %v3208 = vlaneseq
        %v3209 = vshrl.u32 %v3208, 7
        %v3210 = vsub.s32 %v3207, %v3209
        %v3211 = vrot.slane %v3189, %v3210
        %v3213 = vunpack.c.l.s4 1966171168
        %v3214 = vunpack.c.0.s8 %v3213
        %v3215 = vlaneseq
        %v3216 = vshrl.u32 %v3215, 7
        %v3217 = vsub.s32 %v3214, %v3216
        %v3218 = vrot.slane %v3190, %v3217
        %v3219 = vcombine.high %v3197, %v3197
        %v3220 = vcombine.high %v3204, %v3204
        %v3221 = vcombine.high %v3211, %v3211
        %v3222 = vcombine.high %v3218, %v3218
        %v3223 = vlaneseq
        %v3224 = vshrl.u32 %v3223, 7
        %v3225 = vsub.s32 0, %v3224
        %v3226 = vrot.slane %v3197, %v3225
        %v3227 = vlaneseq
        %v3228 = vshrl.u32 %v3227, 7
        %v3229 = vsub.s32 0, %v3228
        %v3230 = vrot.slane %v3211, %v3229
        %v3231 = vlaneseq
        %v3232 = vshrl.u32 %v3231, 7
        %v3233 = vsub.s32 0, %v3232
        %v3234 = vrot.slane %v3219, %v3233
        %v3235 = vlaneseq
        %v3236 = vshrl.u32 %v3235, 7
        %v3237 = vsub.s32 0, %v3236
        %v3238 = vrot.slane %v3221, %v3237
        %v3239 = vlaneseq
        %v3240 = vshrl.u32 %v3239, 7
        %v3241 = vsub.s32 0, %v3240
        %v3242 = vrot.slane %v3204, %v3241
        %v3243 = vlaneseq
        %v3244 = vshrl.u32 %v3243, 7
        %v3245 = vsub.s32 0, %v3244
        %v3246 = vrot.slane %v3218, %v3245
        %v3247 = vlaneseq
        %v3248 = vshrl.u32 %v3247, 7
        %v3249 = vsub.s32 0, %v3248
        %v3250 = vrot.slane %v3220, %v3249
        %v3251 = vlaneseq
        %v3252 = vshrl.u32 %v3251, 7
        %v3253 = vsub.s32 0, %v3252
        %v3254 = vrot.slane %v3222, %v3253
        %v3263 = vadd.f32 %v812, %v3226
        %v3264 = vadd.f32 %v812, %v3230
        %v3265 = vadd.f32 %v812, %v3234
        %v3266 = vadd.f32 %v812, %v3238
        %v3267 = vadd.f32 %v812, %v3242
        %v3268 = vadd.f32 %v812, %v3246
        %v3269 = vadd.f32 %v812, %v3250
        %v3270 = vadd.f32 %v812, %v3254
        %v3271 = vadd.f32 %v817, %v3226
        %v3272 = vadd.f32 %v817, %v3230
        %v3273 = vadd.f32 %v817, %v3234
        %v3274 = vadd.f32 %v817, %v3238
        %v3275 = vadd.f32 %v817, %v3242
        %v3276 = vadd.f32 %v817, %v3246
        %v3277 = vadd.f32 %v817, %v3250
        %v3278 = vadd.f32 %v817, %v3254
        %v3279 = vadd.f32 %v822, %v3226
        %v3280 = vadd.f32 %v822, %v3230
        %v3281 = vadd.f32 %v822, %v3234
        %v3282 = vadd.f32 %v822, %v3238
        %v3283 = vadd.f32 %v822, %v3242
        %v3284 = vadd.f32 %v822, %v3246
        %v3285 = vadd.f32 %v822, %v3250
        %v3286 = vadd.f32 %v822, %v3254
        %v3287 = vadd.f32 %v827, %v3226
        %v3288 = vadd.f32 %v827, %v3230
        %v3289 = vadd.f32 %v827, %v3234
        %v3290 = vadd.f32 %v827, %v3238
        %v3291 = vadd.f32 %v827, %v3242
        %v3292 = vadd.f32 %v827, %v3246
        %v3293 = vadd.f32 %v827, %v3250
        %v3294 = vadd.f32 %v827, %v3254
        %v3295 = vld [vmem:[#allocation2 + $0x118] sm:$0xff]
        %v3296 = vld [vmem:[#allocation2 + $0x120] sm:$0x1]
        %v3297 = vlaneseq
        %v3298 = vshrl.u32 %v3297, 7
        %v3299 = vsub.s32 0, %v3298
        %v3300 = vrot.slane %v3296, %v3299
        %v3302 = vsel %vm849, %v3263, 0
        %v3305 = vsel %vm849, %v3264, 0
        %v3308 = vsel %vm849, %v3265, 0
        %v3311 = vsel %vm849, %v3266, 0
        %v3314 = vsel %vm849, %v3267, 0
        %v3317 = vsel %vm849, %v3268, 0
        %v3320 = vsel %vm849, %v3269, 0
        %v3323 = vsel %vm849, %v3270, 0
        %v3326 = vsel %vm849, %v3271, 0
        %v3329 = vsel %vm849, %v3272, 0
        %v3332 = vsel %vm849, %v3273, 0
        %v3335 = vsel %vm849, %v3274, 0
        %v3338 = vsel %vm849, %v3275, 0
        %v3341 = vsel %vm849, %v3276, 0
        %v3344 = vsel %vm849, %v3277, 0
        %v3347 = vsel %vm849, %v3278, 0
        %v3350 = vsel %vm849, %v3279, 0
        %v3353 = vsel %vm849, %v3280, 0
        %v3356 = vsel %vm849, %v3281, 0
        %v3359 = vsel %vm849, %v3282, 0
        %v3362 = vsel %vm849, %v3283, 0
        %v3365 = vsel %vm849, %v3284, 0
        %v3368 = vsel %vm849, %v3285, 0
        %v3371 = vsel %vm849, %v3286, 0
        %v3374 = vsel %vm849, %v3287, 0
        %v3377 = vsel %vm849, %v3288, 0
        %v3380 = vsel %vm849, %v3289, 0
        %v3383 = vsel %vm849, %v3290, 0
        %v3386 = vsel %vm849, %v3291, 0
        %v3389 = vsel %vm849, %v3292, 0
        %v3392 = vsel %vm849, %v3293, 0
        %v3395 = vsel %vm849, %v3294, 0
        %3397 = vmatprep.subr.mxu0 0.0
        %3398 = vmatpush1.msra.mxu0 %v3295
        %3399 = vmatprep.subr.mxu0 0.0
        %3400 = vmatpush1.msra.mxu0 0.0
        %3401 = vmatprep.subr.mxu0 0.0
        %3402 = vmatpush1.msra.mxu0 0.0
        %3403 = vmatprep.subr.mxu0 0.0
        %3404 = vmatpush1.msra.mxu0 0.0
        %3405 = vmatprep.subr.mxu0 0.0
        %3406 = vmatpush1.msra.mxu0 0.0
        %3407 = vmatprep.subr.mxu0 0.0
        %3408 = vmatpush1.msra.mxu0 0.0
        %3409 = vmatprep.subr.mxu0 0.0
        %3410 = vmatpush1.msra.mxu0 0.0
        %3411 = vmatprep.subr.mxu0 0.0
        %3412 = vmatpush1.msra.mxu0 0.0
        %3413 = vmatprep.subr.mxu0 0.0
        %3414 = vmatpush1.msra.mxu0 0.0
        %3415 = vmatprep.subr.mxu0 0.0
        %3416 = vmatpush1.msra.mxu0 0.0
        %3417 = vmatprep.subr.mxu0 0.0
        %3418 = vmatpush1.msra.mxu0 0.0
        %3419 = vmatprep.subr.mxu0 0.0
        %3420 = vmatpush1.msra.mxu0 0.0
        %3421 = vmatprep.subr.mxu0 0.0
        %3422 = vmatpush1.msra.mxu0 0.0
        %3423 = vmatprep.subr.mxu0 0.0
        %3424 = vmatpush1.msra.mxu0 0.0
        %3425 = vmatprep.subr.mxu0 0.0
        %3426 = vmatpush1.msra.mxu0 0.0
        %3427 = vmatprep.subr.mxu0 0.0
        %3428 = vmatpush1.msra.mxu0 0.0
        %3429 = vmatprep.subr.mxu0 0.0
        %3430 = vmatpush1.msra.mxu0 0.0
        %3431 = vmatprep.subr.mxu0 0.0
        %3432 = vmatpush1.msra.mxu0 0.0
        %3433 = vmatprep.subr.mxu0 0.0
        %3434 = vmatpush1.msra.mxu0 0.0
        %3435 = vmatprep.subr.mxu0 0.0
        %3436 = vmatpush1.msra.mxu0 0.0
        %3437 = vmatprep.subr.mxu0 0.0
        %3438 = vmatpush1.msra.mxu0 0.0
        %3439 = vmatprep.subr.mxu0 0.0
        %3440 = vmatpush1.msra.mxu0 0.0
        %3441 = vmatprep.subr.mxu0 0.0
        %3442 = vmatpush1.msra.mxu0 0.0
        %3443 = vmatprep.subr.mxu0 0.0
        %3444 = vmatpush1.msra.mxu0 0.0
        %3445 = vmatprep.subr.mxu0 0.0
        %3446 = vmatpush1.msra.mxu0 0.0
        %3447 = vmatprep.subr.mxu0 0.0
        %3448 = vmatpush1.msra.mxu0 0.0
        %3449 = vmatprep.subr.mxu0 0.0
        %3450 = vmatpush1.msra.mxu0 0.0
        %3451 = vmatprep.subr.mxu0 0.0
        %3452 = vmatpush1.msra.mxu0 0.0
        %3453 = vmatprep.subr.mxu0 0.0
        %3454 = vmatpush1.msra.mxu0 0.0
        %3455 = vmatprep.subr.mxu0 0.0
        %3456 = vmatpush1.msra.mxu0 0.0
        %3457 = vmatprep.subr.mxu0 0.0
        %3458 = vmatpush1.msra.mxu0 0.0
        %3459 = vmatprep.subr.mxu0 0.0
        %3460 = vmatpush1.msra.mxu0 0.0
        %3461 = vmatprep.mubr.f32.mxu0 0.0
        %3462 = vmatmul.mubr.f32.gmra.mrb[0].mxu0 %v3302
        %v3463 = vpop.f32.mrb[0].mxu0
        %v3464 = vadd.f32 %v3300, %v3463
        %v3465 = vpop.f32.mrb[0].mxu0
        %3466 = vmatprep.mubr.f32.mxu0 0.0
        %3467 = vmatmul.mubr.f32.gmra.mrb[0].mxu0 %v3305
        %v3468 = vpop.f32.mrb[0].mxu0
        %v3469 = vadd.f32 %v3300, %v3468
        %v3470 = vpop.f32.mrb[0].mxu0
        %3471 = vmatprep.mubr.f32.mxu0 0.0
        %3472 = vmatmul.mubr.f32.gmra.mrb[0].mxu0 %v3308
        %v3473 = vpop.f32.mrb[0].mxu0
        %v3474 = vadd.f32 %v3300, %v3473
        %v3475 = vpop.f32.mrb[0].mxu0
        %3476 = vmatprep.mubr.f32.mxu0 0.0
        %3477 = vmatmul.mubr.f32.gmra.mrb[0].mxu0 %v3311
        %v3478 = vpop.f32.mrb[0].mxu0
        %v3479 = vadd.f32 %v3300, %v3478
        %v3480 = vpop.f32.mrb[0].mxu0
        %3481 = vmatprep.mubr.f32.mxu0 0.0
        %3482 = vmatmul.mubr.f32.gmra.mrb[0].mxu0 %v3314
        %v3483 = vpop.f32.mrb[0].mxu0
        %v3484 = vadd.f32 %v3300, %v3483
        %v3485 = vpop.f32.mrb[0].mxu0
        %3486 = vmatprep.mubr.f32.mxu0 0.0
        %3487 = vmatmul.mubr.f32.gmra.mrb[0].mxu0 %v3317
        %v3488 = vpop.f32.mrb[0].mxu0
        %v3489 = vadd.f32 %v3300, %v3488
        %v3490 = vpop.f32.mrb[0].mxu0
        %3491 = vmatprep.mubr.f32.mxu0 0.0
        %3492 = vmatmul.mubr.f32.gmra.mrb[0].mxu0 %v3320
        %v3493 = vpop.f32.mrb[0].mxu0
        %v3494 = vadd.f32 %v3300, %v3493
        %v3495 = vpop.f32.mrb[0].mxu0
        %3496 = vmatprep.mubr.f32.mxu0 0.0
        %3497 = vmatmul.mubr.f32.gmra.mrb[0].mxu0 %v3323
        %v3498 = vpop.f32.mrb[0].mxu0
        %v3499 = vadd.f32 %v3300, %v3498
        %v3500 = vpop.f32.mrb[0].mxu0
        %3501 = vmatprep.mubr.f32.mxu0 0.0
        %3502 = vmatmul.mubr.f32.gmra.mrb[0].mxu0 %v3326
        %v3503 = vpop.f32.mrb[0].mxu0
        %v3504 = vadd.f32 %v3300, %v3503
        %v3505 = vpop.f32.mrb[0].mxu0
        %3506 = vmatprep.mubr.f32.mxu0 0.0
        %3507 = vmatmul.mubr.f32.gmra.mrb[0].mxu0 %v3329
        %v3508 = vpop.f32.mrb[0].mxu0
        %v3509 = vadd.f32 %v3300, %v3508
        %v3510 = vpop.f32.mrb[0].mxu0
        %3511 = vmatprep.mubr.f32.mxu0 0.0
        %3512 = vmatmul.mubr.f32.gmra.mrb[0].mxu0 %v3332
        %v3513 = vpop.f32.mrb[0].mxu0
        %v3514 = vadd.f32 %v3300, %v3513
        %v3515 = vpop.f32.mrb[0].mxu0
        %3516 = vmatprep.mubr.f32.mxu0 0.0
        %3517 = vmatmul.mubr.f32.gmra.mrb[0].mxu0 %v3335
        %v3518 = vpop.f32.mrb[0].mxu0
        %v3519 = vadd.f32 %v3300, %v3518
        %v3520 = vpop.f32.mrb[0].mxu0
        %3521 = vmatprep.mubr.f32.mxu0 0.0
        %3522 = vmatmul.mubr.f32.gmra.mrb[0].mxu0 %v3338
        %v3523 = vpop.f32.mrb[0].mxu0
        %v3524 = vadd.f32 %v3300, %v3523
        %v3525 = vpop.f32.mrb[0].mxu0
        %3526 = vmatprep.mubr.f32.mxu0 0.0
        %3527 = vmatmul.mubr.f32.gmra.mrb[0].mxu0 %v3341
        %v3528 = vpop.f32.mrb[0].mxu0
        %v3529 = vadd.f32 %v3300, %v3528
        %v3530 = vpop.f32.mrb[0].mxu0
        %3531 = vmatprep.mubr.f32.mxu0 0.0
        %3532 = vmatmul.mubr.f32.gmra.mrb[0].mxu0 %v3344
        %v3533 = vpop.f32.mrb[0].mxu0
        %v3534 = vadd.f32 %v3300, %v3533
        %v3535 = vpop.f32.mrb[0].mxu0
        %3536 = vmatprep.mubr.f32.mxu0 0.0
        %3537 = vmatmul.mubr.f32.gmra.mrb[0].mxu0 %v3347
        %v3538 = vpop.f32.mrb[0].mxu0
        %v3539 = vadd.f32 %v3300, %v3538
        %v3540 = vpop.f32.mrb[0].mxu0
        %3541 = vmatprep.mubr.f32.mxu0 0.0
        %3542 = vmatmul.mubr.f32.gmra.mrb[0].mxu0 %v3350
        %v3543 = vpop.f32.mrb[0].mxu0
        %v3544 = vadd.f32 %v3300, %v3543
        %v3545 = vpop.f32.mrb[0].mxu0
        %3546 = vmatprep.mubr.f32.mxu0 0.0
        %3547 = vmatmul.mubr.f32.gmra.mrb[0].mxu0 %v3353
        %v3548 = vpop.f32.mrb[0].mxu0
        %v3549 = vadd.f32 %v3300, %v3548
        %v3550 = vpop.f32.mrb[0].mxu0
        %3551 = vmatprep.mubr.f32.mxu0 0.0
        %3552 = vmatmul.mubr.f32.gmra.mrb[0].mxu0 %v3356
        %v3553 = vpop.f32.mrb[0].mxu0
        %v3554 = vadd.f32 %v3300, %v3553
        %v3555 = vpop.f32.mrb[0].mxu0
        %3556 = vmatprep.mubr.f32.mxu0 0.0
        %3557 = vmatmul.mubr.f32.gmra.mrb[0].mxu0 %v3359
        %v3558 = vpop.f32.mrb[0].mxu0
        %v3559 = vadd.f32 %v3300, %v3558
        %v3560 = vpop.f32.mrb[0].mxu0
        %3561 = vmatprep.mubr.f32.mxu0 0.0
        %3562 = vmatmul.mubr.f32.gmra.mrb[0].mxu0 %v3362
        %v3563 = vpop.f32.mrb[0].mxu0
        %v3564 = vadd.f32 %v3300, %v3563
        %v3565 = vpop.f32.mrb[0].mxu0
        %3566 = vmatprep.mubr.f32.mxu0 0.0
        %3567 = vmatmul.mubr.f32.gmra.mrb[0].mxu0 %v3365
        %v3568 = vpop.f32.mrb[0].mxu0
        %v3569 = vadd.f32 %v3300, %v3568
        %v3570 = vpop.f32.mrb[0].mxu0
        %3571 = vmatprep.mubr.f32.mxu0 0.0
        %3572 = vmatmul.mubr.f32.gmra.mrb[0].mxu0 %v3368
        %v3573 = vpop.f32.mrb[0].mxu0
        %v3574 = vadd.f32 %v3300, %v3573
        %v3575 = vpop.f32.mrb[0].mxu0
        %3576 = vmatprep.mubr.f32.mxu0 0.0
        %3577 = vmatmul.mubr.f32.gmra.mrb[0].mxu0 %v3371
        %v3578 = vpop.f32.mrb[0].mxu0
        %v3579 = vadd.f32 %v3300, %v3578
        %v3580 = vpop.f32.mrb[0].mxu0
        %3581 = vmatprep.mubr.f32.mxu0 0.0
        %3582 = vmatmul.mubr.f32.gmra.mrb[0].mxu0 %v3374
        %v3583 = vpop.f32.mrb[0].mxu0
        %v3584 = vadd.f32 %v3300, %v3583
        %v3585 = vpop.f32.mrb[0].mxu0
        %3586 = vmatprep.mubr.f32.mxu0 0.0
        %3587 = vmatmul.mubr.f32.gmra.mrb[0].mxu0 %v3377
        %v3588 = vpop.f32.mrb[0].mxu0
        %v3589 = vadd.f32 %v3300, %v3588
        %v3590 = vpop.f32.mrb[0].mxu0
        %3591 = vmatprep.mubr.f32.mxu0 0.0
        %3592 = vmatmul.mubr.f32.gmra.mrb[0].mxu0 %v3380
        %v3593 = vpop.f32.mrb[0].mxu0
        %v3594 = vadd.f32 %v3300, %v3593
        %v3595 = vpop.f32.mrb[0].mxu0
        %3596 = vmatprep.mubr.f32.mxu0 0.0
        %3597 = vmatmul.mubr.f32.gmra.mrb[0].mxu0 %v3383
        %v3598 = vpop.f32.mrb[0].mxu0
        %v3599 = vadd.f32 %v3300, %v3598
        %v3600 = vpop.f32.mrb[0].mxu0
        %3601 = vmatprep.mubr.f32.mxu0 0.0
        %3602 = vmatmul.mubr.f32.gmra.mrb[0].mxu0 %v3386
        %v3603 = vpop.f32.mrb[0].mxu0
        %v3604 = vadd.f32 %v3300, %v3603
        %v3605 = vpop.f32.mrb[0].mxu0
        %3606 = vmatprep.mubr.f32.mxu0 0.0
        %3607 = vmatmul.mubr.f32.gmra.mrb[0].mxu0 %v3389
        %v3608 = vpop.f32.mrb[0].mxu0
        %v3609 = vadd.f32 %v3300, %v3608
        %v3610 = vpop.f32.mrb[0].mxu0
        %3611 = vmatprep.mubr.f32.mxu0 0.0
        %3612 = vmatmul.mubr.f32.gmra.mrb[0].mxu0 %v3392
        %v3613 = vpop.f32.mrb[0].mxu0
        %v3614 = vadd.f32 %v3300, %v3613
        %v3615 = vpop.f32.mrb[0].mxu0
        %3616 = vmatprep.mubr.f32.mxu0 0.0
        %3617 = vmatmul.mubr.f32.gmra.mrb[0].mxu0 %v3395
        %v3618 = vpop.f32.mrb[0].mxu0
        %v3619 = vadd.f32 %v3300, %v3618
        %v3620 = vpop.f32.mrb[0].mxu0
        %3621 = vdwg.mxu0
        %v3622 = vmax.f32 %v3464, 0.0
        %v3623 = vmax.f32 %v3469, 0.0
        %v3624 = vmax.f32 %v3474, 0.0
        %v3625 = vmax.f32 %v3479, 0.0
        %v3626 = vmax.f32 %v3484, 0.0
        %v3627 = vmax.f32 %v3489, 0.0
        %v3628 = vmax.f32 %v3494, 0.0
        %v3629 = vmax.f32 %v3499, 0.0
        %v3630 = vmax.f32 %v3504, 0.0
        %v3631 = vmax.f32 %v3509, 0.0
        %v3632 = vmax.f32 %v3514, 0.0
        %v3633 = vmax.f32 %v3519, 0.0
        %v3634 = vmax.f32 %v3524, 0.0
        %v3635 = vmax.f32 %v3529, 0.0
        %v3636 = vmax.f32 %v3534, 0.0
        %v3637 = vmax.f32 %v3539, 0.0
        %v3638 = vmax.f32 %v3544, 0.0
        %v3639 = vmax.f32 %v3549, 0.0
        %v3640 = vmax.f32 %v3554, 0.0
        %v3641 = vmax.f32 %v3559, 0.0
        %v3642 = vmax.f32 %v3564, 0.0
        %v3643 = vmax.f32 %v3569, 0.0
        %v3644 = vmax.f32 %v3574, 0.0
        %v3645 = vmax.f32 %v3579, 0.0
        %v3646 = vmax.f32 %v3584, 0.0
        %v3647 = vmax.f32 %v3589, 0.0
        %v3648 = vmax.f32 %v3594, 0.0
        %v3649 = vmax.f32 %v3599, 0.0
        %v3650 = vmax.f32 %v3604, 0.0
        %v3651 = vmax.f32 %v3609, 0.0
        %v3652 = vmax.f32 %v3614, 0.0
        %v3653 = vmax.f32 %v3619, 0.0
        %vm3654 = vcmp.ne.f32.partialorder %v3464, %v3464
        %vm3655 = vcmp.ne.f32.partialorder %v3469, %v3469
        %vm3656 = vcmp.ne.f32.partialorder %v3474, %v3474
        %vm3657 = vcmp.ne.f32.partialorder %v3479, %v3479
        %vm3658 = vcmp.ne.f32.partialorder %v3484, %v3484
        %vm3659 = vcmp.ne.f32.partialorder %v3489, %v3489
        %vm3660 = vcmp.ne.f32.partialorder %v3494, %v3494
        %vm3661 = vcmp.ne.f32.partialorder %v3499, %v3499
        %vm3662 = vcmp.ne.f32.partialorder %v3504, %v3504
        %vm3663 = vcmp.ne.f32.partialorder %v3509, %v3509
        %vm3664 = vcmp.ne.f32.partialorder %v3514, %v3514
        %vm3665 = vcmp.ne.f32.partialorder %v3519, %v3519
        %vm3666 = vcmp.ne.f32.partialorder %v3524, %v3524
        %vm3667 = vcmp.ne.f32.partialorder %v3529, %v3529
        %vm3668 = vcmp.ne.f32.partialorder %v3534, %v3534
        %vm3669 = vcmp.ne.f32.partialorder %v3539, %v3539
        %vm3670 = vcmp.ne.f32.partialorder %v3544, %v3544
        %vm3671 = vcmp.ne.f32.partialorder %v3549, %v3549
        %vm3672 = vcmp.ne.f32.partialorder %v3554, %v3554
        %vm3673 = vcmp.ne.f32.partialorder %v3559, %v3559
        %vm3674 = vcmp.ne.f32.partialorder %v3564, %v3564
        %vm3675 = vcmp.ne.f32.partialorder %v3569, %v3569
        %vm3676 = vcmp.ne.f32.partialorder %v3574, %v3574
        %vm3677 = vcmp.ne.f32.partialorder %v3579, %v3579
        %vm3678 = vcmp.ne.f32.partialorder %v3584, %v3584
        %vm3679 = vcmp.ne.f32.partialorder %v3589, %v3589
        %vm3680 = vcmp.ne.f32.partialorder %v3594, %v3594
        %vm3681 = vcmp.ne.f32.partialorder %v3599, %v3599
        %vm3682 = vcmp.ne.f32.partialorder %v3604, %v3604
        %vm3683 = vcmp.ne.f32.partialorder %v3609, %v3609
        %vm3684 = vcmp.ne.f32.partialorder %v3614, %v3614
        %vm3685 = vcmp.ne.f32.partialorder %v3619, %v3619
        %v3686 = vadd.f32 %v3464, 0.0
        %v3687 = vadd.f32 %v3469, 0.0
        %v3688 = vadd.f32 %v3474, 0.0
        %v3689 = vadd.f32 %v3479, 0.0
        %v3690 = vadd.f32 %v3484, 0.0
        %v3691 = vadd.f32 %v3489, 0.0
        %v3692 = vadd.f32 %v3494, 0.0
        %v3693 = vadd.f32 %v3499, 0.0
        %v3694 = vadd.f32 %v3504, 0.0
        %v3695 = vadd.f32 %v3509, 0.0
        %v3696 = vadd.f32 %v3514, 0.0
        %v3697 = vadd.f32 %v3519, 0.0
        %v3698 = vadd.f32 %v3524, 0.0
        %v3699 = vadd.f32 %v3529, 0.0
        %v3700 = vadd.f32 %v3534, 0.0
        %v3701 = vadd.f32 %v3539, 0.0
        %v3702 = vadd.f32 %v3544, 0.0
        %v3703 = vadd.f32 %v3549, 0.0
        %v3704 = vadd.f32 %v3554, 0.0
        %v3705 = vadd.f32 %v3559, 0.0
        %v3706 = vadd.f32 %v3564, 0.0
        %v3707 = vadd.f32 %v3569, 0.0
        %v3708 = vadd.f32 %v3574, 0.0
        %v3709 = vadd.f32 %v3579, 0.0
        %v3710 = vadd.f32 %v3584, 0.0
        %v3711 = vadd.f32 %v3589, 0.0
        %v3712 = vadd.f32 %v3594, 0.0
        %v3713 = vadd.f32 %v3599, 0.0
        %v3714 = vadd.f32 %v3604, 0.0
        %v3715 = vadd.f32 %v3609, 0.0
        %v3716 = vadd.f32 %v3614, 0.0
        %v3717 = vadd.f32 %v3619, 0.0
        %v3718 = vand.u32 2147483647, %v3464
        %v3719 = vand.u32 2147483647, %v3469
        %v3720 = vand.u32 2147483647, %v3474
        %v3721 = vand.u32 2147483647, %v3479
        %v3722 = vand.u32 2147483647, %v3484
        %v3723 = vand.u32 2147483647, %v3489
        %v3724 = vand.u32 2147483647, %v3494
        %v3725 = vand.u32 2147483647, %v3499
        %v3726 = vand.u32 2147483647, %v3504
        %v3727 = vand.u32 2147483647, %v3509
        %v3728 = vand.u32 2147483647, %v3514
        %v3729 = vand.u32 2147483647, %v3519
        %v3730 = vand.u32 2147483647, %v3524
        %v3731 = vand.u32 2147483647, %v3529
        %v3732 = vand.u32 2147483647, %v3534
        %v3733 = vand.u32 2147483647, %v3539
        %v3734 = vand.u32 2147483647, %v3544
        %v3735 = vand.u32 2147483647, %v3549
        %v3736 = vand.u32 2147483647, %v3554
        %v3737 = vand.u32 2147483647, %v3559
        %v3738 = vand.u32 2147483647, %v3564
        %v3739 = vand.u32 2147483647, %v3569
        %v3740 = vand.u32 2147483647, %v3574
        %v3741 = vand.u32 2147483647, %v3579
        %v3742 = vand.u32 2147483647, %v3584
        %v3743 = vand.u32 2147483647, %v3589
        %v3744 = vand.u32 2147483647, %v3594
        %v3745 = vand.u32 2147483647, %v3599
        %v3746 = vand.u32 2147483647, %v3604
        %v3747 = vand.u32 2147483647, %v3609
        %v3748 = vand.u32 2147483647, %v3614
        %v3749 = vand.u32 2147483647, %v3619
        %v3750 = vsub.f32 0.0, %v3718
        %v3751 = vsub.f32 0.0, %v3719
        %v3752 = vsub.f32 0.0, %v3720
        %v3753 = vsub.f32 0.0, %v3721
        %v3754 = vsub.f32 0.0, %v3722
        %v3755 = vsub.f32 0.0, %v3723
        %v3756 = vsub.f32 0.0, %v3724
        %v3757 = vsub.f32 0.0, %v3725
        %v3758 = vsub.f32 0.0, %v3726
        %v3759 = vsub.f32 0.0, %v3727
        %v3760 = vsub.f32 0.0, %v3728
        %v3761 = vsub.f32 0.0, %v3729
        %v3762 = vsub.f32 0.0, %v3730
        %v3763 = vsub.f32 0.0, %v3731
        %v3764 = vsub.f32 0.0, %v3732
        %v3765 = vsub.f32 0.0, %v3733
        %v3766 = vsub.f32 0.0, %v3734
        %v3767 = vsub.f32 0.0, %v3735
        %v3768 = vsub.f32 0.0, %v3736
        %v3769 = vsub.f32 0.0, %v3737
        %v3770 = vsub.f32 0.0, %v3738
        %v3771 = vsub.f32 0.0, %v3739
        %v3772 = vsub.f32 0.0, %v3740
        %v3773 = vsub.f32 0.0, %v3741
        %v3774 = vsub.f32 0.0, %v3742
        %v3775 = vsub.f32 0.0, %v3743
        %v3776 = vsub.f32 0.0, %v3744
        %v3777 = vsub.f32 0.0, %v3745
        %v3778 = vsub.f32 0.0, %v3746
        %v3779 = vsub.f32 0.0, %v3747
        %v3780 = vsub.f32 0.0, %v3748
        %v3781 = vsub.f32 0.0, %v3749
        %v3782 = vmul.f32 %v3750, 1.442695
        %v3783 = vpow.pop %v3782
        %v3784 = vmul.f32 %v3751, 1.442695
        %v3785 = vpow.pop %v3784
        %v3786 = vmul.f32 %v3752, 1.442695
        %v3787 = vpow.pop %v3786
        %v3788 = vmul.f32 %v3753, 1.442695
        %v3789 = vpow.pop %v3788
        %v3790 = vmul.f32 %v3754, 1.442695
        %v3791 = vpow.pop %v3790
        %v3792 = vmul.f32 %v3755, 1.442695
        %v3793 = vpow.pop %v3792
        %v3794 = vmul.f32 %v3756, 1.442695
        %v3795 = vpow.pop %v3794
        %v3796 = vmul.f32 %v3757, 1.442695
        %v3797 = vpow.pop %v3796
        %v3798 = vmul.f32 %v3758, 1.442695
        %v3799 = vpow.pop %v3798
        %v3800 = vmul.f32 %v3759, 1.442695
        %v3801 = vpow.pop %v3800
        %v3802 = vmul.f32 %v3760, 1.442695
        %v3803 = vpow.pop %v3802
        %v3804 = vmul.f32 %v3761, 1.442695
        %v3805 = vpow.pop %v3804
        %v3806 = vmul.f32 %v3762, 1.442695
        %v3807 = vpow.pop %v3806
        %v3808 = vmul.f32 %v3763, 1.442695
        %v3809 = vpow.pop %v3808
        %v3810 = vmul.f32 %v3764, 1.442695
        %v3811 = vpow.pop %v3810
        %v3812 = vmul.f32 %v3765, 1.442695
        %v3813 = vpow.pop %v3812
        %v3814 = vmul.f32 %v3766, 1.442695
        %v3815 = vpow.pop %v3814
        %v3816 = vmul.f32 %v3767, 1.442695
        %v3817 = vpow.pop %v3816
        %v3818 = vmul.f32 %v3768, 1.442695
        %v3819 = vpow.pop %v3818
        %v3820 = vmul.f32 %v3769, 1.442695
        %v3821 = vpow.pop %v3820
        %v3822 = vmul.f32 %v3770, 1.442695
        %v3823 = vpow.pop %v3822
        %v3824 = vmul.f32 %v3771, 1.442695
        %v3825 = vpow.pop %v3824
        %v3826 = vmul.f32 %v3772, 1.442695
        %v3827 = vpow.pop %v3826
        %v3828 = vmul.f32 %v3773, 1.442695
        %v3829 = vpow.pop %v3828
        %v3830 = vmul.f32 %v3774, 1.442695
        %v3831 = vpow.pop %v3830
        %v3832 = vmul.f32 %v3775, 1.442695
        %v3833 = vpow.pop %v3832
        %v3834 = vmul.f32 %v3776, 1.442695
        %v3835 = vpow.pop %v3834
        %v3836 = vmul.f32 %v3777, 1.442695
        %v3837 = vpow.pop %v3836
        %v3838 = vmul.f32 %v3778, 1.442695
        %v3839 = vpow.pop %v3838
        %v3840 = vmul.f32 %v3779, 1.442695
        %v3841 = vpow.pop %v3840
        %v3842 = vmul.f32 %v3780, 1.442695
        %v3843 = vpow.pop %v3842
        %v3844 = vmul.f32 %v3781, 1.442695
        %v3845 = vpow.pop %v3844
        %v3846 = vadd.f32 %v3783, 1.0
        %v3847 = vlog2.pop %v3846
        %v3848 = vmul.f32 %v3847, 0.6931472
        %v3849 = vmul.f32 -0.5, %v3783
        %v3850 = vadd.f32 %v3849, 1.0
        %v3851 = vmul.f32 %v3850, %v3783
        %v3852 = vand.u32 2147483647, %v3783
        %vm3853 = vcmp.lt.f32.partialorder %v3852, 0.0004427343
        %v3854 = vsel %vm3853, %v3851, %v3848
        %v3855 = vadd.f32 %v3785, 1.0
        %v3856 = vlog2.pop %v3855
        %v3857 = vmul.f32 %v3856, 0.6931472
        %v3858 = vmul.f32 -0.5, %v3785
        %v3859 = vadd.f32 %v3858, 1.0
        %v3860 = vmul.f32 %v3859, %v3785
        %v3861 = vand.u32 2147483647, %v3785
        %vm3862 = vcmp.lt.f32.partialorder %v3861, 0.0004427343
        %v3863 = vsel %vm3862, %v3860, %v3857
        %v3864 = vadd.f32 %v3787, 1.0
        %v3865 = vlog2.pop %v3864
        %v3866 = vmul.f32 %v3865, 0.6931472
        %v3867 = vmul.f32 -0.5, %v3787
        %v3868 = vadd.f32 %v3867, 1.0
        %v3869 = vmul.f32 %v3868, %v3787
        %v3870 = vand.u32 2147483647, %v3787
        %vm3871 = vcmp.lt.f32.partialorder %v3870, 0.0004427343
        %v3872 = vsel %vm3871, %v3869, %v3866
        %v3873 = vadd.f32 %v3789, 1.0
        %v3874 = vlog2.pop %v3873
        %v3875 = vmul.f32 %v3874, 0.6931472
        %v3876 = vmul.f32 -0.5, %v3789
        %v3877 = vadd.f32 %v3876, 1.0
        %v3878 = vmul.f32 %v3877, %v3789
        %v3879 = vand.u32 2147483647, %v3789
        %vm3880 = vcmp.lt.f32.partialorder %v3879, 0.0004427343
        %v3881 = vsel %vm3880, %v3878, %v3875
        %v3882 = vadd.f32 %v3791, 1.0
        %v3883 = vlog2.pop %v3882
        %v3884 = vmul.f32 %v3883, 0.6931472
        %v3885 = vmul.f32 -0.5, %v3791
        %v3886 = vadd.f32 %v3885, 1.0
        %v3887 = vmul.f32 %v3886, %v3791
        %v3888 = vand.u32 2147483647, %v3791
        %vm3889 = vcmp.lt.f32.partialorder %v3888, 0.0004427343
        %v3890 = vsel %vm3889, %v3887, %v3884
        %v3891 = vadd.f32 %v3793, 1.0
        %v3892 = vlog2.pop %v3891
        %v3893 = vmul.f32 %v3892, 0.6931472
        %v3894 = vmul.f32 -0.5, %v3793
        %v3895 = vadd.f32 %v3894, 1.0
        %v3896 = vmul.f32 %v3895, %v3793
        %v3897 = vand.u32 2147483647, %v3793
        %vm3898 = vcmp.lt.f32.partialorder %v3897, 0.0004427343
        %v3899 = vsel %vm3898, %v3896, %v3893
        %v3900 = vadd.f32 %v3795, 1.0
        %v3901 = vlog2.pop %v3900
        %v3902 = vmul.f32 %v3901, 0.6931472
        %v3903 = vmul.f32 -0.5, %v3795
        %v3904 = vadd.f32 %v3903, 1.0
        %v3905 = vmul.f32 %v3904, %v3795
        %v3906 = vand.u32 2147483647, %v3795
        %vm3907 = vcmp.lt.f32.partialorder %v3906, 0.0004427343
        %v3908 = vsel %vm3907, %v3905, %v3902
        %v3909 = vadd.f32 %v3797, 1.0
        %v3910 = vlog2.pop %v3909
        %v3911 = vmul.f32 %v3910, 0.6931472
        %v3912 = vmul.f32 -0.5, %v3797
        %v3913 = vadd.f32 %v3912, 1.0
        %v3914 = vmul.f32 %v3913, %v3797
        %v3915 = vand.u32 2147483647, %v3797
        %vm3916 = vcmp.lt.f32.partialorder %v3915, 0.0004427343
        %v3917 = vsel %vm3916, %v3914, %v3911
        %v3918 = vadd.f32 %v3799, 1.0
        %v3919 = vlog2.pop %v3918
        %v3920 = vmul.f32 %v3919, 0.6931472
        %v3921 = vmul.f32 -0.5, %v3799
        %v3922 = vadd.f32 %v3921, 1.0
        %v3923 = vmul.f32 %v3922, %v3799
        %v3924 = vand.u32 2147483647, %v3799
        %vm3925 = vcmp.lt.f32.partialorder %v3924, 0.0004427343
        %v3926 = vsel %vm3925, %v3923, %v3920
        %v3927 = vadd.f32 %v3801, 1.0
        %v3928 = vlog2.pop %v3927
        %v3929 = vmul.f32 %v3928, 0.6931472
        %v3930 = vmul.f32 -0.5, %v3801
        %v3931 = vadd.f32 %v3930, 1.0
        %v3932 = vmul.f32 %v3931, %v3801
        %v3933 = vand.u32 2147483647, %v3801
        %vm3934 = vcmp.lt.f32.partialorder %v3933, 0.0004427343
        %v3935 = vsel %vm3934, %v3932, %v3929
        %v3936 = vadd.f32 %v3803, 1.0
        %v3937 = vlog2.pop %v3936
        %v3938 = vmul.f32 %v3937, 0.6931472
        %v3939 = vmul.f32 -0.5, %v3803
        %v3940 = vadd.f32 %v3939, 1.0
        %v3941 = vmul.f32 %v3940, %v3803
        %v3942 = vand.u32 2147483647, %v3803
        %vm3943 = vcmp.lt.f32.partialorder %v3942, 0.0004427343
        %v3944 = vsel %vm3943, %v3941, %v3938
        %v3945 = vadd.f32 %v3805, 1.0
        %v3946 = vlog2.pop %v3945
        %v3947 = vmul.f32 %v3946, 0.6931472
        %v3948 = vmul.f32 -0.5, %v3805
        %v3949 = vadd.f32 %v3948, 1.0
        %v3950 = vmul.f32 %v3949, %v3805
        %v3951 = vand.u32 2147483647, %v3805
        %vm3952 = vcmp.lt.f32.partialorder %v3951, 0.0004427343
        %v3953 = vsel %vm3952, %v3950, %v3947
        %v3954 = vadd.f32 %v3807, 1.0
        %v3955 = vlog2.pop %v3954
        %v3956 = vmul.f32 %v3955, 0.6931472
        %v3957 = vmul.f32 -0.5, %v3807
        %v3958 = vadd.f32 %v3957, 1.0
        %v3959 = vmul.f32 %v3958, %v3807
        %v3960 = vand.u32 2147483647, %v3807
        %vm3961 = vcmp.lt.f32.partialorder %v3960, 0.0004427343
        %v3962 = vsel %vm3961, %v3959, %v3956
        %v3963 = vadd.f32 %v3809, 1.0
        %v3964 = vlog2.pop %v3963
        %v3965 = vmul.f32 %v3964, 0.6931472
        %v3966 = vmul.f32 -0.5, %v3809
        %v3967 = vadd.f32 %v3966, 1.0
        %v3968 = vmul.f32 %v3967, %v3809
        %v3969 = vand.u32 2147483647, %v3809
        %vm3970 = vcmp.lt.f32.partialorder %v3969, 0.0004427343
        %v3971 = vsel %vm3970, %v3968, %v3965
        %v3972 = vadd.f32 %v3811, 1.0
        %v3973 = vlog2.pop %v3972
        %v3974 = vmul.f32 %v3973, 0.6931472
        %v3975 = vmul.f32 -0.5, %v3811
        %v3976 = vadd.f32 %v3975, 1.0
        %v3977 = vmul.f32 %v3976, %v3811
        %v3978 = vand.u32 2147483647, %v3811
        %vm3979 = vcmp.lt.f32.partialorder %v3978, 0.0004427343
        %v3980 = vsel %vm3979, %v3977, %v3974
        %v3981 = vadd.f32 %v3813, 1.0
        %v3982 = vlog2.pop %v3981
        %v3983 = vmul.f32 %v3982, 0.6931472
        %v3984 = vmul.f32 -0.5, %v3813
        %v3985 = vadd.f32 %v3984, 1.0
        %v3986 = vmul.f32 %v3985, %v3813
        %v3987 = vand.u32 2147483647, %v3813
        %vm3988 = vcmp.lt.f32.partialorder %v3987, 0.0004427343
        %v3989 = vsel %vm3988, %v3986, %v3983
        %v3990 = vadd.f32 %v3815, 1.0
        %v3991 = vlog2.pop %v3990
        %v3992 = vmul.f32 %v3991, 0.6931472
        %v3993 = vmul.f32 -0.5, %v3815
        %v3994 = vadd.f32 %v3993, 1.0
        %v3995 = vmul.f32 %v3994, %v3815
        %v3996 = vand.u32 2147483647, %v3815
        %vm3997 = vcmp.lt.f32.partialorder %v3996, 0.0004427343
        %v3998 = vsel %vm3997, %v3995, %v3992
        %v3999 = vadd.f32 %v3817, 1.0
        %v4000 = vlog2.pop %v3999
        %v4001 = vmul.f32 %v4000, 0.6931472
        %v4002 = vmul.f32 -0.5, %v3817
        %v4003 = vadd.f32 %v4002, 1.0
        %v4004 = vmul.f32 %v4003, %v3817
        %v4005 = vand.u32 2147483647, %v3817
        %vm4006 = vcmp.lt.f32.partialorder %v4005, 0.0004427343
        %v4007 = vsel %vm4006, %v4004, %v4001
        %v4008 = vadd.f32 %v3819, 1.0
        %v4009 = vlog2.pop %v4008
        %v4010 = vmul.f32 %v4009, 0.6931472
        %v4011 = vmul.f32 -0.5, %v3819
        %v4012 = vadd.f32 %v4011, 1.0
        %v4013 = vmul.f32 %v4012, %v3819
        %v4014 = vand.u32 2147483647, %v3819
        %vm4015 = vcmp.lt.f32.partialorder %v4014, 0.0004427343
        %v4016 = vsel %vm4015, %v4013, %v4010
        %v4017 = vadd.f32 %v3821, 1.0
        %v4018 = vlog2.pop %v4017
        %v4019 = vmul.f32 %v4018, 0.6931472
        %v4020 = vmul.f32 -0.5, %v3821
        %v4021 = vadd.f32 %v4020, 1.0
        %v4022 = vmul.f32 %v4021, %v3821
        %v4023 = vand.u32 2147483647, %v3821
        %vm4024 = vcmp.lt.f32.partialorder %v4023, 0.0004427343
        %v4025 = vsel %vm4024, %v4022, %v4019
        %v4026 = vadd.f32 %v3823, 1.0
        %v4027 = vlog2.pop %v4026
        %v4028 = vmul.f32 %v4027, 0.6931472
        %v4029 = vmul.f32 -0.5, %v3823
        %v4030 = vadd.f32 %v4029, 1.0
        %v4031 = vmul.f32 %v4030, %v3823
        %v4032 = vand.u32 2147483647, %v3823
        %vm4033 = vcmp.lt.f32.partialorder %v4032, 0.0004427343
        %v4034 = vsel %vm4033, %v4031, %v4028
        %v4035 = vadd.f32 %v3825, 1.0
        %v4036 = vlog2.pop %v4035
        %v4037 = vmul.f32 %v4036, 0.6931472
        %v4038 = vmul.f32 -0.5, %v3825
        %v4039 = vadd.f32 %v4038, 1.0
        %v4040 = vmul.f32 %v4039, %v3825
        %v4041 = vand.u32 2147483647, %v3825
        %vm4042 = vcmp.lt.f32.partialorder %v4041, 0.0004427343
        %v4043 = vsel %vm4042, %v4040, %v4037
        %v4044 = vadd.f32 %v3827, 1.0
        %v4045 = vlog2.pop %v4044
        %v4046 = vmul.f32 %v4045, 0.6931472
        %v4047 = vmul.f32 -0.5, %v3827
        %v4048 = vadd.f32 %v4047, 1.0
        %v4049 = vmul.f32 %v4048, %v3827
        %v4050 = vand.u32 2147483647, %v3827
        %vm4051 = vcmp.lt.f32.partialorder %v4050, 0.0004427343
        %v4052 = vsel %vm4051, %v4049, %v4046
        %v4053 = vadd.f32 %v3829, 1.0
        %v4054 = vlog2.pop %v4053
        %v4055 = vmul.f32 %v4054, 0.6931472
        %v4056 = vmul.f32 -0.5, %v3829
        %v4057 = vadd.f32 %v4056, 1.0
        %v4058 = vmul.f32 %v4057, %v3829
        %v4059 = vand.u32 2147483647, %v3829
        %vm4060 = vcmp.lt.f32.partialorder %v4059, 0.0004427343
        %v4061 = vsel %vm4060, %v4058, %v4055
        %v4062 = vadd.f32 %v3831, 1.0
        %v4063 = vlog2.pop %v4062
        %v4064 = vmul.f32 %v4063, 0.6931472
        %v4065 = vmul.f32 -0.5, %v3831
        %v4066 = vadd.f32 %v4065, 1.0
        %v4067 = vmul.f32 %v4066, %v3831
        %v4068 = vand.u32 2147483647, %v3831
        %vm4069 = vcmp.lt.f32.partialorder %v4068, 0.0004427343
        %v4070 = vsel %vm4069, %v4067, %v4064
        %v4071 = vadd.f32 %v3833, 1.0
        %v4072 = vlog2.pop %v4071
        %v4073 = vmul.f32 %v4072, 0.6931472
        %v4074 = vmul.f32 -0.5, %v3833
        %v4075 = vadd.f32 %v4074, 1.0
        %v4076 = vmul.f32 %v4075, %v3833
        %v4077 = vand.u32 2147483647, %v3833
        %vm4078 = vcmp.lt.f32.partialorder %v4077, 0.0004427343
        %v4079 = vsel %vm4078, %v4076, %v4073
        %v4080 = vadd.f32 %v3835, 1.0
        %v4081 = vlog2.pop %v4080
        %v4082 = vmul.f32 %v4081, 0.6931472
        %v4083 = vmul.f32 -0.5, %v3835
        %v4084 = vadd.f32 %v4083, 1.0
        %v4085 = vmul.f32 %v4084, %v3835
        %v4086 = vand.u32 2147483647, %v3835
        %vm4087 = vcmp.lt.f32.partialorder %v4086, 0.0004427343
        %v4088 = vsel %vm4087, %v4085, %v4082
        %v4089 = vadd.f32 %v3837, 1.0
        %v4090 = vlog2.pop %v4089
        %v4091 = vmul.f32 %v4090, 0.6931472
        %v4092 = vmul.f32 -0.5, %v3837
        %v4093 = vadd.f32 %v4092, 1.0
        %v4094 = vmul.f32 %v4093, %v3837
        %v4095 = vand.u32 2147483647, %v3837
        %vm4096 = vcmp.lt.f32.partialorder %v4095, 0.0004427343
        %v4097 = vsel %vm4096, %v4094, %v4091
        %v4098 = vadd.f32 %v3839, 1.0
        %v4099 = vlog2.pop %v4098
        %v4100 = vmul.f32 %v4099, 0.6931472
        %v4101 = vmul.f32 -0.5, %v3839
        %v4102 = vadd.f32 %v4101, 1.0
        %v4103 = vmul.f32 %v4102, %v3839
        %v4104 = vand.u32 2147483647, %v3839
        %vm4105 = vcmp.lt.f32.partialorder %v4104, 0.0004427343
        %v4106 = vsel %vm4105, %v4103, %v4100
        %v4107 = vadd.f32 %v3841, 1.0
        %v4108 = vlog2.pop %v4107
        %v4109 = vmul.f32 %v4108, 0.6931472
        %v4110 = vmul.f32 -0.5, %v3841
        %v4111 = vadd.f32 %v4110, 1.0
        %v4112 = vmul.f32 %v4111, %v3841
        %v4113 = vand.u32 2147483647, %v3841
        %vm4114 = vcmp.lt.f32.partialorder %v4113, 0.0004427343
        %v4115 = vsel %vm4114, %v4112, %v4109
        %v4116 = vadd.f32 %v3843, 1.0
        %v4117 = vlog2.pop %v4116
        %v4118 = vmul.f32 %v4117, 0.6931472
        %v4119 = vmul.f32 -0.5, %v3843
        %v4120 = vadd.f32 %v4119, 1.0
        %v4121 = vmul.f32 %v4120, %v3843
        %v4122 = vand.u32 2147483647, %v3843
        %vm4123 = vcmp.lt.f32.partialorder %v4122, 0.0004427343
        %v4124 = vsel %vm4123, %v4121, %v4118
        %v4125 = vadd.f32 %v3845, 1.0
        %v4126 = vlog2.pop %v4125
        %v4127 = vmul.f32 %v4126, 0.6931472
        %v4128 = vmul.f32 -0.5, %v3845
        %v4129 = vadd.f32 %v4128, 1.0
        %v4130 = vmul.f32 %v4129, %v3845
        %v4131 = vand.u32 2147483647, %v3845
        %vm4132 = vcmp.lt.f32.partialorder %v4131, 0.0004427343
        %v4133 = vsel %vm4132, %v4130, %v4127
        %v4134 = vadd.f32 %v3622, %v3854
        %v4135 = vadd.f32 %v3623, %v3863
        %v4136 = vadd.f32 %v3624, %v3872
        %v4137 = vadd.f32 %v3625, %v3881
        %v4138 = vadd.f32 %v3626, %v3890
        %v4139 = vadd.f32 %v3627, %v3899
        %v4140 = vadd.f32 %v3628, %v3908
        %v4141 = vadd.f32 %v3629, %v3917
        %v4142 = vadd.f32 %v3630, %v3926
        %v4143 = vadd.f32 %v3631, %v3935
        %v4144 = vadd.f32 %v3632, %v3944
        %v4145 = vadd.f32 %v3633, %v3953
        %v4146 = vadd.f32 %v3634, %v3962
        %v4147 = vadd.f32 %v3635, %v3971
        %v4148 = vadd.f32 %v3636, %v3980
        %v4149 = vadd.f32 %v3637, %v3989
        %v4150 = vadd.f32 %v3638, %v3998
        %v4151 = vadd.f32 %v3639, %v4007
        %v4152 = vadd.f32 %v3640, %v4016
        %v4153 = vadd.f32 %v3641, %v4025
        %v4154 = vadd.f32 %v3642, %v4034
        %v4155 = vadd.f32 %v3643, %v4043
        %v4156 = vadd.f32 %v3644, %v4052
        %v4157 = vadd.f32 %v3645, %v4061
        %v4158 = vadd.f32 %v3646, %v4070
        %v4159 = vadd.f32 %v3647, %v4079
        %v4160 = vadd.f32 %v3648, %v4088
        %v4161 = vadd.f32 %v3649, %v4097
        %v4162 = vadd.f32 %v3650, %v4106
        %v4163 = vadd.f32 %v3651, %v4115
        %v4164 = vadd.f32 %v3652, %v4124
        %v4165 = vadd.f32 %v3653, %v4133
        %v4166 = vsel %vm3654, %v3686, %v4134
        %v4167 = vsel %vm3655, %v3687, %v4135
        %v4168 = vsel %vm3656, %v3688, %v4136
        %v4169 = vsel %vm3657, %v3689, %v4137
        %v4170 = vsel %vm3658, %v3690, %v4138
        %v4171 = vsel %vm3659, %v3691, %v4139
        %v4172 = vsel %vm3660, %v3692, %v4140
        %v4173 = vsel %vm3661, %v3693, %v4141
        %v4174 = vsel %vm3662, %v3694, %v4142
        %v4175 = vsel %vm3663, %v3695, %v4143
        %v4176 = vsel %vm3664, %v3696, %v4144
        %v4177 = vsel %vm3665, %v3697, %v4145
        %v4178 = vsel %vm3666, %v3698, %v4146
        %v4179 = vsel %vm3667, %v3699, %v4147
        %v4180 = vsel %vm3668, %v3700, %v4148
        %v4181 = vsel %vm3669, %v3701, %v4149
        %v4182 = vsel %vm3670, %v3702, %v4150
        %v4183 = vsel %vm3671, %v3703, %v4151
        %v4184 = vsel %vm3672, %v3704, %v4152
        %v4185 = vsel %vm3673, %v3705, %v4153
        %v4186 = vsel %vm3674, %v3706, %v4154
        %v4187 = vsel %vm3675, %v3707, %v4155
        %v4188 = vsel %vm3676, %v3708, %v4156
        %v4189 = vsel %vm3677, %v3709, %v4157
        %v4190 = vsel %vm3678, %v3710, %v4158
        %v4191 = vsel %vm3679, %v3711, %v4159
        %v4192 = vsel %vm3680, %v3712, %v4160
        %v4193 = vsel %vm3681, %v3713, %v4161
        %v4194 = vsel %vm3682, %v3714, %v4162
        %v4195 = vsel %vm3683, %v3715, %v4163
        %v4196 = vsel %vm3684, %v3716, %v4164
        %v4197 = vsel %vm3685, %v3717, %v4165
        %v4198 = vld [vmem:[#allocation2 + $0x128] sm:$0xff]
        %v4199 = vld [vmem:[#allocation2 + $0x130] sm:$0x3]
        %v4200 = vld [vmem:[#allocation2 + $0x138] sm:$0x1]
        %v4201 = vlaneseq
        %v4202 = vshrl.u32 %v4201, 7
        %v4203 = vsub.s32 0, %v4202
        %v4204 = vrot.slane %v4200, %v4203
        %v4206 = vsel %vm370, %v4166, 0
        %v4209 = vsel %vm370, %v4167, 0
        %v4212 = vsel %vm370, %v4168, 0
        %v4215 = vsel %vm370, %v4169, 0
        %v4218 = vsel %vm370, %v4170, 0
        %v4221 = vsel %vm370, %v4171, 0
        %v4224 = vsel %vm370, %v4172, 0
        %v4227 = vsel %vm370, %v4173, 0
        %v4230 = vsel %vm370, %v4174, 0
        %v4233 = vsel %vm370, %v4175, 0
        %v4236 = vsel %vm370, %v4176, 0
        %v4239 = vsel %vm370, %v4177, 0
        %v4242 = vsel %vm370, %v4178, 0
        %v4245 = vsel %vm370, %v4179, 0
        %v4248 = vsel %vm370, %v4180, 0
        %v4251 = vsel %vm370, %v4181, 0
        %v4254 = vsel %vm370, %v4182, 0
        %v4257 = vsel %vm370, %v4183, 0
        %v4260 = vsel %vm370, %v4184, 0
        %v4263 = vsel %vm370, %v4185, 0
        %v4266 = vsel %vm370, %v4186, 0
        %v4269 = vsel %vm370, %v4187, 0
        %v4272 = vsel %vm370, %v4188, 0
        %v4275 = vsel %vm370, %v4189, 0
        %v4278 = vsel %vm370, %v4190, 0
        %v4281 = vsel %vm370, %v4191, 0
        %v4284 = vsel %vm370, %v4192, 0
        %v4287 = vsel %vm370, %v4193, 0
        %v4290 = vsel %vm370, %v4194, 0
        %v4293 = vsel %vm370, %v4195, 0
        %v4296 = vsel %vm370, %v4196, 0
        %v4299 = vsel %vm370, %v4197, 0
        %v4302 = vsel %vm383, %v4199, 0
        %4304 = vmatprep.subr.mxu0 0.0
        %4305 = vmatpush1.msra.mxu0 %v4198
        %4306 = vmatprep.subr.mxu0 0.0
        %4307 = vmatpush1.msra.mxu0 %v4302
        %4308 = vmatprep.subr.mxu0 0.0
        %4309 = vmatpush1.msra.mxu0 0.0
        %4310 = vmatprep.subr.mxu0 0.0
        %4311 = vmatpush1.msra.mxu0 0.0
        %4312 = vmatprep.subr.mxu0 0.0
        %4313 = vmatpush1.msra.mxu0 0.0
        %4314 = vmatprep.subr.mxu0 0.0
        %4315 = vmatpush1.msra.mxu0 0.0
        %4316 = vmatprep.subr.mxu0 0.0
        %4317 = vmatpush1.msra.mxu0 0.0
        %4318 = vmatprep.subr.mxu0 0.0
        %4319 = vmatpush1.msra.mxu0 0.0
        %4320 = vmatprep.subr.mxu0 0.0
        %4321 = vmatpush1.msra.mxu0 0.0
        %4322 = vmatprep.subr.mxu0 0.0
        %4323 = vmatpush1.msra.mxu0 0.0
        %4324 = vmatprep.subr.mxu0 0.0
        %4325 = vmatpush1.msra.mxu0 0.0
        %4326 = vmatprep.subr.mxu0 0.0
        %4327 = vmatpush1.msra.mxu0 0.0
        %4328 = vmatprep.subr.mxu0 0.0
        %4329 = vmatpush1.msra.mxu0 0.0
        %4330 = vmatprep.subr.mxu0 0.0
        %4331 = vmatpush1.msra.mxu0 0.0
        %4332 = vmatprep.subr.mxu0 0.0
        %4333 = vmatpush1.msra.mxu0 0.0
        %4334 = vmatprep.subr.mxu0 0.0
        %4335 = vmatpush1.msra.mxu0 0.0
        %4336 = vmatprep.subr.mxu0 0.0
        %4337 = vmatpush1.msra.mxu0 0.0
        %4338 = vmatprep.subr.mxu0 0.0
        %4339 = vmatpush1.msra.mxu0 0.0
        %4340 = vmatprep.subr.mxu0 0.0
        %4341 = vmatpush1.msra.mxu0 0.0
        %4342 = vmatprep.subr.mxu0 0.0
        %4343 = vmatpush1.msra.mxu0 0.0
        %4344 = vmatprep.subr.mxu0 0.0
        %4345 = vmatpush1.msra.mxu0 0.0
        %4346 = vmatprep.subr.mxu0 0.0
        %4347 = vmatpush1.msra.mxu0 0.0
        %4348 = vmatprep.subr.mxu0 0.0
        %4349 = vmatpush1.msra.mxu0 0.0
        %4350 = vmatprep.subr.mxu0 0.0
        %4351 = vmatpush1.msra.mxu0 0.0
        %4352 = vmatprep.subr.mxu0 0.0
        %4353 = vmatpush1.msra.mxu0 0.0
        %4354 = vmatprep.subr.mxu0 0.0
        %4355 = vmatpush1.msra.mxu0 0.0
        %4356 = vmatprep.subr.mxu0 0.0
        %4357 = vmatpush1.msra.mxu0 0.0
        %4358 = vmatprep.subr.mxu0 0.0
        %4359 = vmatpush1.msra.mxu0 0.0
        %4360 = vmatprep.subr.mxu0 0.0
        %4361 = vmatpush1.msra.mxu0 0.0
        %4362 = vmatprep.subr.mxu0 0.0
        %4363 = vmatpush1.msra.mxu0 0.0
        %4364 = vmatprep.subr.mxu0 0.0
        %4365 = vmatpush1.msra.mxu0 0.0
        %4366 = vmatprep.subr.mxu0 0.0
        %4367 = vmatpush1.msra.mxu0 0.0
        %4368 = vmatprep.mubr.f32.mxu0 0.0
        %4369 = vmatmul.mubr.f32.gmra.mrb[0].mxu0 %v4206
        %v4370 = vpop.f32.mrb[0].mxu0
        %v4371 = vadd.f32 %v4204, %v4370
        %v4372 = vpop.f32.mrb[0].mxu0
        %4373 = vmatprep.mubr.f32.mxu0 0.0
        %4374 = vmatmul.mubr.f32.gmra.mrb[0].mxu0 %v4209
        %v4375 = vpop.f32.mrb[0].mxu0
        %v4376 = vadd.f32 %v4204, %v4375
        %v4377 = vpop.f32.mrb[0].mxu0
        %4378 = vmatprep.mubr.f32.mxu0 0.0
        %4379 = vmatmul.mubr.f32.gmra.mrb[0].mxu0 %v4212
        %v4380 = vpop.f32.mrb[0].mxu0
        %v4381 = vadd.f32 %v4204, %v4380
        %v4382 = vpop.f32.mrb[0].mxu0
        %4383 = vmatprep.mubr.f32.mxu0 0.0
        %4384 = vmatmul.mubr.f32.gmra.mrb[0].mxu0 %v4215
        %v4385 = vpop.f32.mrb[0].mxu0
        %v4386 = vadd.f32 %v4204, %v4385
        %v4387 = vpop.f32.mrb[0].mxu0
        %4388 = vmatprep.mubr.f32.mxu0 0.0
        %4389 = vmatmul.mubr.f32.gmra.mrb[0].mxu0 %v4218
        %v4390 = vpop.f32.mrb[0].mxu0
        %v4391 = vadd.f32 %v4204, %v4390
        %v4392 = vpop.f32.mrb[0].mxu0
        %4393 = vmatprep.mubr.f32.mxu0 0.0
        %4394 = vmatmul.mubr.f32.gmra.mrb[0].mxu0 %v4221
        %v4395 = vpop.f32.mrb[0].mxu0
        %v4396 = vadd.f32 %v4204, %v4395
        %v4397 = vpop.f32.mrb[0].mxu0
        %4398 = vmatprep.mubr.f32.mxu0 0.0
        %4399 = vmatmul.mubr.f32.gmra.mrb[0].mxu0 %v4224
        %v4400 = vpop.f32.mrb[0].mxu0
        %v4401 = vadd.f32 %v4204, %v4400
        %v4402 = vpop.f32.mrb[0].mxu0
        %4403 = vmatprep.mubr.f32.mxu0 0.0
        %4404 = vmatmul.mubr.f32.gmra.mrb[0].mxu0 %v4227
        %v4405 = vpop.f32.mrb[0].mxu0
        %v4406 = vadd.f32 %v4204, %v4405
        %v4407 = vpop.f32.mrb[0].mxu0
        %4408 = vmatprep.mubr.f32.mxu0 0.0
        %4409 = vmatmul.mubr.f32.gmra.mrb[0].mxu0 %v4230
        %v4410 = vpop.f32.mrb[0].mxu0
        %v4411 = vadd.f32 %v4204, %v4410
        %v4412 = vpop.f32.mrb[0].mxu0
        %4413 = vmatprep.mubr.f32.mxu0 0.0
        %4414 = vmatmul.mubr.f32.gmra.mrb[0].mxu0 %v4233
        %v4415 = vpop.f32.mrb[0].mxu0
        %v4416 = vadd.f32 %v4204, %v4415
        %v4417 = vpop.f32.mrb[0].mxu0
        %4418 = vmatprep.mubr.f32.mxu0 0.0
        %4419 = vmatmul.mubr.f32.gmra.mrb[0].mxu0 %v4236
        %v4420 = vpop.f32.mrb[0].mxu0
        %v4421 = vadd.f32 %v4204, %v4420
        %v4422 = vpop.f32.mrb[0].mxu0
        %4423 = vmatprep.mubr.f32.mxu0 0.0
        %4424 = vmatmul.mubr.f32.gmra.mrb[0].mxu0 %v4239
        %v4425 = vpop.f32.mrb[0].mxu0
        %v4426 = vadd.f32 %v4204, %v4425
        %v4427 = vpop.f32.mrb[0].mxu0
        %4428 = vmatprep.mubr.f32.mxu0 0.0
        %4429 = vmatmul.mubr.f32.gmra.mrb[0].mxu0 %v4242
        %v4430 = vpop.f32.mrb[0].mxu0
        %v4431 = vadd.f32 %v4204, %v4430
        %v4432 = vpop.f32.mrb[0].mxu0
        %4433 = vmatprep.mubr.f32.mxu0 0.0
        %4434 = vmatmul.mubr.f32.gmra.mrb[0].mxu0 %v4245
        %v4435 = vpop.f32.mrb[0].mxu0
        %v4436 = vadd.f32 %v4204, %v4435
        %v4437 = vpop.f32.mrb[0].mxu0
        %4438 = vmatprep.mubr.f32.mxu0 0.0
        %4439 = vmatmul.mubr.f32.gmra.mrb[0].mxu0 %v4248
        %v4440 = vpop.f32.mrb[0].mxu0
        %v4441 = vadd.f32 %v4204, %v4440
        %v4442 = vpop.f32.mrb[0].mxu0
        %4443 = vmatprep.mubr.f32.mxu0 0.0
        %4444 = vmatmul.mubr.f32.gmra.mrb[0].mxu0 %v4251
        %v4445 = vpop.f32.mrb[0].mxu0
        %v4446 = vadd.f32 %v4204, %v4445
        %v4447 = vpop.f32.mrb[0].mxu0
        %4448 = vmatprep.mubr.f32.mxu0 0.0
        %4449 = vmatmul.mubr.f32.gmra.mrb[0].mxu0 %v4254
        %v4450 = vpop.f32.mrb[0].mxu0
        %v4451 = vadd.f32 %v4204, %v4450
        %v4452 = vpop.f32.mrb[0].mxu0
        %4453 = vmatprep.mubr.f32.mxu0 0.0
        %4454 = vmatmul.mubr.f32.gmra.mrb[0].mxu0 %v4257
        %v4455 = vpop.f32.mrb[0].mxu0
        %v4456 = vadd.f32 %v4204, %v4455
        %v4457 = vpop.f32.mrb[0].mxu0
        %4458 = vmatprep.mubr.f32.mxu0 0.0
        %4459 = vmatmul.mubr.f32.gmra.mrb[0].mxu0 %v4260
        %v4460 = vpop.f32.mrb[0].mxu0
        %v4461 = vadd.f32 %v4204, %v4460
        %v4462 = vpop.f32.mrb[0].mxu0
        %4463 = vmatprep.mubr.f32.mxu0 0.0
        %4464 = vmatmul.mubr.f32.gmra.mrb[0].mxu0 %v4263
        %v4465 = vpop.f32.mrb[0].mxu0
        %v4466 = vadd.f32 %v4204, %v4465
        %v4467 = vpop.f32.mrb[0].mxu0
        %4468 = vmatprep.mubr.f32.mxu0 0.0
        %4469 = vmatmul.mubr.f32.gmra.mrb[0].mxu0 %v4266
        %v4470 = vpop.f32.mrb[0].mxu0
        %v4471 = vadd.f32 %v4204, %v4470
        %v4472 = vpop.f32.mrb[0].mxu0
        %4473 = vmatprep.mubr.f32.mxu0 0.0
        %4474 = vmatmul.mubr.f32.gmra.mrb[0].mxu0 %v4269
        %v4475 = vpop.f32.mrb[0].mxu0
        %v4476 = vadd.f32 %v4204, %v4475
        %v4477 = vpop.f32.mrb[0].mxu0
        %4478 = vmatprep.mubr.f32.mxu0 0.0
        %4479 = vmatmul.mubr.f32.gmra.mrb[0].mxu0 %v4272
        %v4480 = vpop.f32.mrb[0].mxu0
        %v4481 = vadd.f32 %v4204, %v4480
        %v4482 = vpop.f32.mrb[0].mxu0
        %4483 = vmatprep.mubr.f32.mxu0 0.0
        %4484 = vmatmul.mubr.f32.gmra.mrb[0].mxu0 %v4275
        %v4485 = vpop.f32.mrb[0].mxu0
        %v4486 = vadd.f32 %v4204, %v4485
        %v4487 = vpop.f32.mrb[0].mxu0
        %4488 = vmatprep.mubr.f32.mxu0 0.0
        %4489 = vmatmul.mubr.f32.gmra.mrb[0].mxu0 %v4278
        %v4490 = vpop.f32.mrb[0].mxu0
        %v4491 = vadd.f32 %v4204, %v4490
        %v4492 = vpop.f32.mrb[0].mxu0
        %4493 = vmatprep.mubr.f32.mxu0 0.0
        %4494 = vmatmul.mubr.f32.gmra.mrb[0].mxu0 %v4281
        %v4495 = vpop.f32.mrb[0].mxu0
        %v4496 = vadd.f32 %v4204, %v4495
        %v4497 = vpop.f32.mrb[0].mxu0
        %4498 = vmatprep.mubr.f32.mxu0 0.0
        %4499 = vmatmul.mubr.f32.gmra.mrb[0].mxu0 %v4284
        %v4500 = vpop.f32.mrb[0].mxu0
        %v4501 = vadd.f32 %v4204, %v4500
        %v4502 = vpop.f32.mrb[0].mxu0
        %4503 = vmatprep.mubr.f32.mxu0 0.0
        %4504 = vmatmul.mubr.f32.gmra.mrb[0].mxu0 %v4287
        %v4505 = vpop.f32.mrb[0].mxu0
        %v4506 = vadd.f32 %v4204, %v4505
        %v4507 = vpop.f32.mrb[0].mxu0
        %4508 = vmatprep.mubr.f32.mxu0 0.0
        %4509 = vmatmul.mubr.f32.gmra.mrb[0].mxu0 %v4290
        %v4510 = vpop.f32.mrb[0].mxu0
        %v4511 = vadd.f32 %v4204, %v4510
        %v4512 = vpop.f32.mrb[0].mxu0
        %4513 = vmatprep.mubr.f32.mxu0 0.0
        %4514 = vmatmul.mubr.f32.gmra.mrb[0].mxu0 %v4293
        %v4515 = vpop.f32.mrb[0].mxu0
        %v4516 = vadd.f32 %v4204, %v4515
        %v4517 = vpop.f32.mrb[0].mxu0
        %4518 = vmatprep.mubr.f32.mxu0 0.0
        %4519 = vmatmul.mubr.f32.gmra.mrb[0].mxu0 %v4296
        %v4520 = vpop.f32.mrb[0].mxu0
        %v4521 = vadd.f32 %v4204, %v4520
        %v4522 = vpop.f32.mrb[0].mxu0
        %4523 = vmatprep.mubr.f32.mxu0 0.0
        %4524 = vmatmul.mubr.f32.gmra.mrb[0].mxu0 %v4299
        %v4525 = vpop.f32.mrb[0].mxu0
        %v4526 = vadd.f32 %v4204, %v4525
        %v4527 = vpop.f32.mrb[0].mxu0
        %4528 = vdwg.mxu0
        %v4529 = vmax.f32 %v4371, 0.0
        %v4530 = vmax.f32 %v4376, 0.0
        %v4531 = vmax.f32 %v4381, 0.0
        %v4532 = vmax.f32 %v4386, 0.0
        %v4533 = vmax.f32 %v4391, 0.0
        %v4534 = vmax.f32 %v4396, 0.0
        %v4535 = vmax.f32 %v4401, 0.0
        %v4536 = vmax.f32 %v4406, 0.0
        %v4537 = vmax.f32 %v4411, 0.0
        %v4538 = vmax.f32 %v4416, 0.0
        %v4539 = vmax.f32 %v4421, 0.0
        %v4540 = vmax.f32 %v4426, 0.0
        %v4541 = vmax.f32 %v4431, 0.0
        %v4542 = vmax.f32 %v4436, 0.0
        %v4543 = vmax.f32 %v4441, 0.0
        %v4544 = vmax.f32 %v4446, 0.0
        %v4545 = vmax.f32 %v4451, 0.0
        %v4546 = vmax.f32 %v4456, 0.0
        %v4547 = vmax.f32 %v4461, 0.0
        %v4548 = vmax.f32 %v4466, 0.0
        %v4549 = vmax.f32 %v4471, 0.0
        %v4550 = vmax.f32 %v4476, 0.0
        %v4551 = vmax.f32 %v4481, 0.0
        %v4552 = vmax.f32 %v4486, 0.0
        %v4553 = vmax.f32 %v4491, 0.0
        %v4554 = vmax.f32 %v4496, 0.0
        %v4555 = vmax.f32 %v4501, 0.0
        %v4556 = vmax.f32 %v4506, 0.0
        %v4557 = vmax.f32 %v4511, 0.0
        %v4558 = vmax.f32 %v4516, 0.0
        %v4559 = vmax.f32 %v4521, 0.0
        %v4560 = vmax.f32 %v4526, 0.0
        %vm4561 = vcmp.ne.f32.partialorder %v4371, %v4371
        %vm4562 = vcmp.ne.f32.partialorder %v4376, %v4376
        %vm4563 = vcmp.ne.f32.partialorder %v4381, %v4381
        %vm4564 = vcmp.ne.f32.partialorder %v4386, %v4386
        %vm4565 = vcmp.ne.f32.partialorder %v4391, %v4391
        %vm4566 = vcmp.ne.f32.partialorder %v4396, %v4396
        %vm4567 = vcmp.ne.f32.partialorder %v4401, %v4401
        %vm4568 = vcmp.ne.f32.partialorder %v4406, %v4406
        %vm4569 = vcmp.ne.f32.partialorder %v4411, %v4411
        %vm4570 = vcmp.ne.f32.partialorder %v4416, %v4416
        %vm4571 = vcmp.ne.f32.partialorder %v4421, %v4421
        %vm4572 = vcmp.ne.f32.partialorder %v4426, %v4426
        %vm4573 = vcmp.ne.f32.partialorder %v4431, %v4431
        %vm4574 = vcmp.ne.f32.partialorder %v4436, %v4436
        %vm4575 = vcmp.ne.f32.partialorder %v4441, %v4441
        %vm4576 = vcmp.ne.f32.partialorder %v4446, %v4446
        %vm4577 = vcmp.ne.f32.partialorder %v4451, %v4451
        %vm4578 = vcmp.ne.f32.partialorder %v4456, %v4456
        %vm4579 = vcmp.ne.f32.partialorder %v4461, %v4461
        %vm4580 = vcmp.ne.f32.partialorder %v4466, %v4466
        %vm4581 = vcmp.ne.f32.partialorder %v4471, %v4471
        %vm4582 = vcmp.ne.f32.partialorder %v4476, %v4476
        %vm4583 = vcmp.ne.f32.partialorder %v4481, %v4481
        %vm4584 = vcmp.ne.f32.partialorder %v4486, %v4486
        %vm4585 = vcmp.ne.f32.partialorder %v4491, %v4491
        %vm4586 = vcmp.ne.f32.partialorder %v4496, %v4496
        %vm4587 = vcmp.ne.f32.partialorder %v4501, %v4501
        %vm4588 = vcmp.ne.f32.partialorder %v4506, %v4506
        %vm4589 = vcmp.ne.f32.partialorder %v4511, %v4511
        %vm4590 = vcmp.ne.f32.partialorder %v4516, %v4516
        %vm4591 = vcmp.ne.f32.partialorder %v4521, %v4521
        %vm4592 = vcmp.ne.f32.partialorder %v4526, %v4526
        %v4593 = vadd.f32 %v4371, 0.0
        %v4594 = vadd.f32 %v4376, 0.0
        %v4595 = vadd.f32 %v4381, 0.0
        %v4596 = vadd.f32 %v4386, 0.0
        %v4597 = vadd.f32 %v4391, 0.0
        %v4598 = vadd.f32 %v4396, 0.0
        %v4599 = vadd.f32 %v4401, 0.0
        %v4600 = vadd.f32 %v4406, 0.0
        %v4601 = vadd.f32 %v4411, 0.0
        %v4602 = vadd.f32 %v4416, 0.0
        %v4603 = vadd.f32 %v4421, 0.0
        %v4604 = vadd.f32 %v4426, 0.0
        %v4605 = vadd.f32 %v4431, 0.0
        %v4606 = vadd.f32 %v4436, 0.0
        %v4607 = vadd.f32 %v4441, 0.0
        %v4608 = vadd.f32 %v4446, 0.0
        %v4609 = vadd.f32 %v4451, 0.0
        %v4610 = vadd.f32 %v4456, 0.0
        %v4611 = vadd.f32 %v4461, 0.0
        %v4612 = vadd.f32 %v4466, 0.0
        %v4613 = vadd.f32 %v4471, 0.0
        %v4614 = vadd.f32 %v4476, 0.0
        %v4615 = vadd.f32 %v4481, 0.0
        %v4616 = vadd.f32 %v4486, 0.0
        %v4617 = vadd.f32 %v4491, 0.0
        %v4618 = vadd.f32 %v4496, 0.0
        %v4619 = vadd.f32 %v4501, 0.0
        %v4620 = vadd.f32 %v4506, 0.0
        %v4621 = vadd.f32 %v4511, 0.0
        %v4622 = vadd.f32 %v4516, 0.0
        %v4623 = vadd.f32 %v4521, 0.0
        %v4624 = vadd.f32 %v4526, 0.0
        %v4625 = vand.u32 2147483647, %v4371
        %v4626 = vand.u32 2147483647, %v4376
        %v4627 = vand.u32 2147483647, %v4381
        %v4628 = vand.u32 2147483647, %v4386
        %v4629 = vand.u32 2147483647, %v4391
        %v4630 = vand.u32 2147483647, %v4396
        %v4631 = vand.u32 2147483647, %v4401
        %v4632 = vand.u32 2147483647, %v4406
        %v4633 = vand.u32 2147483647, %v4411
        %v4634 = vand.u32 2147483647, %v4416
        %v4635 = vand.u32 2147483647, %v4421
        %v4636 = vand.u32 2147483647, %v4426
        %v4637 = vand.u32 2147483647, %v4431
        %v4638 = vand.u32 2147483647, %v4436
        %v4639 = vand.u32 2147483647, %v4441
        %v4640 = vand.u32 2147483647, %v4446
        %v4641 = vand.u32 2147483647, %v4451
        %v4642 = vand.u32 2147483647, %v4456
        %v4643 = vand.u32 2147483647, %v4461
        %v4644 = vand.u32 2147483647, %v4466
        %v4645 = vand.u32 2147483647, %v4471
        %v4646 = vand.u32 2147483647, %v4476
        %v4647 = vand.u32 2147483647, %v4481
        %v4648 = vand.u32 2147483647, %v4486
        %v4649 = vand.u32 2147483647, %v4491
        %v4650 = vand.u32 2147483647, %v4496
        %v4651 = vand.u32 2147483647, %v4501
        %v4652 = vand.u32 2147483647, %v4506
        %v4653 = vand.u32 2147483647, %v4511
        %v4654 = vand.u32 2147483647, %v4516
        %v4655 = vand.u32 2147483647, %v4521
        %v4656 = vand.u32 2147483647, %v4526
        %v4657 = vsub.f32 0.0, %v4625
        %v4658 = vsub.f32 0.0, %v4626
        %v4659 = vsub.f32 0.0, %v4627
        %v4660 = vsub.f32 0.0, %v4628
        %v4661 = vsub.f32 0.0, %v4629
        %v4662 = vsub.f32 0.0, %v4630
        %v4663 = vsub.f32 0.0, %v4631
        %v4664 = vsub.f32 0.0, %v4632
        %v4665 = vsub.f32 0.0, %v4633
        %v4666 = vsub.f32 0.0, %v4634
        %v4667 = vsub.f32 0.0, %v4635
        %v4668 = vsub.f32 0.0, %v4636
        %v4669 = vsub.f32 0.0, %v4637
        %v4670 = vsub.f32 0.0, %v4638
        %v4671 = vsub.f32 0.0, %v4639
        %v4672 = vsub.f32 0.0, %v4640
        %v4673 = vsub.f32 0.0, %v4641
        %v4674 = vsub.f32 0.0, %v4642
        %v4675 = vsub.f32 0.0, %v4643
        %v4676 = vsub.f32 0.0, %v4644
        %v4677 = vsub.f32 0.0, %v4645
        %v4678 = vsub.f32 0.0, %v4646
        %v4679 = vsub.f32 0.0, %v4647
        %v4680 = vsub.f32 0.0, %v4648
        %v4681 = vsub.f32 0.0, %v4649
        %v4682 = vsub.f32 0.0, %v4650
        %v4683 = vsub.f32 0.0, %v4651
        %v4684 = vsub.f32 0.0, %v4652
        %v4685 = vsub.f32 0.0, %v4653
        %v4686 = vsub.f32 0.0, %v4654
        %v4687 = vsub.f32 0.0, %v4655
        %v4688 = vsub.f32 0.0, %v4656
        %v4689 = vmul.f32 %v4657, 1.442695
        %v4690 = vpow.pop %v4689
        %v4691 = vmul.f32 %v4658, 1.442695
        %v4692 = vpow.pop %v4691
        %v4693 = vmul.f32 %v4659, 1.442695
        %v4694 = vpow.pop %v4693
        %v4695 = vmul.f32 %v4660, 1.442695
        %v4696 = vpow.pop %v4695
        %v4697 = vmul.f32 %v4661, 1.442695
        %v4698 = vpow.pop %v4697
        %v4699 = vmul.f32 %v4662, 1.442695
        %v4700 = vpow.pop %v4699
        %v4701 = vmul.f32 %v4663, 1.442695
        %v4702 = vpow.pop %v4701
        %v4703 = vmul.f32 %v4664, 1.442695
        %v4704 = vpow.pop %v4703
        %v4705 = vmul.f32 %v4665, 1.442695
        %v4706 = vpow.pop %v4705
        %v4707 = vmul.f32 %v4666, 1.442695
        %v4708 = vpow.pop %v4707
        %v4709 = vmul.f32 %v4667, 1.442695
        %v4710 = vpow.pop %v4709
        %v4711 = vmul.f32 %v4668, 1.442695
        %v4712 = vpow.pop %v4711
        %v4713 = vmul.f32 %v4669, 1.442695
        %v4714 = vpow.pop %v4713
        %v4715 = vmul.f32 %v4670, 1.442695
        %v4716 = vpow.pop %v4715
        %v4717 = vmul.f32 %v4671, 1.442695
        %v4718 = vpow.pop %v4717
        %v4719 = vmul.f32 %v4672, 1.442695
        %v4720 = vpow.pop %v4719
        %v4721 = vmul.f32 %v4673, 1.442695
        %v4722 = vpow.pop %v4721
        %v4723 = vmul.f32 %v4674, 1.442695
        %v4724 = vpow.pop %v4723
        %v4725 = vmul.f32 %v4675, 1.442695
        %v4726 = vpow.pop %v4725
        %v4727 = vmul.f32 %v4676, 1.442695
        %v4728 = vpow.pop %v4727
        %v4729 = vmul.f32 %v4677, 1.442695
        %v4730 = vpow.pop %v4729
        %v4731 = vmul.f32 %v4678, 1.442695
        %v4732 = vpow.pop %v4731
        %v4733 = vmul.f32 %v4679, 1.442695
        %v4734 = vpow.pop %v4733
        %v4735 = vmul.f32 %v4680, 1.442695
        %v4736 = vpow.pop %v4735
        %v4737 = vmul.f32 %v4681, 1.442695
        %v4738 = vpow.pop %v4737
        %v4739 = vmul.f32 %v4682, 1.442695
        %v4740 = vpow.pop %v4739
        %v4741 = vmul.f32 %v4683, 1.442695
        %v4742 = vpow.pop %v4741
        %v4743 = vmul.f32 %v4684, 1.442695
        %v4744 = vpow.pop %v4743
        %v4745 = vmul.f32 %v4685, 1.442695
        %v4746 = vpow.pop %v4745
        %v4747 = vmul.f32 %v4686, 1.442695
        %v4748 = vpow.pop %v4747
        %v4749 = vmul.f32 %v4687, 1.442695
        %v4750 = vpow.pop %v4749
        %v4751 = vmul.f32 %v4688, 1.442695
        %v4752 = vpow.pop %v4751
        %v4753 = vadd.f32 %v4690, 1.0
        %v4754 = vlog2.pop %v4753
        %v4755 = vmul.f32 %v4754, 0.6931472
        %v4756 = vmul.f32 -0.5, %v4690
        %v4757 = vadd.f32 %v4756, 1.0
        %v4758 = vmul.f32 %v4757, %v4690
        %v4759 = vand.u32 2147483647, %v4690
        %vm4760 = vcmp.lt.f32.partialorder %v4759, 0.0004427343
        %v4761 = vsel %vm4760, %v4758, %v4755
        %v4762 = vadd.f32 %v4692, 1.0
        %v4763 = vlog2.pop %v4762
        %v4764 = vmul.f32 %v4763, 0.6931472
        %v4765 = vmul.f32 -0.5, %v4692
        %v4766 = vadd.f32 %v4765, 1.0
        %v4767 = vmul.f32 %v4766, %v4692
        %v4768 = vand.u32 2147483647, %v4692
        %vm4769 = vcmp.lt.f32.partialorder %v4768, 0.0004427343
        %v4770 = vsel %vm4769, %v4767, %v4764
        %v4771 = vadd.f32 %v4694, 1.0
        %v4772 = vlog2.pop %v4771
        %v4773 = vmul.f32 %v4772, 0.6931472
        %v4774 = vmul.f32 -0.5, %v4694
        %v4775 = vadd.f32 %v4774, 1.0
        %v4776 = vmul.f32 %v4775, %v4694
        %v4777 = vand.u32 2147483647, %v4694
        %vm4778 = vcmp.lt.f32.partialorder %v4777, 0.0004427343
        %v4779 = vsel %vm4778, %v4776, %v4773
        %v4780 = vadd.f32 %v4696, 1.0
        %v4781 = vlog2.pop %v4780
        %v4782 = vmul.f32 %v4781, 0.6931472
        %v4783 = vmul.f32 -0.5, %v4696
        %v4784 = vadd.f32 %v4783, 1.0
        %v4785 = vmul.f32 %v4784, %v4696
        %v4786 = vand.u32 2147483647, %v4696
        %vm4787 = vcmp.lt.f32.partialorder %v4786, 0.0004427343
        %v4788 = vsel %vm4787, %v4785, %v4782
        %v4789 = vadd.f32 %v4698, 1.0
        %v4790 = vlog2.pop %v4789
        %v4791 = vmul.f32 %v4790, 0.6931472
        %v4792 = vmul.f32 -0.5, %v4698
        %v4793 = vadd.f32 %v4792, 1.0
        %v4794 = vmul.f32 %v4793, %v4698
        %v4795 = vand.u32 2147483647, %v4698
        %vm4796 = vcmp.lt.f32.partialorder %v4795, 0.0004427343
        %v4797 = vsel %vm4796, %v4794, %v4791
        %v4798 = vadd.f32 %v4700, 1.0
        %v4799 = vlog2.pop %v4798
        %v4800 = vmul.f32 %v4799, 0.6931472
        %v4801 = vmul.f32 -0.5, %v4700
        %v4802 = vadd.f32 %v4801, 1.0
        %v4803 = vmul.f32 %v4802, %v4700
        %v4804 = vand.u32 2147483647, %v4700
        %vm4805 = vcmp.lt.f32.partialorder %v4804, 0.0004427343
        %v4806 = vsel %vm4805, %v4803, %v4800
        %v4807 = vadd.f32 %v4702, 1.0
        %v4808 = vlog2.pop %v4807
        %v4809 = vmul.f32 %v4808, 0.6931472
        %v4810 = vmul.f32 -0.5, %v4702
        %v4811 = vadd.f32 %v4810, 1.0
        %v4812 = vmul.f32 %v4811, %v4702
        %v4813 = vand.u32 2147483647, %v4702
        %vm4814 = vcmp.lt.f32.partialorder %v4813, 0.0004427343
        %v4815 = vsel %vm4814, %v4812, %v4809
        %v4816 = vadd.f32 %v4704, 1.0
        %v4817 = vlog2.pop %v4816
        %v4818 = vmul.f32 %v4817, 0.6931472
        %v4819 = vmul.f32 -0.5, %v4704
        %v4820 = vadd.f32 %v4819, 1.0
        %v4821 = vmul.f32 %v4820, %v4704
        %v4822 = vand.u32 2147483647, %v4704
        %vm4823 = vcmp.lt.f32.partialorder %v4822, 0.0004427343
        %v4824 = vsel %vm4823, %v4821, %v4818
        %v4825 = vadd.f32 %v4706, 1.0
        %v4826 = vlog2.pop %v4825
        %v4827 = vmul.f32 %v4826, 0.6931472
        %v4828 = vmul.f32 -0.5, %v4706
        %v4829 = vadd.f32 %v4828, 1.0
        %v4830 = vmul.f32 %v4829, %v4706
        %v4831 = vand.u32 2147483647, %v4706
        %vm4832 = vcmp.lt.f32.partialorder %v4831, 0.0004427343
        %v4833 = vsel %vm4832, %v4830, %v4827
        %v4834 = vadd.f32 %v4708, 1.0
        %v4835 = vlog2.pop %v4834
        %v4836 = vmul.f32 %v4835, 0.6931472
        %v4837 = vmul.f32 -0.5, %v4708
        %v4838 = vadd.f32 %v4837, 1.0
        %v4839 = vmul.f32 %v4838, %v4708
        %v4840 = vand.u32 2147483647, %v4708
        %vm4841 = vcmp.lt.f32.partialorder %v4840, 0.0004427343
        %v4842 = vsel %vm4841, %v4839, %v4836
        %v4843 = vadd.f32 %v4710, 1.0
        %v4844 = vlog2.pop %v4843
        %v4845 = vmul.f32 %v4844, 0.6931472
        %v4846 = vmul.f32 -0.5, %v4710
        %v4847 = vadd.f32 %v4846, 1.0
        %v4848 = vmul.f32 %v4847, %v4710
        %v4849 = vand.u32 2147483647, %v4710
        %vm4850 = vcmp.lt.f32.partialorder %v4849, 0.0004427343
        %v4851 = vsel %vm4850, %v4848, %v4845
        %v4852 = vadd.f32 %v4712, 1.0
        %v4853 = vlog2.pop %v4852
        %v4854 = vmul.f32 %v4853, 0.6931472
        %v4855 = vmul.f32 -0.5, %v4712
        %v4856 = vadd.f32 %v4855, 1.0
        %v4857 = vmul.f32 %v4856, %v4712
        %v4858 = vand.u32 2147483647, %v4712
        %vm4859 = vcmp.lt.f32.partialorder %v4858, 0.0004427343
        %v4860 = vsel %vm4859, %v4857, %v4854
        %v4861 = vadd.f32 %v4714, 1.0
        %v4862 = vlog2.pop %v4861
        %v4863 = vmul.f32 %v4862, 0.6931472
        %v4864 = vmul.f32 -0.5, %v4714
        %v4865 = vadd.f32 %v4864, 1.0
        %v4866 = vmul.f32 %v4865, %v4714
        %v4867 = vand.u32 2147483647, %v4714
        %vm4868 = vcmp.lt.f32.partialorder %v4867, 0.0004427343
        %v4869 = vsel %vm4868, %v4866, %v4863
        %v4870 = vadd.f32 %v4716, 1.0
        %v4871 = vlog2.pop %v4870
        %v4872 = vmul.f32 %v4871, 0.6931472
        %v4873 = vmul.f32 -0.5, %v4716
        %v4874 = vadd.f32 %v4873, 1.0
        %v4875 = vmul.f32 %v4874, %v4716
        %v4876 = vand.u32 2147483647, %v4716
        %vm4877 = vcmp.lt.f32.partialorder %v4876, 0.0004427343
        %v4878 = vsel %vm4877, %v4875, %v4872
        %v4879 = vadd.f32 %v4718, 1.0
        %v4880 = vlog2.pop %v4879
        %v4881 = vmul.f32 %v4880, 0.6931472
        %v4882 = vmul.f32 -0.5, %v4718
        %v4883 = vadd.f32 %v4882, 1.0
        %v4884 = vmul.f32 %v4883, %v4718
        %v4885 = vand.u32 2147483647, %v4718
        %vm4886 = vcmp.lt.f32.partialorder %v4885, 0.0004427343
        %v4887 = vsel %vm4886, %v4884, %v4881
        %v4888 = vadd.f32 %v4720, 1.0
        %v4889 = vlog2.pop %v4888
        %v4890 = vmul.f32 %v4889, 0.6931472
        %v4891 = vmul.f32 -0.5, %v4720
        %v4892 = vadd.f32 %v4891, 1.0
        %v4893 = vmul.f32 %v4892, %v4720
        %v4894 = vand.u32 2147483647, %v4720
        %vm4895 = vcmp.lt.f32.partialorder %v4894, 0.0004427343
        %v4896 = vsel %vm4895, %v4893, %v4890
        %v4897 = vadd.f32 %v4722, 1.0
        %v4898 = vlog2.pop %v4897
        %v4899 = vmul.f32 %v4898, 0.6931472
        %v4900 = vmul.f32 -0.5, %v4722
        %v4901 = vadd.f32 %v4900, 1.0
        %v4902 = vmul.f32 %v4901, %v4722
        %v4903 = vand.u32 2147483647, %v4722
        %vm4904 = vcmp.lt.f32.partialorder %v4903, 0.0004427343
        %v4905 = vsel %vm4904, %v4902, %v4899
        %v4906 = vadd.f32 %v4724, 1.0
        %v4907 = vlog2.pop %v4906
        %v4908 = vmul.f32 %v4907, 0.6931472
        %v4909 = vmul.f32 -0.5, %v4724
        %v4910 = vadd.f32 %v4909, 1.0
        %v4911 = vmul.f32 %v4910, %v4724
        %v4912 = vand.u32 2147483647, %v4724
        %vm4913 = vcmp.lt.f32.partialorder %v4912, 0.0004427343
        %v4914 = vsel %vm4913, %v4911, %v4908
        %v4915 = vadd.f32 %v4726, 1.0
        %v4916 = vlog2.pop %v4915
        %v4917 = vmul.f32 %v4916, 0.6931472
        %v4918 = vmul.f32 -0.5, %v4726
        %v4919 = vadd.f32 %v4918, 1.0
        %v4920 = vmul.f32 %v4919, %v4726
        %v4921 = vand.u32 2147483647, %v4726
        %vm4922 = vcmp.lt.f32.partialorder %v4921, 0.0004427343
        %v4923 = vsel %vm4922, %v4920, %v4917
        %v4924 = vadd.f32 %v4728, 1.0
        %v4925 = vlog2.pop %v4924
        %v4926 = vmul.f32 %v4925, 0.6931472
        %v4927 = vmul.f32 -0.5, %v4728
        %v4928 = vadd.f32 %v4927, 1.0
        %v4929 = vmul.f32 %v4928, %v4728
        %v4930 = vand.u32 2147483647, %v4728
        %vm4931 = vcmp.lt.f32.partialorder %v4930, 0.0004427343
        %v4932 = vsel %vm4931, %v4929, %v4926
        %v4933 = vadd.f32 %v4730, 1.0
        %v4934 = vlog2.pop %v4933
        %v4935 = vmul.f32 %v4934, 0.6931472
        %v4936 = vmul.f32 -0.5, %v4730
        %v4937 = vadd.f32 %v4936, 1.0
        %v4938 = vmul.f32 %v4937, %v4730
        %v4939 = vand.u32 2147483647, %v4730
        %vm4940 = vcmp.lt.f32.partialorder %v4939, 0.0004427343
        %v4941 = vsel %vm4940, %v4938, %v4935
        %v4942 = vadd.f32 %v4732, 1.0
        %v4943 = vlog2.pop %v4942
        %v4944 = vmul.f32 %v4943, 0.6931472
        %v4945 = vmul.f32 -0.5, %v4732
        %v4946 = vadd.f32 %v4945, 1.0
        %v4947 = vmul.f32 %v4946, %v4732
        %v4948 = vand.u32 2147483647, %v4732
        %vm4949 = vcmp.lt.f32.partialorder %v4948, 0.0004427343
        %v4950 = vsel %vm4949, %v4947, %v4944
        %v4951 = vadd.f32 %v4734, 1.0
        %v4952 = vlog2.pop %v4951
        %v4953 = vmul.f32 %v4952, 0.6931472
        %v4954 = vmul.f32 -0.5, %v4734
        %v4955 = vadd.f32 %v4954, 1.0
        %v4956 = vmul.f32 %v4955, %v4734
        %v4957 = vand.u32 2147483647, %v4734
        %vm4958 = vcmp.lt.f32.partialorder %v4957, 0.0004427343
        %v4959 = vsel %vm4958, %v4956, %v4953
        %v4960 = vadd.f32 %v4736, 1.0
        %v4961 = vlog2.pop %v4960
        %v4962 = vmul.f32 %v4961, 0.6931472
        %v4963 = vmul.f32 -0.5, %v4736
        %v4964 = vadd.f32 %v4963, 1.0
        %v4965 = vmul.f32 %v4964, %v4736
        %v4966 = vand.u32 2147483647, %v4736
        %vm4967 = vcmp.lt.f32.partialorder %v4966, 0.0004427343
        %v4968 = vsel %vm4967, %v4965, %v4962
        %v4969 = vadd.f32 %v4738, 1.0
        %v4970 = vlog2.pop %v4969
        %v4971 = vmul.f32 %v4970, 0.6931472
        %v4972 = vmul.f32 -0.5, %v4738
        %v4973 = vadd.f32 %v4972, 1.0
        %v4974 = vmul.f32 %v4973, %v4738
        %v4975 = vand.u32 2147483647, %v4738
        %vm4976 = vcmp.lt.f32.partialorder %v4975, 0.0004427343
        %v4977 = vsel %vm4976, %v4974, %v4971
        %v4978 = vadd.f32 %v4740, 1.0
        %v4979 = vlog2.pop %v4978
        %v4980 = vmul.f32 %v4979, 0.6931472
        %v4981 = vmul.f32 -0.5, %v4740
        %v4982 = vadd.f32 %v4981, 1.0
        %v4983 = vmul.f32 %v4982, %v4740
        %v4984 = vand.u32 2147483647, %v4740
        %vm4985 = vcmp.lt.f32.partialorder %v4984, 0.0004427343
        %v4986 = vsel %vm4985, %v4983, %v4980
        %v4987 = vadd.f32 %v4742, 1.0
        %v4988 = vlog2.pop %v4987
        %v4989 = vmul.f32 %v4988, 0.6931472
        %v4990 = vmul.f32 -0.5, %v4742
        %v4991 = vadd.f32 %v4990, 1.0
        %v4992 = vmul.f32 %v4991, %v4742
        %v4993 = vand.u32 2147483647, %v4742
        %vm4994 = vcmp.lt.f32.partialorder %v4993, 0.0004427343
        %v4995 = vsel %vm4994, %v4992, %v4989
        %v4996 = vadd.f32 %v4744, 1.0
        %v4997 = vlog2.pop %v4996
        %v4998 = vmul.f32 %v4997, 0.6931472
        %v4999 = vmul.f32 -0.5, %v4744
        %v5000 = vadd.f32 %v4999, 1.0
        %v5001 = vmul.f32 %v5000, %v4744
        %v5002 = vand.u32 2147483647, %v4744
        %vm5003 = vcmp.lt.f32.partialorder %v5002, 0.0004427343
        %v5004 = vsel %vm5003, %v5001, %v4998
        %v5005 = vadd.f32 %v4746, 1.0
        %v5006 = vlog2.pop %v5005
        %v5007 = vmul.f32 %v5006, 0.6931472
        %v5008 = vmul.f32 -0.5, %v4746
        %v5009 = vadd.f32 %v5008, 1.0
        %v5010 = vmul.f32 %v5009, %v4746
        %v5011 = vand.u32 2147483647, %v4746
        %vm5012 = vcmp.lt.f32.partialorder %v5011, 0.0004427343
        %v5013 = vsel %vm5012, %v5010, %v5007
        %v5014 = vadd.f32 %v4748, 1.0
        %v5015 = vlog2.pop %v5014
        %v5016 = vmul.f32 %v5015, 0.6931472
        %v5017 = vmul.f32 -0.5, %v4748
        %v5018 = vadd.f32 %v5017, 1.0
        %v5019 = vmul.f32 %v5018, %v4748
        %v5020 = vand.u32 2147483647, %v4748
        %vm5021 = vcmp.lt.f32.partialorder %v5020, 0.0004427343
        %v5022 = vsel %vm5021, %v5019, %v5016
        %v5023 = vadd.f32 %v4750, 1.0
        %v5024 = vlog2.pop %v5023
        %v5025 = vmul.f32 %v5024, 0.6931472
        %v5026 = vmul.f32 -0.5, %v4750
        %v5027 = vadd.f32 %v5026, 1.0
        %v5028 = vmul.f32 %v5027, %v4750
        %v5029 = vand.u32 2147483647, %v4750
        %vm5030 = vcmp.lt.f32.partialorder %v5029, 0.0004427343
        %v5031 = vsel %vm5030, %v5028, %v5025
        %v5032 = vadd.f32 %v4752, 1.0
        %v5033 = vlog2.pop %v5032
        %v5034 = vmul.f32 %v5033, 0.6931472
        %v5035 = vmul.f32 -0.5, %v4752
        %v5036 = vadd.f32 %v5035, 1.0
        %v5037 = vmul.f32 %v5036, %v4752
        %v5038 = vand.u32 2147483647, %v4752
        %vm5039 = vcmp.lt.f32.partialorder %v5038, 0.0004427343
        %v5040 = vsel %vm5039, %v5037, %v5034
        %v5041 = vadd.f32 %v4529, %v4761
        %v5042 = vadd.f32 %v4530, %v4770
        %v5043 = vadd.f32 %v4531, %v4779
        %v5044 = vadd.f32 %v4532, %v4788
        %v5045 = vadd.f32 %v4533, %v4797
        %v5046 = vadd.f32 %v4534, %v4806
        %v5047 = vadd.f32 %v4535, %v4815
        %v5048 = vadd.f32 %v4536, %v4824
        %v5049 = vadd.f32 %v4537, %v4833
        %v5050 = vadd.f32 %v4538, %v4842
        %v5051 = vadd.f32 %v4539, %v4851
        %v5052 = vadd.f32 %v4540, %v4860
        %v5053 = vadd.f32 %v4541, %v4869
        %v5054 = vadd.f32 %v4542, %v4878
        %v5055 = vadd.f32 %v4543, %v4887
        %v5056 = vadd.f32 %v4544, %v4896
        %v5057 = vadd.f32 %v4545, %v4905
        %v5058 = vadd.f32 %v4546, %v4914
        %v5059 = vadd.f32 %v4547, %v4923
        %v5060 = vadd.f32 %v4548, %v4932
        %v5061 = vadd.f32 %v4549, %v4941
        %v5062 = vadd.f32 %v4550, %v4950
        %v5063 = vadd.f32 %v4551, %v4959
        %v5064 = vadd.f32 %v4552, %v4968
        %v5065 = vadd.f32 %v4553, %v4977
        %v5066 = vadd.f32 %v4554, %v4986
        %v5067 = vadd.f32 %v4555, %v4995
        %v5068 = vadd.f32 %v4556, %v5004
        %v5069 = vadd.f32 %v4557, %v5013
        %v5070 = vadd.f32 %v4558, %v5022
        %v5071 = vadd.f32 %v4559, %v5031
        %v5072 = vadd.f32 %v4560, %v5040
        %v5073 = vsel %vm4561, %v4593, %v5041
        %v5074 = vsel %vm4562, %v4594, %v5042
        %v5075 = vsel %vm4563, %v4595, %v5043
        %v5076 = vsel %vm4564, %v4596, %v5044
        %v5077 = vsel %vm4565, %v4597, %v5045
        %v5078 = vsel %vm4566, %v4598, %v5046
        %v5079 = vsel %vm4567, %v4599, %v5047
        %v5080 = vsel %vm4568, %v4600, %v5048
        %v5081 = vsel %vm4569, %v4601, %v5049
        %v5082 = vsel %vm4570, %v4602, %v5050
        %v5083 = vsel %vm4571, %v4603, %v5051
        %v5084 = vsel %vm4572, %v4604, %v5052
        %v5085 = vsel %vm4573, %v4605, %v5053
        %v5086 = vsel %vm4574, %v4606, %v5054
        %v5087 = vsel %vm4575, %v4607, %v5055
        %v5088 = vsel %vm4576, %v4608, %v5056
        %v5089 = vsel %vm4577, %v4609, %v5057
        %v5090 = vsel %vm4578, %v4610, %v5058
        %v5091 = vsel %vm4579, %v4611, %v5059
        %v5092 = vsel %vm4580, %v4612, %v5060
        %v5093 = vsel %vm4581, %v4613, %v5061
        %v5094 = vsel %vm4582, %v4614, %v5062
        %v5095 = vsel %vm4583, %v4615, %v5063
        %v5096 = vsel %vm4584, %v4616, %v5064
        %v5097 = vsel %vm4585, %v4617, %v5065
        %v5098 = vsel %vm4586, %v4618, %v5066
        %v5099 = vsel %vm4587, %v4619, %v5067
        %v5100 = vsel %vm4588, %v4620, %v5068
        %v5101 = vsel %vm4589, %v4621, %v5069
        %v5102 = vsel %vm4590, %v4622, %v5070
        %v5103 = vsel %vm4591, %v4623, %v5071
        %v5104 = vsel %vm4592, %v4624, %v5072
        %v5105 = vld [vmem:[#allocation2 + $0x140] sm:$0xff]
        %v5106 = vld [vmem:[#allocation2 + $0x148] sm:$0x3]
        %v5107 = vld [vmem:[#allocation2 + $0x150] sm:$0x1]
        %v5108 = vlaneseq
        %v5109 = vshrl.u32 %v5108, 7
        %v5110 = vsub.s32 0, %v5109
        %v5111 = vrot.slane %v5107, %v5110
        %v5113 = vsel %vm370, %v5073, 0
        %v5116 = vsel %vm370, %v5074, 0
        %v5119 = vsel %vm370, %v5075, 0
        %v5122 = vsel %vm370, %v5076, 0
        %v5125 = vsel %vm370, %v5077, 0
        %v5128 = vsel %vm370, %v5078, 0
        %v5131 = vsel %vm370, %v5079, 0
        %v5134 = vsel %vm370, %v5080, 0
        %v5137 = vsel %vm370, %v5081, 0
        %v5140 = vsel %vm370, %v5082, 0
        %v5143 = vsel %vm370, %v5083, 0
        %v5146 = vsel %vm370, %v5084, 0
        %v5149 = vsel %vm370, %v5085, 0
        %v5152 = vsel %vm370, %v5086, 0
        %v5155 = vsel %vm370, %v5087, 0
        %v5158 = vsel %vm370, %v5088, 0
        %v5161 = vsel %vm370, %v5089, 0
        %v5164 = vsel %vm370, %v5090, 0
        %v5167 = vsel %vm370, %v5091, 0
        %v5170 = vsel %vm370, %v5092, 0
        %v5173 = vsel %vm370, %v5093, 0
        %v5176 = vsel %vm370, %v5094, 0
        %v5179 = vsel %vm370, %v5095, 0
        %v5182 = vsel %vm370, %v5096, 0
        %v5185 = vsel %vm370, %v5097, 0
        %v5188 = vsel %vm370, %v5098, 0
        %v5191 = vsel %vm370, %v5099, 0
        %v5194 = vsel %vm370, %v5100, 0
        %v5197 = vsel %vm370, %v5101, 0
        %v5200 = vsel %vm370, %v5102, 0
        %v5203 = vsel %vm370, %v5103, 0
        %v5206 = vsel %vm370, %v5104, 0
        %v5209 = vsel %vm383, %v5106, 0
        %5211 = vmatprep.subr.mxu0 0.0
        %5212 = vmatpush1.msra.mxu0 %v5105
        %5213 = vmatprep.subr.mxu0 0.0
        %5214 = vmatpush1.msra.mxu0 %v5209
        %5215 = vmatprep.subr.mxu0 0.0
        %5216 = vmatpush1.msra.mxu0 0.0
        %5217 = vmatprep.subr.mxu0 0.0
        %5218 = vmatpush1.msra.mxu0 0.0
        %5219 = vmatprep.subr.mxu0 0.0
        %5220 = vmatpush1.msra.mxu0 0.0
        %5221 = vmatprep.subr.mxu0 0.0
        %5222 = vmatpush1.msra.mxu0 0.0
        %5223 = vmatprep.subr.mxu0 0.0
        %5224 = vmatpush1.msra.mxu0 0.0
        %5225 = vmatprep.subr.mxu0 0.0
        %5226 = vmatpush1.msra.mxu0 0.0
        %5227 = vmatprep.subr.mxu0 0.0
        %5228 = vmatpush1.msra.mxu0 0.0
        %5229 = vmatprep.subr.mxu0 0.0
        %5230 = vmatpush1.msra.mxu0 0.0
        %5231 = vmatprep.subr.mxu0 0.0
        %5232 = vmatpush1.msra.mxu0 0.0
        %5233 = vmatprep.subr.mxu0 0.0
        %5234 = vmatpush1.msra.mxu0 0.0
        %5235 = vmatprep.subr.mxu0 0.0
        %5236 = vmatpush1.msra.mxu0 0.0
        %5237 = vmatprep.subr.mxu0 0.0
        %5238 = vmatpush1.msra.mxu0 0.0
        %5239 = vmatprep.subr.mxu0 0.0
        %5240 = vmatpush1.msra.mxu0 0.0
        %5241 = vmatprep.subr.mxu0 0.0
        %5242 = vmatpush1.msra.mxu0 0.0
        %5243 = vmatprep.subr.mxu0 0.0
        %5244 = vmatpush1.msra.mxu0 0.0
        %5245 = vmatprep.subr.mxu0 0.0
        %5246 = vmatpush1.msra.mxu0 0.0
        %5247 = vmatprep.subr.mxu0 0.0
        %5248 = vmatpush1.msra.mxu0 0.0
        %5249 = vmatprep.subr.mxu0 0.0
        %5250 = vmatpush1.msra.mxu0 0.0
        %5251 = vmatprep.subr.mxu0 0.0
        %5252 = vmatpush1.msra.mxu0 0.0
        %5253 = vmatprep.subr.mxu0 0.0
        %5254 = vmatpush1.msra.mxu0 0.0
        %5255 = vmatprep.subr.mxu0 0.0
        %5256 = vmatpush1.msra.mxu0 0.0
        %5257 = vmatprep.subr.mxu0 0.0
        %5258 = vmatpush1.msra.mxu0 0.0
        %5259 = vmatprep.subr.mxu0 0.0
        %5260 = vmatpush1.msra.mxu0 0.0
        %5261 = vmatprep.subr.mxu0 0.0
        %5262 = vmatpush1.msra.mxu0 0.0
        %5263 = vmatprep.subr.mxu0 0.0
        %5264 = vmatpush1.msra.mxu0 0.0
        %5265 = vmatprep.subr.mxu0 0.0
        %5266 = vmatpush1.msra.mxu0 0.0
        %5267 = vmatprep.subr.mxu0 0.0
        %5268 = vmatpush1.msra.mxu0 0.0
        %5269 = vmatprep.subr.mxu0 0.0
        %5270 = vmatpush1.msra.mxu0 0.0
        %5271 = vmatprep.subr.mxu0 0.0
        %5272 = vmatpush1.msra.mxu0 0.0
        %5273 = vmatprep.subr.mxu0 0.0
        %5274 = vmatpush1.msra.mxu0 0.0
        %5275 = vmatprep.mubr.f32.mxu0 0.0
        %5276 = vmatmul.mubr.f32.gmra.mrb[0].mxu0 %v5113
        %v5277 = vpop.f32.mrb[0].mxu0
        %v5278 = vadd.f32 %v5111, %v5277
        %v5279 = vpop.f32.mrb[0].mxu0
        %5280 = vmatprep.mubr.f32.mxu0 0.0
        %5281 = vmatmul.mubr.f32.gmra.mrb[0].mxu0 %v5116
        %v5282 = vpop.f32.mrb[0].mxu0
        %v5283 = vadd.f32 %v5111, %v5282
        %v5284 = vpop.f32.mrb[0].mxu0
        %5285 = vmatprep.mubr.f32.mxu0 0.0
        %5286 = vmatmul.mubr.f32.gmra.mrb[0].mxu0 %v5119
        %v5287 = vpop.f32.mrb[0].mxu0
        %v5288 = vadd.f32 %v5111, %v5287
        %v5289 = vpop.f32.mrb[0].mxu0
        %5290 = vmatprep.mubr.f32.mxu0 0.0
        %5291 = vmatmul.mubr.f32.gmra.mrb[0].mxu0 %v5122
        %v5292 = vpop.f32.mrb[0].mxu0
        %v5293 = vadd.f32 %v5111, %v5292
        %v5294 = vpop.f32.mrb[0].mxu0
        %5295 = vmatprep.mubr.f32.mxu0 0.0
        %5296 = vmatmul.mubr.f32.gmra.mrb[0].mxu0 %v5125
        %v5297 = vpop.f32.mrb[0].mxu0
        %v5298 = vadd.f32 %v5111, %v5297
        %v5299 = vpop.f32.mrb[0].mxu0
        %5300 = vmatprep.mubr.f32.mxu0 0.0
        %5301 = vmatmul.mubr.f32.gmra.mrb[0].mxu0 %v5128
        %v5302 = vpop.f32.mrb[0].mxu0
        %v5303 = vadd.f32 %v5111, %v5302
        %v5304 = vpop.f32.mrb[0].mxu0
        %5305 = vmatprep.mubr.f32.mxu0 0.0
        %5306 = vmatmul.mubr.f32.gmra.mrb[0].mxu0 %v5131
        %v5307 = vpop.f32.mrb[0].mxu0
        %v5308 = vadd.f32 %v5111, %v5307
        %v5309 = vpop.f32.mrb[0].mxu0
        %5310 = vmatprep.mubr.f32.mxu0 0.0
        %5311 = vmatmul.mubr.f32.gmra.mrb[0].mxu0 %v5134
        %v5312 = vpop.f32.mrb[0].mxu0
        %v5313 = vadd.f32 %v5111, %v5312
        %v5314 = vpop.f32.mrb[0].mxu0
        %5315 = vmatprep.mubr.f32.mxu0 0.0
        %5316 = vmatmul.mubr.f32.gmra.mrb[0].mxu0 %v5137
        %v5317 = vpop.f32.mrb[0].mxu0
        %v5318 = vadd.f32 %v5111, %v5317
        %v5319 = vpop.f32.mrb[0].mxu0
        %5320 = vmatprep.mubr.f32.mxu0 0.0
        %5321 = vmatmul.mubr.f32.gmra.mrb[0].mxu0 %v5140
        %v5322 = vpop.f32.mrb[0].mxu0
        %v5323 = vadd.f32 %v5111, %v5322
        %v5324 = vpop.f32.mrb[0].mxu0
        %5325 = vmatprep.mubr.f32.mxu0 0.0
        %5326 = vmatmul.mubr.f32.gmra.mrb[0].mxu0 %v5143
        %v5327 = vpop.f32.mrb[0].mxu0
        %v5328 = vadd.f32 %v5111, %v5327
        %v5329 = vpop.f32.mrb[0].mxu0
        %5330 = vmatprep.mubr.f32.mxu0 0.0
        %5331 = vmatmul.mubr.f32.gmra.mrb[0].mxu0 %v5146
        %v5332 = vpop.f32.mrb[0].mxu0
        %v5333 = vadd.f32 %v5111, %v5332
        %v5334 = vpop.f32.mrb[0].mxu0
        %5335 = vmatprep.mubr.f32.mxu0 0.0
        %5336 = vmatmul.mubr.f32.gmra.mrb[0].mxu0 %v5149
        %v5337 = vpop.f32.mrb[0].mxu0
        %v5338 = vadd.f32 %v5111, %v5337
        %v5339 = vpop.f32.mrb[0].mxu0
        %5340 = vmatprep.mubr.f32.mxu0 0.0
        %5341 = vmatmul.mubr.f32.gmra.mrb[0].mxu0 %v5152
        %v5342 = vpop.f32.mrb[0].mxu0
        %v5343 = vadd.f32 %v5111, %v5342
        %v5344 = vpop.f32.mrb[0].mxu0
        %5345 = vmatprep.mubr.f32.mxu0 0.0
        %5346 = vmatmul.mubr.f32.gmra.mrb[0].mxu0 %v5155
        %v5347 = vpop.f32.mrb[0].mxu0
        %v5348 = vadd.f32 %v5111, %v5347
        %v5349 = vpop.f32.mrb[0].mxu0
        %5350 = vmatprep.mubr.f32.mxu0 0.0
        %5351 = vmatmul.mubr.f32.gmra.mrb[0].mxu0 %v5158
        %v5352 = vpop.f32.mrb[0].mxu0
        %v5353 = vadd.f32 %v5111, %v5352
        %v5354 = vpop.f32.mrb[0].mxu0
        %5355 = vmatprep.mubr.f32.mxu0 0.0
        %5356 = vmatmul.mubr.f32.gmra.mrb[0].mxu0 %v5161
        %v5357 = vpop.f32.mrb[0].mxu0
        %v5358 = vadd.f32 %v5111, %v5357
        %v5359 = vpop.f32.mrb[0].mxu0
        %5360 = vmatprep.mubr.f32.mxu0 0.0
        %5361 = vmatmul.mubr.f32.gmra.mrb[0].mxu0 %v5164
        %v5362 = vpop.f32.mrb[0].mxu0
        %v5363 = vadd.f32 %v5111, %v5362
        %v5364 = vpop.f32.mrb[0].mxu0
        %5365 = vmatprep.mubr.f32.mxu0 0.0
        %5366 = vmatmul.mubr.f32.gmra.mrb[0].mxu0 %v5167
        %v5367 = vpop.f32.mrb[0].mxu0
        %v5368 = vadd.f32 %v5111, %v5367
        %v5369 = vpop.f32.mrb[0].mxu0
        %5370 = vmatprep.mubr.f32.mxu0 0.0
        %5371 = vmatmul.mubr.f32.gmra.mrb[0].mxu0 %v5170
        %v5372 = vpop.f32.mrb[0].mxu0
        %v5373 = vadd.f32 %v5111, %v5372
        %v5374 = vpop.f32.mrb[0].mxu0
        %5375 = vmatprep.mubr.f32.mxu0 0.0
        %5376 = vmatmul.mubr.f32.gmra.mrb[0].mxu0 %v5173
        %v5377 = vpop.f32.mrb[0].mxu0
        %v5378 = vadd.f32 %v5111, %v5377
        %v5379 = vpop.f32.mrb[0].mxu0
        %5380 = vmatprep.mubr.f32.mxu0 0.0
        %5381 = vmatmul.mubr.f32.gmra.mrb[0].mxu0 %v5176
        %v5382 = vpop.f32.mrb[0].mxu0
        %v5383 = vadd.f32 %v5111, %v5382
        %v5384 = vpop.f32.mrb[0].mxu0
        %5385 = vmatprep.mubr.f32.mxu0 0.0
        %5386 = vmatmul.mubr.f32.gmra.mrb[0].mxu0 %v5179
        %v5387 = vpop.f32.mrb[0].mxu0
        %v5388 = vadd.f32 %v5111, %v5387
        %v5389 = vpop.f32.mrb[0].mxu0
        %5390 = vmatprep.mubr.f32.mxu0 0.0
        %5391 = vmatmul.mubr.f32.gmra.mrb[0].mxu0 %v5182
        %v5392 = vpop.f32.mrb[0].mxu0
        %v5393 = vadd.f32 %v5111, %v5392
        %v5394 = vpop.f32.mrb[0].mxu0
        %5395 = vmatprep.mubr.f32.mxu0 0.0
        %5396 = vmatmul.mubr.f32.gmra.mrb[0].mxu0 %v5185
        %v5397 = vpop.f32.mrb[0].mxu0
        %v5398 = vadd.f32 %v5111, %v5397
        %v5399 = vpop.f32.mrb[0].mxu0
        %5400 = vmatprep.mubr.f32.mxu0 0.0
        %5401 = vmatmul.mubr.f32.gmra.mrb[0].mxu0 %v5188
        %v5402 = vpop.f32.mrb[0].mxu0
        %v5403 = vadd.f32 %v5111, %v5402
        %v5404 = vpop.f32.mrb[0].mxu0
        %5405 = vmatprep.mubr.f32.mxu0 0.0
        %5406 = vmatmul.mubr.f32.gmra.mrb[0].mxu0 %v5191
        %v5407 = vpop.f32.mrb[0].mxu0
        %v5408 = vadd.f32 %v5111, %v5407
        %v5409 = vpop.f32.mrb[0].mxu0
        %5410 = vmatprep.mubr.f32.mxu0 0.0
        %5411 = vmatmul.mubr.f32.gmra.mrb[0].mxu0 %v5194
        %v5412 = vpop.f32.mrb[0].mxu0
        %v5413 = vadd.f32 %v5111, %v5412
        %v5414 = vpop.f32.mrb[0].mxu0
        %5415 = vmatprep.mubr.f32.mxu0 0.0
        %5416 = vmatmul.mubr.f32.gmra.mrb[0].mxu0 %v5197
        %v5417 = vpop.f32.mrb[0].mxu0
        %v5418 = vadd.f32 %v5111, %v5417
        %v5419 = vpop.f32.mrb[0].mxu0
        %5420 = vmatprep.mubr.f32.mxu0 0.0
        %5421 = vmatmul.mubr.f32.gmra.mrb[0].mxu0 %v5200
        %v5422 = vpop.f32.mrb[0].mxu0
        %v5423 = vadd.f32 %v5111, %v5422
        %v5424 = vpop.f32.mrb[0].mxu0
        %5425 = vmatprep.mubr.f32.mxu0 0.0
        %5426 = vmatmul.mubr.f32.gmra.mrb[0].mxu0 %v5203
        %v5427 = vpop.f32.mrb[0].mxu0
        %v5428 = vadd.f32 %v5111, %v5427
        %v5429 = vpop.f32.mrb[0].mxu0
        %5430 = vmatprep.mubr.f32.mxu0 0.0
        %5431 = vmatmul.mubr.f32.gmra.mrb[0].mxu0 %v5206
        %v5432 = vpop.f32.mrb[0].mxu0
        %v5433 = vadd.f32 %v5111, %v5432
        %v5434 = vpop.f32.mrb[0].mxu0
        %5435 = vdwg.mxu0
        %v5436 = vmax.f32 %v5278, 0.0
        %v5437 = vmax.f32 %v5283, 0.0
        %v5438 = vmax.f32 %v5288, 0.0
        %v5439 = vmax.f32 %v5293, 0.0
        %v5440 = vmax.f32 %v5298, 0.0
        %v5441 = vmax.f32 %v5303, 0.0
        %v5442 = vmax.f32 %v5308, 0.0
        %v5443 = vmax.f32 %v5313, 0.0
        %v5444 = vmax.f32 %v5318, 0.0
        %v5445 = vmax.f32 %v5323, 0.0
        %v5446 = vmax.f32 %v5328, 0.0
        %v5447 = vmax.f32 %v5333, 0.0
        %v5448 = vmax.f32 %v5338, 0.0
        %v5449 = vmax.f32 %v5343, 0.0
        %v5450 = vmax.f32 %v5348, 0.0
        %v5451 = vmax.f32 %v5353, 0.0
        %v5452 = vmax.f32 %v5358, 0.0
        %v5453 = vmax.f32 %v5363, 0.0
        %v5454 = vmax.f32 %v5368, 0.0
        %v5455 = vmax.f32 %v5373, 0.0
        %v5456 = vmax.f32 %v5378, 0.0
        %v5457 = vmax.f32 %v5383, 0.0
        %v5458 = vmax.f32 %v5388, 0.0
        %v5459 = vmax.f32 %v5393, 0.0
        %v5460 = vmax.f32 %v5398, 0.0
        %v5461 = vmax.f32 %v5403, 0.0
        %v5462 = vmax.f32 %v5408, 0.0
        %v5463 = vmax.f32 %v5413, 0.0
        %v5464 = vmax.f32 %v5418, 0.0
        %v5465 = vmax.f32 %v5423, 0.0
        %v5466 = vmax.f32 %v5428, 0.0
        %v5467 = vmax.f32 %v5433, 0.0
        %vm5468 = vcmp.ne.f32.partialorder %v5278, %v5278
        %vm5469 = vcmp.ne.f32.partialorder %v5283, %v5283
        %vm5470 = vcmp.ne.f32.partialorder %v5288, %v5288
        %vm5471 = vcmp.ne.f32.partialorder %v5293, %v5293
        %vm5472 = vcmp.ne.f32.partialorder %v5298, %v5298
        %vm5473 = vcmp.ne.f32.partialorder %v5303, %v5303
        %vm5474 = vcmp.ne.f32.partialorder %v5308, %v5308
        %vm5475 = vcmp.ne.f32.partialorder %v5313, %v5313
        %vm5476 = vcmp.ne.f32.partialorder %v5318, %v5318
        %vm5477 = vcmp.ne.f32.partialorder %v5323, %v5323
        %vm5478 = vcmp.ne.f32.partialorder %v5328, %v5328
        %vm5479 = vcmp.ne.f32.partialorder %v5333, %v5333
        %vm5480 = vcmp.ne.f32.partialorder %v5338, %v5338
        %vm5481 = vcmp.ne.f32.partialorder %v5343, %v5343
        %vm5482 = vcmp.ne.f32.partialorder %v5348, %v5348
        %vm5483 = vcmp.ne.f32.partialorder %v5353, %v5353
        %vm5484 = vcmp.ne.f32.partialorder %v5358, %v5358
        %vm5485 = vcmp.ne.f32.partialorder %v5363, %v5363
        %vm5486 = vcmp.ne.f32.partialorder %v5368, %v5368
        %vm5487 = vcmp.ne.f32.partialorder %v5373, %v5373
        %vm5488 = vcmp.ne.f32.partialorder %v5378, %v5378
        %vm5489 = vcmp.ne.f32.partialorder %v5383, %v5383
        %vm5490 = vcmp.ne.f32.partialorder %v5388, %v5388
        %vm5491 = vcmp.ne.f32.partialorder %v5393, %v5393
        %vm5492 = vcmp.ne.f32.partialorder %v5398, %v5398
        %vm5493 = vcmp.ne.f32.partialorder %v5403, %v5403
        %vm5494 = vcmp.ne.f32.partialorder %v5408, %v5408
        %vm5495 = vcmp.ne.f32.partialorder %v5413, %v5413
        %vm5496 = vcmp.ne.f32.partialorder %v5418, %v5418
        %vm5497 = vcmp.ne.f32.partialorder %v5423, %v5423
        %vm5498 = vcmp.ne.f32.partialorder %v5428, %v5428
        %vm5499 = vcmp.ne.f32.partialorder %v5433, %v5433
        %v5500 = vadd.f32 %v5278, 0.0
        %v5501 = vadd.f32 %v5283, 0.0
        %v5502 = vadd.f32 %v5288, 0.0
        %v5503 = vadd.f32 %v5293, 0.0
        %v5504 = vadd.f32 %v5298, 0.0
        %v5505 = vadd.f32 %v5303, 0.0
        %v5506 = vadd.f32 %v5308, 0.0
        %v5507 = vadd.f32 %v5313, 0.0
        %v5508 = vadd.f32 %v5318, 0.0
        %v5509 = vadd.f32 %v5323, 0.0
        %v5510 = vadd.f32 %v5328, 0.0
        %v5511 = vadd.f32 %v5333, 0.0
        %v5512 = vadd.f32 %v5338, 0.0
        %v5513 = vadd.f32 %v5343, 0.0
        %v5514 = vadd.f32 %v5348, 0.0
        %v5515 = vadd.f32 %v5353, 0.0
        %v5516 = vadd.f32 %v5358, 0.0
        %v5517 = vadd.f32 %v5363, 0.0
        %v5518 = vadd.f32 %v5368, 0.0
        %v5519 = vadd.f32 %v5373, 0.0
        %v5520 = vadd.f32 %v5378, 0.0
        %v5521 = vadd.f32 %v5383, 0.0
        %v5522 = vadd.f32 %v5388, 0.0
        %v5523 = vadd.f32 %v5393, 0.0
        %v5524 = vadd.f32 %v5398, 0.0
        %v5525 = vadd.f32 %v5403, 0.0
        %v5526 = vadd.f32 %v5408, 0.0
        %v5527 = vadd.f32 %v5413, 0.0
        %v5528 = vadd.f32 %v5418, 0.0
        %v5529 = vadd.f32 %v5423, 0.0
        %v5530 = vadd.f32 %v5428, 0.0
        %v5531 = vadd.f32 %v5433, 0.0
        %v5532 = vand.u32 2147483647, %v5278
        %v5533 = vand.u32 2147483647, %v5283
        %v5534 = vand.u32 2147483647, %v5288
        %v5535 = vand.u32 2147483647, %v5293
        %v5536 = vand.u32 2147483647, %v5298
        %v5537 = vand.u32 2147483647, %v5303
        %v5538 = vand.u32 2147483647, %v5308
        %v5539 = vand.u32 2147483647, %v5313
        %v5540 = vand.u32 2147483647, %v5318
        %v5541 = vand.u32 2147483647, %v5323
        %v5542 = vand.u32 2147483647, %v5328
        %v5543 = vand.u32 2147483647, %v5333
        %v5544 = vand.u32 2147483647, %v5338
        %v5545 = vand.u32 2147483647, %v5343
        %v5546 = vand.u32 2147483647, %v5348
        %v5547 = vand.u32 2147483647, %v5353
        %v5548 = vand.u32 2147483647, %v5358
        %v5549 = vand.u32 2147483647, %v5363
        %v5550 = vand.u32 2147483647, %v5368
        %v5551 = vand.u32 2147483647, %v5373
        %v5552 = vand.u32 2147483647, %v5378
        %v5553 = vand.u32 2147483647, %v5383
        %v5554 = vand.u32 2147483647, %v5388
        %v5555 = vand.u32 2147483647, %v5393
        %v5556 = vand.u32 2147483647, %v5398
        %v5557 = vand.u32 2147483647, %v5403
        %v5558 = vand.u32 2147483647, %v5408
        %v5559 = vand.u32 2147483647, %v5413
        %v5560 = vand.u32 2147483647, %v5418
        %v5561 = vand.u32 2147483647, %v5423
        %v5562 = vand.u32 2147483647, %v5428
        %v5563 = vand.u32 2147483647, %v5433
        %v5564 = vsub.f32 0.0, %v5532
        %v5565 = vsub.f32 0.0, %v5533
        %v5566 = vsub.f32 0.0, %v5534
        %v5567 = vsub.f32 0.0, %v5535
        %v5568 = vsub.f32 0.0, %v5536
        %v5569 = vsub.f32 0.0, %v5537
        %v5570 = vsub.f32 0.0, %v5538
        %v5571 = vsub.f32 0.0, %v5539
        %v5572 = vsub.f32 0.0, %v5540
        %v5573 = vsub.f32 0.0, %v5541
        %v5574 = vsub.f32 0.0, %v5542
        %v5575 = vsub.f32 0.0, %v5543
        %v5576 = vsub.f32 0.0, %v5544
        %v5577 = vsub.f32 0.0, %v5545
        %v5578 = vsub.f32 0.0, %v5546
        %v5579 = vsub.f32 0.0, %v5547
        %v5580 = vsub.f32 0.0, %v5548
        %v5581 = vsub.f32 0.0, %v5549
        %v5582 = vsub.f32 0.0, %v5550
        %v5583 = vsub.f32 0.0, %v5551
        %v5584 = vsub.f32 0.0, %v5552
        %v5585 = vsub.f32 0.0, %v5553
        %v5586 = vsub.f32 0.0, %v5554
        %v5587 = vsub.f32 0.0, %v5555
        %v5588 = vsub.f32 0.0, %v5556
        %v5589 = vsub.f32 0.0, %v5557
        %v5590 = vsub.f32 0.0, %v5558
        %v5591 = vsub.f32 0.0, %v5559
        %v5592 = vsub.f32 0.0, %v5560
        %v5593 = vsub.f32 0.0, %v5561
        %v5594 = vsub.f32 0.0, %v5562
        %v5595 = vsub.f32 0.0, %v5563
        %v5596 = vmul.f32 %v5564, 1.442695
        %v5597 = vpow.pop %v5596
        %v5598 = vmul.f32 %v5565, 1.442695
        %v5599 = vpow.pop %v5598
        %v5600 = vmul.f32 %v5566, 1.442695
        %v5601 = vpow.pop %v5600
        %v5602 = vmul.f32 %v5567, 1.442695
        %v5603 = vpow.pop %v5602
        %v5604 = vmul.f32 %v5568, 1.442695
        %v5605 = vpow.pop %v5604
        %v5606 = vmul.f32 %v5569, 1.442695
        %v5607 = vpow.pop %v5606
        %v5608 = vmul.f32 %v5570, 1.442695
        %v5609 = vpow.pop %v5608
        %v5610 = vmul.f32 %v5571, 1.442695
        %v5611 = vpow.pop %v5610
        %v5612 = vmul.f32 %v5572, 1.442695
        %v5613 = vpow.pop %v5612
        %v5614 = vmul.f32 %v5573, 1.442695
        %v5615 = vpow.pop %v5614
        %v5616 = vmul.f32 %v5574, 1.442695
        %v5617 = vpow.pop %v5616
        %v5618 = vmul.f32 %v5575, 1.442695
        %v5619 = vpow.pop %v5618
        %v5620 = vmul.f32 %v5576, 1.442695
        %v5621 = vpow.pop %v5620
        %v5622 = vmul.f32 %v5577, 1.442695
        %v5623 = vpow.pop %v5622
        %v5624 = vmul.f32 %v5578, 1.442695
        %v5625 = vpow.pop %v5624
        %v5626 = vmul.f32 %v5579, 1.442695
        %v5627 = vpow.pop %v5626
        %v5628 = vmul.f32 %v5580, 1.442695
        %v5629 = vpow.pop %v5628
        %v5630 = vmul.f32 %v5581, 1.442695
        %v5631 = vpow.pop %v5630
        %v5632 = vmul.f32 %v5582, 1.442695
        %v5633 = vpow.pop %v5632
        %v5634 = vmul.f32 %v5583, 1.442695
        %v5635 = vpow.pop %v5634
        %v5636 = vmul.f32 %v5584, 1.442695
        %v5637 = vpow.pop %v5636
        %v5638 = vmul.f32 %v5585, 1.442695
        %v5639 = vpow.pop %v5638
        %v5640 = vmul.f32 %v5586, 1.442695
        %v5641 = vpow.pop %v5640
        %v5642 = vmul.f32 %v5587, 1.442695
        %v5643 = vpow.pop %v5642
        %v5644 = vmul.f32 %v5588, 1.442695
        %v5645 = vpow.pop %v5644
        %v5646 = vmul.f32 %v5589, 1.442695
        %v5647 = vpow.pop %v5646
        %v5648 = vmul.f32 %v5590, 1.442695
        %v5649 = vpow.pop %v5648
        %v5650 = vmul.f32 %v5591, 1.442695
        %v5651 = vpow.pop %v5650
        %v5652 = vmul.f32 %v5592, 1.442695
        %v5653 = vpow.pop %v5652
        %v5654 = vmul.f32 %v5593, 1.442695
        %v5655 = vpow.pop %v5654
        %v5656 = vmul.f32 %v5594, 1.442695
        %v5657 = vpow.pop %v5656
        %v5658 = vmul.f32 %v5595, 1.442695
        %v5659 = vpow.pop %v5658
        %v5660 = vadd.f32 %v5597, 1.0
        %v5661 = vlog2.pop %v5660
        %v5662 = vmul.f32 %v5661, 0.6931472
        %v5663 = vmul.f32 -0.5, %v5597
        %v5664 = vadd.f32 %v5663, 1.0
        %v5665 = vmul.f32 %v5664, %v5597
        %v5666 = vand.u32 2147483647, %v5597
        %vm5667 = vcmp.lt.f32.partialorder %v5666, 0.0004427343
        %v5668 = vsel %vm5667, %v5665, %v5662
        %v5669 = vadd.f32 %v5599, 1.0
        %v5670 = vlog2.pop %v5669
        %v5671 = vmul.f32 %v5670, 0.6931472
        %v5672 = vmul.f32 -0.5, %v5599
        %v5673 = vadd.f32 %v5672, 1.0
        %v5674 = vmul.f32 %v5673, %v5599
        %v5675 = vand.u32 2147483647, %v5599
        %vm5676 = vcmp.lt.f32.partialorder %v5675, 0.0004427343
        %v5677 = vsel %vm5676, %v5674, %v5671
        %v5678 = vadd.f32 %v5601, 1.0
        %v5679 = vlog2.pop %v5678
        %v5680 = vmul.f32 %v5679, 0.6931472
        %v5681 = vmul.f32 -0.5, %v5601
        %v5682 = vadd.f32 %v5681, 1.0
        %v5683 = vmul.f32 %v5682, %v5601
        %v5684 = vand.u32 2147483647, %v5601
        %vm5685 = vcmp.lt.f32.partialorder %v5684, 0.0004427343
        %v5686 = vsel %vm5685, %v5683, %v5680
        %v5687 = vadd.f32 %v5603, 1.0
        %v5688 = vlog2.pop %v5687
        %v5689 = vmul.f32 %v5688, 0.6931472
        %v5690 = vmul.f32 -0.5, %v5603
        %v5691 = vadd.f32 %v5690, 1.0
        %v5692 = vmul.f32 %v5691, %v5603
        %v5693 = vand.u32 2147483647, %v5603
        %vm5694 = vcmp.lt.f32.partialorder %v5693, 0.0004427343
        %v5695 = vsel %vm5694, %v5692, %v5689
        %v5696 = vadd.f32 %v5605, 1.0
        %v5697 = vlog2.pop %v5696
        %v5698 = vmul.f32 %v5697, 0.6931472
        %v5699 = vmul.f32 -0.5, %v5605
        %v5700 = vadd.f32 %v5699, 1.0
        %v5701 = vmul.f32 %v5700, %v5605
        %v5702 = vand.u32 2147483647, %v5605
        %vm5703 = vcmp.lt.f32.partialorder %v5702, 0.0004427343
        %v5704 = vsel %vm5703, %v5701, %v5698
        %v5705 = vadd.f32 %v5607, 1.0
        %v5706 = vlog2.pop %v5705
        %v5707 = vmul.f32 %v5706, 0.6931472
        %v5708 = vmul.f32 -0.5, %v5607
        %v5709 = vadd.f32 %v5708, 1.0
        %v5710 = vmul.f32 %v5709, %v5607
        %v5711 = vand.u32 2147483647, %v5607
        %vm5712 = vcmp.lt.f32.partialorder %v5711, 0.0004427343
        %v5713 = vsel %vm5712, %v5710, %v5707
        %v5714 = vadd.f32 %v5609, 1.0
        %v5715 = vlog2.pop %v5714
        %v5716 = vmul.f32 %v5715, 0.6931472
        %v5717 = vmul.f32 -0.5, %v5609
        %v5718 = vadd.f32 %v5717, 1.0
        %v5719 = vmul.f32 %v5718, %v5609
        %v5720 = vand.u32 2147483647, %v5609
        %vm5721 = vcmp.lt.f32.partialorder %v5720, 0.0004427343
        %v5722 = vsel %vm5721, %v5719, %v5716
        %v5723 = vadd.f32 %v5611, 1.0
        %v5724 = vlog2.pop %v5723
        %v5725 = vmul.f32 %v5724, 0.6931472
        %v5726 = vmul.f32 -0.5, %v5611
        %v5727 = vadd.f32 %v5726, 1.0
        %v5728 = vmul.f32 %v5727, %v5611
        %v5729 = vand.u32 2147483647, %v5611
        %vm5730 = vcmp.lt.f32.partialorder %v5729, 0.0004427343
        %v5731 = vsel %vm5730, %v5728, %v5725
        %v5732 = vadd.f32 %v5613, 1.0
        %v5733 = vlog2.pop %v5732
        %v5734 = vmul.f32 %v5733, 0.6931472
        %v5735 = vmul.f32 -0.5, %v5613
        %v5736 = vadd.f32 %v5735, 1.0
        %v5737 = vmul.f32 %v5736, %v5613
        %v5738 = vand.u32 2147483647, %v5613
        %vm5739 = vcmp.lt.f32.partialorder %v5738, 0.0004427343
        %v5740 = vsel %vm5739, %v5737, %v5734
        %v5741 = vadd.f32 %v5615, 1.0
        %v5742 = vlog2.pop %v5741
        %v5743 = vmul.f32 %v5742, 0.6931472
        %v5744 = vmul.f32 -0.5, %v5615
        %v5745 = vadd.f32 %v5744, 1.0
        %v5746 = vmul.f32 %v5745, %v5615
        %v5747 = vand.u32 2147483647, %v5615
        %vm5748 = vcmp.lt.f32.partialorder %v5747, 0.0004427343
        %v5749 = vsel %vm5748, %v5746, %v5743
        %v5750 = vadd.f32 %v5617, 1.0
        %v5751 = vlog2.pop %v5750
        %v5752 = vmul.f32 %v5751, 0.6931472
        %v5753 = vmul.f32 -0.5, %v5617
        %v5754 = vadd.f32 %v5753, 1.0
        %v5755 = vmul.f32 %v5754, %v5617
        %v5756 = vand.u32 2147483647, %v5617
        %vm5757 = vcmp.lt.f32.partialorder %v5756, 0.0004427343
        %v5758 = vsel %vm5757, %v5755, %v5752
        %v5759 = vadd.f32 %v5619, 1.0
        %v5760 = vlog2.pop %v5759
        %v5761 = vmul.f32 %v5760, 0.6931472
        %v5762 = vmul.f32 -0.5, %v5619
        %v5763 = vadd.f32 %v5762, 1.0
        %v5764 = vmul.f32 %v5763, %v5619
        %v5765 = vand.u32 2147483647, %v5619
        %vm5766 = vcmp.lt.f32.partialorder %v5765, 0.0004427343
        %v5767 = vsel %vm5766, %v5764, %v5761
        %v5768 = vadd.f32 %v5621, 1.0
        %v5769 = vlog2.pop %v5768
        %v5770 = vmul.f32 %v5769, 0.6931472
        %v5771 = vmul.f32 -0.5, %v5621
        %v5772 = vadd.f32 %v5771, 1.0
        %v5773 = vmul.f32 %v5772, %v5621
        %v5774 = vand.u32 2147483647, %v5621
        %vm5775 = vcmp.lt.f32.partialorder %v5774, 0.0004427343
        %v5776 = vsel %vm5775, %v5773, %v5770
        %v5777 = vadd.f32 %v5623, 1.0
        %v5778 = vlog2.pop %v5777
        %v5779 = vmul.f32 %v5778, 0.6931472
        %v5780 = vmul.f32 -0.5, %v5623
        %v5781 = vadd.f32 %v5780, 1.0
        %v5782 = vmul.f32 %v5781, %v5623
        %v5783 = vand.u32 2147483647, %v5623
        %vm5784 = vcmp.lt.f32.partialorder %v5783, 0.0004427343
        %v5785 = vsel %vm5784, %v5782, %v5779
        %v5786 = vadd.f32 %v5625, 1.0
        %v5787 = vlog2.pop %v5786
        %v5788 = vmul.f32 %v5787, 0.6931472
        %v5789 = vmul.f32 -0.5, %v5625
        %v5790 = vadd.f32 %v5789, 1.0
        %v5791 = vmul.f32 %v5790, %v5625
        %v5792 = vand.u32 2147483647, %v5625
        %vm5793 = vcmp.lt.f32.partialorder %v5792, 0.0004427343
        %v5794 = vsel %vm5793, %v5791, %v5788
        %v5795 = vadd.f32 %v5627, 1.0
        %v5796 = vlog2.pop %v5795
        %v5797 = vmul.f32 %v5796, 0.6931472
        %v5798 = vmul.f32 -0.5, %v5627
        %v5799 = vadd.f32 %v5798, 1.0
        %v5800 = vmul.f32 %v5799, %v5627
        %v5801 = vand.u32 2147483647, %v5627
        %vm5802 = vcmp.lt.f32.partialorder %v5801, 0.0004427343
        %v5803 = vsel %vm5802, %v5800, %v5797
        %v5804 = vadd.f32 %v5629, 1.0
        %v5805 = vlog2.pop %v5804
        %v5806 = vmul.f32 %v5805, 0.6931472
        %v5807 = vmul.f32 -0.5, %v5629
        %v5808 = vadd.f32 %v5807, 1.0
        %v5809 = vmul.f32 %v5808, %v5629
        %v5810 = vand.u32 2147483647, %v5629
        %vm5811 = vcmp.lt.f32.partialorder %v5810, 0.0004427343
        %v5812 = vsel %vm5811, %v5809, %v5806
        %v5813 = vadd.f32 %v5631, 1.0
        %v5814 = vlog2.pop %v5813
        %v5815 = vmul.f32 %v5814, 0.6931472
        %v5816 = vmul.f32 -0.5, %v5631
        %v5817 = vadd.f32 %v5816, 1.0
        %v5818 = vmul.f32 %v5817, %v5631
        %v5819 = vand.u32 2147483647, %v5631
        %vm5820 = vcmp.lt.f32.partialorder %v5819, 0.0004427343
        %v5821 = vsel %vm5820, %v5818, %v5815
        %v5822 = vadd.f32 %v5633, 1.0
        %v5823 = vlog2.pop %v5822
        %v5824 = vmul.f32 %v5823, 0.6931472
        %v5825 = vmul.f32 -0.5, %v5633
        %v5826 = vadd.f32 %v5825, 1.0
        %v5827 = vmul.f32 %v5826, %v5633
        %v5828 = vand.u32 2147483647, %v5633
        %vm5829 = vcmp.lt.f32.partialorder %v5828, 0.0004427343
        %v5830 = vsel %vm5829, %v5827, %v5824
        %v5831 = vadd.f32 %v5635, 1.0
        %v5832 = vlog2.pop %v5831
        %v5833 = vmul.f32 %v5832, 0.6931472
        %v5834 = vmul.f32 -0.5, %v5635
        %v5835 = vadd.f32 %v5834, 1.0
        %v5836 = vmul.f32 %v5835, %v5635
        %v5837 = vand.u32 2147483647, %v5635
        %vm5838 = vcmp.lt.f32.partialorder %v5837, 0.0004427343
        %v5839 = vsel %vm5838, %v5836, %v5833
        %v5840 = vadd.f32 %v5637, 1.0
        %v5841 = vlog2.pop %v5840
        %v5842 = vmul.f32 %v5841, 0.6931472
        %v5843 = vmul.f32 -0.5, %v5637
        %v5844 = vadd.f32 %v5843, 1.0
        %v5845 = vmul.f32 %v5844, %v5637
        %v5846 = vand.u32 2147483647, %v5637
        %vm5847 = vcmp.lt.f32.partialorder %v5846, 0.0004427343
        %v5848 = vsel %vm5847, %v5845, %v5842
        %v5849 = vadd.f32 %v5639, 1.0
        %v5850 = vlog2.pop %v5849
        %v5851 = vmul.f32 %v5850, 0.6931472
        %v5852 = vmul.f32 -0.5, %v5639
        %v5853 = vadd.f32 %v5852, 1.0
        %v5854 = vmul.f32 %v5853, %v5639
        %v5855 = vand.u32 2147483647, %v5639
        %vm5856 = vcmp.lt.f32.partialorder %v5855, 0.0004427343
        %v5857 = vsel %vm5856, %v5854, %v5851
        %v5858 = vadd.f32 %v5641, 1.0
        %v5859 = vlog2.pop %v5858
        %v5860 = vmul.f32 %v5859, 0.6931472
        %v5861 = vmul.f32 -0.5, %v5641
        %v5862 = vadd.f32 %v5861, 1.0
        %v5863 = vmul.f32 %v5862, %v5641
        %v5864 = vand.u32 2147483647, %v5641
        %vm5865 = vcmp.lt.f32.partialorder %v5864, 0.0004427343
        %v5866 = vsel %vm5865, %v5863, %v5860
        %v5867 = vadd.f32 %v5643, 1.0
        %v5868 = vlog2.pop %v5867
        %v5869 = vmul.f32 %v5868, 0.6931472
        %v5870 = vmul.f32 -0.5, %v5643
        %v5871 = vadd.f32 %v5870, 1.0
        %v5872 = vmul.f32 %v5871, %v5643
        %v5873 = vand.u32 2147483647, %v5643
        %vm5874 = vcmp.lt.f32.partialorder %v5873, 0.0004427343
        %v5875 = vsel %vm5874, %v5872, %v5869
        %v5876 = vadd.f32 %v5645, 1.0
        %v5877 = vlog2.pop %v5876
        %v5878 = vmul.f32 %v5877, 0.6931472
        %v5879 = vmul.f32 -0.5, %v5645
        %v5880 = vadd.f32 %v5879, 1.0
        %v5881 = vmul.f32 %v5880, %v5645
        %v5882 = vand.u32 2147483647, %v5645
        %vm5883 = vcmp.lt.f32.partialorder %v5882, 0.0004427343
        %v5884 = vsel %vm5883, %v5881, %v5878
        %v5885 = vadd.f32 %v5647, 1.0
        %v5886 = vlog2.pop %v5885
        %v5887 = vmul.f32 %v5886, 0.6931472
        %v5888 = vmul.f32 -0.5, %v5647
        %v5889 = vadd.f32 %v5888, 1.0
        %v5890 = vmul.f32 %v5889, %v5647
        %v5891 = vand.u32 2147483647, %v5647
        %vm5892 = vcmp.lt.f32.partialorder %v5891, 0.0004427343
        %v5893 = vsel %vm5892, %v5890, %v5887
        %v5894 = vadd.f32 %v5649, 1.0
        %v5895 = vlog2.pop %v5894
        %v5896 = vmul.f32 %v5895, 0.6931472
        %v5897 = vmul.f32 -0.5, %v5649
        %v5898 = vadd.f32 %v5897, 1.0
        %v5899 = vmul.f32 %v5898, %v5649
        %v5900 = vand.u32 2147483647, %v5649
        %vm5901 = vcmp.lt.f32.partialorder %v5900, 0.0004427343
        %v5902 = vsel %vm5901, %v5899, %v5896
        %v5903 = vadd.f32 %v5651, 1.0
        %v5904 = vlog2.pop %v5903
        %v5905 = vmul.f32 %v5904, 0.6931472
        %v5906 = vmul.f32 -0.5, %v5651
        %v5907 = vadd.f32 %v5906, 1.0
        %v5908 = vmul.f32 %v5907, %v5651
        %v5909 = vand.u32 2147483647, %v5651
        %vm5910 = vcmp.lt.f32.partialorder %v5909, 0.0004427343
        %v5911 = vsel %vm5910, %v5908, %v5905
        %v5912 = vadd.f32 %v5653, 1.0
        %v5913 = vlog2.pop %v5912
        %v5914 = vmul.f32 %v5913, 0.6931472
        %v5915 = vmul.f32 -0.5, %v5653
        %v5916 = vadd.f32 %v5915, 1.0
        %v5917 = vmul.f32 %v5916, %v5653
        %v5918 = vand.u32 2147483647, %v5653
        %vm5919 = vcmp.lt.f32.partialorder %v5918, 0.0004427343
        %v5920 = vsel %vm5919, %v5917, %v5914
        %v5921 = vadd.f32 %v5655, 1.0
        %v5922 = vlog2.pop %v5921
        %v5923 = vmul.f32 %v5922, 0.6931472
        %v5924 = vmul.f32 -0.5, %v5655
        %v5925 = vadd.f32 %v5924, 1.0
        %v5926 = vmul.f32 %v5925, %v5655
        %v5927 = vand.u32 2147483647, %v5655
        %vm5928 = vcmp.lt.f32.partialorder %v5927, 0.0004427343
        %v5929 = vsel %vm5928, %v5926, %v5923
        %v5930 = vadd.f32 %v5657, 1.0
        %v5931 = vlog2.pop %v5930
        %v5932 = vmul.f32 %v5931, 0.6931472
        %v5933 = vmul.f32 -0.5, %v5657
        %v5934 = vadd.f32 %v5933, 1.0
        %v5935 = vmul.f32 %v5934, %v5657
        %v5936 = vand.u32 2147483647, %v5657
        %vm5937 = vcmp.lt.f32.partialorder %v5936, 0.0004427343
        %v5938 = vsel %vm5937, %v5935, %v5932
        %v5939 = vadd.f32 %v5659, 1.0
        %v5940 = vlog2.pop %v5939
        %v5941 = vmul.f32 %v5940, 0.6931472
        %v5942 = vmul.f32 -0.5, %v5659
        %v5943 = vadd.f32 %v5942, 1.0
        %v5944 = vmul.f32 %v5943, %v5659
        %v5945 = vand.u32 2147483647, %v5659
        %vm5946 = vcmp.lt.f32.partialorder %v5945, 0.0004427343
        %v5947 = vsel %vm5946, %v5944, %v5941
        %v5948 = vadd.f32 %v5436, %v5668
        %v5949 = vadd.f32 %v5437, %v5677
        %v5950 = vadd.f32 %v5438, %v5686
        %v5951 = vadd.f32 %v5439, %v5695
        %v5952 = vadd.f32 %v5440, %v5704
        %v5953 = vadd.f32 %v5441, %v5713
        %v5954 = vadd.f32 %v5442, %v5722
        %v5955 = vadd.f32 %v5443, %v5731
        %v5956 = vadd.f32 %v5444, %v5740
        %v5957 = vadd.f32 %v5445, %v5749
        %v5958 = vadd.f32 %v5446, %v5758
        %v5959 = vadd.f32 %v5447, %v5767
        %v5960 = vadd.f32 %v5448, %v5776
        %v5961 = vadd.f32 %v5449, %v5785
        %v5962 = vadd.f32 %v5450, %v5794
        %v5963 = vadd.f32 %v5451, %v5803
        %v5964 = vadd.f32 %v5452, %v5812
        %v5965 = vadd.f32 %v5453, %v5821
        %v5966 = vadd.f32 %v5454, %v5830
        %v5967 = vadd.f32 %v5455, %v5839
        %v5968 = vadd.f32 %v5456, %v5848
        %v5969 = vadd.f32 %v5457, %v5857
        %v5970 = vadd.f32 %v5458, %v5866
        %v5971 = vadd.f32 %v5459, %v5875
        %v5972 = vadd.f32 %v5460, %v5884
        %v5973 = vadd.f32 %v5461, %v5893
        %v5974 = vadd.f32 %v5462, %v5902
        %v5975 = vadd.f32 %v5463, %v5911
        %v5976 = vadd.f32 %v5464, %v5920
        %v5977 = vadd.f32 %v5465, %v5929
        %v5978 = vadd.f32 %v5466, %v5938
        %v5979 = vadd.f32 %v5467, %v5947
        %v5980 = vsel %vm5468, %v5500, %v5948
        %v5981 = vsel %vm5469, %v5501, %v5949
        %v5982 = vsel %vm5470, %v5502, %v5950
        %v5983 = vsel %vm5471, %v5503, %v5951
        %v5984 = vsel %vm5472, %v5504, %v5952
        %v5985 = vsel %vm5473, %v5505, %v5953
        %v5986 = vsel %vm5474, %v5506, %v5954
        %v5987 = vsel %vm5475, %v5507, %v5955
        %v5988 = vsel %vm5476, %v5508, %v5956
        %v5989 = vsel %vm5477, %v5509, %v5957
        %v5990 = vsel %vm5478, %v5510, %v5958
        %v5991 = vsel %vm5479, %v5511, %v5959
        %v5992 = vsel %vm5480, %v5512, %v5960
        %v5993 = vsel %vm5481, %v5513, %v5961
        %v5994 = vsel %vm5482, %v5514, %v5962
        %v5995 = vsel %vm5483, %v5515, %v5963
        %v5996 = vsel %vm5484, %v5516, %v5964
        %v5997 = vsel %vm5485, %v5517, %v5965
        %v5998 = vsel %vm5486, %v5518, %v5966
        %v5999 = vsel %vm5487, %v5519, %v5967
        %v6000 = vsel %vm5488, %v5520, %v5968
        %v6001 = vsel %vm5489, %v5521, %v5969
        %v6002 = vsel %vm5490, %v5522, %v5970
        %v6003 = vsel %vm5491, %v5523, %v5971
        %v6004 = vsel %vm5492, %v5524, %v5972
        %v6005 = vsel %vm5493, %v5525, %v5973
        %v6006 = vsel %vm5494, %v5526, %v5974
        %v6007 = vsel %vm5495, %v5527, %v5975
        %v6008 = vsel %vm5496, %v5528, %v5976
        %v6009 = vsel %vm5497, %v5529, %v5977
        %v6010 = vsel %vm5498, %v5530, %v5978
        %v6011 = vsel %vm5499, %v5531, %v5979
        %v6012 = vadd.f32 %v5980, 1.0
        %v6013 = vadd.f32 %v5981, 1.0
        %v6014 = vadd.f32 %v5982, 1.0
        %v6015 = vadd.f32 %v5983, 1.0
        %v6016 = vadd.f32 %v5984, 1.0
        %v6017 = vadd.f32 %v5985, 1.0
        %v6018 = vadd.f32 %v5986, 1.0
        %v6019 = vadd.f32 %v5987, 1.0
        %v6020 = vadd.f32 %v5988, 1.0
        %v6021 = vadd.f32 %v5989, 1.0
        %v6022 = vadd.f32 %v5990, 1.0
        %v6023 = vadd.f32 %v5991, 1.0
        %v6024 = vadd.f32 %v5992, 1.0
        %v6025 = vadd.f32 %v5993, 1.0
        %v6026 = vadd.f32 %v5994, 1.0
        %v6027 = vadd.f32 %v5995, 1.0
        %v6028 = vadd.f32 %v5996, 1.0
        %v6029 = vadd.f32 %v5997, 1.0
        %v6030 = vadd.f32 %v5998, 1.0
        %v6031 = vadd.f32 %v5999, 1.0
        %v6032 = vadd.f32 %v6000, 1.0
        %v6033 = vadd.f32 %v6001, 1.0
        %v6034 = vadd.f32 %v6002, 1.0
        %v6035 = vadd.f32 %v6003, 1.0
        %v6036 = vadd.f32 %v6004, 1.0
        %v6037 = vadd.f32 %v6005, 1.0
        %v6038 = vadd.f32 %v6006, 1.0
        %v6039 = vadd.f32 %v6007, 1.0
        %v6040 = vadd.f32 %v6008, 1.0
        %v6041 = vadd.f32 %v6009, 1.0
        %v6042 = vadd.f32 %v6010, 1.0
        %v6043 = vadd.f32 %v6011, 1.0
        %6076 = vrot.lane.b32.xlu0 %v6012, 127
        %v6077 = vpop.permute.xlu0 %6076
        %6078 = vrot.lane.b32.xlu0 %v6013, 127
        %v6079 = vpop.permute.xlu0 %6078
        %6080 = vrot.lane.b32.xlu0 %v6014, 127
        %v6081 = vpop.permute.xlu0 %6080
        %6082 = vrot.lane.b32.xlu0 %v6015, 127
        %v6083 = vpop.permute.xlu0 %6082
        %6084 = vrot.lane.b32.xlu0 %v6016, 127
        %v6085 = vpop.permute.xlu0 %6084
        %6086 = vrot.lane.b32.xlu0 %v6017, 127
        %v6087 = vpop.permute.xlu0 %6086
        %6088 = vrot.lane.b32.xlu0 %v6018, 127
        %v6089 = vpop.permute.xlu0 %6088
        %6090 = vrot.lane.b32.xlu0 %v6019, 127
        %v6091 = vpop.permute.xlu0 %6090
        %6092 = vrot.lane.b32.xlu0 %v6020, 127
        %v6093 = vpop.permute.xlu0 %6092
        %6094 = vrot.lane.b32.xlu0 %v6021, 127
        %v6095 = vpop.permute.xlu0 %6094
        %6096 = vrot.lane.b32.xlu0 %v6022, 127
        %v6097 = vpop.permute.xlu0 %6096
        %6098 = vrot.lane.b32.xlu0 %v6023, 127
        %v6099 = vpop.permute.xlu0 %6098
        %6100 = vrot.lane.b32.xlu0 %v6024, 127
        %v6101 = vpop.permute.xlu0 %6100
        %6102 = vrot.lane.b32.xlu0 %v6025, 127
        %v6103 = vpop.permute.xlu0 %6102
        %6104 = vrot.lane.b32.xlu0 %v6026, 127
        %v6105 = vpop.permute.xlu0 %6104
        %6106 = vrot.lane.b32.xlu0 %v6027, 127
        %v6107 = vpop.permute.xlu0 %6106
        %6108 = vrot.lane.b32.xlu0 %v6028, 127
        %v6109 = vpop.permute.xlu0 %6108
        %6110 = vrot.lane.b32.xlu0 %v6029, 127
        %v6111 = vpop.permute.xlu0 %6110
        %6112 = vrot.lane.b32.xlu0 %v6030, 127
        %v6113 = vpop.permute.xlu0 %6112
        %6114 = vrot.lane.b32.xlu0 %v6031, 127
        %v6115 = vpop.permute.xlu0 %6114
        %6116 = vrot.lane.b32.xlu0 %v6032, 127
        %v6117 = vpop.permute.xlu0 %6116
        %6118 = vrot.lane.b32.xlu0 %v6033, 127
        %v6119 = vpop.permute.xlu0 %6118
        %6120 = vrot.lane.b32.xlu0 %v6034, 127
        %v6121 = vpop.permute.xlu0 %6120
        %6122 = vrot.lane.b32.xlu0 %v6035, 127
        %v6123 = vpop.permute.xlu0 %6122
        %6124 = vrot.lane.b32.xlu0 %v6036, 127
        %v6125 = vpop.permute.xlu0 %6124
        %6126 = vrot.lane.b32.xlu0 %v6037, 127
        %v6127 = vpop.permute.xlu0 %6126
        %6128 = vrot.lane.b32.xlu0 %v6038, 127
        %v6129 = vpop.permute.xlu0 %6128
        %6130 = vrot.lane.b32.xlu0 %v6039, 127
        %v6131 = vpop.permute.xlu0 %6130
        %6132 = vrot.lane.b32.xlu0 %v6040, 127
        %v6133 = vpop.permute.xlu0 %6132
        %6134 = vrot.lane.b32.xlu0 %v6041, 127
        %v6135 = vpop.permute.xlu0 %6134
        %6136 = vrot.lane.b32.xlu0 %v6042, 127
        %v6137 = vpop.permute.xlu0 %6136
        %6138 = vrot.lane.b32.xlu0 %v6043, 127
        %v6139 = vpop.permute.xlu0 %6138
        %v6172 = vadd.f32 %v6012, %v6077
        %v6173 = vadd.f32 %v6013, %v6079
        %v6174 = vadd.f32 %v6014, %v6081
        %v6175 = vadd.f32 %v6015, %v6083
        %v6176 = vadd.f32 %v6016, %v6085
        %v6177 = vadd.f32 %v6017, %v6087
        %v6178 = vadd.f32 %v6018, %v6089
        %v6179 = vadd.f32 %v6019, %v6091
        %v6180 = vadd.f32 %v6020, %v6093
        %v6181 = vadd.f32 %v6021, %v6095
        %v6182 = vadd.f32 %v6022, %v6097
        %v6183 = vadd.f32 %v6023, %v6099
        %v6184 = vadd.f32 %v6024, %v6101
        %v6185 = vadd.f32 %v6025, %v6103
        %v6186 = vadd.f32 %v6026, %v6105
        %v6187 = vadd.f32 %v6027, %v6107
        %v6188 = vadd.f32 %v6028, %v6109
        %v6189 = vadd.f32 %v6029, %v6111
        %v6190 = vadd.f32 %v6030, %v6113
        %v6191 = vadd.f32 %v6031, %v6115
        %v6192 = vadd.f32 %v6032, %v6117
        %v6193 = vadd.f32 %v6033, %v6119
        %v6194 = vadd.f32 %v6034, %v6121
        %v6195 = vadd.f32 %v6035, %v6123
        %v6196 = vadd.f32 %v6036, %v6125
        %v6197 = vadd.f32 %v6037, %v6127
        %v6198 = vadd.f32 %v6038, %v6129
        %v6199 = vadd.f32 %v6039, %v6131
        %v6200 = vadd.f32 %v6040, %v6133
        %v6201 = vadd.f32 %v6041, %v6135
        %v6202 = vadd.f32 %v6042, %v6137
        %v6203 = vadd.f32 %v6043, %v6139
        %v6204 = vrcp.pop %v6172
        %v6205 = vrcp.pop %v6173
        %v6206 = vrcp.pop %v6174
        %v6207 = vrcp.pop %v6175
        %v6208 = vrcp.pop %v6176
        %v6209 = vrcp.pop %v6177
        %v6210 = vrcp.pop %v6178
        %v6211 = vrcp.pop %v6179
        %v6212 = vrcp.pop %v6180
        %v6213 = vrcp.pop %v6181
        %v6214 = vrcp.pop %v6182
        %v6215 = vrcp.pop %v6183
        %v6216 = vrcp.pop %v6184
        %v6217 = vrcp.pop %v6185
        %v6218 = vrcp.pop %v6186
        %v6219 = vrcp.pop %v6187
        %v6220 = vrcp.pop %v6188
        %v6221 = vrcp.pop %v6189
        %v6222 = vrcp.pop %v6190
        %v6223 = vrcp.pop %v6191
        %v6224 = vrcp.pop %v6192
        %v6225 = vrcp.pop %v6193
        %v6226 = vrcp.pop %v6194
        %v6227 = vrcp.pop %v6195
        %v6228 = vrcp.pop %v6196
        %v6229 = vrcp.pop %v6197
        %v6230 = vrcp.pop %v6198
        %v6231 = vrcp.pop %v6199
        %v6232 = vrcp.pop %v6200
        %v6233 = vrcp.pop %v6201
        %v6234 = vrcp.pop %v6202
        %v6235 = vrcp.pop %v6203
        %v6236 = vmul.f32 %v6012, %v6204
        %v6237 = vmul.f32 %v6013, %v6205
        %v6238 = vmul.f32 %v6014, %v6206
        %v6239 = vmul.f32 %v6015, %v6207
        %v6240 = vmul.f32 %v6016, %v6208
        %v6241 = vmul.f32 %v6017, %v6209
        %v6242 = vmul.f32 %v6018, %v6210
        %v6243 = vmul.f32 %v6019, %v6211
        %v6244 = vmul.f32 %v6020, %v6212
        %v6245 = vmul.f32 %v6021, %v6213
        %v6246 = vmul.f32 %v6022, %v6214
        %v6247 = vmul.f32 %v6023, %v6215
        %v6248 = vmul.f32 %v6024, %v6216
        %v6249 = vmul.f32 %v6025, %v6217
        %v6250 = vmul.f32 %v6026, %v6218
        %v6251 = vmul.f32 %v6027, %v6219
        %v6252 = vmul.f32 %v6028, %v6220
        %v6253 = vmul.f32 %v6029, %v6221
        %v6254 = vmul.f32 %v6030, %v6222
        %v6255 = vmul.f32 %v6031, %v6223
        %v6256 = vmul.f32 %v6032, %v6224
        %v6257 = vmul.f32 %v6033, %v6225
        %v6258 = vmul.f32 %v6034, %v6226
        %v6259 = vmul.f32 %v6035, %v6227
        %v6260 = vmul.f32 %v6036, %v6228
        %v6261 = vmul.f32 %v6037, %v6229
        %v6262 = vmul.f32 %v6038, %v6230
        %v6263 = vmul.f32 %v6039, %v6231
        %v6264 = vmul.f32 %v6040, %v6232
        %v6265 = vmul.f32 %v6041, %v6233
        %v6266 = vmul.f32 %v6042, %v6234
        %v6267 = vmul.f32 %v6043, %v6235
        %6268 = vrot.lane.b32.xlu0 %v3141, 1
        %v6269 = vpop.permute.xlu0 %6268
        %6270 = vrot.lane.b32.xlu0 %v3142, 1
        %v6271 = vpop.permute.xlu0 %6270
        %6272 = vrot.lane.b32.xlu0 %v3143, 1
        %v6273 = vpop.permute.xlu0 %6272
        %6274 = vrot.lane.b32.xlu0 %v3144, 1
        %v6275 = vpop.permute.xlu0 %6274
        %6312 = vset.pattern.permute.xlu0 0
        %6313 = vperm.xlu0 %6312, %v6236
        %v6314 = vpop.permute.xlu0 %6313
        %6315 = vset.pattern.permute.xlu0 0
        %6316 = vperm.xlu0 %6315, %v6237
        %v6317 = vpop.permute.xlu0 %6316
        %6318 = vset.pattern.permute.xlu0 0
        %6319 = vperm.xlu0 %6318, %v6238
        %v6320 = vpop.permute.xlu0 %6319
        %6321 = vset.pattern.permute.xlu0 0
        %6322 = vperm.xlu0 %6321, %v6239
        %v6323 = vpop.permute.xlu0 %6322
        %6324 = vset.pattern.permute.xlu0 0
        %6325 = vperm.xlu0 %6324, %v6240
        %v6326 = vpop.permute.xlu0 %6325
        %6327 = vset.pattern.permute.xlu0 0
        %6328 = vperm.xlu0 %6327, %v6241
        %v6329 = vpop.permute.xlu0 %6328
        %6330 = vset.pattern.permute.xlu0 0
        %6331 = vperm.xlu0 %6330, %v6242
        %v6332 = vpop.permute.xlu0 %6331
        %6333 = vset.pattern.permute.xlu0 0
        %6334 = vperm.xlu0 %6333, %v6243
        %v6335 = vpop.permute.xlu0 %6334
        %6336 = vset.pattern.permute.xlu0 0
        %6337 = vperm.xlu0 %6336, %v6244
        %v6338 = vpop.permute.xlu0 %6337
        %6339 = vset.pattern.permute.xlu0 0
        %6340 = vperm.xlu0 %6339, %v6245
        %v6341 = vpop.permute.xlu0 %6340
        %6342 = vset.pattern.permute.xlu0 0
        %6343 = vperm.xlu0 %6342, %v6246
        %v6344 = vpop.permute.xlu0 %6343
        %6345 = vset.pattern.permute.xlu0 0
        %6346 = vperm.xlu0 %6345, %v6247
        %v6347 = vpop.permute.xlu0 %6346
        %6348 = vset.pattern.permute.xlu0 0
        %6349 = vperm.xlu0 %6348, %v6248
        %v6350 = vpop.permute.xlu0 %6349
        %6351 = vset.pattern.permute.xlu0 0
        %6352 = vperm.xlu0 %6351, %v6249
        %v6353 = vpop.permute.xlu0 %6352
        %6354 = vset.pattern.permute.xlu0 0
        %6355 = vperm.xlu0 %6354, %v6250
        %v6356 = vpop.permute.xlu0 %6355
        %6357 = vset.pattern.permute.xlu0 0
        %6358 = vperm.xlu0 %6357, %v6251
        %v6359 = vpop.permute.xlu0 %6358
        %6360 = vset.pattern.permute.xlu0 0
        %6361 = vperm.xlu0 %6360, %v6252
        %v6362 = vpop.permute.xlu0 %6361
        %6363 = vset.pattern.permute.xlu0 0
        %6364 = vperm.xlu0 %6363, %v6253
        %v6365 = vpop.permute.xlu0 %6364
        %6366 = vset.pattern.permute.xlu0 0
        %6367 = vperm.xlu0 %6366, %v6254
        %v6368 = vpop.permute.xlu0 %6367
        %6369 = vset.pattern.permute.xlu0 0
        %6370 = vperm.xlu0 %6369, %v6255
        %v6371 = vpop.permute.xlu0 %6370
        %6372 = vset.pattern.permute.xlu0 0
        %6373 = vperm.xlu0 %6372, %v6256
        %v6374 = vpop.permute.xlu0 %6373
        %6375 = vset.pattern.permute.xlu0 0
        %6376 = vperm.xlu0 %6375, %v6257
        %v6377 = vpop.permute.xlu0 %6376
        %6378 = vset.pattern.permute.xlu0 0
        %6379 = vperm.xlu0 %6378, %v6258
        %v6380 = vpop.permute.xlu0 %6379
        %6381 = vset.pattern.permute.xlu0 0
        %6382 = vperm.xlu0 %6381, %v6259
        %v6383 = vpop.permute.xlu0 %6382
        %6384 = vset.pattern.permute.xlu0 0
        %6385 = vperm.xlu0 %6384, %v6260
        %v6386 = vpop.permute.xlu0 %6385
        %6387 = vset.pattern.permute.xlu0 0
        %6388 = vperm.xlu0 %6387, %v6261
        %v6389 = vpop.permute.xlu0 %6388
        %6390 = vset.pattern.permute.xlu0 0
        %6391 = vperm.xlu0 %6390, %v6262
        %v6392 = vpop.permute.xlu0 %6391
        %6393 = vset.pattern.permute.xlu0 0
        %6394 = vperm.xlu0 %6393, %v6263
        %v6395 = vpop.permute.xlu0 %6394
        %6396 = vset.pattern.permute.xlu0 0
        %6397 = vperm.xlu0 %6396, %v6264
        %v6398 = vpop.permute.xlu0 %6397
        %6399 = vset.pattern.permute.xlu0 0
        %6400 = vperm.xlu0 %6399, %v6265
        %v6401 = vpop.permute.xlu0 %6400
        %6402 = vset.pattern.permute.xlu0 0
        %6403 = vperm.xlu0 %6402, %v6266
        %v6404 = vpop.permute.xlu0 %6403
        %6405 = vset.pattern.permute.xlu0 0
        %6406 = vperm.xlu0 %6405, %v6267
        %v6407 = vpop.permute.xlu0 %6406
        %v6408 = vlaneseq
        %v6409 = vand.u32 %v6408, 127
        %v6410 = vadd.s32 %v6409, 4294967293
        %v6411 = vlaneseq
        %v6412 = vshrl.u32 %v6411, 7
        %v6413 = vsub.s32 %v6410, %v6412
        %v6414 = vrot.slane %v6314, %v6413
        %v6415 = vlaneseq
        %v6416 = vshrl.u32 %v6415, 7
        %v6417 = vsub.s32 %v6410, %v6416
        %v6418 = vrot.slane %v6317, %v6417
        %v6419 = vlaneseq
        %v6420 = vshrl.u32 %v6419, 7
        %v6421 = vsub.s32 %v6410, %v6420
        %v6422 = vrot.slane %v6320, %v6421
        %v6423 = vlaneseq
        %v6424 = vshrl.u32 %v6423, 7
        %v6425 = vsub.s32 %v6410, %v6424
        %v6426 = vrot.slane %v6323, %v6425
        %v6427 = vlaneseq
        %v6428 = vshrl.u32 %v6427, 7
        %v6429 = vsub.s32 %v6410, %v6428
        %v6430 = vrot.slane %v6326, %v6429
        %v6431 = vlaneseq
        %v6432 = vshrl.u32 %v6431, 7
        %v6433 = vsub.s32 %v6410, %v6432
        %v6434 = vrot.slane %v6329, %v6433
        %v6435 = vlaneseq
        %v6436 = vshrl.u32 %v6435, 7
        %v6437 = vsub.s32 %v6410, %v6436
        %v6438 = vrot.slane %v6332, %v6437
        %v6439 = vlaneseq
        %v6440 = vshrl.u32 %v6439, 7
        %v6441 = vsub.s32 %v6410, %v6440
        %v6442 = vrot.slane %v6335, %v6441
        %v6443 = vlaneseq
        %v6444 = vshrl.u32 %v6443, 7
        %v6445 = vsub.s32 %v6410, %v6444
        %v6446 = vrot.slane %v6338, %v6445
        %v6447 = vlaneseq
        %v6448 = vshrl.u32 %v6447, 7
        %v6449 = vsub.s32 %v6410, %v6448
        %v6450 = vrot.slane %v6341, %v6449
        %v6451 = vlaneseq
        %v6452 = vshrl.u32 %v6451, 7
        %v6453 = vsub.s32 %v6410, %v6452
        %v6454 = vrot.slane %v6344, %v6453
        %v6455 = vlaneseq
        %v6456 = vshrl.u32 %v6455, 7
        %v6457 = vsub.s32 %v6410, %v6456
        %v6458 = vrot.slane %v6347, %v6457
        %v6459 = vlaneseq
        %v6460 = vshrl.u32 %v6459, 7
        %v6461 = vsub.s32 %v6410, %v6460
        %v6462 = vrot.slane %v6350, %v6461
        %v6463 = vlaneseq
        %v6464 = vshrl.u32 %v6463, 7
        %v6465 = vsub.s32 %v6410, %v6464
        %v6466 = vrot.slane %v6353, %v6465
        %v6467 = vlaneseq
        %v6468 = vshrl.u32 %v6467, 7
        %v6469 = vsub.s32 %v6410, %v6468
        %v6470 = vrot.slane %v6356, %v6469
        %v6471 = vlaneseq
        %v6472 = vshrl.u32 %v6471, 7
        %v6473 = vsub.s32 %v6410, %v6472
        %v6474 = vrot.slane %v6359, %v6473
        %v6475 = vlaneseq
        %v6476 = vshrl.u32 %v6475, 7
        %v6477 = vsub.s32 %v6410, %v6476
        %v6478 = vrot.slane %v6362, %v6477
        %v6479 = vlaneseq
        %v6480 = vshrl.u32 %v6479, 7
        %v6481 = vsub.s32 %v6410, %v6480
        %v6482 = vrot.slane %v6365, %v6481
        %v6483 = vlaneseq
        %v6484 = vshrl.u32 %v6483, 7
        %v6485 = vsub.s32 %v6410, %v6484
        %v6486 = vrot.slane %v6368, %v6485
        %v6487 = vlaneseq
        %v6488 = vshrl.u32 %v6487, 7
        %v6489 = vsub.s32 %v6410, %v6488
        %v6490 = vrot.slane %v6371, %v6489
        %v6491 = vlaneseq
        %v6492 = vshrl.u32 %v6491, 7
        %v6493 = vsub.s32 %v6410, %v6492
        %v6494 = vrot.slane %v6374, %v6493
        %v6495 = vlaneseq
        %v6496 = vshrl.u32 %v6495, 7
        %v6497 = vsub.s32 %v6410, %v6496
        %v6498 = vrot.slane %v6377, %v6497
        %v6499 = vlaneseq
        %v6500 = vshrl.u32 %v6499, 7
        %v6501 = vsub.s32 %v6410, %v6500
        %v6502 = vrot.slane %v6380, %v6501
        %v6503 = vlaneseq
        %v6504 = vshrl.u32 %v6503, 7
        %v6505 = vsub.s32 %v6410, %v6504
        %v6506 = vrot.slane %v6383, %v6505
        %v6507 = vlaneseq
        %v6508 = vshrl.u32 %v6507, 7
        %v6509 = vsub.s32 %v6410, %v6508
        %v6510 = vrot.slane %v6386, %v6509
        %v6511 = vlaneseq
        %v6512 = vshrl.u32 %v6511, 7
        %v6513 = vsub.s32 %v6410, %v6512
        %v6514 = vrot.slane %v6389, %v6513
        %v6515 = vlaneseq
        %v6516 = vshrl.u32 %v6515, 7
        %v6517 = vsub.s32 %v6410, %v6516
        %v6518 = vrot.slane %v6392, %v6517
        %v6519 = vlaneseq
        %v6520 = vshrl.u32 %v6519, 7
        %v6521 = vsub.s32 %v6410, %v6520
        %v6522 = vrot.slane %v6395, %v6521
        %v6523 = vlaneseq
        %v6524 = vshrl.u32 %v6523, 7
        %v6525 = vsub.s32 %v6410, %v6524
        %v6526 = vrot.slane %v6398, %v6525
        %v6527 = vlaneseq
        %v6528 = vshrl.u32 %v6527, 7
        %v6529 = vsub.s32 %v6410, %v6528
        %v6530 = vrot.slane %v6401, %v6529
        %v6531 = vlaneseq
        %v6532 = vshrl.u32 %v6531, 7
        %v6533 = vsub.s32 %v6410, %v6532
        %v6534 = vrot.slane %v6404, %v6533
        %v6535 = vlaneseq
        %v6536 = vshrl.u32 %v6535, 7
        %v6537 = vsub.s32 %v6410, %v6536
        %v6538 = vrot.slane %v6407, %v6537
        %vm6539 = vcmask 1041409
        %v6540 = vsel %vm6539, %v6418, %v6414
        %vm6541 = vcmask 1042434
        %v6542 = vsel %vm6541, %v6422, %v6540
        %vm6543 = vcmask 1043459
        %v6544 = vsel %vm6543, %v6426, %v6542
        %vm6545 = vcmask 1044484
        %v6546 = vsel %vm6545, %v6430, %v6544
        %vm6547 = vcmask 1045509
        %v6548 = vsel %vm6547, %v6434, %v6546
        %vm6549 = vcmask 1046534
        %v6550 = vsel %vm6549, %v6438, %v6548
        %vm6551 = vcmask 1047559
        %v6552 = vsel %vm6551, %v6442, %v6550
        %v6553 = vsel %vm6539, %v6450, %v6446
        %v6554 = vsel %vm6541, %v6454, %v6553
        %v6555 = vsel %vm6543, %v6458, %v6554
        %v6556 = vsel %vm6545, %v6462, %v6555
        %v6557 = vsel %vm6547, %v6466, %v6556
        %v6558 = vsel %vm6549, %v6470, %v6557
        %v6559 = vsel %vm6551, %v6474, %v6558
        %v6560 = vsel %vm6539, %v6482, %v6478
        %v6561 = vsel %vm6541, %v6486, %v6560
        %v6562 = vsel %vm6543, %v6490, %v6561
        %v6563 = vsel %vm6545, %v6494, %v6562
        %v6564 = vsel %vm6547, %v6498, %v6563
        %v6565 = vsel %vm6549, %v6502, %v6564
        %v6566 = vsel %vm6551, %v6506, %v6565
        %v6567 = vsel %vm6539, %v6514, %v6510
        %v6568 = vsel %vm6541, %v6518, %v6567
        %v6569 = vsel %vm6543, %v6522, %v6568
        %v6570 = vsel %vm6545, %v6526, %v6569
        %v6571 = vsel %vm6547, %v6530, %v6570
        %v6572 = vsel %vm6549, %v6534, %v6571
        %v6573 = vsel %vm6551, %v6538, %v6572
        %6578 = vrot.lane.b32.xlu0 %v2262, 11
        %v6579 = vpop.permute.xlu0 %6578
        %6580 = vrot.lane.b32.xlu0 %v2263, 11
        %v6581 = vpop.permute.xlu0 %6580
        %6582 = vrot.lane.b32.xlu0 %v2264, 11
        %v6583 = vpop.permute.xlu0 %6582
        %6584 = vrot.lane.b32.xlu0 %v2265, 11
        %v6585 = vpop.permute.xlu0 %6584
        %vm6590 = vcmask 7168
        %v6591 = vsel %vm6590, %v3169, %v6269
        %v6592 = vsel %vm6590, %v3170, %v6271
        %v6593 = vsel %vm6590, %v3171, %v6273
        %v6594 = vsel %vm6590, %v3172, %v6275
        %vm6595 = vcmask 23552
        %v6596 = vsel %vm6595, %v6591, %v6552
        %v6597 = vsel %vm6595, %v6592, %v6559
        %v6598 = vsel %vm6595, %v6593, %v6566
        %v6599 = vsel %vm6595, %v6594, %v6573
        %vm6600 = vcmask 89088
        %v6601 = vsel %vm6600, %v6596, %v6579
        %v6602 = vsel %vm6600, %v6597, %v6581
        %v6603 = vsel %vm6600, %v6598, %v6583
        %v6604 = vsel %vm6600, %v6599, %v6585
        %vm6605 = vcmask 154624
        %v6606 = vsel %vm6605, %v6601, 0.0
        %v6607 = vsel %vm6605, %v6602, 0.0
        %v6608 = vsel %vm6605, %v6603, 0.0
        %v6609 = vsel %vm6605, %v6604, 0.0
        %6610 = vst [vmem:[%s224] sm:$0xff] %v6606
        %6611 = vst [vmem:[%s224 + $0x8] sm:$0xff] %v6607
        %6612 = vst [vmem:[%s224 + $0x10] sm:$0xff] %v6608
        %6613 = vst [vmem:[%s224 + $0x18] sm:$0xff] %v6609
        %v6614 = vsel %vm849, %v1320, 0.0
        %v6615 = vsel %vm849, %v1321, 0.0
        %v6616 = vsel %vm849, %v1322, 0.0
        %v6617 = vsel %vm849, %v1323, 0.0
        %6618 = vst [vmem:[%s231] sm:$0xff] %v6614
        %6619 = vst [vmem:[%s231 + $0x8] sm:$0xff] %v6615
        %6620 = vst [vmem:[%s231 + $0x10] sm:$0xff] %v6616
        %6621 = vst [vmem:[%s231 + $0x18] sm:$0xff] %v6617
        %s6622 = sand.u32 %s104, 1
        %s6623 = scalar_lea.sflag [#allocation4], %s6622
        %s6624 = sand.u32 %s104, 1
        %s6625 = smul.addr %s6624, 32
        %s6626 = scalar_lea.vmem [#allocation5], %s6625
        %s6627 = sand.u32 %s130, 1
        %s6628 = scalar_lea.sflag [#allocation7], %s6627
        %s6629 = sand.u32 %s130, 1
        %s6630 = smul.addr %s6629, 32
        %s6631 = scalar_lea.vmem [#allocation6], %s6630
        // Predicated region
        $region37: #{tpu_custom_call.1} parent=31 // pred_check
          %p6632 = pneg %p114
        $region38: #{tpu_custom_call.1} parent=31 // pred_check_branch
          %6634 = sbr.rel (%p6632) target = $region40
        $region39: #{tpu_custom_call.1} parent=31 // pred_region
          %s6635 = smul.u32 4, %s23
          %s6637 = ssub.s32 512, 512
          %6638 = vsyncadd %s6623, %s6637
          %s6639 = smul.addr %s6635, 128
          %s6640 = scalar_lea.hbm %s3, %s6639
          %s6641 = sshll.u32 %s6626, 4
          %s6642 = int_to_ptr.vmem [resolvable:$true] %s6641
          %6647 = dma.vmem_to_hbm [thread:$0]  %s6642, 512, %s6640, %s6623, 128, 128, 8
        $region40: #{tpu_custom_call.1} parent=31 // pred_fallthru
          _
        // Predicated region
        $region41: #{tpu_custom_call.1} parent=31 // pred_check
          %p6648 = pneg %p140
        $region42: #{tpu_custom_call.1} parent=31 // pred_check_branch
          %6650 = sbr.rel (%p6648) target = $region44
        $region43: #{tpu_custom_call.1} parent=31 // pred_region
          %s6651 = smul.u32 4, %s23
          %s6653 = ssub.s32 512, 512
          %6654 = vsyncadd %s6628, %s6653
          %s6655 = smul.addr %s6651, 128
          %s6656 = scalar_lea.hbm %s4, %s6655
          %s6657 = sshll.u32 %s6631, 4
          %s6658 = int_to_ptr.vmem [resolvable:$true] %s6657
          %6663 = dma.vmem_to_hbm [thread:$0]  %s6658, 512, %s6656, %s6628, 128, 128, 8
        $region44: #{tpu_custom_call.1} parent=31 // pred_fallthru
          _
      $region32: #{tpu_custom_call.1} parent=5 // pred_fallthru
        _
      %p6664 = scmp.le.s32.totalorder 2, %s18
      // Predicated region
      $region45: #{tpu_custom_call.1} parent=5 // pred_check
        %p6665 = pneg %p6664
      $region46: #{tpu_custom_call.1} parent=5 // pred_check_branch
        %6667 = sbr.rel (%p6665) target = $region48
      $region47: #{tpu_custom_call.1} parent=5 // pred_region
        %s6668 = ssub.s32 %s18, 2
        // Predicated region
        $region49: #{tpu_custom_call.1} parent=47 // pred_check
          %p6669 = pneg %p120
        $region50: #{tpu_custom_call.1} parent=47 // pred_check_branch
          %6671 = sbr.rel (%p6669) target = $region52
        $region51: #{tpu_custom_call.1} parent=47 // pred_region
          %s6672 = sand.u32 %s105, 1
          %s6673 = scalar_lea.sflag [#allocation4], %s6672
          %s6674 = sand.u32 %s105, 1
          %s6675 = smul.addr %s6674, 32
          %s6676 = scalar_lea.vmem [#allocation5], %s6675
          %6677 = dma.done %s6673, 512
        $region52: #{tpu_custom_call.1} parent=47 // pred_fallthru
          _
        // Predicated region
        $region53: #{tpu_custom_call.1} parent=47 // pred_check
          %p6678 = pneg %p146
        $region54: #{tpu_custom_call.1} parent=47 // pred_check_branch
          %6680 = sbr.rel (%p6678) target = $region56
        $region55: #{tpu_custom_call.1} parent=47 // pred_region
          %s6681 = sand.u32 %s131, 1
          %s6682 = scalar_lea.sflag [#allocation7], %s6681
          %s6683 = sand.u32 %s131, 1
          %s6684 = smul.addr %s6683, 32
          %s6685 = scalar_lea.vmem [#allocation6], %s6684
          %6686 = dma.done %s6682, 512
        $region56: #{tpu_custom_call.1} parent=47 // pred_fallthru
          _
      $region48: #{tpu_custom_call.1} parent=5 // pred_fallthru
        _
    $region6: #{tpu_custom_call.1} parent=1 // loop_footer
      %s22 = sadd.s32 1, %s18
    $region7: #{tpu_custom_call.1} parent=1 // loop_footer_branch
      %17 = sbr.rel target = $region3
    $region8: #{tpu_custom_call.1} parent=1 // loop_exit
      _
    %6687 = vsyncpa [#allocation3], 1
    %s6688 = scalar_lea.sflag [#allocation3], 1
    %6689 = vsyncpa %s6688, 1
    %6690 = vsyncpa [#allocation4], 1
    %s6691 = scalar_lea.sflag [#allocation4], 1
    %6692 = vsyncpa %s6691, 1
    %6693 = vsyncpa [#allocation7], 1
    %s6694 = scalar_lea.sflag [#allocation7], 1
    %6695 = vsyncpa %s6694, 1

</llo_original>
